<compile_context>
chip_gen: v6e
topology: v6e:2x2x1
jax: 0.10.0
libtpu: 0.0.40
codegen_flags: <defaults>
</compile_context>

<pallas_src>
import jax
import jax.numpy as jnp
from jax.experimental import pallas as pl
from jax.experimental.pallas import tpu as pltpu
from jax.scipy.special import erf as _jerf   # host-side reference check only

# ---------------- module config (BertConfig-style, consistent with the torch module) ----------
HIDDEN = 32            # config.hidden_size
HEADS = 4              # config.num_attention_heads
HEAD_DIM = HIDDEN // HEADS
INTER = 64             # config.intermediate_size
T_TXT = 40             # text length   (wm = Linear(40, 1))
S_VIS = 49             # visual length (trs1/trs2 = Linear(49, 40))
S_PAD = 56             # visual length padded to a sublane multiple (extra rows: bias-ones / zero)
EPS = 1e-12            # config.layer_norm_eps (BERT default)

# ---------------- packing config ----------------
L = 4                  # samples packed along the LANE axis (128-lane slabs; use 8 on v6e/v7x -> 256)
G = 4                  # lane-groups stacked along the ROW axis per grid step
N_PER_STEP = L * G     # 16 samples per grid step
EW = L * HIDDEN        # 128  packed hidden width
IW = L * INTER         # 256  packed intermediate width
HW = L * HEADS         # 16   packed per-head-scalar width
RT = G * T_TXT         # 160  text rows per grid step
RS = G * S_PAD         # 224  visual rows per grid step
PW = IW                # lane width of the packed weight / bias slabs

# weight-slab layout (name, rows); every section starts at a multiple of 8 rows
_W_SECTIONS = (
    ("wqe", EW), ("wke", EW), ("wv", EW), ("wo", EW),
    ("wf1", EW), ("wf2", IW), ("wb", EW), ("exh", HW),
    ("sum8", EW), ("meane", EW), ("sumt", RT), ("exr", RT),
    ("wtrs", 2 * RT), ("wmg", 8),
)
_WOFF = {}
_r = 0
for _n, _rows in _W_SECTIONS:
    _WOFF[_n] = _r
    _r += _rows
W_ROWS = _r            # 1944 rows x 256 lanes  (~2 MiB, resident)

_B_NAMES = ("bqe", "bke", "bv", "bo", "bb", "bm", "bf1", "bf2",
            "g_self", "b_self", "g_out", "b_out")
_BROW = {n: i for i, n in enumerate(_B_NAMES)}
B_ROWS = 16


# ---------------- in-kernel math helpers ----------------
def _gelu(x):
    # exact (erf-based) GELU matching nn.GELU(); erf via A&S 7.1.26 (~1.5e-7 abs err).
    # TODO(synk): torch.erf has no direct Mosaic lowering; polynomial stand-in (divide on EUP).
    a1, a2, a3, a4, a5 = 0.254829592, -0.284496736, 1.421413741, -1.453152027, 1.061405429
    pc = 0.3275911
    z = x * 0.7071067811865476
    sgn = jnp.where(z >= 0.0, 1.0, -1.0)
    az = jnp.abs(z)
    t = pl.reciprocal(1.0 + pc * az, approx=True)
    poly = ((((a5 * t + a4) * t + a3) * t + a2) * t + a1) * t
    erf_z = sgn * (1.0 - poly * jnp.exp(-az * az))
    return 0.5 * x * (1.0 + erf_z)


def _block_layer_norm(y, mean_op, gamma, beta):
    # Per-sample LayerNorm over each 32-lane block via a block-diag averaging matmul (MXU).
    mu = jnp.dot(y, mean_op, preferred_element_type=jnp.float32)
    d = y - mu
    var = jnp.dot(d * d, mean_op, preferred_element_type=jnp.float32)
    return d * jax.lax.rsqrt(var + EPS) * gamma + beta


# ---------------- fused kernel (one grid step == G*L = 16 samples) ----------------
def _fused_kernel(x_ref, pkv_ref, mask_ref, w_ref, b_ref, out_ref):
    dot = lambda a, b: jnp.dot(a, b, preferred_element_type=jnp.float32)

    def W(name, rows, cols):
        o = _WOFF[name]
        return w_ref[o:o + rows, 0:cols]

    def Bv(name, cols):
        i = _BROW[name]
        return b_ref[i:i + 1, 0:cols]

    x = x_ref[...]          # (RT, EW)   lane-packed text hidden states
    pkv = pkv_ref[...]      # (RS, EW)   lane-packed visual states (+ bias ones-row per group)
    mask = mask_ref[...]    # (RT, HW)   additive mask, one column per (sample, head)

    wqe = W("wqe", EW, EW); wke = W("wke", EW, EW)
    wv = W("wv", EW, EW);   wo = W("wo", EW, EW)
    wf1 = W("wf1", EW, IW); wf2 = W("wf2", IW, EW)
    wb = W("wb", EW, HW)
    exh = W("exh", HW, EW)            # head column -> 8 lanes expansion
    sum8 = W("sum8", EW, EW)          # per-8-lane-block sums
    meane = W("meane", EW, EW)        # per-32-lane-block means (LayerNorm)
    sumt = W("sumt", RT, RT)          # per-sample column sums over its 40 rows
    exr = W("exr", RT, 8)             # broadcast per-group row over its 40 rows
    wtrs = W("wtrs", 2 * RT, RS)      # [trs1 ; trs2] block-diag over row-groups (+bias column)
    wmg = W("wmg", 8, RT)             # wm (Linear(40,1)) block-diag over row-groups

    bqe = Bv("bqe", EW); bke = Bv("bke", EW); bv = Bv("bv", EW); bo = Bv("bo", EW)
    bb = Bv("bb", HW);   bm = Bv("bm", EW)
    bf1 = Bv("bf1", IW); bf2 = Bv("bf2", EW)
    g_self = Bv("g_self", EW); b_self = Bv("b_self", EW)
    g_out = Bv("g_out", EW);   b_out = Bv("b_out", EW)

    # ---------------- MGMHA_text ----------------
    # query path: query Linear and per-head wqk Linear folded host-side into one matmul
    qq = dot(x, wqe) + bqe                                    # wqk(query_layer)   (RT, EW)

    # visual path: trs1/trs2 along the 49-long visual axis (bias folded via the ones-row),
    # then GELU, then value Linear / (key Linear folded with the per-head wk Linear).
    gkv = _gelu(dot(wtrs, pkv))                               # (2*RT, EW)
    v = dot(gkv[0:RT, :], wv) + bv                            # value_layer        (RT, EW)
    kk = dot(gkv[RT:2 * RT, :], wke) + bke                    # wk(key_layer)      (RT, EW)

    bk = qq * kk                                              # Bk                 (RT, EW)

    # b path: softmax(dim=-2) over the 40 text positions of each sample, per head, with mask.
    b_all = dot(bk, wb) + bb + mask                           # (RT, HW)
    b_all = b_all - jnp.max(b_all, axis=0, keepdims=True)     # per-column shift (invariant)
    eb = jnp.exp(b_all)
    denom = dot(sumt, eb)                                     # per-sample sums, bcast to its rows
    sm_b = eb * pl.reciprocal(denom, approx=True)             # attention_scores   (RT, HW)
    sm_b_full = dot(sm_b, exh)                                # expand head -> 8 lanes (RT, EW)

    # m path: softmax(dim=-1) over head_dim; the additive mask is constant along that axis so
    # it cancels (same NaN behaviour as torch only if the mask were -inf). dropout == identity.
    m_rows = dot(wmg, bk) + bm                                # (8, EW), rows 0..G-1 real
    m_rows = m_rows - jnp.max(m_rows, axis=1, keepdims=True)  # per-row shift (invariant)
    em = jnp.exp(m_rows)
    sm_m = em * pl.reciprocal(dot(em, sum8), approx=True)     # per-8-lane-block softmax
    sm_m_full = dot(exr, sm_m)                                # broadcast over each sample's rows

    # atten_output + atten_outputm == (scores + scores_m) * value_layer
    ctx = (sm_b_full + sm_m_full) * v                         # context_layer      (RT, EW)

    # ---------------- BertSelfOutput ----------------
    attn = _block_layer_norm(dot(ctx, wo) + bo + x, meane, g_self, b_self)

    # (encoder.layer_norm1(attention_output + hidden_states) is computed then immediately
    #  discarded by the reference forward -> skipped.)

    # ---------------- BertIntermediate + BertOutput ----------------
    inter = _gelu(dot(attn, wf1) + bf1)                       # (RT, IW)
    ffo = dot(inter, wf2) + bf2                               # (RT, EW)
    out_ref[...] = _block_layer_norm(ffo + attn, meane, g_out, b_out)


# ---------------- one-time host-side parameter packing ----------------
def _pad_to(a, rows, cols=PW):
    a = jnp.asarray(a, jnp.float32)
    return jnp.pad(a, ((0, rows - a.shape[0]), (0, cols - a.shape[1])))


def pack_params(p):
    """Packs all module parameters into two resident VMEM slabs (call ONCE, reuse)."""
    f32 = jnp.float32
    eyeH = jnp.eye(HEADS, dtype=f32)
    eyeL = jnp.eye(L, dtype=f32)
    eyeG = jnp.eye(G, dtype=f32)
    eyeLH = jnp.eye(L * HEADS, dtype=f32)

    # fold the chained per-head Linears (wqk after query, wk after key) -- exact in f32
    wqk_blk = jnp.kron(eyeH, p["wqk"].T.astype(f32))
    wks_blk = jnp.kron(eyeH, p["wks"].T.astype(f32))
    w_qeff = p["wq"].T.astype(f32) @ wqk_blk
    b_qeff = p["bq"].astype(f32) @ wqk_blk + jnp.tile(p["bqk"].astype(f32), HEADS)
    w_keff = p["wk"].T.astype(f32) @ wks_blk
    b_keff = p["bk"].astype(f32) @ wks_blk + jnp.tile(p["bks"].astype(f32), HEADS)

    # per-sample wb: (E, H), column h carries the wb weights on head h's 8 rows
    w_b = jnp.zeros((HIDDEN, HEADS), f32)
    for h in range(HEADS):
        w_b = w_b.at[h * HEAD_DIM:(h + 1) * HEAD_DIM, h].set(p["wb"][0].astype(f32))
    b_b = jnp.full((HEADS,), p["bb"][0], f32)

    # trs1/trs2 along the visual axis; bias folded into column S_VIS (hits pkv's ones-row)
    def trs_aug(w, b):
        a = jnp.zeros((T_TXT, S_PAD), f32)
        a = a.at[:, :S_VIS].set(w.astype(f32))
        a = a.at[:, S_VIS].set(b.astype(f32))
        return a

    mats = {
        "wqe": jnp.kron(eyeL, w_qeff),
        "wke": jnp.kron(eyeL, w_keff),
        "wv": jnp.kron(eyeL, p["wv"].T.astype(f32)),
        "wo": jnp.kron(eyeL, p["wso"].T.astype(f32)),
        "wf1": jnp.kron(eyeL, p["wfc1"].T.astype(f32)),
        "wf2": jnp.kron(eyeL, p["wfc2"].T.astype(f32)),
        "wb": jnp.kron(eyeL, w_b),
        "exh": jnp.kron(eyeLH, jnp.ones((1, HEAD_DIM), f32)),
        "sum8": jnp.kron(eyeLH, jnp.ones((HEAD_DIM, HEAD_DIM), f32)),
        "meane": jnp.kron(eyeL, jnp.full((HIDDEN, HIDDEN), 1.0 / HIDDEN, f32)),
        "sumt": jnp.kron(eyeG, jnp.ones((T_TXT, T_TXT), f32)),
        "exr": jnp.kron(eyeG, jnp.ones((T_TXT, 1), f32)),
        "wtrs": jnp.concatenate(
            [jnp.kron(eyeG, trs_aug(p["wtrs1"], p["btrs1"])),
             jnp.kron(eyeG, trs_aug(p["wtrs2"], p["btrs2"]))], axis=0),
        "wmg": jnp.kron(eyeG, p["wm"].astype(f32)),
    }
    w_pack = jnp.concatenate([_pad_to(mats[n], r) for n, r in _W_SECTIONS], axis=0)
    assert w_pack.shape == (W_ROWS, PW)

    rows = {
        "bqe": jnp.tile(b_qeff, L),
        "bke": jnp.tile(b_keff, L),
        "bv": jnp.tile(p["bv"].astype(f32), L),
        "bo": jnp.tile(p["bso"].astype(f32), L),
        "bb": jnp.tile(b_b, L),
        "bm": jnp.full((EW,), p["bm"][0], f32),
        "bf1": jnp.tile(p["bfc1"].astype(f32), L),
        "bf2": jnp.tile(p["bfc2"].astype(f32), L),
        "g_self": jnp.tile(p["ln_self_g"].astype(f32), L),
        "b_self": jnp.tile(p["ln_self_b"].astype(f32), L),
        "g_out": jnp.tile(p["ln_out_g"].astype(f32), L),
        "b_out": jnp.tile(p["ln_out_b"].astype(f32), L),
    }
    b_list = [_pad_to(rows[n].reshape(1, -1), 1) for n in _B_NAMES]
    b_list.append(jnp.zeros((B_ROWS - len(_B_NAMES), PW), jnp.float32))
    b_pack = jnp.concatenate(b_list, axis=0)
    assert b_pack.shape == (B_ROWS, PW)
    return w_pack, b_pack


# ---------------- wrapper (lane/row packing is pure layout plumbing, jitted) ----------------
@jax.jit
def mgmha_encoder_text(hidden_states, past_key_values, attention_mask, w_pack, b_pack):
    B = hidden_states.shape[0]
    steps = max(2, (B + N_PER_STEP - 1) // N_PER_STEP)    # >=2 so both v7x TensorCores get work
    padB = steps * N_PER_STEP
    pad = padB - B

    x = jnp.pad(hidden_states.astype(jnp.float32), ((0, pad), (0, 0), (0, 0)))
    x_pack = (x.reshape(steps, G, L, T_TXT, HIDDEN)
               .transpose(0, 1, 3, 2, 4)
               .reshape(steps * RT, EW))

    pkv = jnp.pad(past_key_values.astype(jnp.float32), ((0, pad), (0, 0), (0, 0)))
    pkv = jnp.concatenate(
        [pkv,
         jnp.ones((padB, 1, HIDDEN), jnp.float32),                     # ones-row -> trs bias
         jnp.zeros((padB, S_PAD - S_VIS - 1, HIDDEN), jnp.float32)], axis=1)
    pkv_pack = (pkv.reshape(steps, G, L, S_PAD, HIDDEN)
                  .transpose(0, 1, 3, 2, 4)
                  .reshape(steps * RS, EW))

    # torch: extended (B,1,1,T) mask --permute(0,1,3,2)--> per-sample column over T
    m = jnp.pad(attention_mask.reshape(B, T_TXT).astype(jnp.float32), ((0, pad), (0, 0)))
    m = m.reshape(steps, G, L, T_TXT).transpose(0, 1, 3, 2)            # (steps, G, T, L)
    m = jnp.broadcast_to(m[..., None], (steps, G, T_TXT, L, HEADS))
    mask_pack = m.reshape(steps * RT, HW)

    out2d = pl.pallas_call(
        _fused_kernel,
        grid=(steps,),
        in_specs=[
            pl.BlockSpec((RT, EW), lambda s: (s, 0)),
            pl.BlockSpec((RS, EW), lambda s: (s, 0)),
            pl.BlockSpec((RT, HW), lambda s: (s, 0)),
            pl.BlockSpec((W_ROWS, PW), lambda s: (0, 0)),   # resident packed weight slab
            pl.BlockSpec((B_ROWS, PW), lambda s: (0, 0)),   # resident packed bias slab
        ],
        out_specs=pl.BlockSpec((RT, EW), lambda s: (s, 0)),
        out_shape=jax.ShapeDtypeStruct((steps * RT, EW), jnp.float32),
        compiler_params=pltpu.CompilerParams(
            dimension_semantics=("parallel",),
            vmem_limit_bytes=32 * 1024 * 1024),
    )(x_pack, pkv_pack, mask_pack, w_pack, b_pack)

    out = (out2d.reshape(steps, G, T_TXT, L, HIDDEN)
                .transpose(0, 1, 3, 2, 4)
                .reshape(padB, T_TXT, HIDDEN))
    return out[:B]


# ---------------- deterministic synthetic parameters ----------------
def init_params(key):
    ks = jax.random.split(key, 12)

    def lin(k, out_f, in_f, scale=0.05):
        kw, kb = jax.random.split(k)
        return (scale * jax.random.normal(kw, (out_f, in_f), jnp.float32),   # torch (out, in)
                scale * jax.random.normal(kb, (out_f,), jnp.float32))

    p = {
        "ln_self_g": jnp.ones((HIDDEN,), jnp.float32),    # BertSelfOutput.LayerNorm
        "ln_self_b": jnp.zeros((HIDDEN,), jnp.float32),
        "ln_out_g": jnp.ones((HIDDEN,), jnp.float32),     # BertOutput.LayerNorm
        "ln_out_b": jnp.zeros((HIDDEN,), jnp.float32),
    }
    p["wq"], p["bq"] = lin(ks[0], HIDDEN, HIDDEN)
    p["wk"], p["bk"] = lin(ks[1], HIDDEN, HIDDEN)
    p["wv"], p["bv"] = lin(ks[2], HIDDEN, HIDDEN)
    p["wqk"], p["bqk"] = lin(ks[3], HEAD_DIM, HEAD_DIM)    # self.wqk
    p["wks"], p["bks"] = lin(ks[4], HEAD_DIM, HEAD_DIM)    # self.wk  (head-dim Linear)
    p["wb"], p["bb"] = lin(ks[5], 1, HEAD_DIM)             # self.wb
    p["wm"], p["bm"] = lin(ks[6], 1, T_TXT)                # self.wm  (40 -> 1)
    p["wtrs1"], p["btrs1"] = lin(ks[7], T_TXT, S_VIS)      # self.trs1 (49 -> 40)
    p["wtrs2"], p["btrs2"] = lin(ks[8], T_TXT, S_VIS)      # self.trs2 (49 -> 40)
    p["wso"], p["bso"] = lin(ks[9], HIDDEN, HIDDEN)        # BertSelfOutput.dense
    p["wfc1"], p["bfc1"] = lin(ks[10], INTER, HIDDEN)      # BertIntermediate.dense
    p["wfc2"], p["bfc2"] = lin(ks[11], HIDDEN, INTER)      # BertOutput.dense
    return p


# ---------------- pure-JAX transcription of the torch forward (verification only) ----------------
def _reference(hidden, pkv, mask_ext, p):
    hp = jax.lax.Precision.HIGHEST
    lin = lambda x, w, b: jnp.einsum("...i,oi->...o", x, w, precision=hp) + b
    gelu = lambda v: 0.5 * v * (1.0 + _jerf(v * 0.7071067811865476))
    B = hidden.shape[0]

    def t4s(x):
        return x.reshape(B, -1, HEADS, HEAD_DIM).transpose(0, 2, 1, 3)

    q = t4s(lin(hidden, p["wq"], p["bq"]))
    t1 = gelu(jnp.einsum("ts,bse->bte", p["wtrs1"], pkv, precision=hp) + p["btrs1"][None, :, None])
    t2 = gelu(jnp.einsum("ts,bse->bte", p["wtrs2"], pkv, precision=hp) + p["btrs2"][None, :, None])
    v = t4s(lin(t1, p["wv"], p["bv"]))
    k = t4s(lin(t2, p["wk"], p["bk"]))
    Bk = lin(q, p["wqk"], p["bqk"]) * lin(k, p["wks"], p["bks"])
    b = lin(Bk, p["wb"], p["bb"])                                                # (B,H,T,1)
    m = lin(Bk.transpose(0, 1, 3, 2), p["wm"], p["bm"]).transpose(0, 1, 3, 2)    # (B,H,1,D)
    mask = mask_ext.transpose(0, 1, 3, 2)                                        # (B,1,T,1)
    s_b = jax.nn.softmax(b + mask, axis=-2)
    s_m = jax.nn.softmax(m + mask, axis=-1)
    ctx = (s_b * v + s_m * v).transpose(0, 2, 1, 3).reshape(B, T_TXT, HIDDEN)

    def ln(y, g_, b_):
        mu = y.mean(-1, keepdims=True)
        var = ((y - mu) ** 2).mean(-1, keepdims=True)
        return (y - mu) / jnp.sqrt(var + EPS) * g_ + b_

    attn = ln(lin(ctx, p["wso"], p["bso"]) + hidden, p["ln_self_g"], p["ln_self_b"])
    inter = gelu(lin(attn, p["wfc1"], p["bfc1"]))
    return ln(lin(inter, p["wfc2"], p["bfc2"]) + attn, p["ln_out_g"], p["ln_out_b"])


if __name__ == "__main__":
    key = jax.random.PRNGKey(0)
    k_x, k_pkv, k_p = jax.random.split(key, 3)
    B = 2
    hidden_states = jax.random.normal(k_x, (B, T_TXT, HIDDEN), jnp.float32)       # text
    past_key_values = jax.random.normal(k_pkv, (B, S_VIS, HIDDEN), jnp.float32)   # visual
    lengths = jnp.array([35, 40], jnp.int32)                                      # BERT-style mask
    attention_mask = jnp.where(jnp.arange(T_TXT)[None, :] < lengths[:, None],
                               0.0, -10000.0).astype(jnp.float32).reshape(B, 1, 1, T_TXT)
    params = init_params(k_p)

    w_pack, b_pack = pack_params(params)     # packed ONCE, reused across calls

    out = mgmha_encoder_text(hidden_states, past_key_values, attention_mask, w_pack, b_pack)
    out = jax.block_until_ready(out)
    assert out.shape == (B, T_TXT, HIDDEN) and out.dtype == jnp.float32
    assert bool(jnp.all(jnp.isfinite(out)))

    # sanity check against a pure-JAX transcription of the torch forward; loose tolerance
    # covers MXU matmul precision and the approx EUP reciprocals while still catching any
    # packing/layout mistake (those show up as O(1) errors after the LayerNorms).
    ref = _reference(hidden_states, past_key_values, attention_mask, params)
    max_err = float(jnp.max(jnp.abs(out - ref)))
    assert max_err < 5e-2, f"kernel/reference mismatch: {max_err}"
    # TODO(synk): nn.Dropout layers are identity (eval semantics); torch.erf is an A&S
    # polynomial approximation inside the kernel.
    print("KERNEL_OK")
</pallas_src>

<mosaic_0001>
module attributes {stable_mosaic.version = 11 : i64} {
  func.func @_fused_kernel(%arg0: i32, %arg1: memref<160x128xf32, #tpu.memory_space<vmem>>, %arg2: memref<224x128xf32, #tpu.memory_space<vmem>>, %arg3: memref<160x16xf32, #tpu.memory_space<vmem>>, %arg4: memref<1944x256xf32, #tpu.memory_space<vmem>>, %arg5: memref<16x256xf32, #tpu.memory_space<vmem>>, %arg6: memref<160x128xf32, #tpu.memory_space<vmem>>) attributes {dimension_semantics = [#tpu.dimension_semantics<parallel>], iteration_bounds = array<i64: 2>, scalar_prefetch = 0 : i64, scratch_operands = 0 : i64, tpu.core_type = #tpu.core_type<tc>, window_params = [{transform_indices = @transform_0, window_bounds = array<i64: 160, 128>}, {transform_indices = @transform_1, window_bounds = array<i64: 224, 128>}, {transform_indices = @transform_2, window_bounds = array<i64: 160, 16>}, {pipeline_mode = #tpu.pipeline_mode<synchronous>, transform_indices = @transform_3, window_bounds = array<i64: 1944, 256>}, {pipeline_mode = #tpu.pipeline_mode<synchronous>, transform_indices = @transform_4, window_bounds = array<i64: 16, 256>}, {transform_indices = @transform_5, window_bounds = array<i64: 160, 128>}]} {
    %c0 = arith.constant 0 : index
    %c0_0 = arith.constant 0 : index
    %0 = vector.load %arg1[%c0, %c0_0] : memref<160x128xf32, #tpu.memory_space<vmem>>, vector<160x128xf32>
    %c0_1 = arith.constant 0 : index
    %c0_2 = arith.constant 0 : index
    %1 = vector.load %arg2[%c0_1, %c0_2] : memref<224x128xf32, #tpu.memory_space<vmem>>, vector<224x128xf32>
    %c0_3 = arith.constant 0 : index
    %c0_4 = arith.constant 0 : index
    %2 = vector.load %arg3[%c0_3, %c0_4] : memref<160x16xf32, #tpu.memory_space<vmem>>, vector<160x16xf32>
    %c0_5 = arith.constant 0 : index
    %c0_6 = arith.constant 0 : index
    %3 = vector.load %arg4[%c0_5, %c0_6] : memref<1944x256xf32, #tpu.memory_space<vmem>>, vector<128x128xf32>
    %c128 = arith.constant 128 : index
    %c0_7 = arith.constant 0 : index
    %4 = vector.load %arg4[%c128, %c0_7] : memref<1944x256xf32, #tpu.memory_space<vmem>>, vector<128x128xf32>
    %c256 = arith.constant 256 : index
    %c0_8 = arith.constant 0 : index
    %5 = vector.load %arg4[%c256, %c0_8] : memref<1944x256xf32, #tpu.memory_space<vmem>>, vector<128x128xf32>
    %c384 = arith.constant 384 : index
    %c0_9 = arith.constant 0 : index
    %6 = vector.load %arg4[%c384, %c0_9] : memref<1944x256xf32, #tpu.memory_space<vmem>>, vector<128x128xf32>
    %c512 = arith.constant 512 : index
    %c0_10 = arith.constant 0 : index
    %7 = vector.load %arg4[%c512, %c0_10] : memref<1944x256xf32, #tpu.memory_space<vmem>>, vector<128x256xf32>
    %c640 = arith.constant 640 : index
    %c0_11 = arith.constant 0 : index
    %8 = vector.load %arg4[%c640, %c0_11] : memref<1944x256xf32, #tpu.memory_space<vmem>>, vector<256x128xf32>
    %c896 = arith.constant 896 : index
    %c0_12 = arith.constant 0 : index
    %9 = vector.load %arg4[%c896, %c0_12] : memref<1944x256xf32, #tpu.memory_space<vmem>>, vector<128x16xf32>
    %c1024 = arith.constant 1024 : index
    %c0_13 = arith.constant 0 : index
    %10 = vector.load %arg4[%c1024, %c0_13] : memref<1944x256xf32, #tpu.memory_space<vmem>>, vector<16x128xf32>
    %c1040 = arith.constant 1040 : index
    %c0_14 = arith.constant 0 : index
    %11 = vector.load %arg4[%c1040, %c0_14] : memref<1944x256xf32, #tpu.memory_space<vmem>>, vector<128x128xf32>
    %c1168 = arith.constant 1168 : index
    %c0_15 = arith.constant 0 : index
    %12 = vector.load %arg4[%c1168, %c0_15] : memref<1944x256xf32, #tpu.memory_space<vmem>>, vector<128x128xf32>
    %c1296 = arith.constant 1296 : index
    %c0_16 = arith.constant 0 : index
    %13 = vector.load %arg4[%c1296, %c0_16] : memref<1944x256xf32, #tpu.memory_space<vmem>>, vector<160x160xf32>
    %c1456 = arith.constant 1456 : index
    %c0_17 = arith.constant 0 : index
    %14 = vector.load %arg4[%c1456, %c0_17] : memref<1944x256xf32, #tpu.memory_space<vmem>>, vector<160x8xf32>
    %c1616 = arith.constant 1616 : index
    %c0_18 = arith.constant 0 : index
    %15 = vector.load %arg4[%c1616, %c0_18] : memref<1944x256xf32, #tpu.memory_space<vmem>>, vector<320x224xf32>
    %c1936 = arith.constant 1936 : index
    %c0_19 = arith.constant 0 : index
    %16 = vector.load %arg4[%c1936, %c0_19] : memref<1944x256xf32, #tpu.memory_space<vmem>>, vector<8x160xf32>
    %c0_20 = arith.constant 0 : index
    %c0_21 = arith.constant 0 : index
    %17 = vector.load %arg5[%c0_20, %c0_21] : memref<16x256xf32, #tpu.memory_space<vmem>>, vector<1x128xf32>
    %c1 = arith.constant 1 : index
    %c0_22 = arith.constant 0 : index
    %18 = vector.load %arg5[%c1, %c0_22] : memref<16x256xf32, #tpu.memory_space<vmem>>, vector<1x128xf32>
    %c2 = arith.constant 2 : index
    %c0_23 = arith.constant 0 : index
    %19 = vector.load %arg5[%c2, %c0_23] : memref<16x256xf32, #tpu.memory_space<vmem>>, vector<1x128xf32>
    %c3 = arith.constant 3 : index
    %c0_24 = arith.constant 0 : index
    %20 = vector.load %arg5[%c3, %c0_24] : memref<16x256xf32, #tpu.memory_space<vmem>>, vector<1x128xf32>
    %c4 = arith.constant 4 : index
    %c0_25 = arith.constant 0 : index
    %21 = vector.load %arg5[%c4, %c0_25] : memref<16x256xf32, #tpu.memory_space<vmem>>, vector<1x16xf32>
    %c5 = arith.constant 5 : index
    %c0_26 = arith.constant 0 : index
    %22 = vector.load %arg5[%c5, %c0_26] : memref<16x256xf32, #tpu.memory_space<vmem>>, vector<1x128xf32>
    %c6 = arith.constant 6 : index
    %c0_27 = arith.constant 0 : index
    %23 = vector.load %arg5[%c6, %c0_27] : memref<16x256xf32, #tpu.memory_space<vmem>>, vector<1x256xf32>
    %c7 = arith.constant 7 : index
    %c0_28 = arith.constant 0 : index
    %24 = vector.load %arg5[%c7, %c0_28] : memref<16x256xf32, #tpu.memory_space<vmem>>, vector<1x128xf32>
    %c8 = arith.constant 8 : index
    %c0_29 = arith.constant 0 : index
    %25 = vector.load %arg5[%c8, %c0_29] : memref<16x256xf32, #tpu.memory_space<vmem>>, vector<1x128xf32>
    %c9 = arith.constant 9 : index
    %c0_30 = arith.constant 0 : index
    %26 = vector.load %arg5[%c9, %c0_30] : memref<16x256xf32, #tpu.memory_space<vmem>>, vector<1x128xf32>
    %c10 = arith.constant 10 : index
    %c0_31 = arith.constant 0 : index
    %27 = vector.load %arg5[%c10, %c0_31] : memref<16x256xf32, #tpu.memory_space<vmem>>, vector<1x128xf32>
    %c11 = arith.constant 11 : index
    %c0_32 = arith.constant 0 : index
    %28 = vector.load %arg5[%c11, %c0_32] : memref<16x256xf32, #tpu.memory_space<vmem>>, vector<1x128xf32>
    %cst = arith.constant dense<0.000000e+00> : vector<160x128xf32>
    %29 = tpu.matmul %0, %3, %cst {dimension_numbers = #tpu.dot_dimension_numbers<[1], [0], [0], [1], [0, 0, 1, 1], [], []>} : vector<160x128xf32>, vector<128x128xf32>, vector<160x128xf32> -> vector<160x128xf32>
    %30 = vector.broadcast %17 : vector<1x128xf32> to vector<160x128xf32>
    %31 = arith.addf %29, %30 : vector<160x128xf32>
    %cst_33 = arith.constant dense<0.000000e+00> : vector<320x128xf32>
    %32 = tpu.matmul %15, %1, %cst_33 {dimension_numbers = #tpu.dot_dimension_numbers<[1], [0], [0], [1], [0, 0, 1, 1], [], []>} : vector<320x224xf32>, vector<224x128xf32>, vector<320x128xf32> -> vector<320x128xf32>
    %cst_34 = arith.constant 0.707106769 : f32
    %33 = vector.broadcast %cst_34 : f32 to vector<320x128xf32>
    %34 = arith.mulf %32, %33 : vector<320x128xf32>
    %cst_35 = arith.constant 0.000000e+00 : f32
    %35 = vector.broadcast %cst_35 : f32 to vector<320x128xf32>
    %36 = arith.cmpf oge, %34, %35 : vector<320x128xf32>
    %cst_36 = arith.constant 1.000000e+00 : f32
    %cst_37 = arith.constant -1.000000e+00 : f32
    %37 = vector.broadcast %cst_36 : f32 to vector<320x128xf32>
    %38 = vector.broadcast %cst_37 : f32 to vector<320x128xf32>
    %39 = arith.select %36, %37, %38 : vector<320x128xi1>, vector<320x128xf32>
    %40 = math.absf %34 : vector<320x128xf32>
    %cst_38 = arith.constant 0.327591091 : f32
    %41 = vector.broadcast %cst_38 : f32 to vector<320x128xf32>
    %42 = arith.mulf %41, %40 : vector<320x128xf32>
    %cst_39 = arith.constant 1.000000e+00 : f32
    %43 = vector.broadcast %cst_39 : f32 to vector<320x128xf32>
    %44 = arith.addf %43, %42 : vector<320x128xf32>
    %45 = tpu.reciprocal %44 {approx = true} : vector<320x128xf32> -> vector<320x128xf32>
    %cst_40 = arith.constant 1.06140542 : f32
    %46 = vector.broadcast %cst_40 : f32 to vector<320x128xf32>
    %47 = arith.mulf %46, %45 : vector<320x128xf32>
    %cst_41 = arith.constant -1.45315206 : f32
    %48 = vector.broadcast %cst_41 : f32 to vector<320x128xf32>
    %49 = arith.addf %47, %48 : vector<320x128xf32>
    %50 = arith.mulf %49, %45 : vector<320x128xf32>
    %cst_42 = arith.constant 1.42141378 : f32
    %51 = vector.broadcast %cst_42 : f32 to vector<320x128xf32>
    %52 = arith.addf %50, %51 : vector<320x128xf32>
    %53 = arith.mulf %52, %45 : vector<320x128xf32>
    %cst_43 = arith.constant -0.284496725 : f32
    %54 = vector.broadcast %cst_43 : f32 to vector<320x128xf32>
    %55 = arith.addf %53, %54 : vector<320x128xf32>
    %56 = arith.mulf %55, %45 : vector<320x128xf32>
    %cst_44 = arith.constant 0.254829586 : f32
    %57 = vector.broadcast %cst_44 : f32 to vector<320x128xf32>
    %58 = arith.addf %56, %57 : vector<320x128xf32>
    %59 = arith.mulf %58, %45 : vector<320x128xf32>
    %cst_45 = arith.constant 0.000000e+00 : f32
    %60 = vector.broadcast %cst_45 : f32 to vector<320x128xf32>
    %61 = arith.subf %60, %40 : vector<320x128xf32>
    %62 = arith.mulf %61, %40 : vector<320x128xf32>
    %63 = math.exp %62 : vector<320x128xf32>
    %64 = arith.mulf %59, %63 : vector<320x128xf32>
    %cst_46 = arith.constant 1.000000e+00 : f32
    %65 = vector.broadcast %cst_46 : f32 to vector<320x128xf32>
    %66 = arith.subf %65, %64 : vector<320x128xf32>
    %67 = arith.mulf %39, %66 : vector<320x128xf32>
    %cst_47 = arith.constant 5.000000e-01 : f32
    %68 = vector.broadcast %cst_47 : f32 to vector<320x128xf32>
    %69 = arith.mulf %68, %32 : vector<320x128xf32>
    %cst_48 = arith.constant 1.000000e+00 : f32
    %70 = vector.broadcast %cst_48 : f32 to vector<320x128xf32>
    %71 = arith.addf %70, %67 : vector<320x128xf32>
    %72 = arith.mulf %69, %71 : vector<320x128xf32>
    %73 = vector.extract_strided_slice %72 {offsets = [0, 0], sizes = [160, 128], strides = [1, 1]} : vector<320x128xf32> to vector<160x128xf32>
    %cst_49 = arith.constant dense<0.000000e+00> : vector<160x128xf32>
    %74 = tpu.matmul %73, %5, %cst_49 {dimension_numbers = #tpu.dot_dimension_numbers<[1], [0], [0], [1], [0, 0, 1, 1], [], []>} : vector<160x128xf32>, vector<128x128xf32>, vector<160x128xf32> -> vector<160x128xf32>
    %75 = vector.broadcast %19 : vector<1x128xf32> to vector<160x128xf32>
    %76 = arith.addf %74, %75 : vector<160x128xf32>
    %77 = vector.extract_strided_slice %72 {offsets = [160, 0], sizes = [160, 128], strides = [1, 1]} : vector<320x128xf32> to vector<160x128xf32>
    %cst_50 = arith.constant dense<0.000000e+00> : vector<160x128xf32>
    %78 = tpu.matmul %77, %4, %cst_50 {dimension_numbers = #tpu.dot_dimension_numbers<[1], [0], [0], [1], [0, 0, 1, 1], [], []>} : vector<160x128xf32>, vector<128x128xf32>, vector<160x128xf32> -> vector<160x128xf32>
    %79 = vector.broadcast %18 : vector<1x128xf32> to vector<160x128xf32>
    %80 = arith.addf %78, %79 : vector<160x128xf32>
    %81 = arith.mulf %31, %80 : vector<160x128xf32>
    %cst_51 = arith.constant dense<0.000000e+00> : vector<160x16xf32>
    %82 = tpu.matmul %81, %9, %cst_51 {dimension_numbers = #tpu.dot_dimension_numbers<[1], [0], [0], [1], [0, 0, 1, 1], [], []>} : vector<160x128xf32>, vector<128x16xf32>, vector<160x16xf32> -> vector<160x16xf32>
    %83 = vector.broadcast %21 : vector<1x16xf32> to vector<160x16xf32>
    %84 = arith.addf %82, %83 : vector<160x16xf32>
    %85 = arith.addf %84, %2 : vector<160x16xf32>
    %cst_52 = arith.constant dense<0xFF800000> : vector<16xf32>
    %86 = vector.multi_reduction <maximumf>, %85, %cst_52 [0] : vector<160x16xf32> to vector<16xf32>
    %87 = vector.shape_cast %86 : vector<16xf32> to vector<1x16xf32>
    %88 = vector.broadcast %87 : vector<1x16xf32> to vector<160x16xf32>
    %89 = arith.subf %85, %88 : vector<160x16xf32>
    %90 = math.exp %89 : vector<160x16xf32>
    %cst_53 = arith.constant dense<0.000000e+00> : vector<160x16xf32>
    %91 = tpu.matmul %13, %90, %cst_53 {dimension_numbers = #tpu.dot_dimension_numbers<[1], [0], [0], [1], [0, 0, 1, 1], [], []>} : vector<160x160xf32>, vector<160x16xf32>, vector<160x16xf32> -> vector<160x16xf32>
    %92 = tpu.reciprocal %91 {approx = true} : vector<160x16xf32> -> vector<160x16xf32>
    %93 = arith.mulf %90, %92 : vector<160x16xf32>
    %cst_54 = arith.constant dense<0.000000e+00> : vector<160x128xf32>
    %94 = tpu.matmul %93, %10, %cst_54 {dimension_numbers = #tpu.dot_dimension_numbers<[1], [0], [0], [1], [0, 0, 1, 1], [], []>} : vector<160x16xf32>, vector<16x128xf32>, vector<160x128xf32> -> vector<160x128xf32>
    %cst_55 = arith.constant dense<0.000000e+00> : vector<8x128xf32>
    %95 = tpu.matmul %16, %81, %cst_55 {dimension_numbers = #tpu.dot_dimension_numbers<[1], [0], [0], [1], [0, 0, 1, 1], [], []>} : vector<8x160xf32>, vector<160x128xf32>, vector<8x128xf32> -> vector<8x128xf32>
    %96 = vector.broadcast %22 : vector<1x128xf32> to vector<8x128xf32>
    %97 = arith.addf %95, %96 : vector<8x128xf32>
    %cst_56 = arith.constant dense<0xFF800000> : vector<8xf32>
    %98 = vector.multi_reduction <maximumf>, %97, %cst_56 [1] : vector<8x128xf32> to vector<8xf32>
    %99 = vector.shape_cast %98 : vector<8xf32> to vector<8x1xf32>
    %100 = vector.broadcast %99 : vector<8x1xf32> to vector<8x128xf32>
    %101 = arith.subf %97, %100 : vector<8x128xf32>
    %102 = math.exp %101 : vector<8x128xf32>
    %cst_57 = arith.constant dense<0.000000e+00> : vector<8x128xf32>
    %103 = tpu.matmul %102, %11, %cst_57 {dimension_numbers = #tpu.dot_dimension_numbers<[1], [0], [0], [1], [0, 0, 1, 1], [], []>} : vector<8x128xf32>, vector<128x128xf32>, vector<8x128xf32> -> vector<8x128xf32>
    %104 = tpu.reciprocal %103 {approx = true} : vector<8x128xf32> -> vector<8x128xf32>
    %105 = arith.mulf %102, %104 : vector<8x128xf32>
    %cst_58 = arith.constant dense<0.000000e+00> : vector<160x128xf32>
    %106 = tpu.matmul %14, %105, %cst_58 {dimension_numbers = #tpu.dot_dimension_numbers<[1], [0], [0], [1], [0, 0, 1, 1], [], []>} : vector<160x8xf32>, vector<8x128xf32>, vector<160x128xf32> -> vector<160x128xf32>
    %107 = arith.addf %94, %106 : vector<160x128xf32>
    %108 = arith.mulf %107, %76 : vector<160x128xf32>
    %cst_59 = arith.constant dense<0.000000e+00> : vector<160x128xf32>
    %109 = tpu.matmul %108, %6, %cst_59 {dimension_numbers = #tpu.dot_dimension_numbers<[1], [0], [0], [1], [0, 0, 1, 1], [], []>} : vector<160x128xf32>, vector<128x128xf32>, vector<160x128xf32> -> vector<160x128xf32>
    %110 = vector.broadcast %20 : vector<1x128xf32> to vector<160x128xf32>
    %111 = arith.addf %109, %110 : vector<160x128xf32>
    %112 = arith.addf %111, %0 : vector<160x128xf32>
    %cst_60 = arith.constant dense<0.000000e+00> : vector<160x128xf32>
    %113 = tpu.matmul %112, %12, %cst_60 {dimension_numbers = #tpu.dot_dimension_numbers<[1], [0], [0], [1], [0, 0, 1, 1], [], []>} : vector<160x128xf32>, vector<128x128xf32>, vector<160x128xf32> -> vector<160x128xf32>
    %114 = arith.subf %112, %113 : vector<160x128xf32>
    %115 = arith.mulf %114, %114 : vector<160x128xf32>
    %cst_61 = arith.constant dense<0.000000e+00> : vector<160x128xf32>
    %116 = tpu.matmul %115, %12, %cst_61 {dimension_numbers = #tpu.dot_dimension_numbers<[1], [0], [0], [1], [0, 0, 1, 1], [], []>} : vector<160x128xf32>, vector<128x128xf32>, vector<160x128xf32> -> vector<160x128xf32>
    %cst_62 = arith.constant 9.99999996E-13 : f32
    %117 = vector.broadcast %cst_62 : f32 to vector<160x128xf32>
    %118 = arith.addf %116, %117 : vector<160x128xf32>
    %119 = math.rsqrt %118 : vector<160x128xf32>
    %120 = arith.mulf %114, %119 : vector<160x128xf32>
    %121 = vector.broadcast %25 : vector<1x128xf32> to vector<160x128xf32>
    %122 = arith.mulf %120, %121 : vector<160x128xf32>
    %123 = vector.broadcast %26 : vector<1x128xf32> to vector<160x128xf32>
    %124 = arith.addf %122, %123 : vector<160x128xf32>
    %cst_63 = arith.constant dense<0.000000e+00> : vector<160x256xf32>
    %125 = tpu.matmul %124, %7, %cst_63 {dimension_numbers = #tpu.dot_dimension_numbers<[1], [0], [0], [1], [0, 0, 1, 1], [], []>} : vector<160x128xf32>, vector<128x256xf32>, vector<160x256xf32> -> vector<160x256xf32>
    %126 = vector.broadcast %23 : vector<1x256xf32> to vector<160x256xf32>
    %127 = arith.addf %125, %126 : vector<160x256xf32>
    %cst_64 = arith.constant 0.707106769 : f32
    %128 = vector.broadcast %cst_64 : f32 to vector<160x256xf32>
    %129 = arith.mulf %127, %128 : vector<160x256xf32>
    %cst_65 = arith.constant 0.000000e+00 : f32
    %130 = vector.broadcast %cst_65 : f32 to vector<160x256xf32>
    %131 = arith.cmpf oge, %129, %130 : vector<160x256xf32>
    %cst_66 = arith.constant 1.000000e+00 : f32
    %cst_67 = arith.constant -1.000000e+00 : f32
    %132 = vector.broadcast %cst_66 : f32 to vector<160x256xf32>
    %133 = vector.broadcast %cst_67 : f32 to vector<160x256xf32>
    %134 = arith.select %131, %132, %133 : vector<160x256xi1>, vector<160x256xf32>
    %135 = math.absf %129 : vector<160x256xf32>
    %cst_68 = arith.constant 0.327591091 : f32
    %136 = vector.broadcast %cst_68 : f32 to vector<160x256xf32>
    %137 = arith.mulf %136, %135 : vector<160x256xf32>
    %cst_69 = arith.constant 1.000000e+00 : f32
    %138 = vector.broadcast %cst_69 : f32 to vector<160x256xf32>
    %139 = arith.addf %138, %137 : vector<160x256xf32>
    %140 = tpu.reciprocal %139 {approx = true} : vector<160x256xf32> -> vector<160x256xf32>
    %cst_70 = arith.constant 1.06140542 : f32
    %141 = vector.broadcast %cst_70 : f32 to vector<160x256xf32>
    %142 = arith.mulf %141, %140 : vector<160x256xf32>
    %cst_71 = arith.constant -1.45315206 : f32
    %143 = vector.broadcast %cst_71 : f32 to vector<160x256xf32>
    %144 = arith.addf %142, %143 : vector<160x256xf32>
    %145 = arith.mulf %144, %140 : vector<160x256xf32>
    %cst_72 = arith.constant 1.42141378 : f32
    %146 = vector.broadcast %cst_72 : f32 to vector<160x256xf32>
    %147 = arith.addf %145, %146 : vector<160x256xf32>
    %148 = arith.mulf %147, %140 : vector<160x256xf32>
    %cst_73 = arith.constant -0.284496725 : f32
    %149 = vector.broadcast %cst_73 : f32 to vector<160x256xf32>
    %150 = arith.addf %148, %149 : vector<160x256xf32>
    %151 = arith.mulf %150, %140 : vector<160x256xf32>
    %cst_74 = arith.constant 0.254829586 : f32
    %152 = vector.broadcast %cst_74 : f32 to vector<160x256xf32>
    %153 = arith.addf %151, %152 : vector<160x256xf32>
    %154 = arith.mulf %153, %140 : vector<160x256xf32>
    %cst_75 = arith.constant 0.000000e+00 : f32
    %155 = vector.broadcast %cst_75 : f32 to vector<160x256xf32>
    %156 = arith.subf %155, %135 : vector<160x256xf32>
    %157 = arith.mulf %156, %135 : vector<160x256xf32>
    %158 = math.exp %157 : vector<160x256xf32>
    %159 = arith.mulf %154, %158 : vector<160x256xf32>
    %cst_76 = arith.constant 1.000000e+00 : f32
    %160 = vector.broadcast %cst_76 : f32 to vector<160x256xf32>
    %161 = arith.subf %160, %159 : vector<160x256xf32>
    %162 = arith.mulf %134, %161 : vector<160x256xf32>
    %cst_77 = arith.constant 5.000000e-01 : f32
    %163 = vector.broadcast %cst_77 : f32 to vector<160x256xf32>
    %164 = arith.mulf %163, %127 : vector<160x256xf32>
    %cst_78 = arith.constant 1.000000e+00 : f32
    %165 = vector.broadcast %cst_78 : f32 to vector<160x256xf32>
    %166 = arith.addf %165, %162 : vector<160x256xf32>
    %167 = arith.mulf %164, %166 : vector<160x256xf32>
    %cst_79 = arith.constant dense<0.000000e+00> : vector<160x128xf32>
    %168 = tpu.matmul %167, %8, %cst_79 {dimension_numbers = #tpu.dot_dimension_numbers<[1], [0], [0], [1], [0, 0, 1, 1], [], []>} : vector<160x256xf32>, vector<256x128xf32>, vector<160x128xf32> -> vector<160x128xf32>
    %169 = vector.broadcast %24 : vector<1x128xf32> to vector<160x128xf32>
    %170 = arith.addf %168, %169 : vector<160x128xf32>
    %171 = arith.addf %170, %124 : vector<160x128xf32>
    %cst_80 = arith.constant dense<0.000000e+00> : vector<160x128xf32>
    %172 = tpu.matmul %171, %12, %cst_80 {dimension_numbers = #tpu.dot_dimension_numbers<[1], [0], [0], [1], [0, 0, 1, 1], [], []>} : vector<160x128xf32>, vector<128x128xf32>, vector<160x128xf32> -> vector<160x128xf32>
    %173 = arith.subf %171, %172 : vector<160x128xf32>
    %174 = arith.mulf %173, %173 : vector<160x128xf32>
    %cst_81 = arith.constant dense<0.000000e+00> : vector<160x128xf32>
    %175 = tpu.matmul %174, %12, %cst_81 {dimension_numbers = #tpu.dot_dimension_numbers<[1], [0], [0], [1], [0, 0, 1, 1], [], []>} : vector<160x128xf32>, vector<128x128xf32>, vector<160x128xf32> -> vector<160x128xf32>
    %cst_82 = arith.constant 9.99999996E-13 : f32
    %176 = vector.broadcast %cst_82 : f32 to vector<160x128xf32>
    %177 = arith.addf %175, %176 : vector<160x128xf32>
    %178 = math.rsqrt %177 : vector<160x128xf32>
    %179 = arith.mulf %173, %178 : vector<160x128xf32>
    %180 = vector.broadcast %27 : vector<1x128xf32> to vector<160x128xf32>
    %181 = arith.mulf %179, %180 : vector<160x128xf32>
    %182 = vector.broadcast %28 : vector<1x128xf32> to vector<160x128xf32>
    %183 = arith.addf %181, %182 : vector<160x128xf32>
    %c0_83 = arith.constant 0 : index
    %c0_84 = arith.constant 0 : index
    %184 = vector.load %arg6[%c0_83, %c0_84] : memref<160x128xf32, #tpu.memory_space<vmem>>, vector<160x128xf32>
    tpu.vector_store %arg6[%c0_83, %c0_84], %183 {strides = array<i32>} : memref<160x128xf32, #tpu.memory_space<vmem>>, vector<160x128xf32>,
    return
  }
  func.func @transform_0(%arg0: i32) -> (i32, i32) {
    %c0_i32 = arith.constant 0 : i32
    %c0_i32_0 = arith.constant 0 : i32
    return %arg0, %c0_i32 : i32, i32
  }
  func.func @transform_1(%arg0: i32) -> (i32, i32) {
    %c0_i32 = arith.constant 0 : i32
    %c0_i32_0 = arith.constant 0 : i32
    return %arg0, %c0_i32 : i32, i32
  }
  func.func @transform_2(%arg0: i32) -> (i32, i32) {
    %c0_i32 = arith.constant 0 : i32
    %c0_i32_0 = arith.constant 0 : i32
    return %arg0, %c0_i32 : i32, i32
  }
  func.func @transform_3(%arg0: i32) -> (i32, i32) {
    %c0_i32 = arith.constant 0 : i32
    %c0_i32_0 = arith.constant 0 : i32
    %c0_i32_1 = arith.constant 0 : i32
    return %c0_i32, %c0_i32_0 : i32, i32
  }
  func.func @transform_4(%arg0: i32) -> (i32, i32) {
    %c0_i32 = arith.constant 0 : i32
    %c0_i32_0 = arith.constant 0 : i32
    %c0_i32_1 = arith.constant 0 : i32
    return %c0_i32, %c0_i32_0 : i32, i32
  }
  func.func @transform_5(%arg0: i32) -> (i32, i32) {
    %c0_i32 = arith.constant 0 : i32
    %c0_i32_0 = arith.constant 0 : i32
    return %arg0, %c0_i32 : i32, i32
  }
}

</mosaic_0001>

<llo_original>
// kernel: mgmha_encoder_text.1
$region0: #{mgmha_encoder_text.1}
  #allocation0 [shape = 'u32[]', space=smem, size = 0x4, offset = 0x4, fixed_abs, tag = 'smem constant byte address 0x4 - core index']
  #allocation1 [shape = 'u32[144,128]{1,0:T(1,128)}', space=vmem, size = 0x12000, scoped, tag = 'internal scratch']
  %s0 = inlined_call_operand.vmem [shape: f32[320,128], index: 0, kind: input, shape index: {}]
  %s1 = inlined_call_operand.vmem [shape: f32[448,128], index: 1, kind: input, shape index: {}]
  %s2 = inlined_call_operand.vmem [shape: f32[320,16], index: 2, kind: input, shape index: {}]
  %s3 = inlined_call_operand.vmem [shape: f32[1944,256], index: 3, kind: input, shape index: {}]
  %s4 = inlined_call_operand.vmem [shape: f32[16,256], index: 4, kind: input, shape index: {}]
  %s5 = inlined_call_operand.vmem [shape: f32[320,128], index: 5, kind: output, shape index: {}]
  %s6 = sld [smem:[#allocation0]]
  $region53: #{mgmha_encoder_text.1} parent=0
    _
  %s8 = ssub.s32 1, %s6
  %s9 = scalar_select 0, %s8, %s6
  loop: start=0, step=1, limit=4
  $region2: #{mgmha_encoder_text.1} parent=0 // loop_pre_header
    _
  $region3: #{mgmha_encoder_text.1} parent=0 // loop_header
    %s11 = sphi 0, %s15
    %p12 = scmp.ge.s32.totalorder %s11, 4
    %s21 = sphi 0, %s23
    %s24 = sphi 0, %s21
    %s25 = sphi 0, %s24
    %s41 = sphi 0, %s25
    %s47 = sphi 0, %s49
    %s50 = sphi 0, %s47
    %s51 = sphi 0, %s50
    %s67 = sphi 0, %s51
    %s73 = sphi 0, %s75
    %s76 = sphi 0, %s73
    %s77 = sphi 0, %s76
    %s93 = sphi 0, %s77
    %s97 = sphi 0, %s97
    %s99 = sphi 0, %s97
    %s100 = sphi 0, %s99
    %s114 = sphi 0, %s100
    %s118 = sphi 0, %s118
    %s120 = sphi 0, %s118
    %s121 = sphi 0, %s120
    %s135 = sphi 0, %s121
    %s141 = sphi 0, %s143
    %s144 = sphi 0, %s141
    %s145 = sphi 0, %s144
    %s161 = sphi 0, %s145
  $region4: #{mgmha_encoder_text.1} parent=0 // loop_header_branch
    %14 = sbr.rel (%p12) target = $region8
  $region5: #{mgmha_encoder_text.1} parent=0 // loop_body
    %s16 = ssub.s32 %s11, 1
    %s17 = ssub.s32 %s11, 2
    %s18 = sadd.s32 %s11, 1
    %s19 = ssub.s32 %s11, %s18
    %p20 = scmp.eq.s32.totalorder %s19, 0
    %s22 = sadd.s32 %s21, 1
    %s23 = scalar_select %p20, %s21, %s22
    %p26 = pneg %p20
    %p27 = scmp.eq.s32.totalorder %s11, 1
    %p28 = por %p26, %p27
    %p29 = scmp.ne.s32.totalorder %s21, %s24
    %p30 = scmp.eq.s32.totalorder %s11, 0
    %p31 = por %p29, %p30
    %p32 = scmp.ne.s32.totalorder %s21, %s24
    %p33 = scmp.eq.s32.totalorder %s16, 1
    %p34 = por %p32, %p33
    %p35 = scmp.ne.s32.totalorder %s24, %s25
    %p36 = scmp.eq.s32.totalorder %s16, 0
    %p37 = por %p35, %p36
    %p38 = scmp.ne.s32.totalorder %s24, %s25
    %p39 = scmp.eq.s32.totalorder %s17, 1
    %p40 = por %p38, %p39
    %p42 = scmp.ne.s32.totalorder %s25, %s41
    %p43 = scmp.eq.s32.totalorder %s17, 0
    %p44 = por %p42, %p43
    %s45 = ssub.s32 %s11, %s18
    %p46 = scmp.eq.s32.totalorder %s45, 0
    %s48 = sadd.s32 %s47, 1
    %s49 = scalar_select %p46, %s47, %s48
    %p52 = pneg %p46
    %p53 = scmp.eq.s32.totalorder %s11, 1
    %p54 = por %p52, %p53
    %p55 = scmp.ne.s32.totalorder %s47, %s50
    %p56 = scmp.eq.s32.totalorder %s11, 0
    %p57 = por %p55, %p56
    %p58 = scmp.ne.s32.totalorder %s47, %s50
    %p59 = scmp.eq.s32.totalorder %s16, 1
    %p60 = por %p58, %p59
    %p61 = scmp.ne.s32.totalorder %s50, %s51
    %p62 = scmp.eq.s32.totalorder %s16, 0
    %p63 = por %p61, %p62
    %p64 = scmp.ne.s32.totalorder %s50, %s51
    %p65 = scmp.eq.s32.totalorder %s17, 1
    %p66 = por %p64, %p65
    %p68 = scmp.ne.s32.totalorder %s51, %s67
    %p69 = scmp.eq.s32.totalorder %s17, 0
    %p70 = por %p68, %p69
    %s71 = ssub.s32 %s11, %s18
    %p72 = scmp.eq.s32.totalorder %s71, 0
    %s74 = sadd.s32 %s73, 1
    %s75 = scalar_select %p72, %s73, %s74
    %p78 = pneg %p72
    %p79 = scmp.eq.s32.totalorder %s11, 1
    %p80 = por %p78, %p79
    %p81 = scmp.ne.s32.totalorder %s73, %s76
    %p82 = scmp.eq.s32.totalorder %s11, 0
    %p83 = por %p81, %p82
    %p84 = scmp.ne.s32.totalorder %s73, %s76
    %p85 = scmp.eq.s32.totalorder %s16, 1
    %p86 = por %p84, %p85
    %p87 = scmp.ne.s32.totalorder %s76, %s77
    %p88 = scmp.eq.s32.totalorder %s16, 0
    %p89 = por %p87, %p88
    %p90 = scmp.ne.s32.totalorder %s76, %s77
    %p91 = scmp.eq.s32.totalorder %s17, 1
    %p92 = por %p90, %p91
    %p94 = scmp.ne.s32.totalorder %s77, %s93
    %p95 = scmp.eq.s32.totalorder %s17, 0
    %p96 = por %p94, %p95
    %s98 = sadd.s32 %s97, 1
    %p101 = scmp.eq.s32.totalorder %s11, 1
    %p102 = scmp.ne.s32.totalorder %s97, %s99
    %p103 = scmp.eq.s32.totalorder %s11, 0
    %p104 = por %p102, %p103
    %p105 = scmp.ne.s32.totalorder %s97, %s99
    %p106 = scmp.eq.s32.totalorder %s16, 1
    %p107 = por %p105, %p106
    %p108 = scmp.ne.s32.totalorder %s99, %s100
    %p109 = scmp.eq.s32.totalorder %s16, 0
    %p110 = por %p108, %p109
    %p111 = scmp.ne.s32.totalorder %s99, %s100
    %p112 = scmp.eq.s32.totalorder %s17, 1
    %p113 = por %p111, %p112
    %p115 = scmp.ne.s32.totalorder %s100, %s114
    %p116 = scmp.eq.s32.totalorder %s17, 0
    %p117 = por %p115, %p116
    %s119 = sadd.s32 %s118, 1
    %p122 = scmp.eq.s32.totalorder %s11, 1
    %p123 = scmp.ne.s32.totalorder %s118, %s120
    %p124 = scmp.eq.s32.totalorder %s11, 0
    %p125 = por %p123, %p124
    %p126 = scmp.ne.s32.totalorder %s118, %s120
    %p127 = scmp.eq.s32.totalorder %s16, 1
    %p128 = por %p126, %p127
    %p129 = scmp.ne.s32.totalorder %s120, %s121
    %p130 = scmp.eq.s32.totalorder %s16, 0
    %p131 = por %p129, %p130
    %p132 = scmp.ne.s32.totalorder %s120, %s121
    %p133 = scmp.eq.s32.totalorder %s17, 1
    %p134 = por %p132, %p133
    %p136 = scmp.ne.s32.totalorder %s121, %s135
    %p137 = scmp.eq.s32.totalorder %s17, 0
    %p138 = por %p136, %p137
    %s139 = ssub.s32 %s11, %s18
    %p140 = scmp.eq.s32.totalorder %s139, 0
    %s142 = sadd.s32 %s141, 1
    %s143 = scalar_select %p140, %s141, %s142
    %p146 = pneg %p140
    %p147 = scmp.eq.s32.totalorder %s11, 1
    %p148 = por %p146, %p147
    %p149 = scmp.ne.s32.totalorder %s141, %s144
    %p150 = scmp.eq.s32.totalorder %s11, 0
    %p151 = por %p149, %p150
    %p152 = scmp.ne.s32.totalorder %s141, %s144
    %p153 = scmp.eq.s32.totalorder %s16, 1
    %p154 = por %p152, %p153
    %p155 = scmp.ne.s32.totalorder %s144, %s145
    %p156 = scmp.eq.s32.totalorder %s16, 0
    %p157 = por %p155, %p156
    %p158 = scmp.ne.s32.totalorder %s144, %s145
    %p159 = scmp.eq.s32.totalorder %s17, 1
    %p160 = por %p158, %p159
    %p162 = scmp.ne.s32.totalorder %s145, %s161
    %p163 = scmp.eq.s32.totalorder %s17, 0
    %p164 = por %p162, %p163
    %p165 = scmp.le.s32.totalorder 1, %s11
    %p166 = scmp.lt.s32.totalorder %s11, 3
    %p167 = pnand %p165, %p166
    %p168 = pneg %p167
    // Predicated region
    $region9: #{mgmha_encoder_text.1} parent=5 // pred_check
      _
    $region10: #{mgmha_encoder_text.1} parent=5 // pred_check_branch
      %170 = sbr.rel (%p167) target = $region12
    $region11: #{mgmha_encoder_text.1} parent=5 // pred_region
      %s171 = ssub.s32 %s11, 1
      // Predicated region
      $region13: #{mgmha_encoder_text.1} parent=11 // pred_check
        %p172 = pneg %p110
      $region14: #{mgmha_encoder_text.1} parent=11 // pred_check_branch
        %174 = sbr.rel (%p172) target = $region16
      $region15: #{mgmha_encoder_text.1} parent=11 // pred_region
        _
      $region16: #{mgmha_encoder_text.1} parent=11 // pred_fallthru
        _
      // Predicated region
      $region17: #{mgmha_encoder_text.1} parent=11 // pred_check
        %p175 = pneg %p131
      $region18: #{mgmha_encoder_text.1} parent=11 // pred_check_branch
        %177 = sbr.rel (%p175) target = $region20
      $region19: #{mgmha_encoder_text.1} parent=11 // pred_region
        _
      $region20: #{mgmha_encoder_text.1} parent=11 // pred_fallthru
        _
    $region12: #{mgmha_encoder_text.1} parent=5 // pred_fallthru
      _
    %p178 = scmp.lt.s32.totalorder %s11, 2
    // Predicated region
    $region21: #{mgmha_encoder_text.1} parent=5 // pred_check
      %p179 = pneg %p178
    $region22: #{mgmha_encoder_text.1} parent=5 // pred_check_branch
      %181 = sbr.rel (%p179) target = $region24
    $region23: #{mgmha_encoder_text.1} parent=5 // pred_region
      // Predicated region
      $region25: #{mgmha_encoder_text.1} parent=23 // pred_check
        %p182 = pneg %p31
      $region26: #{mgmha_encoder_text.1} parent=23 // pred_check_branch
        %184 = sbr.rel (%p182) target = $region28
      $region27: #{mgmha_encoder_text.1} parent=23 // pred_region
        %s185 = smul.u32 20, %s11
        %p186 = scmp.lt.s32.totalorder %s185, 39
        %s187 = scalar_select %p186, %s185, 39
        %s188 = smul.addr %s187, 8
        %s189 = scalar_lea.vmem %s0, %s188
        %s190 = smul.u32 20, %s11
      $region28: #{mgmha_encoder_text.1} parent=23 // pred_fallthru
        _
      // Predicated region
      $region29: #{mgmha_encoder_text.1} parent=23 // pred_check
        %p191 = pneg %p57
      $region30: #{mgmha_encoder_text.1} parent=23 // pred_check_branch
        %193 = sbr.rel (%p191) target = $region32
      $region31: #{mgmha_encoder_text.1} parent=23 // pred_region
        %s194 = smul.u32 28, %s11
        %p195 = scmp.lt.s32.totalorder %s194, 55
        %s196 = scalar_select %p195, %s194, 55
        %s197 = smul.addr %s196, 8
        %s198 = scalar_lea.vmem %s1, %s197
        %s199 = smul.u32 28, %s11
      $region32: #{mgmha_encoder_text.1} parent=23 // pred_fallthru
        _
      // Predicated region
      $region33: #{mgmha_encoder_text.1} parent=23 // pred_check
        %p200 = pneg %p83
      $region34: #{mgmha_encoder_text.1} parent=23 // pred_check_branch
        %202 = sbr.rel (%p200) target = $region36
      $region35: #{mgmha_encoder_text.1} parent=23 // pred_region
        %s203 = smul.u32 20, %s11
        %p204 = scmp.lt.s32.totalorder %s203, 39
        %s205 = scalar_select %p204, %s203, 39
        %s206 = smul.addr %s205, 8
        %s207 = scalar_lea.vmem %s2, %s206
        %s208 = smul.u32 20, %s11
      $region36: #{mgmha_encoder_text.1} parent=23 // pred_fallthru
        _
    $region24: #{mgmha_encoder_text.1} parent=5 // pred_fallthru
      _
    %p209 = scmp.le.s32.totalorder 1, %s11
    %p210 = scmp.lt.s32.totalorder %s11, 3
    %p211 = pnand %p209, %p210
    %p212 = pneg %p211
    // Predicated region
    $region37: #{mgmha_encoder_text.1} parent=5 // pred_check
      _
    $region38: #{mgmha_encoder_text.1} parent=5 // pred_check_branch
      %214 = sbr.rel (%p211) target = $region40
    $region39: #{mgmha_encoder_text.1} parent=5 // pred_region
      %s215 = ssub.s32 %s11, 1
      %s216 = smul.u32 20, %s16
      %p217 = scmp.lt.s32.totalorder %s216, 39
      %s218 = scalar_select %p217, %s216, 39
      %s219 = smul.addr %s218, 8
      %s220 = scalar_lea.vmem %s0, %s219
      %p221 = pneg %p37
      %p222 = pneg %p34
      %s223 = smul.u32 28, %s16
      %p224 = scmp.lt.s32.totalorder %s223, 55
      %s225 = scalar_select %p224, %s223, 55
      %s226 = smul.addr %s225, 8
      %s227 = scalar_lea.vmem %s1, %s226
      %p228 = pneg %p63
      %p229 = pneg %p60
      %s230 = smul.u32 20, %s16
      %p231 = scmp.lt.s32.totalorder %s230, 39
      %s232 = scalar_select %p231, %s230, 39
      %s233 = smul.addr %s232, 8
      %s234 = scalar_lea.vmem %s2, %s233
      %p235 = pneg %p89
      %p236 = pneg %p86
      %p237 = pneg %p110
      %p238 = pneg %p107
      %p239 = pneg %p131
      %p240 = pneg %p128
      %p241 = pneg %p157
      %p242 = pneg %p154
      %s243 = smul.u32 20, %s16
      %p244 = scmp.lt.s32.totalorder %s243, 39
      %s245 = scalar_select %p244, %s243, 39
      %s246 = smul.addr %s245, 8
      %s247 = scalar_lea.vmem %s5, %s246
      %s248 = smul.u32 20, %s16
      %p249 = scmp.lt.s32.totalorder %s248, 39
      %s250 = scalar_select %p249, %s248, 39
      %s251 = smul.addr %s250, 8
      %s252 = scalar_lea.vmem %s0, %s251
      %s253 = smul.u32 20, %s16
      %s254 = smul.u32 28, %s16
      %p255 = scmp.lt.s32.totalorder %s254, 55
      %s256 = scalar_select %p255, %s254, 55
      %s257 = smul.addr %s256, 8
      %s258 = scalar_lea.vmem %s1, %s257
      %s259 = smul.u32 28, %s16
      %s260 = smul.u32 20, %s16
      %p261 = scmp.lt.s32.totalorder %s260, 39
      %s262 = scalar_select %p261, %s260, 39
      %s263 = smul.addr %s262, 8
      %s264 = scalar_lea.vmem %s2, %s263
      %s265 = smul.u32 20, %s16
      %s266 = smul.u32 20, %s16
      %p267 = scmp.lt.s32.totalorder %s266, 39
      %s268 = scalar_select %p267, %s266, 39
      %s269 = smul.addr %s268, 8
      %s270 = scalar_lea.vmem %s5, %s269
      %s271 = smul.u32 20, %s16
      %v272 = vld [vmem:[%s252] sm:$0xff]
      %v273 = vld [vmem:[%s252 + $0x8] sm:$0xff]
      %v274 = vld [vmem:[%s252 + $0x10] sm:$0xff]
      %v275 = vld [vmem:[%s252 + $0x18] sm:$0xff]
      %v276 = vld [vmem:[%s252 + $0x20] sm:$0xff]
      %v277 = vld [vmem:[%s252 + $0x28] sm:$0xff]
      %v278 = vld [vmem:[%s252 + $0x30] sm:$0xff]
      %v279 = vld [vmem:[%s252 + $0x38] sm:$0xff]
      %v280 = vld [vmem:[%s252 + $0x40] sm:$0xff]
      %v281 = vld [vmem:[%s252 + $0x48] sm:$0xff]
      %v282 = vld [vmem:[%s252 + $0x50] sm:$0xff]
      %v283 = vld [vmem:[%s252 + $0x58] sm:$0xff]
      %v284 = vld [vmem:[%s252 + $0x60] sm:$0xff]
      %v285 = vld [vmem:[%s252 + $0x68] sm:$0xff]
      %v286 = vld [vmem:[%s252 + $0x70] sm:$0xff]
      %v287 = vld [vmem:[%s252 + $0x78] sm:$0xff]
      %v288 = vld [vmem:[%s252 + $0x80] sm:$0xff]
      %v289 = vld [vmem:[%s252 + $0x88] sm:$0xff]
      %v290 = vld [vmem:[%s252 + $0x90] sm:$0xff]
      %v291 = vld [vmem:[%s252 + $0x98] sm:$0xff]
      %v292 = vld [vmem:[%s258] sm:$0xff]
      %v293 = vld [vmem:[%s258 + $0x8] sm:$0xff]
      %v294 = vld [vmem:[%s258 + $0x10] sm:$0xff]
      %v295 = vld [vmem:[%s258 + $0x18] sm:$0xff]
      %v296 = vld [vmem:[%s258 + $0x20] sm:$0xff]
      %v297 = vld [vmem:[%s258 + $0x28] sm:$0xff]
      %v298 = vld [vmem:[%s258 + $0x30] sm:$0xff]
      %v299 = vld [vmem:[%s258 + $0x38] sm:$0xff]
      %v300 = vld [vmem:[%s258 + $0x40] sm:$0xff]
      %v301 = vld [vmem:[%s258 + $0x48] sm:$0xff]
      %v302 = vld [vmem:[%s258 + $0x50] sm:$0xff]
      %v303 = vld [vmem:[%s258 + $0x58] sm:$0xff]
      %v304 = vld [vmem:[%s258 + $0x60] sm:$0xff]
      %v305 = vld [vmem:[%s258 + $0x68] sm:$0xff]
      %v306 = vld [vmem:[%s258 + $0x70] sm:$0xff]
      %v307 = vld [vmem:[%s258 + $0x78] sm:$0xff]
      %v308 = vld [vmem:[%s258 + $0x80] sm:$0xff]
      %v309 = vld [vmem:[%s258 + $0x88] sm:$0xff]
      %v310 = vld [vmem:[%s258 + $0x90] sm:$0xff]
      %v311 = vld [vmem:[%s258 + $0x98] sm:$0xff]
      %v312 = vld [vmem:[%s258 + $0xa0] sm:$0xff]
      %v313 = vld [vmem:[%s258 + $0xa8] sm:$0xff]
      %v314 = vld [vmem:[%s258 + $0xb0] sm:$0xff]
      %v315 = vld [vmem:[%s258 + $0xb8] sm:$0xff]
      %v316 = vld [vmem:[%s258 + $0xc0] sm:$0xff]
      %v317 = vld [vmem:[%s258 + $0xc8] sm:$0xff]
      %v318 = vld [vmem:[%s258 + $0xd0] sm:$0xff]
      %v319 = vld [vmem:[%s258 + $0xd8] sm:$0xff]
      %v320 = vld [vmem:[%s264] sm:$0xff]
      %v321 = vld [vmem:[%s264 + $0x8] sm:$0xff]
      %v322 = vld [vmem:[%s264 + $0x10] sm:$0xff]
      %v323 = vld [vmem:[%s264 + $0x18] sm:$0xff]
      %v324 = vld [vmem:[%s264 + $0x20] sm:$0xff]
      %v325 = vld [vmem:[%s264 + $0x28] sm:$0xff]
      %v326 = vld [vmem:[%s264 + $0x30] sm:$0xff]
      %v327 = vld [vmem:[%s264 + $0x38] sm:$0xff]
      %v328 = vld [vmem:[%s264 + $0x40] sm:$0xff]
      %v329 = vld [vmem:[%s264 + $0x48] sm:$0xff]
      %v330 = vld [vmem:[%s264 + $0x50] sm:$0xff]
      %v331 = vld [vmem:[%s264 + $0x58] sm:$0xff]
      %v332 = vld [vmem:[%s264 + $0x60] sm:$0xff]
      %v333 = vld [vmem:[%s264 + $0x68] sm:$0xff]
      %v334 = vld [vmem:[%s264 + $0x70] sm:$0xff]
      %v335 = vld [vmem:[%s264 + $0x78] sm:$0xff]
      %v336 = vld [vmem:[%s264 + $0x80] sm:$0xff]
      %v337 = vld [vmem:[%s264 + $0x88] sm:$0xff]
      %v338 = vld [vmem:[%s264 + $0x90] sm:$0xff]
      %v339 = vld [vmem:[%s264 + $0x98] sm:$0xff]
      %v340 = vld [vmem:[%s3] sm:$0xff]
      %v341 = vld [vmem:[%s3 + $0x10] sm:$0xff]
      %v342 = vld [vmem:[%s3 + $0x20] sm:$0xff]
      %v343 = vld [vmem:[%s3 + $0x30] sm:$0xff]
      %v344 = vld [vmem:[%s3 + $0x40] sm:$0xff]
      %v345 = vld [vmem:[%s3 + $0x50] sm:$0xff]
      %v346 = vld [vmem:[%s3 + $0x60] sm:$0xff]
      %v347 = vld [vmem:[%s3 + $0x70] sm:$0xff]
      %v348 = vld [vmem:[%s3 + $0x80] sm:$0xff]
      %v349 = vld [vmem:[%s3 + $0x90] sm:$0xff]
      %v350 = vld [vmem:[%s3 + $0xa0] sm:$0xff]
      %v351 = vld [vmem:[%s3 + $0xb0] sm:$0xff]
      %v352 = vld [vmem:[%s3 + $0xc0] sm:$0xff]
      %v353 = vld [vmem:[%s3 + $0xd0] sm:$0xff]
      %v354 = vld [vmem:[%s3 + $0xe0] sm:$0xff]
      %v355 = vld [vmem:[%s3 + $0xf0] sm:$0xff]
      %v356 = vld [vmem:[%s3 + $0x100] sm:$0xff]
      %v357 = vld [vmem:[%s3 + $0x110] sm:$0xff]
      %v358 = vld [vmem:[%s3 + $0x120] sm:$0xff]
      %v359 = vld [vmem:[%s3 + $0x130] sm:$0xff]
      %v360 = vld [vmem:[%s3 + $0x140] sm:$0xff]
      %v361 = vld [vmem:[%s3 + $0x150] sm:$0xff]
      %v362 = vld [vmem:[%s3 + $0x160] sm:$0xff]
      %v363 = vld [vmem:[%s3 + $0x170] sm:$0xff]
      %v364 = vld [vmem:[%s3 + $0x180] sm:$0xff]
      %v365 = vld [vmem:[%s3 + $0x190] sm:$0xff]
      %v366 = vld [vmem:[%s3 + $0x1a0] sm:$0xff]
      %v367 = vld [vmem:[%s3 + $0x1b0] sm:$0xff]
      %v368 = vld [vmem:[%s3 + $0x1c0] sm:$0xff]
      %v369 = vld [vmem:[%s3 + $0x1d0] sm:$0xff]
      %v370 = vld [vmem:[%s3 + $0x1e0] sm:$0xff]
      %v371 = vld [vmem:[%s3 + $0x1f0] sm:$0xff]
      %v372 = vld [vmem:[%s3 + $0x200] sm:$0xff]
      %v373 = vld [vmem:[%s3 + $0x210] sm:$0xff]
      %v374 = vld [vmem:[%s3 + $0x220] sm:$0xff]
      %v375 = vld [vmem:[%s3 + $0x230] sm:$0xff]
      %v376 = vld [vmem:[%s3 + $0x240] sm:$0xff]
      %v377 = vld [vmem:[%s3 + $0x250] sm:$0xff]
      %v378 = vld [vmem:[%s3 + $0x260] sm:$0xff]
      %v379 = vld [vmem:[%s3 + $0x270] sm:$0xff]
      %v380 = vld [vmem:[%s3 + $0x280] sm:$0xff]
      %v381 = vld [vmem:[%s3 + $0x290] sm:$0xff]
      %v382 = vld [vmem:[%s3 + $0x2a0] sm:$0xff]
      %v383 = vld [vmem:[%s3 + $0x2b0] sm:$0xff]
      %v384 = vld [vmem:[%s3 + $0x2c0] sm:$0xff]
      %v385 = vld [vmem:[%s3 + $0x2d0] sm:$0xff]
      %v386 = vld [vmem:[%s3 + $0x2e0] sm:$0xff]
      %v387 = vld [vmem:[%s3 + $0x2f0] sm:$0xff]
      %v388 = vld [vmem:[%s3 + $0x300] sm:$0xff]
      %v389 = vld [vmem:[%s3 + $0x310] sm:$0xff]
      %v390 = vld [vmem:[%s3 + $0x320] sm:$0xff]
      %v391 = vld [vmem:[%s3 + $0x330] sm:$0xff]
      %v392 = vld [vmem:[%s3 + $0x340] sm:$0xff]
      %v393 = vld [vmem:[%s3 + $0x350] sm:$0xff]
      %v394 = vld [vmem:[%s3 + $0x360] sm:$0xff]
      %v395 = vld [vmem:[%s3 + $0x370] sm:$0xff]
      %v396 = vld [vmem:[%s3 + $0x380] sm:$0xff]
      %v397 = vld [vmem:[%s3 + $0x390] sm:$0xff]
      %v398 = vld [vmem:[%s3 + $0x3a0] sm:$0xff]
      %v399 = vld [vmem:[%s3 + $0x3b0] sm:$0xff]
      %v400 = vld [vmem:[%s3 + $0x3c0] sm:$0xff]
      %v401 = vld [vmem:[%s3 + $0x3d0] sm:$0xff]
      %v402 = vld [vmem:[%s3 + $0x3e0] sm:$0xff]
      %v403 = vld [vmem:[%s3 + $0x3f0] sm:$0xff]
      %v404 = vld [vmem:[%s3 + $0x400] sm:$0xff]
      %v405 = vld [vmem:[%s3 + $0x408] sm:$0xff]
      %v406 = vld [vmem:[%s3 + $0x410] sm:$0xff]
      %v407 = vld [vmem:[%s3 + $0x418] sm:$0xff]
      %v408 = vld [vmem:[%s3 + $0x420] sm:$0xff]
      %v409 = vld [vmem:[%s3 + $0x428] sm:$0xff]
      %v410 = vld [vmem:[%s3 + $0x430] sm:$0xff]
      %v411 = vld [vmem:[%s3 + $0x438] sm:$0xff]
      %v412 = vld [vmem:[%s3 + $0x440] sm:$0xff]
      %v413 = vld [vmem:[%s3 + $0x448] sm:$0xff]
      %v414 = vld [vmem:[%s3 + $0x450] sm:$0xff]
      %v415 = vld [vmem:[%s3 + $0x458] sm:$0xff]
      %v416 = vld [vmem:[%s3 + $0x460] sm:$0xff]
      %v417 = vld [vmem:[%s3 + $0x468] sm:$0xff]
      %v418 = vld [vmem:[%s3 + $0x470] sm:$0xff]
      %v419 = vld [vmem:[%s3 + $0x478] sm:$0xff]
      %v420 = vld [vmem:[%s3 + $0x480] sm:$0xff]
      %v421 = vld [vmem:[%s3 + $0x488] sm:$0xff]
      %v422 = vld [vmem:[%s3 + $0x490] sm:$0xff]
      %v423 = vld [vmem:[%s3 + $0x498] sm:$0xff]
      %v424 = vld [vmem:[%s3 + $0x4a0] sm:$0xff]
      %v425 = vld [vmem:[%s3 + $0x4a8] sm:$0xff]
      %v426 = vld [vmem:[%s3 + $0x4b0] sm:$0xff]
      %v427 = vld [vmem:[%s3 + $0x4b8] sm:$0xff]
      %v428 = vld [vmem:[%s3 + $0x4c0] sm:$0xff]
      %v429 = vld [vmem:[%s3 + $0x4c8] sm:$0xff]
      %v430 = vld [vmem:[%s3 + $0x4d0] sm:$0xff]
      %v431 = vld [vmem:[%s3 + $0x4d8] sm:$0xff]
      %v432 = vld [vmem:[%s3 + $0x4e0] sm:$0xff]
      %v433 = vld [vmem:[%s3 + $0x4e8] sm:$0xff]
      %v434 = vld [vmem:[%s3 + $0x4f0] sm:$0xff]
      %v435 = vld [vmem:[%s3 + $0x4f8] sm:$0xff]
      %v436 = vld [vmem:[%s3 + $0x500] sm:$0xff]
      %v437 = vld [vmem:[%s3 + $0x510] sm:$0xff]
      %v438 = vld [vmem:[%s3 + $0x520] sm:$0xff]
      %v439 = vld [vmem:[%s3 + $0x530] sm:$0xff]
      %v440 = vld [vmem:[%s3 + $0x540] sm:$0xff]
      %v441 = vld [vmem:[%s3 + $0x550] sm:$0xff]
      %v442 = vld [vmem:[%s3 + $0x560] sm:$0xff]
      %v443 = vld [vmem:[%s3 + $0x570] sm:$0xff]
      %v444 = vld [vmem:[%s3 + $0x580] sm:$0xff]
      %v445 = vld [vmem:[%s3 + $0x590] sm:$0xff]
      %v446 = vld [vmem:[%s3 + $0x5a0] sm:$0xff]
      %v447 = vld [vmem:[%s3 + $0x5b0] sm:$0xff]
      %v448 = vld [vmem:[%s3 + $0x5c0] sm:$0xff]
      %v449 = vld [vmem:[%s3 + $0x5d0] sm:$0xff]
      %v450 = vld [vmem:[%s3 + $0x5e0] sm:$0xff]
      %v451 = vld [vmem:[%s3 + $0x5f0] sm:$0xff]
      %v452 = vld [vmem:[%s3 + $0x600] sm:$0xff]
      %v453 = vld [vmem:[%s3 + $0x610] sm:$0xff]
      %v454 = vld [vmem:[%s3 + $0x620] sm:$0xff]
      %v455 = vld [vmem:[%s3 + $0x630] sm:$0xff]
      %v456 = vld [vmem:[%s3 + $0x640] sm:$0xff]
      %v457 = vld [vmem:[%s3 + $0x650] sm:$0xff]
      %v458 = vld [vmem:[%s3 + $0x660] sm:$0xff]
      %v459 = vld [vmem:[%s3 + $0x670] sm:$0xff]
      %v460 = vld [vmem:[%s3 + $0x680] sm:$0xff]
      %v461 = vld [vmem:[%s3 + $0x690] sm:$0xff]
      %v462 = vld [vmem:[%s3 + $0x6a0] sm:$0xff]
      %v463 = vld [vmem:[%s3 + $0x6b0] sm:$0xff]
      %v464 = vld [vmem:[%s3 + $0x6c0] sm:$0xff]
      %v465 = vld [vmem:[%s3 + $0x6d0] sm:$0xff]
      %v466 = vld [vmem:[%s3 + $0x6e0] sm:$0xff]
      %v467 = vld [vmem:[%s3 + $0x6f0] sm:$0xff]
      %v468 = vld [vmem:[%s3 + $0x700] sm:$0xff]
      %v469 = vld [vmem:[%s3 + $0x710] sm:$0xff]
      %v470 = vld [vmem:[%s3 + $0x720] sm:$0xff]
      %v471 = vld [vmem:[%s3 + $0x730] sm:$0xff]
      %v472 = vld [vmem:[%s3 + $0x740] sm:$0xff]
      %v473 = vld [vmem:[%s3 + $0x750] sm:$0xff]
      %v474 = vld [vmem:[%s3 + $0x760] sm:$0xff]
      %v475 = vld [vmem:[%s3 + $0x770] sm:$0xff]
      %v476 = vld [vmem:[%s3 + $0x780] sm:$0xff]
      %v477 = vld [vmem:[%s3 + $0x790] sm:$0xff]
      %v478 = vld [vmem:[%s3 + $0x7a0] sm:$0xff]
      %v479 = vld [vmem:[%s3 + $0x7b0] sm:$0xff]
      %v480 = vld [vmem:[%s3 + $0x7c0] sm:$0xff]
      %v481 = vld [vmem:[%s3 + $0x7d0] sm:$0xff]
      %v482 = vld [vmem:[%s3 + $0x7e0] sm:$0xff]
      %v483 = vld [vmem:[%s3 + $0x7f0] sm:$0xff]
      %v484 = vld [vmem:[%s3 + $0x800] sm:$0xff]
      %v485 = vld [vmem:[%s3 + $0x810] sm:$0xff]
      %v486 = vld [vmem:[%s3 + $0x820] sm:$0xff]
      %v487 = vld [vmem:[%s3 + $0x830] sm:$0xff]
      %v488 = vld [vmem:[%s3 + $0x840] sm:$0xff]
      %v489 = vld [vmem:[%s3 + $0x850] sm:$0xff]
      %v490 = vld [vmem:[%s3 + $0x860] sm:$0xff]
      %v491 = vld [vmem:[%s3 + $0x870] sm:$0xff]
      %v492 = vld [vmem:[%s3 + $0x880] sm:$0xff]
      %v493 = vld [vmem:[%s3 + $0x890] sm:$0xff]
      %v494 = vld [vmem:[%s3 + $0x8a0] sm:$0xff]
      %v495 = vld [vmem:[%s3 + $0x8b0] sm:$0xff]
      %v496 = vld [vmem:[%s3 + $0x8c0] sm:$0xff]
      %v497 = vld [vmem:[%s3 + $0x8d0] sm:$0xff]
      %v498 = vld [vmem:[%s3 + $0x8e0] sm:$0xff]
      %v499 = vld [vmem:[%s3 + $0x8f0] sm:$0xff]
      %v500 = vld [vmem:[%s3 + $0x900] sm:$0xff]
      %v501 = vld [vmem:[%s3 + $0x910] sm:$0xff]
      %v502 = vld [vmem:[%s3 + $0x920] sm:$0xff]
      %v503 = vld [vmem:[%s3 + $0x930] sm:$0xff]
      %v504 = vld [vmem:[%s3 + $0x940] sm:$0xff]
      %v505 = vld [vmem:[%s3 + $0x950] sm:$0xff]
      %v506 = vld [vmem:[%s3 + $0x960] sm:$0xff]
      %v507 = vld [vmem:[%s3 + $0x970] sm:$0xff]
      %v508 = vld [vmem:[%s3 + $0x980] sm:$0xff]
      %v509 = vld [vmem:[%s3 + $0x990] sm:$0xff]
      %v510 = vld [vmem:[%s3 + $0x9a0] sm:$0xff]
      %v511 = vld [vmem:[%s3 + $0x9b0] sm:$0xff]
      %v512 = vld [vmem:[%s3 + $0x9c0] sm:$0xff]
      %v513 = vld [vmem:[%s3 + $0x9d0] sm:$0xff]
      %v514 = vld [vmem:[%s3 + $0x9e0] sm:$0xff]
      %v515 = vld [vmem:[%s3 + $0x9f0] sm:$0xff]
      %v516 = vld [vmem:[%s3 + $0xa00] sm:$0xff]
      %v517 = vld [vmem:[%s3 + $0xa10] sm:$0xff]
      %v518 = vld [vmem:[%s3 + $0xa20] sm:$0xff]
      %v519 = vld [vmem:[%s3 + $0xa28] sm:$0xff]
      %v520 = vld [vmem:[%s3 + $0xa30] sm:$0xff]
      %v521 = vld [vmem:[%s3 + $0xa38] sm:$0xff]
      %v522 = vld [vmem:[%s3 + $0xa40] sm:$0xff]
      %v523 = vld [vmem:[%s3 + $0xa48] sm:$0xff]
      %v524 = vld [vmem:[%s3 + $0xa50] sm:$0xff]
      %v525 = vld [vmem:[%s3 + $0xa58] sm:$0xff]
      %v526 = vld [vmem:[%s3 + $0xa60] sm:$0xff]
      %v527 = vld [vmem:[%s3 + $0xa68] sm:$0xff]
      %v528 = vld [vmem:[%s3 + $0xa70] sm:$0xff]
      %v529 = vld [vmem:[%s3 + $0xa78] sm:$0xff]
      %v530 = vld [vmem:[%s3 + $0xa80] sm:$0xff]
      %v531 = vld [vmem:[%s3 + $0xa88] sm:$0xff]
      %v532 = vld [vmem:[%s3 + $0xa90] sm:$0xff]
      %v533 = vld [vmem:[%s3 + $0xa98] sm:$0xff]
      %v534 = vld [vmem:[%s3 + $0xaa0] sm:$0xff]
      %v535 = vld [vmem:[%s3 + $0xaa8] sm:$0xff]
      %v536 = vld [vmem:[%s3 + $0xab0] sm:$0xff]
      %v537 = vld [vmem:[%s3 + $0xab8] sm:$0xff]
      %v538 = vld [vmem:[%s3 + $0xac0] sm:$0xff]
      %v539 = vld [vmem:[%s3 + $0xac8] sm:$0xff]
      %v540 = vld [vmem:[%s3 + $0xad0] sm:$0xff]
      %v541 = vld [vmem:[%s3 + $0xad8] sm:$0xff]
      %v542 = vld [vmem:[%s3 + $0xae0] sm:$0xff]
      %v543 = vld [vmem:[%s3 + $0xae8] sm:$0xff]
      %v544 = vld [vmem:[%s3 + $0xaf0] sm:$0xff]
      %v545 = vld [vmem:[%s3 + $0xaf8] sm:$0xff]
      %v546 = vld [vmem:[%s3 + $0xb00] sm:$0xff]
      %v547 = vld [vmem:[%s3 + $0xb08] sm:$0xff]
      %v548 = vld [vmem:[%s3 + $0xb10] sm:$0xff]
      %v549 = vld [vmem:[%s3 + $0xb18] sm:$0xff]
      %v550 = vld [vmem:[%s3 + $0xb20] sm:$0xff]
      %v551 = vld [vmem:[%s3 + $0xb28] sm:$0xff]
      %v552 = vld [vmem:[%s3 + $0xb30] sm:$0xff]
      %v553 = vld [vmem:[%s3 + $0xb38] sm:$0xff]
      %v554 = vld [vmem:[%s3 + $0xb40] sm:$0xff]
      %v555 = vld [vmem:[%s3 + $0xb48] sm:$0xff]
      %v556 = vld [vmem:[%s3 + $0xb50] sm:$0xff]
      %v557 = vld [vmem:[%s3 + $0xb58] sm:$0xff]
      %v558 = vld [vmem:[%s3 + $0xb60] sm:$0xff]
      %v559 = vld [vmem:[%s3 + $0xb70] sm:$0xff]
      %v560 = vld [vmem:[%s3 + $0xb80] sm:$0xff]
      %v561 = vld [vmem:[%s3 + $0xb90] sm:$0xff]
      %v562 = vld [vmem:[%s3 + $0xba0] sm:$0xff]
      %v563 = vld [vmem:[%s3 + $0xbb0] sm:$0xff]
      %v564 = vld [vmem:[%s3 + $0xbc0] sm:$0xff]
      %v565 = vld [vmem:[%s3 + $0xbd0] sm:$0xff]
      %v566 = vld [vmem:[%s3 + $0xbe0] sm:$0xff]
      %v567 = vld [vmem:[%s3 + $0xbf0] sm:$0xff]
      %v568 = vld [vmem:[%s3 + $0xc00] sm:$0xff]
      %v569 = vld [vmem:[%s3 + $0xc10] sm:$0xff]
      %v570 = vld [vmem:[%s3 + $0xc20] sm:$0xff]
      %v571 = vld [vmem:[%s3 + $0xc30] sm:$0xff]
      %v572 = vld [vmem:[%s3 + $0xc40] sm:$0xff]
      %v573 = vld [vmem:[%s3 + $0xc50] sm:$0xff]
      %v574 = vld [vmem:[%s3 + $0xc60] sm:$0xff]
      %v575 = vld [vmem:[%s3 + $0xc70] sm:$0xff]
      %v576 = vld [vmem:[%s3 + $0xc80] sm:$0xff]
      %v577 = vld [vmem:[%s3 + $0xc90] sm:$0xff]
      %v578 = vld [vmem:[%s3 + $0xca0] sm:$0xff]
      %v579 = vld [vmem:[%s3 + $0xca8] sm:$0xff]
      %v580 = vld [vmem:[%s3 + $0xcb0] sm:$0xff]
      %v581 = vld [vmem:[%s3 + $0xcb8] sm:$0xff]
      %v582 = vld [vmem:[%s3 + $0xcc0] sm:$0xff]
      %v583 = vld [vmem:[%s3 + $0xcc8] sm:$0xff]
      %v584 = vld [vmem:[%s3 + $0xcd0] sm:$0xff]
      %v585 = vld [vmem:[%s3 + $0xcd8] sm:$0xff]
      %v586 = vld [vmem:[%s3 + $0xce0] sm:$0xff]
      %v587 = vld [vmem:[%s3 + $0xce8] sm:$0xff]
      %v588 = vld [vmem:[%s3 + $0xcf0] sm:$0xff]
      %v589 = vld [vmem:[%s3 + $0xcf8] sm:$0xff]
      %v590 = vld [vmem:[%s3 + $0xd00] sm:$0xff]
      %v591 = vld [vmem:[%s3 + $0xd08] sm:$0xff]
      %v592 = vld [vmem:[%s3 + $0xd10] sm:$0xff]
      %v593 = vld [vmem:[%s3 + $0xd18] sm:$0xff]
      %v594 = vld [vmem:[%s3 + $0xd20] sm:$0xff]
      %v595 = vld [vmem:[%s3 + $0xd28] sm:$0xff]
      %v596 = vld [vmem:[%s3 + $0xd30] sm:$0xff]
      %v597 = vld [vmem:[%s3 + $0xd38] sm:$0xff]
      %v598 = vld [vmem:[%s3 + $0xd40] sm:$0xff]
      %v599 = vld [vmem:[%s3 + $0xd48] sm:$0xff]
      %v600 = vld [vmem:[%s3 + $0xd50] sm:$0xff]
      %v601 = vld [vmem:[%s3 + $0xd58] sm:$0xff]
      %v602 = vld [vmem:[%s3 + $0xd60] sm:$0xff]
      %v603 = vld [vmem:[%s3 + $0xd68] sm:$0xff]
      %v604 = vld [vmem:[%s3 + $0xd70] sm:$0xff]
      %v605 = vld [vmem:[%s3 + $0xd78] sm:$0xff]
      %v606 = vld [vmem:[%s3 + $0xd80] sm:$0xff]
      %v607 = vld [vmem:[%s3 + $0xd88] sm:$0xff]
      %v608 = vld [vmem:[%s3 + $0xd90] sm:$0xff]
      %v609 = vld [vmem:[%s3 + $0xd98] sm:$0xff]
      %v610 = vld [vmem:[%s3 + $0xda0] sm:$0xff]
      %v611 = vld [vmem:[%s3 + $0xda8] sm:$0xff]
      %v612 = vld [vmem:[%s3 + $0xdb0] sm:$0xff]
      %v613 = vld [vmem:[%s3 + $0xdb8] sm:$0xff]
      %v614 = vld [vmem:[%s3 + $0xdc0] sm:$0xff]
      %v615 = vld [vmem:[%s3 + $0xdc8] sm:$0xff]
      %v616 = vld [vmem:[%s3 + $0xdd0] sm:$0xff]
      %v617 = vld [vmem:[%s3 + $0xdd8] sm:$0xff]
      %v618 = vld [vmem:[%s3 + $0xde0] sm:$0xff]
      %v619 = vld [vmem:[%s3 + $0xde8] sm:$0xff]
      %v620 = vld [vmem:[%s3 + $0xdf0] sm:$0xff]
      %v621 = vld [vmem:[%s3 + $0xdf8] sm:$0xff]
      %v622 = vld [vmem:[%s3 + $0xe00] sm:$0xff]
      %v623 = vld [vmem:[%s3 + $0xe08] sm:$0xff]
      %v624 = vld [vmem:[%s3 + $0xe10] sm:$0xff]
      %v625 = vld [vmem:[%s3 + $0xe18] sm:$0xff]
      %v626 = vld [vmem:[%s3 + $0xe20] sm:$0xff]
      %v627 = vld [vmem:[%s3 + $0xe28] sm:$0xff]
      %v628 = vld [vmem:[%s3 + $0xe30] sm:$0xff]
      %v629 = vld [vmem:[%s3 + $0xe38] sm:$0xff]
      %v630 = vld [vmem:[%s3 + $0xe40] sm:$0xff]
      %v631 = vld [vmem:[%s3 + $0xe48] sm:$0xff]
      %v632 = vld [vmem:[%s3 + $0xe50] sm:$0xff]
      %v633 = vld [vmem:[%s3 + $0xe58] sm:$0xff]
      %v634 = vld [vmem:[%s3 + $0xe60] sm:$0xff]
      %v635 = vld [vmem:[%s3 + $0xe68] sm:$0xff]
      %v636 = vld [vmem:[%s3 + $0xe70] sm:$0xff]
      %v637 = vld [vmem:[%s3 + $0xe78] sm:$0xff]
      %v638 = vld [vmem:[%s3 + $0xe80] sm:$0xff]
      %v639 = vld [vmem:[%s3 + $0xe88] sm:$0xff]
      %v640 = vld [vmem:[%s3 + $0xe90] sm:$0xff]
      %v641 = vld [vmem:[%s3 + $0xe98] sm:$0xff]
      %v642 = vld [vmem:[%s3 + $0xea0] sm:$0xff]
      %v643 = vld [vmem:[%s3 + $0xea8] sm:$0xff]
      %v644 = vld [vmem:[%s3 + $0xeb0] sm:$0xff]
      %v645 = vld [vmem:[%s3 + $0xeb8] sm:$0xff]
      %v646 = vld [vmem:[%s3 + $0xec0] sm:$0xff]
      %v647 = vld [vmem:[%s3 + $0xec8] sm:$0xff]
      %v648 = vld [vmem:[%s3 + $0xed0] sm:$0xff]
      %v649 = vld [vmem:[%s3 + $0xed8] sm:$0xff]
      %v650 = vld [vmem:[%s3 + $0xee0] sm:$0xff]
      %v651 = vld [vmem:[%s3 + $0xee8] sm:$0xff]
      %v652 = vld [vmem:[%s3 + $0xef0] sm:$0xff]
      %v653 = vld [vmem:[%s3 + $0xef8] sm:$0xff]
      %v654 = vld [vmem:[%s3 + $0xf00] sm:$0xff]
      %v655 = vld [vmem:[%s3 + $0xf08] sm:$0xff]
      %v656 = vld [vmem:[%s3 + $0xf10] sm:$0xff]
      %v657 = vld [vmem:[%s3 + $0xf18] sm:$0xff]
      %v658 = vld [vmem:[%s3 + $0xf20] sm:$0xff]
      %v659 = vld [vmem:[%s3 + $0xf28] sm:$0xff]
      %v660 = vld [vmem:[%s4] ss:$0 sm:$0xff]
      %v661 = vld [vmem:[%s4 + $0x1] ss:$0 sm:$0xff]
      %v662 = vld [vmem:[%s4 + $0x2] ss:$0 sm:$0xff]
      %v663 = vld [vmem:[%s4 + $0x3] ss:$0 sm:$0xff]
      %v664 = vld [vmem:[%s4 + $0x4] ss:$0 sm:$0xff]
      %v665 = vld [vmem:[%s4 + $0x5] ss:$0 sm:$0xff]
      %s666 = scalar_lea.vmem %s4, 6
      %v667 = vld [vmem:[%s666] ss:$8 sm:$0x3]
      %v668 = vld [vmem:[%s4 + $0x7] ss:$0 sm:$0xff]
      %v669 = vld [vmem:[%s4 + $0x10] ss:$0 sm:$0xff]
      %v670 = vld [vmem:[%s4 + $0x11] ss:$0 sm:$0xff]
      %v671 = vld [vmem:[%s4 + $0x12] ss:$0 sm:$0xff]
      %v672 = vld [vmem:[%s4 + $0x13] ss:$0 sm:$0xff]
      %673 = vmatprep.subr.mxu0 0.0
      %674 = vmatpush1.msra.mxu0 %v355
      %675 = vmatprep.subr.mxu0 0.0
      %676 = vmatpush1.msra.mxu0 %v354
      %677 = vmatprep.subr.mxu0 0.0
      %678 = vmatpush1.msra.mxu0 %v353
      %679 = vmatprep.subr.mxu0 0.0
      %680 = vmatpush1.msra.mxu0 %v352
      %681 = vmatprep.subr.mxu0 0.0
      %682 = vmatpush1.msra.mxu0 %v351
      %683 = vmatprep.subr.mxu0 0.0
      %684 = vmatpush1.msra.mxu0 %v350
      %685 = vmatprep.subr.mxu0 0.0
      %686 = vmatpush1.msra.mxu0 %v349
      %687 = vmatprep.subr.mxu0 0.0
      %688 = vmatpush1.msra.mxu0 %v348
      %689 = vmatprep.subr.mxu0 0.0
      %690 = vmatpush1.msra.mxu0 %v347
      %691 = vmatprep.subr.mxu0 0.0
      %692 = vmatpush1.msra.mxu0 %v346
      %693 = vmatprep.subr.mxu0 0.0
      %694 = vmatpush1.msra.mxu0 %v345
      %695 = vmatprep.subr.mxu0 0.0
      %696 = vmatpush1.msra.mxu0 %v344
      %697 = vmatprep.subr.mxu0 0.0
      %698 = vmatpush1.msra.mxu0 %v343
      %699 = vmatprep.subr.mxu0 0.0
      %700 = vmatpush1.msra.mxu0 %v342
      %701 = vmatprep.subr.mxu0 0.0
      %702 = vmatpush1.msra.mxu0 %v341
      %703 = vmatprep.subr.mxu0 0.0
      %704 = vmatpush1.msra.mxu0 %v340
      %705 = vmatprep.subr.mxu0 0.0
      %706 = vmatpush2.msra.mxu0 0.0
      %707 = vmatprep.subr.mxu0 0.0
      %708 = vmatpush2.msra.mxu0 0.0
      %709 = vmatprep.subr.mxu0 0.0
      %710 = vmatpush2.msra.mxu0 0.0
      %711 = vmatprep.subr.mxu0 0.0
      %712 = vmatpush2.msra.mxu0 0.0
      %713 = vmatprep.subr.mxu0 0.0
      %714 = vmatpush2.msra.mxu0 0.0
      %715 = vmatprep.subr.mxu0 0.0
      %716 = vmatpush2.msra.mxu0 0.0
      %717 = vmatprep.subr.mxu0 0.0
      %718 = vmatpush2.msra.mxu0 0.0
      %719 = vmatprep.subr.mxu0 0.0
      %720 = vmatpush2.msra.mxu0 0.0
      %721 = vmatprep.subr.mxu0 0.0
      %722 = vmatpush2.msra.mxu0 0.0
      %723 = vmatprep.subr.mxu0 0.0
      %724 = vmatpush2.msra.mxu0 0.0
      %725 = vmatprep.subr.mxu0 0.0
      %726 = vmatpush2.msra.mxu0 0.0
      %727 = vmatprep.subr.mxu0 0.0
      %728 = vmatpush2.msra.mxu0 0.0
      %729 = vmatprep.subr.mxu0 0.0
      %730 = vmatpush2.msra.mxu0 0.0
      %731 = vmatprep.subr.mxu0 0.0
      %732 = vmatpush2.msra.mxu0 0.0
      %733 = vmatprep.subr.mxu0 0.0
      %734 = vmatpush2.msra.mxu0 0.0
      %735 = vmatprep.subr.mxu0 0.0
      %736 = vmatpush2.msra.mxu0 0.0
      %737 = vmatprep.mubr.f32.mxu0 0.0
      %738 = vmatmul.mubr.f32.gmra.mxu0 %v272
      %v739 = vpop.f32.mrf.mxu0
      %v740 = vadd.f32 %v660, %v739
      %v741 = vpop.f32.mrf.mxu0
      %742 = vmatprep.mubr.f32.mxu0 0.0
      %743 = vmatmul.mubr.f32.gmra.mxu0 %v273
      %v744 = vpop.f32.mrf.mxu0
      %v745 = vadd.f32 %v660, %v744
      %v746 = vpop.f32.mrf.mxu0
      %747 = vmatprep.mubr.f32.mxu0 0.0
      %748 = vmatmul.mubr.f32.gmra.mxu0 %v274
      %v749 = vpop.f32.mrf.mxu0
      %v750 = vadd.f32 %v660, %v749
      %v751 = vpop.f32.mrf.mxu0
      %752 = vmatprep.mubr.f32.mxu0 0.0
      %753 = vmatmul.mubr.f32.gmra.mxu0 %v275
      %v754 = vpop.f32.mrf.mxu0
      %v755 = vadd.f32 %v660, %v754
      %v756 = vpop.f32.mrf.mxu0
      %757 = vmatprep.mubr.f32.mxu0 0.0
      %758 = vmatmul.mubr.f32.gmra.mxu0 %v276
      %v759 = vpop.f32.mrf.mxu0
      %v760 = vadd.f32 %v660, %v759
      %v761 = vpop.f32.mrf.mxu0
      %762 = vmatprep.mubr.f32.mxu0 0.0
      %763 = vmatmul.mubr.f32.gmra.mxu0 %v277
      %v764 = vpop.f32.mrf.mxu0
      %v765 = vadd.f32 %v660, %v764
      %v766 = vpop.f32.mrf.mxu0
      %767 = vmatprep.mubr.f32.mxu0 0.0
      %768 = vmatmul.mubr.f32.gmra.mxu0 %v278
      %v769 = vpop.f32.mrf.mxu0
      %v770 = vadd.f32 %v660, %v769
      %v771 = vpop.f32.mrf.mxu0
      %772 = vmatprep.mubr.f32.mxu0 0.0
      %773 = vmatmul.mubr.f32.gmra.mxu0 %v279
      %v774 = vpop.f32.mrf.mxu0
      %v775 = vadd.f32 %v660, %v774
      %v776 = vpop.f32.mrf.mxu0
      %777 = vmatprep.mubr.f32.mxu0 0.0
      %778 = vmatmul.mubr.f32.gmra.mxu0 %v280
      %v779 = vpop.f32.mrf.mxu0
      %v780 = vadd.f32 %v660, %v779
      %v781 = vpop.f32.mrf.mxu0
      %782 = vmatprep.mubr.f32.mxu0 0.0
      %783 = vmatmul.mubr.f32.gmra.mxu0 %v281
      %v784 = vpop.f32.mrf.mxu0
      %v785 = vadd.f32 %v660, %v784
      %v786 = vpop.f32.mrf.mxu0
      %787 = vmatprep.mubr.f32.mxu0 0.0
      %788 = vmatmul.mubr.f32.gmra.mxu0 %v282
      %v789 = vpop.f32.mrf.mxu0
      %v790 = vadd.f32 %v660, %v789
      %v791 = vpop.f32.mrf.mxu0
      %792 = vmatprep.mubr.f32.mxu0 0.0
      %793 = vmatmul.mubr.f32.gmra.mxu0 %v283
      %v794 = vpop.f32.mrf.mxu0
      %v795 = vadd.f32 %v660, %v794
      %v796 = vpop.f32.mrf.mxu0
      %797 = vmatprep.mubr.f32.mxu0 0.0
      %798 = vmatmul.mubr.f32.gmra.mxu0 %v284
      %v799 = vpop.f32.mrf.mxu0
      %v800 = vadd.f32 %v660, %v799
      %v801 = vpop.f32.mrf.mxu0
      %802 = vmatprep.mubr.f32.mxu0 0.0
      %803 = vmatmul.mubr.f32.gmra.mxu0 %v285
      %v804 = vpop.f32.mrf.mxu0
      %v805 = vadd.f32 %v660, %v804
      %v806 = vpop.f32.mrf.mxu0
      %807 = vmatprep.mubr.f32.mxu0 0.0
      %808 = vmatmul.mubr.f32.gmra.mxu0 %v286
      %v809 = vpop.f32.mrf.mxu0
      %v810 = vadd.f32 %v660, %v809
      %v811 = vpop.f32.mrf.mxu0
      %812 = vmatprep.mubr.f32.mxu0 0.0
      %813 = vmatmul.mubr.f32.gmra.mxu0 %v287
      %v814 = vpop.f32.mrf.mxu0
      %v815 = vadd.f32 %v660, %v814
      %v816 = vpop.f32.mrf.mxu0
      %817 = vmatprep.mubr.f32.mxu0 0.0
      %818 = vmatmul.mubr.f32.gmra.mxu0 %v288
      %v819 = vpop.f32.mrf.mxu0
      %v820 = vadd.f32 %v660, %v819
      %v821 = vpop.f32.mrf.mxu0
      %822 = vmatprep.mubr.f32.mxu0 0.0
      %823 = vmatmul.mubr.f32.gmra.mxu0 %v289
      %v824 = vpop.f32.mrf.mxu0
      %v825 = vadd.f32 %v660, %v824
      %v826 = vpop.f32.mrf.mxu0
      %827 = vmatprep.mubr.f32.mxu0 0.0
      %828 = vmatmul.mubr.f32.gmra.mxu0 %v290
      %v829 = vpop.f32.mrf.mxu0
      %v830 = vadd.f32 %v660, %v829
      %v831 = vpop.f32.mrf.mxu0
      %832 = vmatprep.mubr.f32.mxu0 0.0
      %833 = vmatmul.mubr.f32.gmra.mxu0 %v291
      %v834 = vpop.f32.mrf.mxu0
      %v835 = vadd.f32 %v660, %v834
      %v836 = vpop.f32.mrf.mxu0
      %837 = vdwg.mxu0
      %vm838 = vcmask 785408
      %v840 = vsel %vm838, %v579, 0
      %v843 = vsel %vm838, %v581, 0
      %v846 = vsel %vm838, %v583, 0
      %v849 = vsel %vm838, %v585, 0
      %v852 = vsel %vm838, %v587, 0
      %v855 = vsel %vm838, %v589, 0
      %v858 = vsel %vm838, %v591, 0
      %v861 = vsel %vm838, %v593, 0
      %v864 = vsel %vm838, %v595, 0
      %v867 = vsel %vm838, %v597, 0
      %v870 = vsel %vm838, %v599, 0
      %v873 = vsel %vm838, %v601, 0
      %v876 = vsel %vm838, %v603, 0
      %v879 = vsel %vm838, %v605, 0
      %v882 = vsel %vm838, %v607, 0
      %v885 = vsel %vm838, %v609, 0
      %v888 = vsel %vm838, %v611, 0
      %v891 = vsel %vm838, %v613, 0
      %v894 = vsel %vm838, %v615, 0
      %v897 = vsel %vm838, %v617, 0
      %v900 = vsel %vm838, %v619, 0
      %v903 = vsel %vm838, %v621, 0
      %v906 = vsel %vm838, %v623, 0
      %v909 = vsel %vm838, %v625, 0
      %v912 = vsel %vm838, %v627, 0
      %v915 = vsel %vm838, %v629, 0
      %v918 = vsel %vm838, %v631, 0
      %v921 = vsel %vm838, %v633, 0
      %v924 = vsel %vm838, %v635, 0
      %v927 = vsel %vm838, %v637, 0
      %v930 = vsel %vm838, %v639, 0
      %v933 = vsel %vm838, %v641, 0
      %v936 = vsel %vm838, %v643, 0
      %v939 = vsel %vm838, %v645, 0
      %v942 = vsel %vm838, %v647, 0
      %v945 = vsel %vm838, %v649, 0
      %v948 = vsel %vm838, %v651, 0
      %v951 = vsel %vm838, %v653, 0
      %v954 = vsel %vm838, %v655, 0
      %v957 = vsel %vm838, %v657, 0
      %959 = vmatprep.subr.mxu0 0.0
      %960 = vmatpush1.msra.mxu0 %v307
      %961 = vmatprep.subr.mxu0 0.0
      %962 = vmatpush1.msra.mxu0 %v306
      %963 = vmatprep.subr.mxu0 0.0
      %964 = vmatpush1.msra.mxu0 %v305
      %965 = vmatprep.subr.mxu0 0.0
      %966 = vmatpush1.msra.mxu0 %v304
      %967 = vmatprep.subr.mxu0 0.0
      %968 = vmatpush1.msra.mxu0 %v303
      %969 = vmatprep.subr.mxu0 0.0
      %970 = vmatpush1.msra.mxu0 %v302
      %971 = vmatprep.subr.mxu0 0.0
      %972 = vmatpush1.msra.mxu0 %v301
      %973 = vmatprep.subr.mxu0 0.0
      %974 = vmatpush1.msra.mxu0 %v300
      %975 = vmatprep.subr.mxu0 0.0
      %976 = vmatpush1.msra.mxu0 %v299
      %977 = vmatprep.subr.mxu0 0.0
      %978 = vmatpush1.msra.mxu0 %v298
      %979 = vmatprep.subr.mxu0 0.0
      %980 = vmatpush1.msra.mxu0 %v297
      %981 = vmatprep.subr.mxu0 0.0
      %982 = vmatpush1.msra.mxu0 %v296
      %983 = vmatprep.subr.mxu0 0.0
      %984 = vmatpush1.msra.mxu0 %v295
      %985 = vmatprep.subr.mxu0 0.0
      %986 = vmatpush1.msra.mxu0 %v294
      %987 = vmatprep.subr.mxu0 0.0
      %988 = vmatpush1.msra.mxu0 %v293
      %989 = vmatprep.subr.mxu0 0.0
      %990 = vmatpush1.msra.mxu0 %v292
      %991 = vmatprep.subr.mxu0 0.0
      %992 = vmatpush2.msra.mxu0 0.0
      %993 = vmatprep.subr.mxu0 0.0
      %994 = vmatpush2.msra.mxu0 0.0
      %995 = vmatprep.subr.mxu0 0.0
      %996 = vmatpush2.msra.mxu0 0.0
      %997 = vmatprep.subr.mxu0 0.0
      %998 = vmatpush2.msra.mxu0 0.0
      %999 = vmatprep.subr.mxu0 0.0
      %1000 = vmatpush2.msra.mxu0 %v319
      %1001 = vmatprep.subr.mxu0 0.0
      %1002 = vmatpush2.msra.mxu0 %v318
      %1003 = vmatprep.subr.mxu0 0.0
      %1004 = vmatpush2.msra.mxu0 %v317
      %1005 = vmatprep.subr.mxu0 0.0
      %1006 = vmatpush2.msra.mxu0 %v316
      %1007 = vmatprep.subr.mxu0 0.0
      %1008 = vmatpush2.msra.mxu0 %v315
      %1009 = vmatprep.subr.mxu0 0.0
      %1010 = vmatpush2.msra.mxu0 %v314
      %1011 = vmatprep.subr.mxu0 0.0
      %1012 = vmatpush2.msra.mxu0 %v313
      %1013 = vmatprep.subr.mxu0 0.0
      %1014 = vmatpush2.msra.mxu0 %v312
      %1015 = vmatprep.subr.mxu0 0.0
      %1016 = vmatpush2.msra.mxu0 %v311
      %1017 = vmatprep.subr.mxu0 0.0
      %1018 = vmatpush2.msra.mxu0 %v310
      %1019 = vmatprep.subr.mxu0 0.0
      %1020 = vmatpush2.msra.mxu0 %v309
      %1021 = vmatprep.subr.mxu0 0.0
      %1022 = vmatpush2.msra.mxu0 %v308
      %1023 = vmatprep.mubr.f32.mxu0 %v840
      %1024 = vmatmul.mubr.f32.gmra.mxu0 %v578
      %v1025 = vpop.f32.mrf.mxu0
      %v1026 = vadd.f32 0.0, %v1025
      %v1027 = vpop.f32.mrf.mxu0
      %1028 = vmatprep.mubr.f32.mxu0 %v843
      %1029 = vmatmul.mubr.f32.gmra.mxu0 %v580
      %v1030 = vpop.f32.mrf.mxu0
      %v1031 = vadd.f32 0.0, %v1030
      %v1032 = vpop.f32.mrf.mxu0
      %1033 = vmatprep.mubr.f32.mxu0 %v846
      %1034 = vmatmul.mubr.f32.gmra.mxu0 %v582
      %v1035 = vpop.f32.mrf.mxu0
      %v1036 = vadd.f32 0.0, %v1035
      %v1037 = vpop.f32.mrf.mxu0
      %1038 = vmatprep.mubr.f32.mxu0 %v849
      %1039 = vmatmul.mubr.f32.gmra.mxu0 %v584
      %v1040 = vpop.f32.mrf.mxu0
      %v1041 = vadd.f32 0.0, %v1040
      %v1042 = vpop.f32.mrf.mxu0
      %1043 = vmatprep.mubr.f32.mxu0 %v852
      %1044 = vmatmul.mubr.f32.gmra.mxu0 %v586
      %v1045 = vpop.f32.mrf.mxu0
      %v1046 = vadd.f32 0.0, %v1045
      %v1047 = vpop.f32.mrf.mxu0
      %1048 = vmatprep.mubr.f32.mxu0 %v855
      %1049 = vmatmul.mubr.f32.gmra.mxu0 %v588
      %v1050 = vpop.f32.mrf.mxu0
      %v1051 = vadd.f32 0.0, %v1050
      %v1052 = vpop.f32.mrf.mxu0
      %1053 = vmatprep.mubr.f32.mxu0 %v858
      %1054 = vmatmul.mubr.f32.gmra.mxu0 %v590
      %v1055 = vpop.f32.mrf.mxu0
      %v1056 = vadd.f32 0.0, %v1055
      %v1057 = vpop.f32.mrf.mxu0
      %1058 = vmatprep.mubr.f32.mxu0 %v861
      %1059 = vmatmul.mubr.f32.gmra.mxu0 %v592
      %v1060 = vpop.f32.mrf.mxu0
      %v1061 = vadd.f32 0.0, %v1060
      %v1062 = vpop.f32.mrf.mxu0
      %1063 = vmatprep.mubr.f32.mxu0 %v864
      %1064 = vmatmul.mubr.f32.gmra.mxu0 %v594
      %v1065 = vpop.f32.mrf.mxu0
      %v1066 = vadd.f32 0.0, %v1065
      %v1067 = vpop.f32.mrf.mxu0
      %1068 = vmatprep.mubr.f32.mxu0 %v867
      %1069 = vmatmul.mubr.f32.gmra.mxu0 %v596
      %v1070 = vpop.f32.mrf.mxu0
      %v1071 = vadd.f32 0.0, %v1070
      %v1072 = vpop.f32.mrf.mxu0
      %1073 = vmatprep.mubr.f32.mxu0 %v870
      %1074 = vmatmul.mubr.f32.gmra.mxu0 %v598
      %v1075 = vpop.f32.mrf.mxu0
      %v1076 = vadd.f32 0.0, %v1075
      %v1077 = vpop.f32.mrf.mxu0
      %1078 = vmatprep.mubr.f32.mxu0 %v873
      %1079 = vmatmul.mubr.f32.gmra.mxu0 %v600
      %v1080 = vpop.f32.mrf.mxu0
      %v1081 = vadd.f32 0.0, %v1080
      %v1082 = vpop.f32.mrf.mxu0
      %1083 = vmatprep.mubr.f32.mxu0 %v876
      %1084 = vmatmul.mubr.f32.gmra.mxu0 %v602
      %v1085 = vpop.f32.mrf.mxu0
      %v1086 = vadd.f32 0.0, %v1085
      %v1087 = vpop.f32.mrf.mxu0
      %1088 = vmatprep.mubr.f32.mxu0 %v879
      %1089 = vmatmul.mubr.f32.gmra.mxu0 %v604
      %v1090 = vpop.f32.mrf.mxu0
      %v1091 = vadd.f32 0.0, %v1090
      %v1092 = vpop.f32.mrf.mxu0
      %1093 = vmatprep.mubr.f32.mxu0 %v882
      %1094 = vmatmul.mubr.f32.gmra.mxu0 %v606
      %v1095 = vpop.f32.mrf.mxu0
      %v1096 = vadd.f32 0.0, %v1095
      %v1097 = vpop.f32.mrf.mxu0
      %1098 = vmatprep.mubr.f32.mxu0 %v885
      %1099 = vmatmul.mubr.f32.gmra.mxu0 %v608
      %v1100 = vpop.f32.mrf.mxu0
      %v1101 = vadd.f32 0.0, %v1100
      %v1102 = vpop.f32.mrf.mxu0
      %1103 = vmatprep.mubr.f32.mxu0 %v888
      %1104 = vmatmul.mubr.f32.gmra.mxu0 %v610
      %v1105 = vpop.f32.mrf.mxu0
      %v1106 = vadd.f32 0.0, %v1105
      %v1107 = vpop.f32.mrf.mxu0
      %1108 = vmatprep.mubr.f32.mxu0 %v891
      %1109 = vmatmul.mubr.f32.gmra.mxu0 %v612
      %v1110 = vpop.f32.mrf.mxu0
      %v1111 = vadd.f32 0.0, %v1110
      %v1112 = vpop.f32.mrf.mxu0
      %1113 = vmatprep.mubr.f32.mxu0 %v894
      %1114 = vmatmul.mubr.f32.gmra.mxu0 %v614
      %v1115 = vpop.f32.mrf.mxu0
      %v1116 = vadd.f32 0.0, %v1115
      %v1117 = vpop.f32.mrf.mxu0
      %1118 = vmatprep.mubr.f32.mxu0 %v897
      %1119 = vmatmul.mubr.f32.gmra.mxu0 %v616
      %v1120 = vpop.f32.mrf.mxu0
      %v1121 = vadd.f32 0.0, %v1120
      %v1122 = vpop.f32.mrf.mxu0
      %1123 = vmatprep.mubr.f32.mxu0 %v900
      %1124 = vmatmul.mubr.f32.gmra.mxu0 %v618
      %v1125 = vpop.f32.mrf.mxu0
      %v1126 = vadd.f32 0.0, %v1125
      %v1127 = vpop.f32.mrf.mxu0
      %1128 = vmatprep.mubr.f32.mxu0 %v903
      %1129 = vmatmul.mubr.f32.gmra.mxu0 %v620
      %v1130 = vpop.f32.mrf.mxu0
      %v1131 = vadd.f32 0.0, %v1130
      %v1132 = vpop.f32.mrf.mxu0
      %1133 = vmatprep.mubr.f32.mxu0 %v906
      %1134 = vmatmul.mubr.f32.gmra.mxu0 %v622
      %v1135 = vpop.f32.mrf.mxu0
      %v1136 = vadd.f32 0.0, %v1135
      %v1137 = vpop.f32.mrf.mxu0
      %1138 = vmatprep.mubr.f32.mxu0 %v909
      %1139 = vmatmul.mubr.f32.gmra.mxu0 %v624
      %v1140 = vpop.f32.mrf.mxu0
      %v1141 = vadd.f32 0.0, %v1140
      %v1142 = vpop.f32.mrf.mxu0
      %1143 = vmatprep.mubr.f32.mxu0 %v912
      %1144 = vmatmul.mubr.f32.gmra.mxu0 %v626
      %v1145 = vpop.f32.mrf.mxu0
      %v1146 = vadd.f32 0.0, %v1145
      %v1147 = vpop.f32.mrf.mxu0
      %1148 = vmatprep.mubr.f32.mxu0 %v915
      %1149 = vmatmul.mubr.f32.gmra.mxu0 %v628
      %v1150 = vpop.f32.mrf.mxu0
      %v1151 = vadd.f32 0.0, %v1150
      %v1152 = vpop.f32.mrf.mxu0
      %1153 = vmatprep.mubr.f32.mxu0 %v918
      %1154 = vmatmul.mubr.f32.gmra.mxu0 %v630
      %v1155 = vpop.f32.mrf.mxu0
      %v1156 = vadd.f32 0.0, %v1155
      %v1157 = vpop.f32.mrf.mxu0
      %1158 = vmatprep.mubr.f32.mxu0 %v921
      %1159 = vmatmul.mubr.f32.gmra.mxu0 %v632
      %v1160 = vpop.f32.mrf.mxu0
      %v1161 = vadd.f32 0.0, %v1160
      %v1162 = vpop.f32.mrf.mxu0
      %1163 = vmatprep.mubr.f32.mxu0 %v924
      %1164 = vmatmul.mubr.f32.gmra.mxu0 %v634
      %v1165 = vpop.f32.mrf.mxu0
      %v1166 = vadd.f32 0.0, %v1165
      %v1167 = vpop.f32.mrf.mxu0
      %1168 = vmatprep.mubr.f32.mxu0 %v927
      %1169 = vmatmul.mubr.f32.gmra.mxu0 %v636
      %v1170 = vpop.f32.mrf.mxu0
      %v1171 = vadd.f32 0.0, %v1170
      %v1172 = vpop.f32.mrf.mxu0
      %1173 = vmatprep.mubr.f32.mxu0 %v930
      %1174 = vmatmul.mubr.f32.gmra.mxu0 %v638
      %v1175 = vpop.f32.mrf.mxu0
      %v1176 = vadd.f32 0.0, %v1175
      %v1177 = vpop.f32.mrf.mxu0
      %1178 = vmatprep.mubr.f32.mxu0 %v933
      %1179 = vmatmul.mubr.f32.gmra.mxu0 %v640
      %v1180 = vpop.f32.mrf.mxu0
      %v1181 = vadd.f32 0.0, %v1180
      %v1182 = vpop.f32.mrf.mxu0
      %1183 = vmatprep.mubr.f32.mxu0 %v936
      %1184 = vmatmul.mubr.f32.gmra.mxu0 %v642
      %v1185 = vpop.f32.mrf.mxu0
      %v1186 = vadd.f32 0.0, %v1185
      %v1187 = vpop.f32.mrf.mxu0
      %1188 = vmatprep.mubr.f32.mxu0 %v939
      %1189 = vmatmul.mubr.f32.gmra.mxu0 %v644
      %v1190 = vpop.f32.mrf.mxu0
      %v1191 = vadd.f32 0.0, %v1190
      %v1192 = vpop.f32.mrf.mxu0
      %1193 = vmatprep.mubr.f32.mxu0 %v942
      %1194 = vmatmul.mubr.f32.gmra.mxu0 %v646
      %v1195 = vpop.f32.mrf.mxu0
      %v1196 = vadd.f32 0.0, %v1195
      %v1197 = vpop.f32.mrf.mxu0
      %1198 = vmatprep.mubr.f32.mxu0 %v945
      %1199 = vmatmul.mubr.f32.gmra.mxu0 %v648
      %v1200 = vpop.f32.mrf.mxu0
      %v1201 = vadd.f32 0.0, %v1200
      %v1202 = vpop.f32.mrf.mxu0
      %1203 = vmatprep.mubr.f32.mxu0 %v948
      %1204 = vmatmul.mubr.f32.gmra.mxu0 %v650
      %v1205 = vpop.f32.mrf.mxu0
      %v1206 = vadd.f32 0.0, %v1205
      %v1207 = vpop.f32.mrf.mxu0
      %1208 = vmatprep.mubr.f32.mxu0 %v951
      %1209 = vmatmul.mubr.f32.gmra.mxu0 %v652
      %v1210 = vpop.f32.mrf.mxu0
      %v1211 = vadd.f32 0.0, %v1210
      %v1212 = vpop.f32.mrf.mxu0
      %1213 = vmatprep.mubr.f32.mxu0 %v954
      %1214 = vmatmul.mubr.f32.gmra.mxu0 %v654
      %v1215 = vpop.f32.mrf.mxu0
      %v1216 = vadd.f32 0.0, %v1215
      %v1217 = vpop.f32.mrf.mxu0
      %1218 = vmatprep.mubr.f32.mxu0 %v957
      %1219 = vmatmul.mubr.f32.gmra.mxu0 %v656
      %v1220 = vpop.f32.mrf.mxu0
      %v1221 = vadd.f32 0.0, %v1220
      %v1222 = vpop.f32.mrf.mxu0
      %1223 = vdwg.mxu0
      %v1224 = vmul.f32 %v1026, 0.70710677
      %v1225 = vmul.f32 %v1031, 0.70710677
      %v1226 = vmul.f32 %v1036, 0.70710677
      %v1227 = vmul.f32 %v1041, 0.70710677
      %v1228 = vmul.f32 %v1046, 0.70710677
      %v1229 = vmul.f32 %v1051, 0.70710677
      %v1230 = vmul.f32 %v1056, 0.70710677
      %v1231 = vmul.f32 %v1061, 0.70710677
      %v1232 = vmul.f32 %v1066, 0.70710677
      %v1233 = vmul.f32 %v1071, 0.70710677
      %v1234 = vmul.f32 %v1076, 0.70710677
      %v1235 = vmul.f32 %v1081, 0.70710677
      %v1236 = vmul.f32 %v1086, 0.70710677
      %v1237 = vmul.f32 %v1091, 0.70710677
      %v1238 = vmul.f32 %v1096, 0.70710677
      %v1239 = vmul.f32 %v1101, 0.70710677
      %v1240 = vmul.f32 %v1106, 0.70710677
      %v1241 = vmul.f32 %v1111, 0.70710677
      %v1242 = vmul.f32 %v1116, 0.70710677
      %v1243 = vmul.f32 %v1121, 0.70710677
      %v1244 = vmul.f32 %v1126, 0.70710677
      %v1245 = vmul.f32 %v1131, 0.70710677
      %v1246 = vmul.f32 %v1136, 0.70710677
      %v1247 = vmul.f32 %v1141, 0.70710677
      %v1248 = vmul.f32 %v1146, 0.70710677
      %v1249 = vmul.f32 %v1151, 0.70710677
      %v1250 = vmul.f32 %v1156, 0.70710677
      %v1251 = vmul.f32 %v1161, 0.70710677
      %v1252 = vmul.f32 %v1166, 0.70710677
      %v1253 = vmul.f32 %v1171, 0.70710677
      %v1254 = vmul.f32 %v1176, 0.70710677
      %v1255 = vmul.f32 %v1181, 0.70710677
      %v1256 = vmul.f32 %v1186, 0.70710677
      %v1257 = vmul.f32 %v1191, 0.70710677
      %v1258 = vmul.f32 %v1196, 0.70710677
      %v1259 = vmul.f32 %v1201, 0.70710677
      %v1260 = vmul.f32 %v1206, 0.70710677
      %v1261 = vmul.f32 %v1211, 0.70710677
      %v1262 = vmul.f32 %v1216, 0.70710677
      %v1263 = vmul.f32 %v1221, 0.70710677
      %vm1264 = vcmp.ge.f32.partialorder %v1224, 0.0
      %vm1265 = vcmp.ge.f32.partialorder %v1225, 0.0
      %vm1266 = vcmp.ge.f32.partialorder %v1226, 0.0
      %vm1267 = vcmp.ge.f32.partialorder %v1227, 0.0
      %vm1268 = vcmp.ge.f32.partialorder %v1228, 0.0
      %vm1269 = vcmp.ge.f32.partialorder %v1229, 0.0
      %vm1270 = vcmp.ge.f32.partialorder %v1230, 0.0
      %vm1271 = vcmp.ge.f32.partialorder %v1231, 0.0
      %vm1272 = vcmp.ge.f32.partialorder %v1232, 0.0
      %vm1273 = vcmp.ge.f32.partialorder %v1233, 0.0
      %vm1274 = vcmp.ge.f32.partialorder %v1234, 0.0
      %vm1275 = vcmp.ge.f32.partialorder %v1235, 0.0
      %vm1276 = vcmp.ge.f32.partialorder %v1236, 0.0
      %vm1277 = vcmp.ge.f32.partialorder %v1237, 0.0
      %vm1278 = vcmp.ge.f32.partialorder %v1238, 0.0
      %vm1279 = vcmp.ge.f32.partialorder %v1239, 0.0
      %vm1280 = vcmp.ge.f32.partialorder %v1240, 0.0
      %vm1281 = vcmp.ge.f32.partialorder %v1241, 0.0
      %vm1282 = vcmp.ge.f32.partialorder %v1242, 0.0
      %vm1283 = vcmp.ge.f32.partialorder %v1243, 0.0
      %vm1284 = vcmp.ge.f32.partialorder %v1244, 0.0
      %vm1285 = vcmp.ge.f32.partialorder %v1245, 0.0
      %vm1286 = vcmp.ge.f32.partialorder %v1246, 0.0
      %vm1287 = vcmp.ge.f32.partialorder %v1247, 0.0
      %vm1288 = vcmp.ge.f32.partialorder %v1248, 0.0
      %vm1289 = vcmp.ge.f32.partialorder %v1249, 0.0
      %vm1290 = vcmp.ge.f32.partialorder %v1250, 0.0
      %vm1291 = vcmp.ge.f32.partialorder %v1251, 0.0
      %vm1292 = vcmp.ge.f32.partialorder %v1252, 0.0
      %vm1293 = vcmp.ge.f32.partialorder %v1253, 0.0
      %vm1294 = vcmp.ge.f32.partialorder %v1254, 0.0
      %vm1295 = vcmp.ge.f32.partialorder %v1255, 0.0
      %vm1296 = vcmp.ge.f32.partialorder %v1256, 0.0
      %vm1297 = vcmp.ge.f32.partialorder %v1257, 0.0
      %vm1298 = vcmp.ge.f32.partialorder %v1258, 0.0
      %vm1299 = vcmp.ge.f32.partialorder %v1259, 0.0
      %vm1300 = vcmp.ge.f32.partialorder %v1260, 0.0
      %vm1301 = vcmp.ge.f32.partialorder %v1261, 0.0
      %vm1302 = vcmp.ge.f32.partialorder %v1262, 0.0
      %vm1303 = vcmp.ge.f32.partialorder %v1263, 0.0
      %v1304 = vsel %vm1264, 1.0, -1.0
      %v1305 = vsel %vm1265, 1.0, -1.0
      %v1306 = vsel %vm1266, 1.0, -1.0
      %v1307 = vsel %vm1267, 1.0, -1.0
      %v1308 = vsel %vm1268, 1.0, -1.0
      %v1309 = vsel %vm1269, 1.0, -1.0
      %v1310 = vsel %vm1270, 1.0, -1.0
      %v1311 = vsel %vm1271, 1.0, -1.0
      %v1312 = vsel %vm1272, 1.0, -1.0
      %v1313 = vsel %vm1273, 1.0, -1.0
      %v1314 = vsel %vm1274, 1.0, -1.0
      %v1315 = vsel %vm1275, 1.0, -1.0
      %v1316 = vsel %vm1276, 1.0, -1.0
      %v1317 = vsel %vm1277, 1.0, -1.0
      %v1318 = vsel %vm1278, 1.0, -1.0
      %v1319 = vsel %vm1279, 1.0, -1.0
      %v1320 = vsel %vm1280, 1.0, -1.0
      %v1321 = vsel %vm1281, 1.0, -1.0
      %v1322 = vsel %vm1282, 1.0, -1.0
      %v1323 = vsel %vm1283, 1.0, -1.0
      %v1324 = vsel %vm1284, 1.0, -1.0
      %v1325 = vsel %vm1285, 1.0, -1.0
      %v1326 = vsel %vm1286, 1.0, -1.0
      %v1327 = vsel %vm1287, 1.0, -1.0
      %v1328 = vsel %vm1288, 1.0, -1.0
      %v1329 = vsel %vm1289, 1.0, -1.0
      %v1330 = vsel %vm1290, 1.0, -1.0
      %v1331 = vsel %vm1291, 1.0, -1.0
      %v1332 = vsel %vm1292, 1.0, -1.0
      %v1333 = vsel %vm1293, 1.0, -1.0
      %v1334 = vsel %vm1294, 1.0, -1.0
      %v1335 = vsel %vm1295, 1.0, -1.0
      %v1336 = vsel %vm1296, 1.0, -1.0
      %v1337 = vsel %vm1297, 1.0, -1.0
      %v1338 = vsel %vm1298, 1.0, -1.0
      %v1339 = vsel %vm1299, 1.0, -1.0
      %v1340 = vsel %vm1300, 1.0, -1.0
      %v1341 = vsel %vm1301, 1.0, -1.0
      %v1342 = vsel %vm1302, 1.0, -1.0
      %v1343 = vsel %vm1303, 1.0, -1.0
      %v1344 = vand.u32 2147483647, %v1224
      %v1345 = vand.u32 2147483647, %v1225
      %v1346 = vand.u32 2147483647, %v1226
      %v1347 = vand.u32 2147483647, %v1227
      %v1348 = vand.u32 2147483647, %v1228
      %v1349 = vand.u32 2147483647, %v1229
      %v1350 = vand.u32 2147483647, %v1230
      %v1351 = vand.u32 2147483647, %v1231
      %v1352 = vand.u32 2147483647, %v1232
      %v1353 = vand.u32 2147483647, %v1233
      %v1354 = vand.u32 2147483647, %v1234
      %v1355 = vand.u32 2147483647, %v1235
      %v1356 = vand.u32 2147483647, %v1236
      %v1357 = vand.u32 2147483647, %v1237
      %v1358 = vand.u32 2147483647, %v1238
      %v1359 = vand.u32 2147483647, %v1239
      %v1360 = vand.u32 2147483647, %v1240
      %v1361 = vand.u32 2147483647, %v1241
      %v1362 = vand.u32 2147483647, %v1242
      %v1363 = vand.u32 2147483647, %v1243
      %v1364 = vand.u32 2147483647, %v1244
      %v1365 = vand.u32 2147483647, %v1245
      %v1366 = vand.u32 2147483647, %v1246
      %v1367 = vand.u32 2147483647, %v1247
      %v1368 = vand.u32 2147483647, %v1248
      %v1369 = vand.u32 2147483647, %v1249
      %v1370 = vand.u32 2147483647, %v1250
      %v1371 = vand.u32 2147483647, %v1251
      %v1372 = vand.u32 2147483647, %v1252
      %v1373 = vand.u32 2147483647, %v1253
      %v1374 = vand.u32 2147483647, %v1254
      %v1375 = vand.u32 2147483647, %v1255
      %v1376 = vand.u32 2147483647, %v1256
      %v1377 = vand.u32 2147483647, %v1257
      %v1378 = vand.u32 2147483647, %v1258
      %v1379 = vand.u32 2147483647, %v1259
      %v1380 = vand.u32 2147483647, %v1260
      %v1381 = vand.u32 2147483647, %v1261
      %v1382 = vand.u32 2147483647, %v1262
      %v1383 = vand.u32 2147483647, %v1263
      %v1384 = vmul.f32 %v1344, 0.3275911
      %v1385 = vmul.f32 %v1345, 0.3275911
      %v1386 = vmul.f32 %v1346, 0.3275911
      %v1387 = vmul.f32 %v1347, 0.3275911
      %v1388 = vmul.f32 %v1348, 0.3275911
      %v1389 = vmul.f32 %v1349, 0.3275911
      %v1390 = vmul.f32 %v1350, 0.3275911
      %v1391 = vmul.f32 %v1351, 0.3275911
      %v1392 = vmul.f32 %v1352, 0.3275911
      %v1393 = vmul.f32 %v1353, 0.3275911
      %v1394 = vmul.f32 %v1354, 0.3275911
      %v1395 = vmul.f32 %v1355, 0.3275911
      %v1396 = vmul.f32 %v1356, 0.3275911
      %v1397 = vmul.f32 %v1357, 0.3275911
      %v1398 = vmul.f32 %v1358, 0.3275911
      %v1399 = vmul.f32 %v1359, 0.3275911
      %v1400 = vmul.f32 %v1360, 0.3275911
      %v1401 = vmul.f32 %v1361, 0.3275911
      %v1402 = vmul.f32 %v1362, 0.3275911
      %v1403 = vmul.f32 %v1363, 0.3275911
      %v1404 = vmul.f32 %v1364, 0.3275911
      %v1405 = vmul.f32 %v1365, 0.3275911
      %v1406 = vmul.f32 %v1366, 0.3275911
      %v1407 = vmul.f32 %v1367, 0.3275911
      %v1408 = vmul.f32 %v1368, 0.3275911
      %v1409 = vmul.f32 %v1369, 0.3275911
      %v1410 = vmul.f32 %v1370, 0.3275911
      %v1411 = vmul.f32 %v1371, 0.3275911
      %v1412 = vmul.f32 %v1372, 0.3275911
      %v1413 = vmul.f32 %v1373, 0.3275911
      %v1414 = vmul.f32 %v1374, 0.3275911
      %v1415 = vmul.f32 %v1375, 0.3275911
      %v1416 = vmul.f32 %v1376, 0.3275911
      %v1417 = vmul.f32 %v1377, 0.3275911
      %v1418 = vmul.f32 %v1378, 0.3275911
      %v1419 = vmul.f32 %v1379, 0.3275911
      %v1420 = vmul.f32 %v1380, 0.3275911
      %v1421 = vmul.f32 %v1381, 0.3275911
      %v1422 = vmul.f32 %v1382, 0.3275911
      %v1423 = vmul.f32 %v1383, 0.3275911
      %v1424 = vadd.f32 %v1384, 1.0
      %v1425 = vadd.f32 %v1385, 1.0
      %v1426 = vadd.f32 %v1386, 1.0
      %v1427 = vadd.f32 %v1387, 1.0
      %v1428 = vadd.f32 %v1388, 1.0
      %v1429 = vadd.f32 %v1389, 1.0
      %v1430 = vadd.f32 %v1390, 1.0
      %v1431 = vadd.f32 %v1391, 1.0
      %v1432 = vadd.f32 %v1392, 1.0
      %v1433 = vadd.f32 %v1393, 1.0
      %v1434 = vadd.f32 %v1394, 1.0
      %v1435 = vadd.f32 %v1395, 1.0
      %v1436 = vadd.f32 %v1396, 1.0
      %v1437 = vadd.f32 %v1397, 1.0
      %v1438 = vadd.f32 %v1398, 1.0
      %v1439 = vadd.f32 %v1399, 1.0
      %v1440 = vadd.f32 %v1400, 1.0
      %v1441 = vadd.f32 %v1401, 1.0
      %v1442 = vadd.f32 %v1402, 1.0
      %v1443 = vadd.f32 %v1403, 1.0
      %v1444 = vadd.f32 %v1404, 1.0
      %v1445 = vadd.f32 %v1405, 1.0
      %v1446 = vadd.f32 %v1406, 1.0
      %v1447 = vadd.f32 %v1407, 1.0
      %v1448 = vadd.f32 %v1408, 1.0
      %v1449 = vadd.f32 %v1409, 1.0
      %v1450 = vadd.f32 %v1410, 1.0
      %v1451 = vadd.f32 %v1411, 1.0
      %v1452 = vadd.f32 %v1412, 1.0
      %v1453 = vadd.f32 %v1413, 1.0
      %v1454 = vadd.f32 %v1414, 1.0
      %v1455 = vadd.f32 %v1415, 1.0
      %v1456 = vadd.f32 %v1416, 1.0
      %v1457 = vadd.f32 %v1417, 1.0
      %v1458 = vadd.f32 %v1418, 1.0
      %v1459 = vadd.f32 %v1419, 1.0
      %v1460 = vadd.f32 %v1420, 1.0
      %v1461 = vadd.f32 %v1421, 1.0
      %v1462 = vadd.f32 %v1422, 1.0
      %v1463 = vadd.f32 %v1423, 1.0
      %v1464 = vrcp.pop %v1424
      %v1465 = vrcp.pop %v1425
      %v1466 = vrcp.pop %v1426
      %v1467 = vrcp.pop %v1427
      %v1468 = vrcp.pop %v1428
      %v1469 = vrcp.pop %v1429
      %v1470 = vrcp.pop %v1430
      %v1471 = vrcp.pop %v1431
      %v1472 = vrcp.pop %v1432
      %v1473 = vrcp.pop %v1433
      %v1474 = vrcp.pop %v1434
      %v1475 = vrcp.pop %v1435
      %v1476 = vrcp.pop %v1436
      %v1477 = vrcp.pop %v1437
      %v1478 = vrcp.pop %v1438
      %v1479 = vrcp.pop %v1439
      %v1480 = vrcp.pop %v1440
      %v1481 = vrcp.pop %v1441
      %v1482 = vrcp.pop %v1442
      %v1483 = vrcp.pop %v1443
      %v1484 = vrcp.pop %v1444
      %v1485 = vrcp.pop %v1445
      %v1486 = vrcp.pop %v1446
      %v1487 = vrcp.pop %v1447
      %v1488 = vrcp.pop %v1448
      %v1489 = vrcp.pop %v1449
      %v1490 = vrcp.pop %v1450
      %v1491 = vrcp.pop %v1451
      %v1492 = vrcp.pop %v1452
      %v1493 = vrcp.pop %v1453
      %v1494 = vrcp.pop %v1454
      %v1495 = vrcp.pop %v1455
      %v1496 = vrcp.pop %v1456
      %v1497 = vrcp.pop %v1457
      %v1498 = vrcp.pop %v1458
      %v1499 = vrcp.pop %v1459
      %v1500 = vrcp.pop %v1460
      %v1501 = vrcp.pop %v1461
      %v1502 = vrcp.pop %v1462
      %v1503 = vrcp.pop %v1463
      %v1504 = vmul.f32 %v1464, 1.0614054
      %v1505 = vmul.f32 %v1465, 1.0614054
      %v1506 = vmul.f32 %v1466, 1.0614054
      %v1507 = vmul.f32 %v1467, 1.0614054
      %v1508 = vmul.f32 %v1468, 1.0614054
      %v1509 = vmul.f32 %v1469, 1.0614054
      %v1510 = vmul.f32 %v1470, 1.0614054
      %v1511 = vmul.f32 %v1471, 1.0614054
      %v1512 = vmul.f32 %v1472, 1.0614054
      %v1513 = vmul.f32 %v1473, 1.0614054
      %v1514 = vmul.f32 %v1474, 1.0614054
      %v1515 = vmul.f32 %v1475, 1.0614054
      %v1516 = vmul.f32 %v1476, 1.0614054
      %v1517 = vmul.f32 %v1477, 1.0614054
      %v1518 = vmul.f32 %v1478, 1.0614054
      %v1519 = vmul.f32 %v1479, 1.0614054
      %v1520 = vmul.f32 %v1480, 1.0614054
      %v1521 = vmul.f32 %v1481, 1.0614054
      %v1522 = vmul.f32 %v1482, 1.0614054
      %v1523 = vmul.f32 %v1483, 1.0614054
      %v1524 = vmul.f32 %v1484, 1.0614054
      %v1525 = vmul.f32 %v1485, 1.0614054
      %v1526 = vmul.f32 %v1486, 1.0614054
      %v1527 = vmul.f32 %v1487, 1.0614054
      %v1528 = vmul.f32 %v1488, 1.0614054
      %v1529 = vmul.f32 %v1489, 1.0614054
      %v1530 = vmul.f32 %v1490, 1.0614054
      %v1531 = vmul.f32 %v1491, 1.0614054
      %v1532 = vmul.f32 %v1492, 1.0614054
      %v1533 = vmul.f32 %v1493, 1.0614054
      %v1534 = vmul.f32 %v1494, 1.0614054
      %v1535 = vmul.f32 %v1495, 1.0614054
      %v1536 = vmul.f32 %v1496, 1.0614054
      %v1537 = vmul.f32 %v1497, 1.0614054
      %v1538 = vmul.f32 %v1498, 1.0614054
      %v1539 = vmul.f32 %v1499, 1.0614054
      %v1540 = vmul.f32 %v1500, 1.0614054
      %v1541 = vmul.f32 %v1501, 1.0614054
      %v1542 = vmul.f32 %v1502, 1.0614054
      %v1543 = vmul.f32 %v1503, 1.0614054
      %v1544 = vadd.f32 %v1504, -1.4531521
      %v1545 = vadd.f32 %v1505, -1.4531521
      %v1546 = vadd.f32 %v1506, -1.4531521
      %v1547 = vadd.f32 %v1507, -1.4531521
      %v1548 = vadd.f32 %v1508, -1.4531521
      %v1549 = vadd.f32 %v1509, -1.4531521
      %v1550 = vadd.f32 %v1510, -1.4531521
      %v1551 = vadd.f32 %v1511, -1.4531521
      %v1552 = vadd.f32 %v1512, -1.4531521
      %v1553 = vadd.f32 %v1513, -1.4531521
      %v1554 = vadd.f32 %v1514, -1.4531521
      %v1555 = vadd.f32 %v1515, -1.4531521
      %v1556 = vadd.f32 %v1516, -1.4531521
      %v1557 = vadd.f32 %v1517, -1.4531521
      %v1558 = vadd.f32 %v1518, -1.4531521
      %v1559 = vadd.f32 %v1519, -1.4531521
      %v1560 = vadd.f32 %v1520, -1.4531521
      %v1561 = vadd.f32 %v1521, -1.4531521
      %v1562 = vadd.f32 %v1522, -1.4531521
      %v1563 = vadd.f32 %v1523, -1.4531521
      %v1564 = vadd.f32 %v1524, -1.4531521
      %v1565 = vadd.f32 %v1525, -1.4531521
      %v1566 = vadd.f32 %v1526, -1.4531521
      %v1567 = vadd.f32 %v1527, -1.4531521
      %v1568 = vadd.f32 %v1528, -1.4531521
      %v1569 = vadd.f32 %v1529, -1.4531521
      %v1570 = vadd.f32 %v1530, -1.4531521
      %v1571 = vadd.f32 %v1531, -1.4531521
      %v1572 = vadd.f32 %v1532, -1.4531521
      %v1573 = vadd.f32 %v1533, -1.4531521
      %v1574 = vadd.f32 %v1534, -1.4531521
      %v1575 = vadd.f32 %v1535, -1.4531521
      %v1576 = vadd.f32 %v1536, -1.4531521
      %v1577 = vadd.f32 %v1537, -1.4531521
      %v1578 = vadd.f32 %v1538, -1.4531521
      %v1579 = vadd.f32 %v1539, -1.4531521
      %v1580 = vadd.f32 %v1540, -1.4531521
      %v1581 = vadd.f32 %v1541, -1.4531521
      %v1582 = vadd.f32 %v1542, -1.4531521
      %v1583 = vadd.f32 %v1543, -1.4531521
      %v1584 = vmul.f32 %v1544, %v1464
      %v1585 = vmul.f32 %v1545, %v1465
      %v1586 = vmul.f32 %v1546, %v1466
      %v1587 = vmul.f32 %v1547, %v1467
      %v1588 = vmul.f32 %v1548, %v1468
      %v1589 = vmul.f32 %v1549, %v1469
      %v1590 = vmul.f32 %v1550, %v1470
      %v1591 = vmul.f32 %v1551, %v1471
      %v1592 = vmul.f32 %v1552, %v1472
      %v1593 = vmul.f32 %v1553, %v1473
      %v1594 = vmul.f32 %v1554, %v1474
      %v1595 = vmul.f32 %v1555, %v1475
      %v1596 = vmul.f32 %v1556, %v1476
      %v1597 = vmul.f32 %v1557, %v1477
      %v1598 = vmul.f32 %v1558, %v1478
      %v1599 = vmul.f32 %v1559, %v1479
      %v1600 = vmul.f32 %v1560, %v1480
      %v1601 = vmul.f32 %v1561, %v1481
      %v1602 = vmul.f32 %v1562, %v1482
      %v1603 = vmul.f32 %v1563, %v1483
      %v1604 = vmul.f32 %v1564, %v1484
      %v1605 = vmul.f32 %v1565, %v1485
      %v1606 = vmul.f32 %v1566, %v1486
      %v1607 = vmul.f32 %v1567, %v1487
      %v1608 = vmul.f32 %v1568, %v1488
      %v1609 = vmul.f32 %v1569, %v1489
      %v1610 = vmul.f32 %v1570, %v1490
      %v1611 = vmul.f32 %v1571, %v1491
      %v1612 = vmul.f32 %v1572, %v1492
      %v1613 = vmul.f32 %v1573, %v1493
      %v1614 = vmul.f32 %v1574, %v1494
      %v1615 = vmul.f32 %v1575, %v1495
      %v1616 = vmul.f32 %v1576, %v1496
      %v1617 = vmul.f32 %v1577, %v1497
      %v1618 = vmul.f32 %v1578, %v1498
      %v1619 = vmul.f32 %v1579, %v1499
      %v1620 = vmul.f32 %v1580, %v1500
      %v1621 = vmul.f32 %v1581, %v1501
      %v1622 = vmul.f32 %v1582, %v1502
      %v1623 = vmul.f32 %v1583, %v1503
      %v1624 = vadd.f32 %v1584, 1.4214138
      %v1625 = vadd.f32 %v1585, 1.4214138
      %v1626 = vadd.f32 %v1586, 1.4214138
      %v1627 = vadd.f32 %v1587, 1.4214138
      %v1628 = vadd.f32 %v1588, 1.4214138
      %v1629 = vadd.f32 %v1589, 1.4214138
      %v1630 = vadd.f32 %v1590, 1.4214138
      %v1631 = vadd.f32 %v1591, 1.4214138
      %v1632 = vadd.f32 %v1592, 1.4214138
      %v1633 = vadd.f32 %v1593, 1.4214138
      %v1634 = vadd.f32 %v1594, 1.4214138
      %v1635 = vadd.f32 %v1595, 1.4214138
      %v1636 = vadd.f32 %v1596, 1.4214138
      %v1637 = vadd.f32 %v1597, 1.4214138
      %v1638 = vadd.f32 %v1598, 1.4214138
      %v1639 = vadd.f32 %v1599, 1.4214138
      %v1640 = vadd.f32 %v1600, 1.4214138
      %v1641 = vadd.f32 %v1601, 1.4214138
      %v1642 = vadd.f32 %v1602, 1.4214138
      %v1643 = vadd.f32 %v1603, 1.4214138
      %v1644 = vadd.f32 %v1604, 1.4214138
      %v1645 = vadd.f32 %v1605, 1.4214138
      %v1646 = vadd.f32 %v1606, 1.4214138
      %v1647 = vadd.f32 %v1607, 1.4214138
      %v1648 = vadd.f32 %v1608, 1.4214138
      %v1649 = vadd.f32 %v1609, 1.4214138
      %v1650 = vadd.f32 %v1610, 1.4214138
      %v1651 = vadd.f32 %v1611, 1.4214138
      %v1652 = vadd.f32 %v1612, 1.4214138
      %v1653 = vadd.f32 %v1613, 1.4214138
      %v1654 = vadd.f32 %v1614, 1.4214138
      %v1655 = vadd.f32 %v1615, 1.4214138
      %v1656 = vadd.f32 %v1616, 1.4214138
      %v1657 = vadd.f32 %v1617, 1.4214138
      %v1658 = vadd.f32 %v1618, 1.4214138
      %v1659 = vadd.f32 %v1619, 1.4214138
      %v1660 = vadd.f32 %v1620, 1.4214138
      %v1661 = vadd.f32 %v1621, 1.4214138
      %v1662 = vadd.f32 %v1622, 1.4214138
      %v1663 = vadd.f32 %v1623, 1.4214138
      %v1664 = vmul.f32 %v1624, %v1464
      %v1665 = vmul.f32 %v1625, %v1465
      %v1666 = vmul.f32 %v1626, %v1466
      %v1667 = vmul.f32 %v1627, %v1467
      %v1668 = vmul.f32 %v1628, %v1468
      %v1669 = vmul.f32 %v1629, %v1469
      %v1670 = vmul.f32 %v1630, %v1470
      %v1671 = vmul.f32 %v1631, %v1471
      %v1672 = vmul.f32 %v1632, %v1472
      %v1673 = vmul.f32 %v1633, %v1473
      %v1674 = vmul.f32 %v1634, %v1474
      %v1675 = vmul.f32 %v1635, %v1475
      %v1676 = vmul.f32 %v1636, %v1476
      %v1677 = vmul.f32 %v1637, %v1477
      %v1678 = vmul.f32 %v1638, %v1478
      %v1679 = vmul.f32 %v1639, %v1479
      %v1680 = vmul.f32 %v1640, %v1480
      %v1681 = vmul.f32 %v1641, %v1481
      %v1682 = vmul.f32 %v1642, %v1482
      %v1683 = vmul.f32 %v1643, %v1483
      %v1684 = vmul.f32 %v1644, %v1484
      %v1685 = vmul.f32 %v1645, %v1485
      %v1686 = vmul.f32 %v1646, %v1486
      %v1687 = vmul.f32 %v1647, %v1487
      %v1688 = vmul.f32 %v1648, %v1488
      %v1689 = vmul.f32 %v1649, %v1489
      %v1690 = vmul.f32 %v1650, %v1490
      %v1691 = vmul.f32 %v1651, %v1491
      %v1692 = vmul.f32 %v1652, %v1492
      %v1693 = vmul.f32 %v1653, %v1493
      %v1694 = vmul.f32 %v1654, %v1494
      %v1695 = vmul.f32 %v1655, %v1495
      %v1696 = vmul.f32 %v1656, %v1496
      %v1697 = vmul.f32 %v1657, %v1497
      %v1698 = vmul.f32 %v1658, %v1498
      %v1699 = vmul.f32 %v1659, %v1499
      %v1700 = vmul.f32 %v1660, %v1500
      %v1701 = vmul.f32 %v1661, %v1501
      %v1702 = vmul.f32 %v1662, %v1502
      %v1703 = vmul.f32 %v1663, %v1503
      %v1704 = vadd.f32 %v1664, -0.28449672
      %v1705 = vadd.f32 %v1665, -0.28449672
      %v1706 = vadd.f32 %v1666, -0.28449672
      %v1707 = vadd.f32 %v1667, -0.28449672
      %v1708 = vadd.f32 %v1668, -0.28449672
      %v1709 = vadd.f32 %v1669, -0.28449672
      %v1710 = vadd.f32 %v1670, -0.28449672
      %v1711 = vadd.f32 %v1671, -0.28449672
      %v1712 = vadd.f32 %v1672, -0.28449672
      %v1713 = vadd.f32 %v1673, -0.28449672
      %v1714 = vadd.f32 %v1674, -0.28449672
      %v1715 = vadd.f32 %v1675, -0.28449672
      %v1716 = vadd.f32 %v1676, -0.28449672
      %v1717 = vadd.f32 %v1677, -0.28449672
      %v1718 = vadd.f32 %v1678, -0.28449672
      %v1719 = vadd.f32 %v1679, -0.28449672
      %v1720 = vadd.f32 %v1680, -0.28449672
      %v1721 = vadd.f32 %v1681, -0.28449672
      %v1722 = vadd.f32 %v1682, -0.28449672
      %v1723 = vadd.f32 %v1683, -0.28449672
      %v1724 = vadd.f32 %v1684, -0.28449672
      %v1725 = vadd.f32 %v1685, -0.28449672
      %v1726 = vadd.f32 %v1686, -0.28449672
      %v1727 = vadd.f32 %v1687, -0.28449672
      %v1728 = vadd.f32 %v1688, -0.28449672
      %v1729 = vadd.f32 %v1689, -0.28449672
      %v1730 = vadd.f32 %v1690, -0.28449672
      %v1731 = vadd.f32 %v1691, -0.28449672
      %v1732 = vadd.f32 %v1692, -0.28449672
      %v1733 = vadd.f32 %v1693, -0.28449672
      %v1734 = vadd.f32 %v1694, -0.28449672
      %v1735 = vadd.f32 %v1695, -0.28449672
      %v1736 = vadd.f32 %v1696, -0.28449672
      %v1737 = vadd.f32 %v1697, -0.28449672
      %v1738 = vadd.f32 %v1698, -0.28449672
      %v1739 = vadd.f32 %v1699, -0.28449672
      %v1740 = vadd.f32 %v1700, -0.28449672
      %v1741 = vadd.f32 %v1701, -0.28449672
      %v1742 = vadd.f32 %v1702, -0.28449672
      %v1743 = vadd.f32 %v1703, -0.28449672
      %v1744 = vmul.f32 %v1704, %v1464
      %v1745 = vmul.f32 %v1705, %v1465
      %v1746 = vmul.f32 %v1706, %v1466
      %v1747 = vmul.f32 %v1707, %v1467
      %v1748 = vmul.f32 %v1708, %v1468
      %v1749 = vmul.f32 %v1709, %v1469
      %v1750 = vmul.f32 %v1710, %v1470
      %v1751 = vmul.f32 %v1711, %v1471
      %v1752 = vmul.f32 %v1712, %v1472
      %v1753 = vmul.f32 %v1713, %v1473
      %v1754 = vmul.f32 %v1714, %v1474
      %v1755 = vmul.f32 %v1715, %v1475
      %v1756 = vmul.f32 %v1716, %v1476
      %v1757 = vmul.f32 %v1717, %v1477
      %v1758 = vmul.f32 %v1718, %v1478
      %v1759 = vmul.f32 %v1719, %v1479
      %v1760 = vmul.f32 %v1720, %v1480
      %v1761 = vmul.f32 %v1721, %v1481
      %v1762 = vmul.f32 %v1722, %v1482
      %v1763 = vmul.f32 %v1723, %v1483
      %v1764 = vmul.f32 %v1724, %v1484
      %v1765 = vmul.f32 %v1725, %v1485
      %v1766 = vmul.f32 %v1726, %v1486
      %v1767 = vmul.f32 %v1727, %v1487
      %v1768 = vmul.f32 %v1728, %v1488
      %v1769 = vmul.f32 %v1729, %v1489
      %v1770 = vmul.f32 %v1730, %v1490
      %v1771 = vmul.f32 %v1731, %v1491
      %v1772 = vmul.f32 %v1732, %v1492
      %v1773 = vmul.f32 %v1733, %v1493
      %v1774 = vmul.f32 %v1734, %v1494
      %v1775 = vmul.f32 %v1735, %v1495
      %v1776 = vmul.f32 %v1736, %v1496
      %v1777 = vmul.f32 %v1737, %v1497
      %v1778 = vmul.f32 %v1738, %v1498
      %v1779 = vmul.f32 %v1739, %v1499
      %v1780 = vmul.f32 %v1740, %v1500
      %v1781 = vmul.f32 %v1741, %v1501
      %v1782 = vmul.f32 %v1742, %v1502
      %v1783 = vmul.f32 %v1743, %v1503
      %v1784 = vadd.f32 %v1744, 0.2548296
      %v1785 = vadd.f32 %v1745, 0.2548296
      %v1786 = vadd.f32 %v1746, 0.2548296
      %v1787 = vadd.f32 %v1747, 0.2548296
      %v1788 = vadd.f32 %v1748, 0.2548296
      %v1789 = vadd.f32 %v1749, 0.2548296
      %v1790 = vadd.f32 %v1750, 0.2548296
      %v1791 = vadd.f32 %v1751, 0.2548296
      %v1792 = vadd.f32 %v1752, 0.2548296
      %v1793 = vadd.f32 %v1753, 0.2548296
      %v1794 = vadd.f32 %v1754, 0.2548296
      %v1795 = vadd.f32 %v1755, 0.2548296
      %v1796 = vadd.f32 %v1756, 0.2548296
      %v1797 = vadd.f32 %v1757, 0.2548296
      %v1798 = vadd.f32 %v1758, 0.2548296
      %v1799 = vadd.f32 %v1759, 0.2548296
      %v1800 = vadd.f32 %v1760, 0.2548296
      %v1801 = vadd.f32 %v1761, 0.2548296
      %v1802 = vadd.f32 %v1762, 0.2548296
      %v1803 = vadd.f32 %v1763, 0.2548296
      %v1804 = vadd.f32 %v1764, 0.2548296
      %v1805 = vadd.f32 %v1765, 0.2548296
      %v1806 = vadd.f32 %v1766, 0.2548296
      %v1807 = vadd.f32 %v1767, 0.2548296
      %v1808 = vadd.f32 %v1768, 0.2548296
      %v1809 = vadd.f32 %v1769, 0.2548296
      %v1810 = vadd.f32 %v1770, 0.2548296
      %v1811 = vadd.f32 %v1771, 0.2548296
      %v1812 = vadd.f32 %v1772, 0.2548296
      %v1813 = vadd.f32 %v1773, 0.2548296
      %v1814 = vadd.f32 %v1774, 0.2548296
      %v1815 = vadd.f32 %v1775, 0.2548296
      %v1816 = vadd.f32 %v1776, 0.2548296
      %v1817 = vadd.f32 %v1777, 0.2548296
      %v1818 = vadd.f32 %v1778, 0.2548296
      %v1819 = vadd.f32 %v1779, 0.2548296
      %v1820 = vadd.f32 %v1780, 0.2548296
      %v1821 = vadd.f32 %v1781, 0.2548296
      %v1822 = vadd.f32 %v1782, 0.2548296
      %v1823 = vadd.f32 %v1783, 0.2548296
      %v1824 = vmul.f32 %v1784, %v1464
      %v1825 = vmul.f32 %v1785, %v1465
      %v1826 = vmul.f32 %v1786, %v1466
      %v1827 = vmul.f32 %v1787, %v1467
      %v1828 = vmul.f32 %v1788, %v1468
      %v1829 = vmul.f32 %v1789, %v1469
      %v1830 = vmul.f32 %v1790, %v1470
      %v1831 = vmul.f32 %v1791, %v1471
      %v1832 = vmul.f32 %v1792, %v1472
      %v1833 = vmul.f32 %v1793, %v1473
      %v1834 = vmul.f32 %v1794, %v1474
      %v1835 = vmul.f32 %v1795, %v1475
      %v1836 = vmul.f32 %v1796, %v1476
      %v1837 = vmul.f32 %v1797, %v1477
      %v1838 = vmul.f32 %v1798, %v1478
      %v1839 = vmul.f32 %v1799, %v1479
      %v1840 = vmul.f32 %v1800, %v1480
      %v1841 = vmul.f32 %v1801, %v1481
      %v1842 = vmul.f32 %v1802, %v1482
      %v1843 = vmul.f32 %v1803, %v1483
      %v1844 = vmul.f32 %v1804, %v1484
      %v1845 = vmul.f32 %v1805, %v1485
      %v1846 = vmul.f32 %v1806, %v1486
      %v1847 = vmul.f32 %v1807, %v1487
      %v1848 = vmul.f32 %v1808, %v1488
      %v1849 = vmul.f32 %v1809, %v1489
      %v1850 = vmul.f32 %v1810, %v1490
      %v1851 = vmul.f32 %v1811, %v1491
      %v1852 = vmul.f32 %v1812, %v1492
      %v1853 = vmul.f32 %v1813, %v1493
      %v1854 = vmul.f32 %v1814, %v1494
      %v1855 = vmul.f32 %v1815, %v1495
      %v1856 = vmul.f32 %v1816, %v1496
      %v1857 = vmul.f32 %v1817, %v1497
      %v1858 = vmul.f32 %v1818, %v1498
      %v1859 = vmul.f32 %v1819, %v1499
      %v1860 = vmul.f32 %v1820, %v1500
      %v1861 = vmul.f32 %v1821, %v1501
      %v1862 = vmul.f32 %v1822, %v1502
      %v1863 = vmul.f32 %v1823, %v1503
      %v1864 = vsub.f32 0.0, %v1344
      %v1865 = vsub.f32 0.0, %v1345
      %v1866 = vsub.f32 0.0, %v1346
      %v1867 = vsub.f32 0.0, %v1347
      %v1868 = vsub.f32 0.0, %v1348
      %v1869 = vsub.f32 0.0, %v1349
      %v1870 = vsub.f32 0.0, %v1350
      %v1871 = vsub.f32 0.0, %v1351
      %v1872 = vsub.f32 0.0, %v1352
      %v1873 = vsub.f32 0.0, %v1353
      %v1874 = vsub.f32 0.0, %v1354
      %v1875 = vsub.f32 0.0, %v1355
      %v1876 = vsub.f32 0.0, %v1356
      %v1877 = vsub.f32 0.0, %v1357
      %v1878 = vsub.f32 0.0, %v1358
      %v1879 = vsub.f32 0.0, %v1359
      %v1880 = vsub.f32 0.0, %v1360
      %v1881 = vsub.f32 0.0, %v1361
      %v1882 = vsub.f32 0.0, %v1362
      %v1883 = vsub.f32 0.0, %v1363
      %v1884 = vsub.f32 0.0, %v1364
      %v1885 = vsub.f32 0.0, %v1365
      %v1886 = vsub.f32 0.0, %v1366
      %v1887 = vsub.f32 0.0, %v1367
      %v1888 = vsub.f32 0.0, %v1368
      %v1889 = vsub.f32 0.0, %v1369
      %v1890 = vsub.f32 0.0, %v1370
      %v1891 = vsub.f32 0.0, %v1371
      %v1892 = vsub.f32 0.0, %v1372
      %v1893 = vsub.f32 0.0, %v1373
      %v1894 = vsub.f32 0.0, %v1374
      %v1895 = vsub.f32 0.0, %v1375
      %v1896 = vsub.f32 0.0, %v1376
      %v1897 = vsub.f32 0.0, %v1377
      %v1898 = vsub.f32 0.0, %v1378
      %v1899 = vsub.f32 0.0, %v1379
      %v1900 = vsub.f32 0.0, %v1380
      %v1901 = vsub.f32 0.0, %v1381
      %v1902 = vsub.f32 0.0, %v1382
      %v1903 = vsub.f32 0.0, %v1383
      %v1904 = vmul.f32 %v1864, %v1344
      %v1905 = vmul.f32 %v1865, %v1345
      %v1906 = vmul.f32 %v1866, %v1346
      %v1907 = vmul.f32 %v1867, %v1347
      %v1908 = vmul.f32 %v1868, %v1348
      %v1909 = vmul.f32 %v1869, %v1349
      %v1910 = vmul.f32 %v1870, %v1350
      %v1911 = vmul.f32 %v1871, %v1351
      %v1912 = vmul.f32 %v1872, %v1352
      %v1913 = vmul.f32 %v1873, %v1353
      %v1914 = vmul.f32 %v1874, %v1354
      %v1915 = vmul.f32 %v1875, %v1355
      %v1916 = vmul.f32 %v1876, %v1356
      %v1917 = vmul.f32 %v1877, %v1357
      %v1918 = vmul.f32 %v1878, %v1358
      %v1919 = vmul.f32 %v1879, %v1359
      %v1920 = vmul.f32 %v1880, %v1360
      %v1921 = vmul.f32 %v1881, %v1361
      %v1922 = vmul.f32 %v1882, %v1362
      %v1923 = vmul.f32 %v1883, %v1363
      %v1924 = vmul.f32 %v1884, %v1364
      %v1925 = vmul.f32 %v1885, %v1365
      %v1926 = vmul.f32 %v1886, %v1366
      %v1927 = vmul.f32 %v1887, %v1367
      %v1928 = vmul.f32 %v1888, %v1368
      %v1929 = vmul.f32 %v1889, %v1369
      %v1930 = vmul.f32 %v1890, %v1370
      %v1931 = vmul.f32 %v1891, %v1371
      %v1932 = vmul.f32 %v1892, %v1372
      %v1933 = vmul.f32 %v1893, %v1373
      %v1934 = vmul.f32 %v1894, %v1374
      %v1935 = vmul.f32 %v1895, %v1375
      %v1936 = vmul.f32 %v1896, %v1376
      %v1937 = vmul.f32 %v1897, %v1377
      %v1938 = vmul.f32 %v1898, %v1378
      %v1939 = vmul.f32 %v1899, %v1379
      %v1940 = vmul.f32 %v1900, %v1380
      %v1941 = vmul.f32 %v1901, %v1381
      %v1942 = vmul.f32 %v1902, %v1382
      %v1943 = vmul.f32 %v1903, %v1383
      %v1944 = vmul.f32 %v1904, 1.442695
      %v1945 = vpow.pop %v1944
      %v1946 = vmul.f32 %v1905, 1.442695
      %v1947 = vpow.pop %v1946
      %v1948 = vmul.f32 %v1906, 1.442695
      %v1949 = vpow.pop %v1948
      %v1950 = vmul.f32 %v1907, 1.442695
      %v1951 = vpow.pop %v1950
      %v1952 = vmul.f32 %v1908, 1.442695
      %v1953 = vpow.pop %v1952
      %v1954 = vmul.f32 %v1909, 1.442695
      %v1955 = vpow.pop %v1954
      %v1956 = vmul.f32 %v1910, 1.442695
      %v1957 = vpow.pop %v1956
      %v1958 = vmul.f32 %v1911, 1.442695
      %v1959 = vpow.pop %v1958
      %v1960 = vmul.f32 %v1912, 1.442695
      %v1961 = vpow.pop %v1960
      %v1962 = vmul.f32 %v1913, 1.442695
      %v1963 = vpow.pop %v1962
      %v1964 = vmul.f32 %v1914, 1.442695
      %v1965 = vpow.pop %v1964
      %v1966 = vmul.f32 %v1915, 1.442695
      %v1967 = vpow.pop %v1966
      %v1968 = vmul.f32 %v1916, 1.442695
      %v1969 = vpow.pop %v1968
      %v1970 = vmul.f32 %v1917, 1.442695
      %v1971 = vpow.pop %v1970
      %v1972 = vmul.f32 %v1918, 1.442695
      %v1973 = vpow.pop %v1972
      %v1974 = vmul.f32 %v1919, 1.442695
      %v1975 = vpow.pop %v1974
      %v1976 = vmul.f32 %v1920, 1.442695
      %v1977 = vpow.pop %v1976
      %v1978 = vmul.f32 %v1921, 1.442695
      %v1979 = vpow.pop %v1978
      %v1980 = vmul.f32 %v1922, 1.442695
      %v1981 = vpow.pop %v1980
      %v1982 = vmul.f32 %v1923, 1.442695
      %v1983 = vpow.pop %v1982
      %v1984 = vmul.f32 %v1924, 1.442695
      %v1985 = vpow.pop %v1984
      %v1986 = vmul.f32 %v1925, 1.442695
      %v1987 = vpow.pop %v1986
      %v1988 = vmul.f32 %v1926, 1.442695
      %v1989 = vpow.pop %v1988
      %v1990 = vmul.f32 %v1927, 1.442695
      %v1991 = vpow.pop %v1990
      %v1992 = vmul.f32 %v1928, 1.442695
      %v1993 = vpow.pop %v1992
      %v1994 = vmul.f32 %v1929, 1.442695
      %v1995 = vpow.pop %v1994
      %v1996 = vmul.f32 %v1930, 1.442695
      %v1997 = vpow.pop %v1996
      %v1998 = vmul.f32 %v1931, 1.442695
      %v1999 = vpow.pop %v1998
      %v2000 = vmul.f32 %v1932, 1.442695
      %v2001 = vpow.pop %v2000
      %v2002 = vmul.f32 %v1933, 1.442695
      %v2003 = vpow.pop %v2002
      %v2004 = vmul.f32 %v1934, 1.442695
      %v2005 = vpow.pop %v2004
      %v2006 = vmul.f32 %v1935, 1.442695
      %v2007 = vpow.pop %v2006
      %v2008 = vmul.f32 %v1936, 1.442695
      %v2009 = vpow.pop %v2008
      %v2010 = vmul.f32 %v1937, 1.442695
      %v2011 = vpow.pop %v2010
      %v2012 = vmul.f32 %v1938, 1.442695
      %v2013 = vpow.pop %v2012
      %v2014 = vmul.f32 %v1939, 1.442695
      %v2015 = vpow.pop %v2014
      %v2016 = vmul.f32 %v1940, 1.442695
      %v2017 = vpow.pop %v2016
      %v2018 = vmul.f32 %v1941, 1.442695
      %v2019 = vpow.pop %v2018
      %v2020 = vmul.f32 %v1942, 1.442695
      %v2021 = vpow.pop %v2020
      %v2022 = vmul.f32 %v1943, 1.442695
      %v2023 = vpow.pop %v2022
      %v2024 = vmul.f32 %v1824, %v1945
      %v2025 = vmul.f32 %v1825, %v1947
      %v2026 = vmul.f32 %v1826, %v1949
      %v2027 = vmul.f32 %v1827, %v1951
      %v2028 = vmul.f32 %v1828, %v1953
      %v2029 = vmul.f32 %v1829, %v1955
      %v2030 = vmul.f32 %v1830, %v1957
      %v2031 = vmul.f32 %v1831, %v1959
      %v2032 = vmul.f32 %v1832, %v1961
      %v2033 = vmul.f32 %v1833, %v1963
      %v2034 = vmul.f32 %v1834, %v1965
      %v2035 = vmul.f32 %v1835, %v1967
      %v2036 = vmul.f32 %v1836, %v1969
      %v2037 = vmul.f32 %v1837, %v1971
      %v2038 = vmul.f32 %v1838, %v1973
      %v2039 = vmul.f32 %v1839, %v1975
      %v2040 = vmul.f32 %v1840, %v1977
      %v2041 = vmul.f32 %v1841, %v1979
      %v2042 = vmul.f32 %v1842, %v1981
      %v2043 = vmul.f32 %v1843, %v1983
      %v2044 = vmul.f32 %v1844, %v1985
      %v2045 = vmul.f32 %v1845, %v1987
      %v2046 = vmul.f32 %v1846, %v1989
      %v2047 = vmul.f32 %v1847, %v1991
      %v2048 = vmul.f32 %v1848, %v1993
      %v2049 = vmul.f32 %v1849, %v1995
      %v2050 = vmul.f32 %v1850, %v1997
      %v2051 = vmul.f32 %v1851, %v1999
      %v2052 = vmul.f32 %v1852, %v2001
      %v2053 = vmul.f32 %v1853, %v2003
      %v2054 = vmul.f32 %v1854, %v2005
      %v2055 = vmul.f32 %v1855, %v2007
      %v2056 = vmul.f32 %v1856, %v2009
      %v2057 = vmul.f32 %v1857, %v2011
      %v2058 = vmul.f32 %v1858, %v2013
      %v2059 = vmul.f32 %v1859, %v2015
      %v2060 = vmul.f32 %v1860, %v2017
      %v2061 = vmul.f32 %v1861, %v2019
      %v2062 = vmul.f32 %v1862, %v2021
      %v2063 = vmul.f32 %v1863, %v2023
      %v2064 = vsub.f32 1.0, %v2024
      %v2065 = vsub.f32 1.0, %v2025
      %v2066 = vsub.f32 1.0, %v2026
      %v2067 = vsub.f32 1.0, %v2027
      %v2068 = vsub.f32 1.0, %v2028
      %v2069 = vsub.f32 1.0, %v2029
      %v2070 = vsub.f32 1.0, %v2030
      %v2071 = vsub.f32 1.0, %v2031
      %v2072 = vsub.f32 1.0, %v2032
      %v2073 = vsub.f32 1.0, %v2033
      %v2074 = vsub.f32 1.0, %v2034
      %v2075 = vsub.f32 1.0, %v2035
      %v2076 = vsub.f32 1.0, %v2036
      %v2077 = vsub.f32 1.0, %v2037
      %v2078 = vsub.f32 1.0, %v2038
      %v2079 = vsub.f32 1.0, %v2039
      %v2080 = vsub.f32 1.0, %v2040
      %v2081 = vsub.f32 1.0, %v2041
      %v2082 = vsub.f32 1.0, %v2042
      %v2083 = vsub.f32 1.0, %v2043
      %v2084 = vsub.f32 1.0, %v2044
      %v2085 = vsub.f32 1.0, %v2045
      %v2086 = vsub.f32 1.0, %v2046
      %v2087 = vsub.f32 1.0, %v2047
      %v2088 = vsub.f32 1.0, %v2048
      %v2089 = vsub.f32 1.0, %v2049
      %v2090 = vsub.f32 1.0, %v2050
      %v2091 = vsub.f32 1.0, %v2051
      %v2092 = vsub.f32 1.0, %v2052
      %v2093 = vsub.f32 1.0, %v2053
      %v2094 = vsub.f32 1.0, %v2054
      %v2095 = vsub.f32 1.0, %v2055
      %v2096 = vsub.f32 1.0, %v2056
      %v2097 = vsub.f32 1.0, %v2057
      %v2098 = vsub.f32 1.0, %v2058
      %v2099 = vsub.f32 1.0, %v2059
      %v2100 = vsub.f32 1.0, %v2060
      %v2101 = vsub.f32 1.0, %v2061
      %v2102 = vsub.f32 1.0, %v2062
      %v2103 = vsub.f32 1.0, %v2063
      %v2104 = vmul.f32 %v1304, %v2064
      %v2105 = vmul.f32 %v1305, %v2065
      %v2106 = vmul.f32 %v1306, %v2066
      %v2107 = vmul.f32 %v1307, %v2067
      %v2108 = vmul.f32 %v1308, %v2068
      %v2109 = vmul.f32 %v1309, %v2069
      %v2110 = vmul.f32 %v1310, %v2070
      %v2111 = vmul.f32 %v1311, %v2071
      %v2112 = vmul.f32 %v1312, %v2072
      %v2113 = vmul.f32 %v1313, %v2073
      %v2114 = vmul.f32 %v1314, %v2074
      %v2115 = vmul.f32 %v1315, %v2075
      %v2116 = vmul.f32 %v1316, %v2076
      %v2117 = vmul.f32 %v1317, %v2077
      %v2118 = vmul.f32 %v1318, %v2078
      %v2119 = vmul.f32 %v1319, %v2079
      %v2120 = vmul.f32 %v1320, %v2080
      %v2121 = vmul.f32 %v1321, %v2081
      %v2122 = vmul.f32 %v1322, %v2082
      %v2123 = vmul.f32 %v1323, %v2083
      %v2124 = vmul.f32 %v1324, %v2084
      %v2125 = vmul.f32 %v1325, %v2085
      %v2126 = vmul.f32 %v1326, %v2086
      %v2127 = vmul.f32 %v1327, %v2087
      %v2128 = vmul.f32 %v1328, %v2088
      %v2129 = vmul.f32 %v1329, %v2089
      %v2130 = vmul.f32 %v1330, %v2090
      %v2131 = vmul.f32 %v1331, %v2091
      %v2132 = vmul.f32 %v1332, %v2092
      %v2133 = vmul.f32 %v1333, %v2093
      %v2134 = vmul.f32 %v1334, %v2094
      %v2135 = vmul.f32 %v1335, %v2095
      %v2136 = vmul.f32 %v1336, %v2096
      %v2137 = vmul.f32 %v1337, %v2097
      %v2138 = vmul.f32 %v1338, %v2098
      %v2139 = vmul.f32 %v1339, %v2099
      %v2140 = vmul.f32 %v1340, %v2100
      %v2141 = vmul.f32 %v1341, %v2101
      %v2142 = vmul.f32 %v1342, %v2102
      %v2143 = vmul.f32 %v1343, %v2103
      %v2144 = vmul.f32 %v1026, 0.5
      %v2145 = vmul.f32 %v1031, 0.5
      %v2146 = vmul.f32 %v1036, 0.5
      %v2147 = vmul.f32 %v1041, 0.5
      %v2148 = vmul.f32 %v1046, 0.5
      %v2149 = vmul.f32 %v1051, 0.5
      %v2150 = vmul.f32 %v1056, 0.5
      %v2151 = vmul.f32 %v1061, 0.5
      %v2152 = vmul.f32 %v1066, 0.5
      %v2153 = vmul.f32 %v1071, 0.5
      %v2154 = vmul.f32 %v1076, 0.5
      %v2155 = vmul.f32 %v1081, 0.5
      %v2156 = vmul.f32 %v1086, 0.5
      %v2157 = vmul.f32 %v1091, 0.5
      %v2158 = vmul.f32 %v1096, 0.5
      %v2159 = vmul.f32 %v1101, 0.5
      %v2160 = vmul.f32 %v1106, 0.5
      %v2161 = vmul.f32 %v1111, 0.5
      %v2162 = vmul.f32 %v1116, 0.5
      %v2163 = vmul.f32 %v1121, 0.5
      %v2164 = vmul.f32 %v1126, 0.5
      %v2165 = vmul.f32 %v1131, 0.5
      %v2166 = vmul.f32 %v1136, 0.5
      %v2167 = vmul.f32 %v1141, 0.5
      %v2168 = vmul.f32 %v1146, 0.5
      %v2169 = vmul.f32 %v1151, 0.5
      %v2170 = vmul.f32 %v1156, 0.5
      %v2171 = vmul.f32 %v1161, 0.5
      %v2172 = vmul.f32 %v1166, 0.5
      %v2173 = vmul.f32 %v1171, 0.5
      %v2174 = vmul.f32 %v1176, 0.5
      %v2175 = vmul.f32 %v1181, 0.5
      %v2176 = vmul.f32 %v1186, 0.5
      %v2177 = vmul.f32 %v1191, 0.5
      %v2178 = vmul.f32 %v1196, 0.5
      %v2179 = vmul.f32 %v1201, 0.5
      %v2180 = vmul.f32 %v1206, 0.5
      %v2181 = vmul.f32 %v1211, 0.5
      %v2182 = vmul.f32 %v1216, 0.5
      %v2183 = vmul.f32 %v1221, 0.5
      %v2184 = vadd.f32 %v2104, 1.0
      %v2185 = vadd.f32 %v2105, 1.0
      %v2186 = vadd.f32 %v2106, 1.0
      %v2187 = vadd.f32 %v2107, 1.0
      %v2188 = vadd.f32 %v2108, 1.0
      %v2189 = vadd.f32 %v2109, 1.0
      %v2190 = vadd.f32 %v2110, 1.0
      %v2191 = vadd.f32 %v2111, 1.0
      %v2192 = vadd.f32 %v2112, 1.0
      %v2193 = vadd.f32 %v2113, 1.0
      %v2194 = vadd.f32 %v2114, 1.0
      %v2195 = vadd.f32 %v2115, 1.0
      %v2196 = vadd.f32 %v2116, 1.0
      %v2197 = vadd.f32 %v2117, 1.0
      %v2198 = vadd.f32 %v2118, 1.0
      %v2199 = vadd.f32 %v2119, 1.0
      %v2200 = vadd.f32 %v2120, 1.0
      %v2201 = vadd.f32 %v2121, 1.0
      %v2202 = vadd.f32 %v2122, 1.0
      %v2203 = vadd.f32 %v2123, 1.0
      %v2204 = vadd.f32 %v2124, 1.0
      %v2205 = vadd.f32 %v2125, 1.0
      %v2206 = vadd.f32 %v2126, 1.0
      %v2207 = vadd.f32 %v2127, 1.0
      %v2208 = vadd.f32 %v2128, 1.0
      %v2209 = vadd.f32 %v2129, 1.0
      %v2210 = vadd.f32 %v2130, 1.0
      %v2211 = vadd.f32 %v2131, 1.0
      %v2212 = vadd.f32 %v2132, 1.0
      %v2213 = vadd.f32 %v2133, 1.0
      %v2214 = vadd.f32 %v2134, 1.0
      %v2215 = vadd.f32 %v2135, 1.0
      %v2216 = vadd.f32 %v2136, 1.0
      %v2217 = vadd.f32 %v2137, 1.0
      %v2218 = vadd.f32 %v2138, 1.0
      %v2219 = vadd.f32 %v2139, 1.0
      %v2220 = vadd.f32 %v2140, 1.0
      %v2221 = vadd.f32 %v2141, 1.0
      %v2222 = vadd.f32 %v2142, 1.0
      %v2223 = vadd.f32 %v2143, 1.0
      %v2224 = vmul.f32 %v2144, %v2184
      %v2225 = vmul.f32 %v2145, %v2185
      %v2226 = vmul.f32 %v2146, %v2186
      %v2227 = vmul.f32 %v2147, %v2187
      %v2228 = vmul.f32 %v2148, %v2188
      %v2229 = vmul.f32 %v2149, %v2189
      %v2230 = vmul.f32 %v2150, %v2190
      %v2231 = vmul.f32 %v2151, %v2191
      %v2232 = vmul.f32 %v2152, %v2192
      %v2233 = vmul.f32 %v2153, %v2193
      %v2234 = vmul.f32 %v2154, %v2194
      %v2235 = vmul.f32 %v2155, %v2195
      %v2236 = vmul.f32 %v2156, %v2196
      %v2237 = vmul.f32 %v2157, %v2197
      %v2238 = vmul.f32 %v2158, %v2198
      %v2239 = vmul.f32 %v2159, %v2199
      %v2240 = vmul.f32 %v2160, %v2200
      %v2241 = vmul.f32 %v2161, %v2201
      %v2242 = vmul.f32 %v2162, %v2202
      %v2243 = vmul.f32 %v2163, %v2203
      %v2244 = vmul.f32 %v2164, %v2204
      %v2245 = vmul.f32 %v2165, %v2205
      %v2246 = vmul.f32 %v2166, %v2206
      %v2247 = vmul.f32 %v2167, %v2207
      %v2248 = vmul.f32 %v2168, %v2208
      %v2249 = vmul.f32 %v2169, %v2209
      %v2250 = vmul.f32 %v2170, %v2210
      %v2251 = vmul.f32 %v2171, %v2211
      %v2252 = vmul.f32 %v2172, %v2212
      %v2253 = vmul.f32 %v2173, %v2213
      %v2254 = vmul.f32 %v2174, %v2214
      %v2255 = vmul.f32 %v2175, %v2215
      %v2256 = vmul.f32 %v2176, %v2216
      %v2257 = vmul.f32 %v2177, %v2217
      %v2258 = vmul.f32 %v2178, %v2218
      %v2259 = vmul.f32 %v2179, %v2219
      %v2260 = vmul.f32 %v2180, %v2220
      %v2261 = vmul.f32 %v2181, %v2221
      %v2262 = vmul.f32 %v2182, %v2222
      %v2263 = vmul.f32 %v2183, %v2223
      %2264 = vmatprep.subr.mxu0 0.0
      %2265 = vmatpush1.msra.mxu0 %v387
      %2266 = vmatprep.subr.mxu0 0.0
      %2267 = vmatpush1.msra.mxu0 %v386
      %2268 = vmatprep.subr.mxu0 0.0
      %2269 = vmatpush1.msra.mxu0 %v385
      %2270 = vmatprep.subr.mxu0 0.0
      %2271 = vmatpush1.msra.mxu0 %v384
      %2272 = vmatprep.subr.mxu0 0.0
      %2273 = vmatpush1.msra.mxu0 %v383
      %2274 = vmatprep.subr.mxu0 0.0
      %2275 = vmatpush1.msra.mxu0 %v382
      %2276 = vmatprep.subr.mxu0 0.0
      %2277 = vmatpush1.msra.mxu0 %v381
      %2278 = vmatprep.subr.mxu0 0.0
      %2279 = vmatpush1.msra.mxu0 %v380
      %2280 = vmatprep.subr.mxu0 0.0
      %2281 = vmatpush1.msra.mxu0 %v379
      %2282 = vmatprep.subr.mxu0 0.0
      %2283 = vmatpush1.msra.mxu0 %v378
      %2284 = vmatprep.subr.mxu0 0.0
      %2285 = vmatpush1.msra.mxu0 %v377
      %2286 = vmatprep.subr.mxu0 0.0
      %2287 = vmatpush1.msra.mxu0 %v376
      %2288 = vmatprep.subr.mxu0 0.0
      %2289 = vmatpush1.msra.mxu0 %v375
      %2290 = vmatprep.subr.mxu0 0.0
      %2291 = vmatpush1.msra.mxu0 %v374
      %2292 = vmatprep.subr.mxu0 0.0
      %2293 = vmatpush1.msra.mxu0 %v373
      %2294 = vmatprep.subr.mxu0 0.0
      %2295 = vmatpush1.msra.mxu0 %v372
      %2296 = vmatprep.subr.mxu0 0.0
      %2297 = vmatpush2.msra.mxu0 0.0
      %2298 = vmatprep.subr.mxu0 0.0
      %2299 = vmatpush2.msra.mxu0 0.0
      %2300 = vmatprep.subr.mxu0 0.0
      %2301 = vmatpush2.msra.mxu0 0.0
      %2302 = vmatprep.subr.mxu0 0.0
      %2303 = vmatpush2.msra.mxu0 0.0
      %2304 = vmatprep.subr.mxu0 0.0
      %2305 = vmatpush2.msra.mxu0 0.0
      %2306 = vmatprep.subr.mxu0 0.0
      %2307 = vmatpush2.msra.mxu0 0.0
      %2308 = vmatprep.subr.mxu0 0.0
      %2309 = vmatpush2.msra.mxu0 0.0
      %2310 = vmatprep.subr.mxu0 0.0
      %2311 = vmatpush2.msra.mxu0 0.0
      %2312 = vmatprep.subr.mxu0 0.0
      %2313 = vmatpush2.msra.mxu0 0.0
      %2314 = vmatprep.subr.mxu0 0.0
      %2315 = vmatpush2.msra.mxu0 0.0
      %2316 = vmatprep.subr.mxu0 0.0
      %2317 = vmatpush2.msra.mxu0 0.0
      %2318 = vmatprep.subr.mxu0 0.0
      %2319 = vmatpush2.msra.mxu0 0.0
      %2320 = vmatprep.subr.mxu0 0.0
      %2321 = vmatpush2.msra.mxu0 0.0
      %2322 = vmatprep.subr.mxu0 0.0
      %2323 = vmatpush2.msra.mxu0 0.0
      %2324 = vmatprep.subr.mxu0 0.0
      %2325 = vmatpush2.msra.mxu0 0.0
      %2326 = vmatprep.subr.mxu0 0.0
      %2327 = vmatpush2.msra.mxu0 0.0
      %2328 = vmatprep.mubr.f32.mxu0 0.0
      %2329 = vmatmul.mubr.f32.gmra.mxu0 %v2224
      %v2330 = vpop.f32.mrf.mxu0
      %v2331 = vadd.f32 %v662, %v2330
      %v2332 = vpop.f32.mrf.mxu0
      %2333 = vmatprep.mubr.f32.mxu0 0.0
      %2334 = vmatmul.mubr.f32.gmra.mxu0 %v2225
      %v2335 = vpop.f32.mrf.mxu0
      %v2336 = vadd.f32 %v662, %v2335
      %v2337 = vpop.f32.mrf.mxu0
      %2338 = vmatprep.mubr.f32.mxu0 0.0
      %2339 = vmatmul.mubr.f32.gmra.mxu0 %v2226
      %v2340 = vpop.f32.mrf.mxu0
      %v2341 = vadd.f32 %v662, %v2340
      %v2342 = vpop.f32.mrf.mxu0
      %2343 = vmatprep.mubr.f32.mxu0 0.0
      %2344 = vmatmul.mubr.f32.gmra.mxu0 %v2227
      %v2345 = vpop.f32.mrf.mxu0
      %v2346 = vadd.f32 %v662, %v2345
      %v2347 = vpop.f32.mrf.mxu0
      %2348 = vmatprep.mubr.f32.mxu0 0.0
      %2349 = vmatmul.mubr.f32.gmra.mxu0 %v2228
      %v2350 = vpop.f32.mrf.mxu0
      %v2351 = vadd.f32 %v662, %v2350
      %v2352 = vpop.f32.mrf.mxu0
      %2353 = vmatprep.mubr.f32.mxu0 0.0
      %2354 = vmatmul.mubr.f32.gmra.mxu0 %v2229
      %v2355 = vpop.f32.mrf.mxu0
      %v2356 = vadd.f32 %v662, %v2355
      %v2357 = vpop.f32.mrf.mxu0
      %2358 = vmatprep.mubr.f32.mxu0 0.0
      %2359 = vmatmul.mubr.f32.gmra.mxu0 %v2230
      %v2360 = vpop.f32.mrf.mxu0
      %v2361 = vadd.f32 %v662, %v2360
      %v2362 = vpop.f32.mrf.mxu0
      %2363 = vmatprep.mubr.f32.mxu0 0.0
      %2364 = vmatmul.mubr.f32.gmra.mxu0 %v2231
      %v2365 = vpop.f32.mrf.mxu0
      %v2366 = vadd.f32 %v662, %v2365
      %v2367 = vpop.f32.mrf.mxu0
      %2368 = vmatprep.mubr.f32.mxu0 0.0
      %2369 = vmatmul.mubr.f32.gmra.mxu0 %v2232
      %v2370 = vpop.f32.mrf.mxu0
      %v2371 = vadd.f32 %v662, %v2370
      %v2372 = vpop.f32.mrf.mxu0
      %2373 = vmatprep.mubr.f32.mxu0 0.0
      %2374 = vmatmul.mubr.f32.gmra.mxu0 %v2233
      %v2375 = vpop.f32.mrf.mxu0
      %v2376 = vadd.f32 %v662, %v2375
      %v2377 = vpop.f32.mrf.mxu0
      %2378 = vmatprep.mubr.f32.mxu0 0.0
      %2379 = vmatmul.mubr.f32.gmra.mxu0 %v2234
      %v2380 = vpop.f32.mrf.mxu0
      %v2381 = vadd.f32 %v662, %v2380
      %v2382 = vpop.f32.mrf.mxu0
      %2383 = vmatprep.mubr.f32.mxu0 0.0
      %2384 = vmatmul.mubr.f32.gmra.mxu0 %v2235
      %v2385 = vpop.f32.mrf.mxu0
      %v2386 = vadd.f32 %v662, %v2385
      %v2387 = vpop.f32.mrf.mxu0
      %2388 = vmatprep.mubr.f32.mxu0 0.0
      %2389 = vmatmul.mubr.f32.gmra.mxu0 %v2236
      %v2390 = vpop.f32.mrf.mxu0
      %v2391 = vadd.f32 %v662, %v2390
      %v2392 = vpop.f32.mrf.mxu0
      %2393 = vmatprep.mubr.f32.mxu0 0.0
      %2394 = vmatmul.mubr.f32.gmra.mxu0 %v2237
      %v2395 = vpop.f32.mrf.mxu0
      %v2396 = vadd.f32 %v662, %v2395
      %v2397 = vpop.f32.mrf.mxu0
      %2398 = vmatprep.mubr.f32.mxu0 0.0
      %2399 = vmatmul.mubr.f32.gmra.mxu0 %v2238
      %v2400 = vpop.f32.mrf.mxu0
      %v2401 = vadd.f32 %v662, %v2400
      %v2402 = vpop.f32.mrf.mxu0
      %2403 = vmatprep.mubr.f32.mxu0 0.0
      %2404 = vmatmul.mubr.f32.gmra.mxu0 %v2239
      %v2405 = vpop.f32.mrf.mxu0
      %v2406 = vadd.f32 %v662, %v2405
      %v2407 = vpop.f32.mrf.mxu0
      %2408 = vmatprep.mubr.f32.mxu0 0.0
      %2409 = vmatmul.mubr.f32.gmra.mxu0 %v2240
      %v2410 = vpop.f32.mrf.mxu0
      %v2411 = vadd.f32 %v662, %v2410
      %v2412 = vpop.f32.mrf.mxu0
      %2413 = vmatprep.mubr.f32.mxu0 0.0
      %2414 = vmatmul.mubr.f32.gmra.mxu0 %v2241
      %v2415 = vpop.f32.mrf.mxu0
      %v2416 = vadd.f32 %v662, %v2415
      %v2417 = vpop.f32.mrf.mxu0
      %2418 = vmatprep.mubr.f32.mxu0 0.0
      %2419 = vmatmul.mubr.f32.gmra.mxu0 %v2242
      %v2420 = vpop.f32.mrf.mxu0
      %v2421 = vadd.f32 %v662, %v2420
      %v2422 = vpop.f32.mrf.mxu0
      %2423 = vmatprep.mubr.f32.mxu0 0.0
      %2424 = vmatmul.mubr.f32.gmra.mxu0 %v2243
      %v2425 = vpop.f32.mrf.mxu0
      %v2426 = vadd.f32 %v662, %v2425
      %v2427 = vpop.f32.mrf.mxu0
      %2428 = vdwg.mxu0
      %2429 = vmatprep.subr.mxu0 0.0
      %2430 = vmatpush1.msra.mxu0 %v371
      %2431 = vmatprep.subr.mxu0 0.0
      %2432 = vmatpush1.msra.mxu0 %v370
      %2433 = vmatprep.subr.mxu0 0.0
      %2434 = vmatpush1.msra.mxu0 %v369
      %2435 = vmatprep.subr.mxu0 0.0
      %2436 = vmatpush1.msra.mxu0 %v368
      %2437 = vmatprep.subr.mxu0 0.0
      %2438 = vmatpush1.msra.mxu0 %v367
      %2439 = vmatprep.subr.mxu0 0.0
      %2440 = vmatpush1.msra.mxu0 %v366
      %2441 = vmatprep.subr.mxu0 0.0
      %2442 = vmatpush1.msra.mxu0 %v365
      %2443 = vmatprep.subr.mxu0 0.0
      %2444 = vmatpush1.msra.mxu0 %v364
      %2445 = vmatprep.subr.mxu0 0.0
      %2446 = vmatpush1.msra.mxu0 %v363
      %2447 = vmatprep.subr.mxu0 0.0
      %2448 = vmatpush1.msra.mxu0 %v362
      %2449 = vmatprep.subr.mxu0 0.0
      %2450 = vmatpush1.msra.mxu0 %v361
      %2451 = vmatprep.subr.mxu0 0.0
      %2452 = vmatpush1.msra.mxu0 %v360
      %2453 = vmatprep.subr.mxu0 0.0
      %2454 = vmatpush1.msra.mxu0 %v359
      %2455 = vmatprep.subr.mxu0 0.0
      %2456 = vmatpush1.msra.mxu0 %v358
      %2457 = vmatprep.subr.mxu0 0.0
      %2458 = vmatpush1.msra.mxu0 %v357
      %2459 = vmatprep.subr.mxu0 0.0
      %2460 = vmatpush1.msra.mxu0 %v356
      %2461 = vmatprep.subr.mxu0 0.0
      %2462 = vmatpush2.msra.mxu0 0.0
      %2463 = vmatprep.subr.mxu0 0.0
      %2464 = vmatpush2.msra.mxu0 0.0
      %2465 = vmatprep.subr.mxu0 0.0
      %2466 = vmatpush2.msra.mxu0 0.0
      %2467 = vmatprep.subr.mxu0 0.0
      %2468 = vmatpush2.msra.mxu0 0.0
      %2469 = vmatprep.subr.mxu0 0.0
      %2470 = vmatpush2.msra.mxu0 0.0
      %2471 = vmatprep.subr.mxu0 0.0
      %2472 = vmatpush2.msra.mxu0 0.0
      %2473 = vmatprep.subr.mxu0 0.0
      %2474 = vmatpush2.msra.mxu0 0.0
      %2475 = vmatprep.subr.mxu0 0.0
      %2476 = vmatpush2.msra.mxu0 0.0
      %2477 = vmatprep.subr.mxu0 0.0
      %2478 = vmatpush2.msra.mxu0 0.0
      %2479 = vmatprep.subr.mxu0 0.0
      %2480 = vmatpush2.msra.mxu0 0.0
      %2481 = vmatprep.subr.mxu0 0.0
      %2482 = vmatpush2.msra.mxu0 0.0
      %2483 = vmatprep.subr.mxu0 0.0
      %2484 = vmatpush2.msra.mxu0 0.0
      %2485 = vmatprep.subr.mxu0 0.0
      %2486 = vmatpush2.msra.mxu0 0.0
      %2487 = vmatprep.subr.mxu0 0.0
      %2488 = vmatpush2.msra.mxu0 0.0
      %2489 = vmatprep.subr.mxu0 0.0
      %2490 = vmatpush2.msra.mxu0 0.0
      %2491 = vmatprep.subr.mxu0 0.0
      %2492 = vmatpush2.msra.mxu0 0.0
      %2493 = vmatprep.mubr.f32.mxu0 0.0
      %2494 = vmatmul.mubr.f32.gmra.mxu0 %v2244
      %v2495 = vpop.f32.mrf.mxu0
      %v2496 = vadd.f32 %v661, %v2495
      %v2497 = vpop.f32.mrf.mxu0
      %2498 = vmatprep.mubr.f32.mxu0 0.0
      %2499 = vmatmul.mubr.f32.gmra.mxu0 %v2245
      %v2500 = vpop.f32.mrf.mxu0
      %v2501 = vadd.f32 %v661, %v2500
      %v2502 = vpop.f32.mrf.mxu0
      %2503 = vmatprep.mubr.f32.mxu0 0.0
      %2504 = vmatmul.mubr.f32.gmra.mxu0 %v2246
      %v2505 = vpop.f32.mrf.mxu0
      %v2506 = vadd.f32 %v661, %v2505
      %v2507 = vpop.f32.mrf.mxu0
      %2508 = vmatprep.mubr.f32.mxu0 0.0
      %2509 = vmatmul.mubr.f32.gmra.mxu0 %v2247
      %v2510 = vpop.f32.mrf.mxu0
      %v2511 = vadd.f32 %v661, %v2510
      %v2512 = vpop.f32.mrf.mxu0
      %2513 = vmatprep.mubr.f32.mxu0 0.0
      %2514 = vmatmul.mubr.f32.gmra.mxu0 %v2248
      %v2515 = vpop.f32.mrf.mxu0
      %v2516 = vadd.f32 %v661, %v2515
      %v2517 = vpop.f32.mrf.mxu0
      %2518 = vmatprep.mubr.f32.mxu0 0.0
      %2519 = vmatmul.mubr.f32.gmra.mxu0 %v2249
      %v2520 = vpop.f32.mrf.mxu0
      %v2521 = vadd.f32 %v661, %v2520
      %v2522 = vpop.f32.mrf.mxu0
      %2523 = vmatprep.mubr.f32.mxu0 0.0
      %2524 = vmatmul.mubr.f32.gmra.mxu0 %v2250
      %v2525 = vpop.f32.mrf.mxu0
      %v2526 = vadd.f32 %v661, %v2525
      %v2527 = vpop.f32.mrf.mxu0
      %2528 = vmatprep.mubr.f32.mxu0 0.0
      %2529 = vmatmul.mubr.f32.gmra.mxu0 %v2251
      %v2530 = vpop.f32.mrf.mxu0
      %v2531 = vadd.f32 %v661, %v2530
      %v2532 = vpop.f32.mrf.mxu0
      %2533 = vmatprep.mubr.f32.mxu0 0.0
      %2534 = vmatmul.mubr.f32.gmra.mxu0 %v2252
      %v2535 = vpop.f32.mrf.mxu0
      %v2536 = vadd.f32 %v661, %v2535
      %v2537 = vpop.f32.mrf.mxu0
      %2538 = vmatprep.mubr.f32.mxu0 0.0
      %2539 = vmatmul.mubr.f32.gmra.mxu0 %v2253
      %v2540 = vpop.f32.mrf.mxu0
      %v2541 = vadd.f32 %v661, %v2540
      %v2542 = vpop.f32.mrf.mxu0
      %2543 = vmatprep.mubr.f32.mxu0 0.0
      %2544 = vmatmul.mubr.f32.gmra.mxu0 %v2254
      %v2545 = vpop.f32.mrf.mxu0
      %v2546 = vadd.f32 %v661, %v2545
      %v2547 = vpop.f32.mrf.mxu0
      %2548 = vmatprep.mubr.f32.mxu0 0.0
      %2549 = vmatmul.mubr.f32.gmra.mxu0 %v2255
      %v2550 = vpop.f32.mrf.mxu0
      %v2551 = vadd.f32 %v661, %v2550
      %v2552 = vpop.f32.mrf.mxu0
      %2553 = vmatprep.mubr.f32.mxu0 0.0
      %2554 = vmatmul.mubr.f32.gmra.mxu0 %v2256
      %v2555 = vpop.f32.mrf.mxu0
      %v2556 = vadd.f32 %v661, %v2555
      %v2557 = vpop.f32.mrf.mxu0
      %2558 = vmatprep.mubr.f32.mxu0 0.0
      %2559 = vmatmul.mubr.f32.gmra.mxu0 %v2257
      %v2560 = vpop.f32.mrf.mxu0
      %v2561 = vadd.f32 %v661, %v2560
      %v2562 = vpop.f32.mrf.mxu0
      %2563 = vmatprep.mubr.f32.mxu0 0.0
      %2564 = vmatmul.mubr.f32.gmra.mxu0 %v2258
      %v2565 = vpop.f32.mrf.mxu0
      %v2566 = vadd.f32 %v661, %v2565
      %v2567 = vpop.f32.mrf.mxu0
      %2568 = vmatprep.mubr.f32.mxu0 0.0
      %2569 = vmatmul.mubr.f32.gmra.mxu0 %v2259
      %v2570 = vpop.f32.mrf.mxu0
      %v2571 = vadd.f32 %v661, %v2570
      %v2572 = vpop.f32.mrf.mxu0
      %2573 = vmatprep.mubr.f32.mxu0 0.0
      %2574 = vmatmul.mubr.f32.gmra.mxu0 %v2260
      %v2575 = vpop.f32.mrf.mxu0
      %v2576 = vadd.f32 %v661, %v2575
      %v2577 = vpop.f32.mrf.mxu0
      %2578 = vmatprep.mubr.f32.mxu0 0.0
      %2579 = vmatmul.mubr.f32.gmra.mxu0 %v2261
      %v2580 = vpop.f32.mrf.mxu0
      %v2581 = vadd.f32 %v661, %v2580
      %v2582 = vpop.f32.mrf.mxu0
      %2583 = vmatprep.mubr.f32.mxu0 0.0
      %2584 = vmatmul.mubr.f32.gmra.mxu0 %v2262
      %v2585 = vpop.f32.mrf.mxu0
      %v2586 = vadd.f32 %v661, %v2585
      %v2587 = vpop.f32.mrf.mxu0
      %2588 = vmatprep.mubr.f32.mxu0 0.0
      %2589 = vmatmul.mubr.f32.gmra.mxu0 %v2263
      %v2590 = vpop.f32.mrf.mxu0
      %v2591 = vadd.f32 %v661, %v2590
      %v2592 = vpop.f32.mrf.mxu0
      %2593 = vdwg.mxu0
      %v2594 = vmul.f32 %v740, %v2496
      %v2595 = vmul.f32 %v745, %v2501
      %v2596 = vmul.f32 %v750, %v2506
      %v2597 = vmul.f32 %v755, %v2511
      %v2598 = vmul.f32 %v760, %v2516
      %v2599 = vmul.f32 %v765, %v2521
      %v2600 = vmul.f32 %v770, %v2526
      %v2601 = vmul.f32 %v775, %v2531
      %v2602 = vmul.f32 %v780, %v2536
      %v2603 = vmul.f32 %v785, %v2541
      %v2604 = vmul.f32 %v790, %v2546
      %v2605 = vmul.f32 %v795, %v2551
      %v2606 = vmul.f32 %v800, %v2556
      %v2607 = vmul.f32 %v805, %v2561
      %v2608 = vmul.f32 %v810, %v2566
      %v2609 = vmul.f32 %v815, %v2571
      %v2610 = vmul.f32 %v820, %v2576
      %v2611 = vmul.f32 %v825, %v2581
      %v2612 = vmul.f32 %v830, %v2586
      %v2613 = vmul.f32 %v835, %v2591
      %2614 = vmatprep.subr.mxu0 0.0
      %2615 = vmatpush1.msra.mxu0 %v483
      %2616 = vmatprep.subr.mxu0 0.0
      %2617 = vmatpush1.msra.mxu0 %v482
      %2618 = vmatprep.subr.mxu0 0.0
      %2619 = vmatpush1.msra.mxu0 %v481
      %2620 = vmatprep.subr.mxu0 0.0
      %2621 = vmatpush1.msra.mxu0 %v480
      %2622 = vmatprep.subr.mxu0 0.0
      %2623 = vmatpush1.msra.mxu0 %v479
      %2624 = vmatprep.subr.mxu0 0.0
      %2625 = vmatpush1.msra.mxu0 %v478
      %2626 = vmatprep.subr.mxu0 0.0
      %2627 = vmatpush1.msra.mxu0 %v477
      %2628 = vmatprep.subr.mxu0 0.0
      %2629 = vmatpush1.msra.mxu0 %v476
      %2630 = vmatprep.subr.mxu0 0.0
      %2631 = vmatpush1.msra.mxu0 %v475
      %2632 = vmatprep.subr.mxu0 0.0
      %2633 = vmatpush1.msra.mxu0 %v474
      %2634 = vmatprep.subr.mxu0 0.0
      %2635 = vmatpush1.msra.mxu0 %v473
      %2636 = vmatprep.subr.mxu0 0.0
      %2637 = vmatpush1.msra.mxu0 %v472
      %2638 = vmatprep.subr.mxu0 0.0
      %2639 = vmatpush1.msra.mxu0 %v471
      %2640 = vmatprep.subr.mxu0 0.0
      %2641 = vmatpush1.msra.mxu0 %v470
      %2642 = vmatprep.subr.mxu0 0.0
      %2643 = vmatpush1.msra.mxu0 %v469
      %2644 = vmatprep.subr.mxu0 0.0
      %2645 = vmatpush1.msra.mxu0 %v468
      %2646 = vmatprep.subr.mxu0 0.0
      %2647 = vmatpush2.msra.mxu0 0.0
      %2648 = vmatprep.subr.mxu0 0.0
      %2649 = vmatpush2.msra.mxu0 0.0
      %2650 = vmatprep.subr.mxu0 0.0
      %2651 = vmatpush2.msra.mxu0 0.0
      %2652 = vmatprep.subr.mxu0 0.0
      %2653 = vmatpush2.msra.mxu0 0.0
      %2654 = vmatprep.subr.mxu0 0.0
      %2655 = vmatpush2.msra.mxu0 0.0
      %2656 = vmatprep.subr.mxu0 0.0
      %2657 = vmatpush2.msra.mxu0 0.0
      %2658 = vmatprep.subr.mxu0 0.0
      %2659 = vmatpush2.msra.mxu0 0.0
      %2660 = vmatprep.subr.mxu0 0.0
      %2661 = vmatpush2.msra.mxu0 0.0
      %2662 = vmatprep.subr.mxu0 0.0
      %2663 = vmatpush2.msra.mxu0 0.0
      %2664 = vmatprep.subr.mxu0 0.0
      %2665 = vmatpush2.msra.mxu0 0.0
      %2666 = vmatprep.subr.mxu0 0.0
      %2667 = vmatpush2.msra.mxu0 0.0
      %2668 = vmatprep.subr.mxu0 0.0
      %2669 = vmatpush2.msra.mxu0 0.0
      %2670 = vmatprep.subr.mxu0 0.0
      %2671 = vmatpush2.msra.mxu0 0.0
      %2672 = vmatprep.subr.mxu0 0.0
      %2673 = vmatpush2.msra.mxu0 0.0
      %2674 = vmatprep.subr.mxu0 0.0
      %2675 = vmatpush2.msra.mxu0 0.0
      %2676 = vmatprep.subr.mxu0 0.0
      %2677 = vmatpush2.msra.mxu0 0.0
      %2678 = vmatprep.mubr.f32.mxu0 0.0
      %2679 = vmatmul.mubr.f32.gmra.mxu0 %v2594
      %v2680 = vpop.f32.mrf.mxu0
      %v2681 = vadd.f32 %v664, %v2680
      %v2682 = vpop.f32.mrf.mxu0
      %2683 = vmatprep.mubr.f32.mxu0 0.0
      %2684 = vmatmul.mubr.f32.gmra.mxu0 %v2595
      %v2685 = vpop.f32.mrf.mxu0
      %v2686 = vadd.f32 %v664, %v2685
      %v2687 = vpop.f32.mrf.mxu0
      %2688 = vmatprep.mubr.f32.mxu0 0.0
      %2689 = vmatmul.mubr.f32.gmra.mxu0 %v2596
      %v2690 = vpop.f32.mrf.mxu0
      %v2691 = vadd.f32 %v664, %v2690
      %v2692 = vpop.f32.mrf.mxu0
      %2693 = vmatprep.mubr.f32.mxu0 0.0
      %2694 = vmatmul.mubr.f32.gmra.mxu0 %v2597
      %v2695 = vpop.f32.mrf.mxu0
      %v2696 = vadd.f32 %v664, %v2695
      %v2697 = vpop.f32.mrf.mxu0
      %2698 = vmatprep.mubr.f32.mxu0 0.0
      %2699 = vmatmul.mubr.f32.gmra.mxu0 %v2598
      %v2700 = vpop.f32.mrf.mxu0
      %v2701 = vadd.f32 %v664, %v2700
      %v2702 = vpop.f32.mrf.mxu0
      %2703 = vmatprep.mubr.f32.mxu0 0.0
      %2704 = vmatmul.mubr.f32.gmra.mxu0 %v2599
      %v2705 = vpop.f32.mrf.mxu0
      %v2706 = vadd.f32 %v664, %v2705
      %v2707 = vpop.f32.mrf.mxu0
      %2708 = vmatprep.mubr.f32.mxu0 0.0
      %2709 = vmatmul.mubr.f32.gmra.mxu0 %v2600
      %v2710 = vpop.f32.mrf.mxu0
      %v2711 = vadd.f32 %v664, %v2710
      %v2712 = vpop.f32.mrf.mxu0
      %2713 = vmatprep.mubr.f32.mxu0 0.0
      %2714 = vmatmul.mubr.f32.gmra.mxu0 %v2601
      %v2715 = vpop.f32.mrf.mxu0
      %v2716 = vadd.f32 %v664, %v2715
      %v2717 = vpop.f32.mrf.mxu0
      %2718 = vmatprep.mubr.f32.mxu0 0.0
      %2719 = vmatmul.mubr.f32.gmra.mxu0 %v2602
      %v2720 = vpop.f32.mrf.mxu0
      %v2721 = vadd.f32 %v664, %v2720
      %v2722 = vpop.f32.mrf.mxu0
      %2723 = vmatprep.mubr.f32.mxu0 0.0
      %2724 = vmatmul.mubr.f32.gmra.mxu0 %v2603
      %v2725 = vpop.f32.mrf.mxu0
      %v2726 = vadd.f32 %v664, %v2725
      %v2727 = vpop.f32.mrf.mxu0
      %2728 = vmatprep.mubr.f32.mxu0 0.0
      %2729 = vmatmul.mubr.f32.gmra.mxu0 %v2604
      %v2730 = vpop.f32.mrf.mxu0
      %v2731 = vadd.f32 %v664, %v2730
      %v2732 = vpop.f32.mrf.mxu0
      %2733 = vmatprep.mubr.f32.mxu0 0.0
      %2734 = vmatmul.mubr.f32.gmra.mxu0 %v2605
      %v2735 = vpop.f32.mrf.mxu0
      %v2736 = vadd.f32 %v664, %v2735
      %v2737 = vpop.f32.mrf.mxu0
      %2738 = vmatprep.mubr.f32.mxu0 0.0
      %2739 = vmatmul.mubr.f32.gmra.mxu0 %v2606
      %v2740 = vpop.f32.mrf.mxu0
      %v2741 = vadd.f32 %v664, %v2740
      %v2742 = vpop.f32.mrf.mxu0
      %2743 = vmatprep.mubr.f32.mxu0 0.0
      %2744 = vmatmul.mubr.f32.gmra.mxu0 %v2607
      %v2745 = vpop.f32.mrf.mxu0
      %v2746 = vadd.f32 %v664, %v2745
      %v2747 = vpop.f32.mrf.mxu0
      %2748 = vmatprep.mubr.f32.mxu0 0.0
      %2749 = vmatmul.mubr.f32.gmra.mxu0 %v2608
      %v2750 = vpop.f32.mrf.mxu0
      %v2751 = vadd.f32 %v664, %v2750
      %v2752 = vpop.f32.mrf.mxu0
      %2753 = vmatprep.mubr.f32.mxu0 0.0
      %2754 = vmatmul.mubr.f32.gmra.mxu0 %v2609
      %v2755 = vpop.f32.mrf.mxu0
      %v2756 = vadd.f32 %v664, %v2755
      %v2757 = vpop.f32.mrf.mxu0
      %2758 = vmatprep.mubr.f32.mxu0 0.0
      %2759 = vmatmul.mubr.f32.gmra.mxu0 %v2610
      %v2760 = vpop.f32.mrf.mxu0
      %v2761 = vadd.f32 %v664, %v2760
      %v2762 = vpop.f32.mrf.mxu0
      %2763 = vmatprep.mubr.f32.mxu0 0.0
      %2764 = vmatmul.mubr.f32.gmra.mxu0 %v2611
      %v2765 = vpop.f32.mrf.mxu0
      %v2766 = vadd.f32 %v664, %v2765
      %v2767 = vpop.f32.mrf.mxu0
      %2768 = vmatprep.mubr.f32.mxu0 0.0
      %2769 = vmatmul.mubr.f32.gmra.mxu0 %v2612
      %v2770 = vpop.f32.mrf.mxu0
      %v2771 = vadd.f32 %v664, %v2770
      %v2772 = vpop.f32.mrf.mxu0
      %2773 = vmatprep.mubr.f32.mxu0 0.0
      %2774 = vmatmul.mubr.f32.gmra.mxu0 %v2613
      %v2775 = vpop.f32.mrf.mxu0
      %v2776 = vadd.f32 %v664, %v2775
      %v2777 = vpop.f32.mrf.mxu0
      %2778 = vdwg.mxu0
      %v2779 = vadd.f32 %v2681, %v320
      %v2780 = vadd.f32 %v2686, %v321
      %v2781 = vadd.f32 %v2691, %v322
      %v2782 = vadd.f32 %v2696, %v323
      %v2783 = vadd.f32 %v2701, %v324
      %v2784 = vadd.f32 %v2706, %v325
      %v2785 = vadd.f32 %v2711, %v326
      %v2786 = vadd.f32 %v2716, %v327
      %v2787 = vadd.f32 %v2721, %v328
      %v2788 = vadd.f32 %v2726, %v329
      %v2789 = vadd.f32 %v2731, %v330
      %v2790 = vadd.f32 %v2736, %v331
      %v2791 = vadd.f32 %v2741, %v332
      %v2792 = vadd.f32 %v2746, %v333
      %v2793 = vadd.f32 %v2751, %v334
      %v2794 = vadd.f32 %v2756, %v335
      %v2795 = vadd.f32 %v2761, %v336
      %v2796 = vadd.f32 %v2766, %v337
      %v2797 = vadd.f32 %v2771, %v338
      %v2798 = vadd.f32 %v2776, %v339
      %vm2799 = vcmask 130048
      %v2800 = vsel %vm2799, %v2779, -inf
      %v2801 = vsel %vm2799, %v2780, -inf
      %v2802 = vsel %vm2799, %v2781, -inf
      %v2803 = vsel %vm2799, %v2782, -inf
      %v2804 = vsel %vm2799, %v2783, -inf
      %v2805 = vmax.f32 %v2800, %v2804
      %v2806 = vsel %vm2799, %v2784, -inf
      %v2807 = vmax.f32 %v2801, %v2806
      %v2808 = vsel %vm2799, %v2785, -inf
      %v2809 = vmax.f32 %v2802, %v2808
      %v2810 = vsel %vm2799, %v2786, -inf
      %v2811 = vmax.f32 %v2803, %v2810
      %v2812 = vsel %vm2799, %v2787, -inf
      %v2813 = vmax.f32 %v2805, %v2812
      %v2814 = vsel %vm2799, %v2788, -inf
      %v2815 = vmax.f32 %v2807, %v2814
      %v2816 = vsel %vm2799, %v2789, -inf
      %v2817 = vmax.f32 %v2809, %v2816
      %v2818 = vsel %vm2799, %v2790, -inf
      %v2819 = vmax.f32 %v2811, %v2818
      %v2820 = vsel %vm2799, %v2791, -inf
      %v2821 = vmax.f32 %v2813, %v2820
      %v2822 = vsel %vm2799, %v2792, -inf
      %v2823 = vmax.f32 %v2815, %v2822
      %v2824 = vsel %vm2799, %v2793, -inf
      %v2825 = vmax.f32 %v2817, %v2824
      %v2826 = vsel %vm2799, %v2794, -inf
      %v2827 = vmax.f32 %v2819, %v2826
      %v2828 = vsel %vm2799, %v2795, -inf
      %v2829 = vmax.f32 %v2821, %v2828
      %v2830 = vsel %vm2799, %v2796, -inf
      %v2831 = vmax.f32 %v2823, %v2830
      %v2832 = vsel %vm2799, %v2797, -inf
      %v2833 = vmax.f32 %v2825, %v2832
      %v2834 = vsel %vm2799, %v2798, -inf
      %v2835 = vmax.f32 %v2827, %v2834
      %v2836 = vmax.f32 %v2829, %v2831
      %v2837 = vmax.f32 %v2833, %v2835
      %v2838 = vmax.f32 %v2836, %v2837
      %v2839 = vrot.slane %v2838, 4
      %v2840 = vmax.f32 %v2838, %v2839
      %v2841 = vrot.slane %v2840, 2
      %v2842 = vmax.f32 %v2840, %v2841
      %v2843 = vrot.slane %v2842, 1
      %v2844 = vmax.f32 %v2842, %v2843
      %v2845 = vsub.f32 %v2779, %v2844
      %v2846 = vsub.f32 %v2780, %v2844
      %v2847 = vsub.f32 %v2781, %v2844
      %v2848 = vsub.f32 %v2782, %v2844
      %v2849 = vsub.f32 %v2783, %v2844
      %v2850 = vsub.f32 %v2784, %v2844
      %v2851 = vsub.f32 %v2785, %v2844
      %v2852 = vsub.f32 %v2786, %v2844
      %v2853 = vsub.f32 %v2787, %v2844
      %v2854 = vsub.f32 %v2788, %v2844
      %v2855 = vsub.f32 %v2789, %v2844
      %v2856 = vsub.f32 %v2790, %v2844
      %v2857 = vsub.f32 %v2791, %v2844
      %v2858 = vsub.f32 %v2792, %v2844
      %v2859 = vsub.f32 %v2793, %v2844
      %v2860 = vsub.f32 %v2794, %v2844
      %v2861 = vsub.f32 %v2795, %v2844
      %v2862 = vsub.f32 %v2796, %v2844
      %v2863 = vsub.f32 %v2797, %v2844
      %v2864 = vsub.f32 %v2798, %v2844
      %v2865 = vmul.f32 %v2845, 1.442695
      %v2866 = vpow.pop %v2865
      %v2867 = vmul.f32 %v2846, 1.442695
      %v2868 = vpow.pop %v2867
      %v2869 = vmul.f32 %v2847, 1.442695
      %v2870 = vpow.pop %v2869
      %v2871 = vmul.f32 %v2848, 1.442695
      %v2872 = vpow.pop %v2871
      %v2873 = vmul.f32 %v2849, 1.442695
      %v2874 = vpow.pop %v2873
      %v2875 = vmul.f32 %v2850, 1.442695
      %v2876 = vpow.pop %v2875
      %v2877 = vmul.f32 %v2851, 1.442695
      %v2878 = vpow.pop %v2877
      %v2879 = vmul.f32 %v2852, 1.442695
      %v2880 = vpow.pop %v2879
      %v2881 = vmul.f32 %v2853, 1.442695
      %v2882 = vpow.pop %v2881
      %v2883 = vmul.f32 %v2854, 1.442695
      %v2884 = vpow.pop %v2883
      %v2885 = vmul.f32 %v2855, 1.442695
      %v2886 = vpow.pop %v2885
      %v2887 = vmul.f32 %v2856, 1.442695
      %v2888 = vpow.pop %v2887
      %v2889 = vmul.f32 %v2857, 1.442695
      %v2890 = vpow.pop %v2889
      %v2891 = vmul.f32 %v2858, 1.442695
      %v2892 = vpow.pop %v2891
      %v2893 = vmul.f32 %v2859, 1.442695
      %v2894 = vpow.pop %v2893
      %v2895 = vmul.f32 %v2860, 1.442695
      %v2896 = vpow.pop %v2895
      %v2897 = vmul.f32 %v2861, 1.442695
      %v2898 = vpow.pop %v2897
      %v2899 = vmul.f32 %v2862, 1.442695
      %v2900 = vpow.pop %v2899
      %v2901 = vmul.f32 %v2863, 1.442695
      %v2902 = vpow.pop %v2901
      %v2903 = vmul.f32 %v2864, 1.442695
      %v2904 = vpow.pop %v2903
      %vm2905 = vcmask 261120
      %v2907 = vsel %vm2905, %v519, 0
      %v2910 = vsel %vm2905, %v521, 0
      %v2913 = vsel %vm2905, %v523, 0
      %v2916 = vsel %vm2905, %v525, 0
      %v2919 = vsel %vm2905, %v527, 0
      %v2922 = vsel %vm2905, %v529, 0
      %v2925 = vsel %vm2905, %v531, 0
      %v2928 = vsel %vm2905, %v533, 0
      %v2931 = vsel %vm2905, %v535, 0
      %v2934 = vsel %vm2905, %v537, 0
      %v2937 = vsel %vm2905, %v539, 0
      %v2940 = vsel %vm2905, %v541, 0
      %v2943 = vsel %vm2905, %v543, 0
      %v2946 = vsel %vm2905, %v545, 0
      %v2949 = vsel %vm2905, %v547, 0
      %v2952 = vsel %vm2905, %v549, 0
      %v2955 = vsel %vm2905, %v551, 0
      %v2958 = vsel %vm2905, %v553, 0
      %v2961 = vsel %vm2905, %v555, 0
      %v2964 = vsel %vm2905, %v557, 0
      %2966 = vmatprep.subr.mxu0 0.0
      %2967 = vmatpush1.msra.mxu0 %v2896
      %2968 = vmatprep.subr.mxu0 0.0
      %2969 = vmatpush1.msra.mxu0 %v2894
      %2970 = vmatprep.subr.mxu0 0.0
      %2971 = vmatpush1.msra.mxu0 %v2892
      %2972 = vmatprep.subr.mxu0 0.0
      %2973 = vmatpush1.msra.mxu0 %v2890
      %2974 = vmatprep.subr.mxu0 0.0
      %2975 = vmatpush1.msra.mxu0 %v2888
      %2976 = vmatprep.subr.mxu0 0.0
      %2977 = vmatpush1.msra.mxu0 %v2886
      %2978 = vmatprep.subr.mxu0 0.0
      %2979 = vmatpush1.msra.mxu0 %v2884
      %2980 = vmatprep.subr.mxu0 0.0
      %2981 = vmatpush1.msra.mxu0 %v2882
      %2982 = vmatprep.subr.mxu0 0.0
      %2983 = vmatpush1.msra.mxu0 %v2880
      %2984 = vmatprep.subr.mxu0 0.0
      %2985 = vmatpush1.msra.mxu0 %v2878
      %2986 = vmatprep.subr.mxu0 0.0
      %2987 = vmatpush1.msra.mxu0 %v2876
      %2988 = vmatprep.subr.mxu0 0.0
      %2989 = vmatpush1.msra.mxu0 %v2874
      %2990 = vmatprep.subr.mxu0 0.0
      %2991 = vmatpush1.msra.mxu0 %v2872
      %2992 = vmatprep.subr.mxu0 0.0
      %2993 = vmatpush1.msra.mxu0 %v2870
      %2994 = vmatprep.subr.mxu0 0.0
      %2995 = vmatpush1.msra.mxu0 %v2868
      %2996 = vmatprep.subr.mxu0 0.0
      %2997 = vmatpush1.msra.mxu0 %v2866
      %2998 = vmatprep.subr.mxu0 0.0
      %2999 = vmatpush2.msra.mxu0 0.0
      %3000 = vmatprep.subr.mxu0 0.0
      %3001 = vmatpush2.msra.mxu0 0.0
      %3002 = vmatprep.subr.mxu0 0.0
      %3003 = vmatpush2.msra.mxu0 0.0
      %3004 = vmatprep.subr.mxu0 0.0
      %3005 = vmatpush2.msra.mxu0 0.0
      %3006 = vmatprep.subr.mxu0 0.0
      %3007 = vmatpush2.msra.mxu0 0.0
      %3008 = vmatprep.subr.mxu0 0.0
      %3009 = vmatpush2.msra.mxu0 0.0
      %3010 = vmatprep.subr.mxu0 0.0
      %3011 = vmatpush2.msra.mxu0 0.0
      %3012 = vmatprep.subr.mxu0 0.0
      %3013 = vmatpush2.msra.mxu0 0.0
      %3014 = vmatprep.subr.mxu0 0.0
      %3015 = vmatpush2.msra.mxu0 0.0
      %3016 = vmatprep.subr.mxu0 0.0
      %3017 = vmatpush2.msra.mxu0 0.0
      %3018 = vmatprep.subr.mxu0 0.0
      %3019 = vmatpush2.msra.mxu0 0.0
      %3020 = vmatprep.subr.mxu0 0.0
      %3021 = vmatpush2.msra.mxu0 0.0
      %3022 = vmatprep.subr.mxu0 0.0
      %3023 = vmatpush2.msra.mxu0 %v2904
      %3024 = vmatprep.subr.mxu0 0.0
      %3025 = vmatpush2.msra.mxu0 %v2902
      %3026 = vmatprep.subr.mxu0 0.0
      %3027 = vmatpush2.msra.mxu0 %v2900
      %3028 = vmatprep.subr.mxu0 0.0
      %3029 = vmatpush2.msra.mxu0 %v2898
      %3030 = vmatprep.mubr.f32.mxu0 %v2907
      %3031 = vmatmul.mubr.f32.gmra.mxu0 %v518
      %v3032 = vpop.f32.mrf.mxu0
      %v3033 = vadd.f32 0.0, %v3032
      %v3034 = vpop.f32.mrf.mxu0
      %3035 = vmatprep.mubr.f32.mxu0 %v2910
      %3036 = vmatmul.mubr.f32.gmra.mxu0 %v520
      %v3037 = vpop.f32.mrf.mxu0
      %v3038 = vadd.f32 0.0, %v3037
      %v3039 = vpop.f32.mrf.mxu0
      %3040 = vmatprep.mubr.f32.mxu0 %v2913
      %3041 = vmatmul.mubr.f32.gmra.mxu0 %v522
      %v3042 = vpop.f32.mrf.mxu0
      %v3043 = vadd.f32 0.0, %v3042
      %v3044 = vpop.f32.mrf.mxu0
      %3045 = vmatprep.mubr.f32.mxu0 %v2916
      %3046 = vmatmul.mubr.f32.gmra.mxu0 %v524
      %v3047 = vpop.f32.mrf.mxu0
      %v3048 = vadd.f32 0.0, %v3047
      %v3049 = vpop.f32.mrf.mxu0
      %3050 = vmatprep.mubr.f32.mxu0 %v2919
      %3051 = vmatmul.mubr.f32.gmra.mxu0 %v526
      %v3052 = vpop.f32.mrf.mxu0
      %v3053 = vadd.f32 0.0, %v3052
      %v3054 = vpop.f32.mrf.mxu0
      %3055 = vmatprep.mubr.f32.mxu0 %v2922
      %3056 = vmatmul.mubr.f32.gmra.mxu0 %v528
      %v3057 = vpop.f32.mrf.mxu0
      %v3058 = vadd.f32 0.0, %v3057
      %v3059 = vpop.f32.mrf.mxu0
      %3060 = vmatprep.mubr.f32.mxu0 %v2925
      %3061 = vmatmul.mubr.f32.gmra.mxu0 %v530
      %v3062 = vpop.f32.mrf.mxu0
      %v3063 = vadd.f32 0.0, %v3062
      %v3064 = vpop.f32.mrf.mxu0
      %3065 = vmatprep.mubr.f32.mxu0 %v2928
      %3066 = vmatmul.mubr.f32.gmra.mxu0 %v532
      %v3067 = vpop.f32.mrf.mxu0
      %v3068 = vadd.f32 0.0, %v3067
      %v3069 = vpop.f32.mrf.mxu0
      %3070 = vmatprep.mubr.f32.mxu0 %v2931
      %3071 = vmatmul.mubr.f32.gmra.mxu0 %v534
      %v3072 = vpop.f32.mrf.mxu0
      %v3073 = vadd.f32 0.0, %v3072
      %v3074 = vpop.f32.mrf.mxu0
      %3075 = vmatprep.mubr.f32.mxu0 %v2934
      %3076 = vmatmul.mubr.f32.gmra.mxu0 %v536
      %v3077 = vpop.f32.mrf.mxu0
      %v3078 = vadd.f32 0.0, %v3077
      %v3079 = vpop.f32.mrf.mxu0
      %3080 = vmatprep.mubr.f32.mxu0 %v2937
      %3081 = vmatmul.mubr.f32.gmra.mxu0 %v538
      %v3082 = vpop.f32.mrf.mxu0
      %v3083 = vadd.f32 0.0, %v3082
      %v3084 = vpop.f32.mrf.mxu0
      %3085 = vmatprep.mubr.f32.mxu0 %v2940
      %3086 = vmatmul.mubr.f32.gmra.mxu0 %v540
      %v3087 = vpop.f32.mrf.mxu0
      %v3088 = vadd.f32 0.0, %v3087
      %v3089 = vpop.f32.mrf.mxu0
      %3090 = vmatprep.mubr.f32.mxu0 %v2943
      %3091 = vmatmul.mubr.f32.gmra.mxu0 %v542
      %v3092 = vpop.f32.mrf.mxu0
      %v3093 = vadd.f32 0.0, %v3092
      %v3094 = vpop.f32.mrf.mxu0
      %3095 = vmatprep.mubr.f32.mxu0 %v2946
      %3096 = vmatmul.mubr.f32.gmra.mxu0 %v544
      %v3097 = vpop.f32.mrf.mxu0
      %v3098 = vadd.f32 0.0, %v3097
      %v3099 = vpop.f32.mrf.mxu0
      %3100 = vmatprep.mubr.f32.mxu0 %v2949
      %3101 = vmatmul.mubr.f32.gmra.mxu0 %v546
      %v3102 = vpop.f32.mrf.mxu0
      %v3103 = vadd.f32 0.0, %v3102
      %v3104 = vpop.f32.mrf.mxu0
      %3105 = vmatprep.mubr.f32.mxu0 %v2952
      %3106 = vmatmul.mubr.f32.gmra.mxu0 %v548
      %v3107 = vpop.f32.mrf.mxu0
      %v3108 = vadd.f32 0.0, %v3107
      %v3109 = vpop.f32.mrf.mxu0
      %3110 = vmatprep.mubr.f32.mxu0 %v2955
      %3111 = vmatmul.mubr.f32.gmra.mxu0 %v550
      %v3112 = vpop.f32.mrf.mxu0
      %v3113 = vadd.f32 0.0, %v3112
      %v3114 = vpop.f32.mrf.mxu0
      %3115 = vmatprep.mubr.f32.mxu0 %v2958
      %3116 = vmatmul.mubr.f32.gmra.mxu0 %v552
      %v3117 = vpop.f32.mrf.mxu0
      %v3118 = vadd.f32 0.0, %v3117
      %v3119 = vpop.f32.mrf.mxu0
      %3120 = vmatprep.mubr.f32.mxu0 %v2961
      %3121 = vmatmul.mubr.f32.gmra.mxu0 %v554
      %v3122 = vpop.f32.mrf.mxu0
      %v3123 = vadd.f32 0.0, %v3122
      %v3124 = vpop.f32.mrf.mxu0
      %3125 = vmatprep.mubr.f32.mxu0 %v2964
      %3126 = vmatmul.mubr.f32.gmra.mxu0 %v556
      %v3127 = vpop.f32.mrf.mxu0
      %v3128 = vadd.f32 0.0, %v3127
      %v3129 = vpop.f32.mrf.mxu0
      %3130 = vdwg.mxu0
      %v3131 = vrcp.pop %v3033
      %v3132 = vrcp.pop %v3038
      %v3133 = vrcp.pop %v3043
      %v3134 = vrcp.pop %v3048
      %v3135 = vrcp.pop %v3053
      %v3136 = vrcp.pop %v3058
      %v3137 = vrcp.pop %v3063
      %v3138 = vrcp.pop %v3068
      %v3139 = vrcp.pop %v3073
      %v3140 = vrcp.pop %v3078
      %v3141 = vrcp.pop %v3083
      %v3142 = vrcp.pop %v3088
      %v3143 = vrcp.pop %v3093
      %v3144 = vrcp.pop %v3098
      %v3145 = vrcp.pop %v3103
      %v3146 = vrcp.pop %v3108
      %v3147 = vrcp.pop %v3113
      %v3148 = vrcp.pop %v3118
      %v3149 = vrcp.pop %v3123
      %v3150 = vrcp.pop %v3128
      %v3151 = vmul.f32 %v2866, %v3131
      %v3152 = vmul.f32 %v2868, %v3132
      %v3153 = vmul.f32 %v2870, %v3133
      %v3154 = vmul.f32 %v2872, %v3134
      %v3155 = vmul.f32 %v2874, %v3135
      %v3156 = vmul.f32 %v2876, %v3136
      %v3157 = vmul.f32 %v2878, %v3137
      %v3158 = vmul.f32 %v2880, %v3138
      %v3159 = vmul.f32 %v2882, %v3139
      %v3160 = vmul.f32 %v2884, %v3140
      %v3161 = vmul.f32 %v2886, %v3141
      %v3162 = vmul.f32 %v2888, %v3142
      %v3163 = vmul.f32 %v2890, %v3143
      %v3164 = vmul.f32 %v2892, %v3144
      %v3165 = vmul.f32 %v2894, %v3145
      %v3166 = vmul.f32 %v2896, %v3146
      %v3167 = vmul.f32 %v2898, %v3147
      %v3168 = vmul.f32 %v2900, %v3148
      %v3169 = vmul.f32 %v2902, %v3149
      %v3170 = vmul.f32 %v2904, %v3150
      %v3172 = vsel %vm2905, %v659, 0
      %3174 = vmatprep.subr.mxu0 0.0
      %3175 = vmatpush1.msra.mxu0 %v2609
      %3176 = vmatprep.subr.mxu0 0.0
      %3177 = vmatpush1.msra.mxu0 %v2608
      %3178 = vmatprep.subr.mxu0 0.0
      %3179 = vmatpush1.msra.mxu0 %v2607
      %3180 = vmatprep.subr.mxu0 0.0
      %3181 = vmatpush1.msra.mxu0 %v2606
      %3182 = vmatprep.subr.mxu0 0.0
      %3183 = vmatpush1.msra.mxu0 %v2605
      %3184 = vmatprep.subr.mxu0 0.0
      %3185 = vmatpush1.msra.mxu0 %v2604
      %3186 = vmatprep.subr.mxu0 0.0
      %3187 = vmatpush1.msra.mxu0 %v2603
      %3188 = vmatprep.subr.mxu0 0.0
      %3189 = vmatpush1.msra.mxu0 %v2602
      %3190 = vmatprep.subr.mxu0 0.0
      %3191 = vmatpush1.msra.mxu0 %v2601
      %3192 = vmatprep.subr.mxu0 0.0
      %3193 = vmatpush1.msra.mxu0 %v2600
      %3194 = vmatprep.subr.mxu0 0.0
      %3195 = vmatpush1.msra.mxu0 %v2599
      %3196 = vmatprep.subr.mxu0 0.0
      %3197 = vmatpush1.msra.mxu0 %v2598
      %3198 = vmatprep.subr.mxu0 0.0
      %3199 = vmatpush1.msra.mxu0 %v2597
      %3200 = vmatprep.subr.mxu0 0.0
      %3201 = vmatpush1.msra.mxu0 %v2596
      %3202 = vmatprep.subr.mxu0 0.0
      %3203 = vmatpush1.msra.mxu0 %v2595
      %3204 = vmatprep.subr.mxu0 0.0
      %3205 = vmatpush1.msra.mxu0 %v2594
      %3206 = vmatprep.subr.mxu0 0.0
      %3207 = vmatpush2.msra.mxu0 0.0
      %3208 = vmatprep.subr.mxu0 0.0
      %3209 = vmatpush2.msra.mxu0 0.0
      %3210 = vmatprep.subr.mxu0 0.0
      %3211 = vmatpush2.msra.mxu0 0.0
      %3212 = vmatprep.subr.mxu0 0.0
      %3213 = vmatpush2.msra.mxu0 0.0
      %3214 = vmatprep.subr.mxu0 0.0
      %3215 = vmatpush2.msra.mxu0 0.0
      %3216 = vmatprep.subr.mxu0 0.0
      %3217 = vmatpush2.msra.mxu0 0.0
      %3218 = vmatprep.subr.mxu0 0.0
      %3219 = vmatpush2.msra.mxu0 0.0
      %3220 = vmatprep.subr.mxu0 0.0
      %3221 = vmatpush2.msra.mxu0 0.0
      %3222 = vmatprep.subr.mxu0 0.0
      %3223 = vmatpush2.msra.mxu0 0.0
      %3224 = vmatprep.subr.mxu0 0.0
      %3225 = vmatpush2.msra.mxu0 0.0
      %3226 = vmatprep.subr.mxu0 0.0
      %3227 = vmatpush2.msra.mxu0 0.0
      %3228 = vmatprep.subr.mxu0 0.0
      %3229 = vmatpush2.msra.mxu0 0.0
      %3230 = vmatprep.subr.mxu0 0.0
      %3231 = vmatpush2.msra.mxu0 %v2613
      %3232 = vmatprep.subr.mxu0 0.0
      %3233 = vmatpush2.msra.mxu0 %v2612
      %3234 = vmatprep.subr.mxu0 0.0
      %3235 = vmatpush2.msra.mxu0 %v2611
      %3236 = vmatprep.subr.mxu0 0.0
      %3237 = vmatpush2.msra.mxu0 %v2610
      %3238 = vmatprep.mubr.f32.mxu0 %v3172
      %3239 = vmatmul.mubr.f32.gmra.mxu0 %v658
      %v3240 = vpop.f32.mrf.mxu0
      %v3241 = vadd.f32 %v665, %v3240
      %v3242 = vpop.f32.mrf.mxu0
      %3243 = vdwg.mxu0
      %3244 = vmax.xlane.f32.xlu0 %v3241
      %v3245 = vpop.xlane.xlu0 %3244
      %v3246 = vsub.f32 %v3241, %v3245
      %v3247 = vmul.f32 %v3246, 1.442695
      %v3248 = vpow.pop %v3247
      %3249 = vmatprep.subr.mxu0 0.0
      %3250 = vmatpush1.msra.mxu0 %v501
      %3251 = vmatprep.subr.mxu0 0.0
      %3252 = vmatpush1.msra.mxu0 %v500
      %3253 = vmatprep.subr.mxu0 0.0
      %3254 = vmatpush1.msra.mxu0 %v499
      %3255 = vmatprep.subr.mxu0 0.0
      %3256 = vmatpush1.msra.mxu0 %v498
      %3257 = vmatprep.subr.mxu0 0.0
      %3258 = vmatpush1.msra.mxu0 %v497
      %3259 = vmatprep.subr.mxu0 0.0
      %3260 = vmatpush1.msra.mxu0 %v496
      %3261 = vmatprep.subr.mxu0 0.0
      %3262 = vmatpush1.msra.mxu0 %v495
      %3263 = vmatprep.subr.mxu0 0.0
      %3264 = vmatpush1.msra.mxu0 %v494
      %3265 = vmatprep.subr.mxu0 0.0
      %3266 = vmatpush1.msra.mxu0 %v493
      %3267 = vmatprep.subr.mxu0 0.0
      %3268 = vmatpush1.msra.mxu0 %v492
      %3269 = vmatprep.subr.mxu0 0.0
      %3270 = vmatpush1.msra.mxu0 %v491
      %3271 = vmatprep.subr.mxu0 0.0
      %3272 = vmatpush1.msra.mxu0 %v490
      %3273 = vmatprep.subr.mxu0 0.0
      %3274 = vmatpush1.msra.mxu0 %v489
      %3275 = vmatprep.subr.mxu0 0.0
      %3276 = vmatpush1.msra.mxu0 %v488
      %3277 = vmatprep.subr.mxu0 0.0
      %3278 = vmatpush1.msra.mxu0 %v487
      %3279 = vmatprep.subr.mxu0 0.0
      %3280 = vmatpush1.msra.mxu0 %v486
      %3281 = vmatprep.subr.mxu0 0.0
      %3282 = vmatpush2.msra.mxu0 0.0
      %3283 = vmatprep.subr.mxu0 0.0
      %3284 = vmatpush2.msra.mxu0 0.0
      %3285 = vmatprep.subr.mxu0 0.0
      %3286 = vmatpush2.msra.mxu0 0.0
      %3287 = vmatprep.subr.mxu0 0.0
      %3288 = vmatpush2.msra.mxu0 0.0
      %3289 = vmatprep.subr.mxu0 0.0
      %3290 = vmatpush2.msra.mxu0 0.0
      %3291 = vmatprep.subr.mxu0 0.0
      %3292 = vmatpush2.msra.mxu0 0.0
      %3293 = vmatprep.subr.mxu0 0.0
      %3294 = vmatpush2.msra.mxu0 0.0
      %3295 = vmatprep.subr.mxu0 0.0
      %3296 = vmatpush2.msra.mxu0 0.0
      %3297 = vmatprep.subr.mxu0 0.0
      %3298 = vmatpush2.msra.mxu0 0.0
      %3299 = vmatprep.subr.mxu0 0.0
      %3300 = vmatpush2.msra.mxu0 0.0
      %3301 = vmatprep.subr.mxu0 0.0
      %3302 = vmatpush2.msra.mxu0 0.0
      %3303 = vmatprep.subr.mxu0 0.0
      %3304 = vmatpush2.msra.mxu0 0.0
      %3305 = vmatprep.subr.mxu0 0.0
      %3306 = vmatpush2.msra.mxu0 0.0
      %3307 = vmatprep.subr.mxu0 0.0
      %3308 = vmatpush2.msra.mxu0 0.0
      %3309 = vmatprep.subr.mxu0 0.0
      %3310 = vmatpush2.msra.mxu0 0.0
      %3311 = vmatprep.subr.mxu0 0.0
      %3312 = vmatpush2.msra.mxu0 0.0
      %3313 = vmatprep.mubr.f32.mxu0 0.0
      %3314 = vmatmul.mubr.f32.gmra.mxu0 %v3248
      %v3315 = vpop.f32.mrf.mxu0
      %v3316 = vadd.f32 0.0, %v3315
      %v3317 = vpop.f32.mrf.mxu0
      %3318 = vdwg.mxu0
      %v3319 = vrcp.pop %v3316
      %v3320 = vmul.f32 %v3248, %v3319
      %vm3321 = vcmask 64512
      %v3323 = vsel %vm3321, %v558, 0
      %v3326 = vsel %vm3321, %v559, 0
      %v3329 = vsel %vm3321, %v560, 0
      %v3332 = vsel %vm3321, %v561, 0
      %v3335 = vsel %vm3321, %v562, 0
      %v3338 = vsel %vm3321, %v563, 0
      %v3341 = vsel %vm3321, %v564, 0
      %v3344 = vsel %vm3321, %v565, 0
      %v3347 = vsel %vm3321, %v566, 0
      %v3350 = vsel %vm3321, %v567, 0
      %v3353 = vsel %vm3321, %v568, 0
      %v3356 = vsel %vm3321, %v569, 0
      %v3359 = vsel %vm3321, %v570, 0
      %v3362 = vsel %vm3321, %v571, 0
      %v3365 = vsel %vm3321, %v572, 0
      %v3368 = vsel %vm3321, %v573, 0
      %v3371 = vsel %vm3321, %v574, 0
      %v3374 = vsel %vm3321, %v575, 0
      %v3377 = vsel %vm3321, %v576, 0
      %v3380 = vsel %vm3321, %v577, 0
      %3382 = vmatprep.subr.mxu0 0.0
      %3383 = vmatpush1.msra.mxu0 0.0
      %3384 = vmatprep.subr.mxu0 0.0
      %3385 = vmatpush1.msra.mxu0 0.0
      %3386 = vmatprep.subr.mxu0 0.0
      %3387 = vmatpush1.msra.mxu0 0.0
      %3388 = vmatprep.subr.mxu0 0.0
      %3389 = vmatpush1.msra.mxu0 0.0
      %3390 = vmatprep.subr.mxu0 0.0
      %3391 = vmatpush1.msra.mxu0 0.0
      %3392 = vmatprep.subr.mxu0 0.0
      %3393 = vmatpush1.msra.mxu0 0.0
      %3394 = vmatprep.subr.mxu0 0.0
      %3395 = vmatpush1.msra.mxu0 0.0
      %3396 = vmatprep.subr.mxu0 0.0
      %3397 = vmatpush1.msra.mxu0 0.0
      %3398 = vmatprep.subr.mxu0 0.0
      %3399 = vmatpush1.msra.mxu0 0.0
      %3400 = vmatprep.subr.mxu0 0.0
      %3401 = vmatpush1.msra.mxu0 0.0
      %3402 = vmatprep.subr.mxu0 0.0
      %3403 = vmatpush1.msra.mxu0 0.0
      %3404 = vmatprep.subr.mxu0 0.0
      %3405 = vmatpush1.msra.mxu0 0.0
      %3406 = vmatprep.subr.mxu0 0.0
      %3407 = vmatpush1.msra.mxu0 0.0
      %3408 = vmatprep.subr.mxu0 0.0
      %3409 = vmatpush1.msra.mxu0 0.0
      %3410 = vmatprep.subr.mxu0 0.0
      %3411 = vmatpush1.msra.mxu0 0.0
      %3412 = vmatprep.subr.mxu0 0.0
      %3413 = vmatpush1.msra.mxu0 %v3320
      %3414 = vmatprep.subr.mxu0 0.0
      %3415 = vmatpush2.msra.mxu0 0.0
      %3416 = vmatprep.subr.mxu0 0.0
      %3417 = vmatpush2.msra.mxu0 0.0
      %3418 = vmatprep.subr.mxu0 0.0
      %3419 = vmatpush2.msra.mxu0 0.0
      %3420 = vmatprep.subr.mxu0 0.0
      %3421 = vmatpush2.msra.mxu0 0.0
      %3422 = vmatprep.subr.mxu0 0.0
      %3423 = vmatpush2.msra.mxu0 0.0
      %3424 = vmatprep.subr.mxu0 0.0
      %3425 = vmatpush2.msra.mxu0 0.0
      %3426 = vmatprep.subr.mxu0 0.0
      %3427 = vmatpush2.msra.mxu0 0.0
      %3428 = vmatprep.subr.mxu0 0.0
      %3429 = vmatpush2.msra.mxu0 0.0
      %3430 = vmatprep.subr.mxu0 0.0
      %3431 = vmatpush2.msra.mxu0 0.0
      %3432 = vmatprep.subr.mxu0 0.0
      %3433 = vmatpush2.msra.mxu0 0.0
      %3434 = vmatprep.subr.mxu0 0.0
      %3435 = vmatpush2.msra.mxu0 0.0
      %3436 = vmatprep.subr.mxu0 0.0
      %3437 = vmatpush2.msra.mxu0 0.0
      %3438 = vmatprep.subr.mxu0 0.0
      %3439 = vmatpush2.msra.mxu0 0.0
      %3440 = vmatprep.subr.mxu0 0.0
      %3441 = vmatpush2.msra.mxu0 0.0
      %3442 = vmatprep.subr.mxu0 0.0
      %3443 = vmatpush2.msra.mxu0 0.0
      %3444 = vmatprep.subr.mxu0 0.0
      %3445 = vmatpush2.msra.mxu0 0.0
      %3446 = vmatprep.mubr.f32.mxu0 0.0
      %3447 = vmatmul.mubr.f32.gmra.mxu0 %v3323
      %v3448 = vpop.f32.mrf.mxu0
      %v3449 = vadd.f32 0.0, %v3448
      %v3450 = vpop.f32.mrf.mxu0
      %3451 = vmatprep.mubr.f32.mxu0 0.0
      %3452 = vmatmul.mubr.f32.gmra.mxu0 %v3326
      %v3453 = vpop.f32.mrf.mxu0
      %v3454 = vadd.f32 0.0, %v3453
      %v3455 = vpop.f32.mrf.mxu0
      %3456 = vmatprep.mubr.f32.mxu0 0.0
      %3457 = vmatmul.mubr.f32.gmra.mxu0 %v3329
      %v3458 = vpop.f32.mrf.mxu0
      %v3459 = vadd.f32 0.0, %v3458
      %v3460 = vpop.f32.mrf.mxu0
      %3461 = vmatprep.mubr.f32.mxu0 0.0
      %3462 = vmatmul.mubr.f32.gmra.mxu0 %v3332
      %v3463 = vpop.f32.mrf.mxu0
      %v3464 = vadd.f32 0.0, %v3463
      %v3465 = vpop.f32.mrf.mxu0
      %3466 = vmatprep.mubr.f32.mxu0 0.0
      %3467 = vmatmul.mubr.f32.gmra.mxu0 %v3335
      %v3468 = vpop.f32.mrf.mxu0
      %v3469 = vadd.f32 0.0, %v3468
      %v3470 = vpop.f32.mrf.mxu0
      %3471 = vmatprep.mubr.f32.mxu0 0.0
      %3472 = vmatmul.mubr.f32.gmra.mxu0 %v3338
      %v3473 = vpop.f32.mrf.mxu0
      %v3474 = vadd.f32 0.0, %v3473
      %v3475 = vpop.f32.mrf.mxu0
      %3476 = vmatprep.mubr.f32.mxu0 0.0
      %3477 = vmatmul.mubr.f32.gmra.mxu0 %v3341
      %v3478 = vpop.f32.mrf.mxu0
      %v3479 = vadd.f32 0.0, %v3478
      %v3480 = vpop.f32.mrf.mxu0
      %3481 = vmatprep.mubr.f32.mxu0 0.0
      %3482 = vmatmul.mubr.f32.gmra.mxu0 %v3344
      %v3483 = vpop.f32.mrf.mxu0
      %v3484 = vadd.f32 0.0, %v3483
      %v3485 = vpop.f32.mrf.mxu0
      %3486 = vmatprep.mubr.f32.mxu0 0.0
      %3487 = vmatmul.mubr.f32.gmra.mxu0 %v3347
      %v3488 = vpop.f32.mrf.mxu0
      %v3489 = vadd.f32 0.0, %v3488
      %v3490 = vpop.f32.mrf.mxu0
      %3491 = vmatprep.mubr.f32.mxu0 0.0
      %3492 = vmatmul.mubr.f32.gmra.mxu0 %v3350
      %v3493 = vpop.f32.mrf.mxu0
      %v3494 = vadd.f32 0.0, %v3493
      %v3495 = vpop.f32.mrf.mxu0
      %3496 = vmatprep.mubr.f32.mxu0 0.0
      %3497 = vmatmul.mubr.f32.gmra.mxu0 %v3353
      %v3498 = vpop.f32.mrf.mxu0
      %v3499 = vadd.f32 0.0, %v3498
      %v3500 = vpop.f32.mrf.mxu0
      %3501 = vmatprep.mubr.f32.mxu0 0.0
      %3502 = vmatmul.mubr.f32.gmra.mxu0 %v3356
      %v3503 = vpop.f32.mrf.mxu0
      %v3504 = vadd.f32 0.0, %v3503
      %v3505 = vpop.f32.mrf.mxu0
      %3506 = vmatprep.mubr.f32.mxu0 0.0
      %3507 = vmatmul.mubr.f32.gmra.mxu0 %v3359
      %v3508 = vpop.f32.mrf.mxu0
      %v3509 = vadd.f32 0.0, %v3508
      %v3510 = vpop.f32.mrf.mxu0
      %3511 = vmatprep.mubr.f32.mxu0 0.0
      %3512 = vmatmul.mubr.f32.gmra.mxu0 %v3362
      %v3513 = vpop.f32.mrf.mxu0
      %v3514 = vadd.f32 0.0, %v3513
      %v3515 = vpop.f32.mrf.mxu0
      %3516 = vmatprep.mubr.f32.mxu0 0.0
      %3517 = vmatmul.mubr.f32.gmra.mxu0 %v3365
      %v3518 = vpop.f32.mrf.mxu0
      %v3519 = vadd.f32 0.0, %v3518
      %v3520 = vpop.f32.mrf.mxu0
      %3521 = vmatprep.mubr.f32.mxu0 0.0
      %3522 = vmatmul.mubr.f32.gmra.mxu0 %v3368
      %v3523 = vpop.f32.mrf.mxu0
      %v3524 = vadd.f32 0.0, %v3523
      %v3525 = vpop.f32.mrf.mxu0
      %3526 = vmatprep.mubr.f32.mxu0 0.0
      %3527 = vmatmul.mubr.f32.gmra.mxu0 %v3371
      %v3528 = vpop.f32.mrf.mxu0
      %v3529 = vadd.f32 0.0, %v3528
      %v3530 = vpop.f32.mrf.mxu0
      %3531 = vmatprep.mubr.f32.mxu0 0.0
      %3532 = vmatmul.mubr.f32.gmra.mxu0 %v3374
      %v3533 = vpop.f32.mrf.mxu0
      %v3534 = vadd.f32 0.0, %v3533
      %v3535 = vpop.f32.mrf.mxu0
      %3536 = vmatprep.mubr.f32.mxu0 0.0
      %3537 = vmatmul.mubr.f32.gmra.mxu0 %v3377
      %v3538 = vpop.f32.mrf.mxu0
      %v3539 = vadd.f32 0.0, %v3538
      %v3540 = vpop.f32.mrf.mxu0
      %3541 = vmatprep.mubr.f32.mxu0 0.0
      %3542 = vmatmul.mubr.f32.gmra.mxu0 %v3380
      %v3543 = vpop.f32.mrf.mxu0
      %v3544 = vadd.f32 0.0, %v3543
      %v3545 = vpop.f32.mrf.mxu0
      %3546 = vdwg.mxu0
      %v3548 = vsel %vm2799, %v3151, 0
      %v3551 = vsel %vm2799, %v3152, 0
      %v3554 = vsel %vm2799, %v3153, 0
      %v3557 = vsel %vm2799, %v3154, 0
      %v3560 = vsel %vm2799, %v3155, 0
      %v3563 = vsel %vm2799, %v3156, 0
      %v3566 = vsel %vm2799, %v3157, 0
      %v3569 = vsel %vm2799, %v3158, 0
      %v3572 = vsel %vm2799, %v3159, 0
      %v3575 = vsel %vm2799, %v3160, 0
      %v3578 = vsel %vm2799, %v3161, 0
      %v3581 = vsel %vm2799, %v3162, 0
      %v3584 = vsel %vm2799, %v3163, 0
      %v3587 = vsel %vm2799, %v3164, 0
      %v3590 = vsel %vm2799, %v3165, 0
      %v3593 = vsel %vm2799, %v3166, 0
      %v3596 = vsel %vm2799, %v3167, 0
      %v3599 = vsel %vm2799, %v3168, 0
      %v3602 = vsel %vm2799, %v3169, 0
      %v3605 = vsel %vm2799, %v3170, 0
      %3607 = vmatprep.subr.mxu0 0.0
      %3608 = vmatpush1.msra.mxu0 0.0
      %3609 = vmatprep.subr.mxu0 0.0
      %3610 = vmatpush1.msra.mxu0 0.0
      %3611 = vmatprep.subr.mxu0 0.0
      %3612 = vmatpush1.msra.mxu0 0.0
      %3613 = vmatprep.subr.mxu0 0.0
      %3614 = vmatpush1.msra.mxu0 0.0
      %3615 = vmatprep.subr.mxu0 0.0
      %3616 = vmatpush1.msra.mxu0 0.0
      %3617 = vmatprep.subr.mxu0 0.0
      %3618 = vmatpush1.msra.mxu0 0.0
      %3619 = vmatprep.subr.mxu0 0.0
      %3620 = vmatpush1.msra.mxu0 0.0
      %3621 = vmatprep.subr.mxu0 0.0
      %3622 = vmatpush1.msra.mxu0 0.0
      %3623 = vmatprep.subr.mxu0 0.0
      %3624 = vmatpush1.msra.mxu0 0.0
      %3625 = vmatprep.subr.mxu0 0.0
      %3626 = vmatpush1.msra.mxu0 0.0
      %3627 = vmatprep.subr.mxu0 0.0
      %3628 = vmatpush1.msra.mxu0 0.0
      %3629 = vmatprep.subr.mxu0 0.0
      %3630 = vmatpush1.msra.mxu0 0.0
      %3631 = vmatprep.subr.mxu0 0.0
      %3632 = vmatpush1.msra.mxu0 0.0
      %3633 = vmatprep.subr.mxu0 0.0
      %3634 = vmatpush1.msra.mxu0 0.0
      %3635 = vmatprep.subr.mxu0 0.0
      %3636 = vmatpush1.msra.mxu0 %v485
      %3637 = vmatprep.subr.mxu0 0.0
      %3638 = vmatpush1.msra.mxu0 %v484
      %3639 = vmatprep.subr.mxu0 0.0
      %3640 = vmatpush2.msra.mxu0 0.0
      %3641 = vmatprep.subr.mxu0 0.0
      %3642 = vmatpush2.msra.mxu0 0.0
      %3643 = vmatprep.subr.mxu0 0.0
      %3644 = vmatpush2.msra.mxu0 0.0
      %3645 = vmatprep.subr.mxu0 0.0
      %3646 = vmatpush2.msra.mxu0 0.0
      %3647 = vmatprep.subr.mxu0 0.0
      %3648 = vmatpush2.msra.mxu0 0.0
      %3649 = vmatprep.subr.mxu0 0.0
      %3650 = vmatpush2.msra.mxu0 0.0
      %3651 = vmatprep.subr.mxu0 0.0
      %3652 = vmatpush2.msra.mxu0 0.0
      %3653 = vmatprep.subr.mxu0 0.0
      %3654 = vmatpush2.msra.mxu0 0.0
      %3655 = vmatprep.subr.mxu0 0.0
      %3656 = vmatpush2.msra.mxu0 0.0
      %3657 = vmatprep.subr.mxu0 0.0
      %3658 = vmatpush2.msra.mxu0 0.0
      %3659 = vmatprep.subr.mxu0 0.0
      %3660 = vmatpush2.msra.mxu0 0.0
      %3661 = vmatprep.subr.mxu0 0.0
      %3662 = vmatpush2.msra.mxu0 0.0
      %3663 = vmatprep.subr.mxu0 0.0
      %3664 = vmatpush2.msra.mxu0 0.0
      %3665 = vmatprep.subr.mxu0 0.0
      %3666 = vmatpush2.msra.mxu0 0.0
      %3667 = vmatprep.subr.mxu0 0.0
      %3668 = vmatpush2.msra.mxu0 0.0
      %3669 = vmatprep.subr.mxu0 0.0
      %3670 = vmatpush2.msra.mxu0 0.0
      %3671 = vmatprep.mubr.f32.mxu0 0.0
      %3672 = vmatmul.mubr.f32.gmra.mxu0 %v3548
      %v3673 = vpop.f32.mrf.mxu0
      %v3674 = vadd.f32 %v3449, %v3673
      %v3675 = vpop.f32.mrf.mxu0
      %3676 = vmatprep.mubr.f32.mxu0 0.0
      %3677 = vmatmul.mubr.f32.gmra.mxu0 %v3551
      %v3678 = vpop.f32.mrf.mxu0
      %v3679 = vadd.f32 %v3454, %v3678
      %v3680 = vpop.f32.mrf.mxu0
      %3681 = vmatprep.mubr.f32.mxu0 0.0
      %3682 = vmatmul.mubr.f32.gmra.mxu0 %v3554
      %v3683 = vpop.f32.mrf.mxu0
      %v3684 = vadd.f32 %v3459, %v3683
      %v3685 = vpop.f32.mrf.mxu0
      %3686 = vmatprep.mubr.f32.mxu0 0.0
      %3687 = vmatmul.mubr.f32.gmra.mxu0 %v3557
      %v3688 = vpop.f32.mrf.mxu0
      %v3689 = vadd.f32 %v3464, %v3688
      %v3690 = vpop.f32.mrf.mxu0
      %3691 = vmatprep.mubr.f32.mxu0 0.0
      %3692 = vmatmul.mubr.f32.gmra.mxu0 %v3560
      %v3693 = vpop.f32.mrf.mxu0
      %v3694 = vadd.f32 %v3469, %v3693
      %v3695 = vpop.f32.mrf.mxu0
      %3696 = vmatprep.mubr.f32.mxu0 0.0
      %3697 = vmatmul.mubr.f32.gmra.mxu0 %v3563
      %v3698 = vpop.f32.mrf.mxu0
      %v3699 = vadd.f32 %v3474, %v3698
      %v3700 = vpop.f32.mrf.mxu0
      %3701 = vmatprep.mubr.f32.mxu0 0.0
      %3702 = vmatmul.mubr.f32.gmra.mxu0 %v3566
      %v3703 = vpop.f32.mrf.mxu0
      %v3704 = vadd.f32 %v3479, %v3703
      %v3705 = vpop.f32.mrf.mxu0
      %3706 = vmatprep.mubr.f32.mxu0 0.0
      %3707 = vmatmul.mubr.f32.gmra.mxu0 %v3569
      %v3708 = vpop.f32.mrf.mxu0
      %v3709 = vadd.f32 %v3484, %v3708
      %v3710 = vpop.f32.mrf.mxu0
      %3711 = vmatprep.mubr.f32.mxu0 0.0
      %3712 = vmatmul.mubr.f32.gmra.mxu0 %v3572
      %v3713 = vpop.f32.mrf.mxu0
      %v3714 = vadd.f32 %v3489, %v3713
      %v3715 = vpop.f32.mrf.mxu0
      %3716 = vmatprep.mubr.f32.mxu0 0.0
      %3717 = vmatmul.mubr.f32.gmra.mxu0 %v3575
      %v3718 = vpop.f32.mrf.mxu0
      %v3719 = vadd.f32 %v3494, %v3718
      %v3720 = vpop.f32.mrf.mxu0
      %3721 = vmatprep.mubr.f32.mxu0 0.0
      %3722 = vmatmul.mubr.f32.gmra.mxu0 %v3578
      %v3723 = vpop.f32.mrf.mxu0
      %v3724 = vadd.f32 %v3499, %v3723
      %v3725 = vpop.f32.mrf.mxu0
      %3726 = vmatprep.mubr.f32.mxu0 0.0
      %3727 = vmatmul.mubr.f32.gmra.mxu0 %v3581
      %v3728 = vpop.f32.mrf.mxu0
      %v3729 = vadd.f32 %v3504, %v3728
      %v3730 = vpop.f32.mrf.mxu0
      %3731 = vmatprep.mubr.f32.mxu0 0.0
      %3732 = vmatmul.mubr.f32.gmra.mxu0 %v3584
      %v3733 = vpop.f32.mrf.mxu0
      %v3734 = vadd.f32 %v3509, %v3733
      %v3735 = vpop.f32.mrf.mxu0
      %3736 = vmatprep.mubr.f32.mxu0 0.0
      %3737 = vmatmul.mubr.f32.gmra.mxu0 %v3587
      %v3738 = vpop.f32.mrf.mxu0
      %v3739 = vadd.f32 %v3514, %v3738
      %v3740 = vpop.f32.mrf.mxu0
      %3741 = vmatprep.mubr.f32.mxu0 0.0
      %3742 = vmatmul.mubr.f32.gmra.mxu0 %v3590
      %v3743 = vpop.f32.mrf.mxu0
      %v3744 = vadd.f32 %v3519, %v3743
      %v3745 = vpop.f32.mrf.mxu0
      %3746 = vmatprep.mubr.f32.mxu0 0.0
      %3747 = vmatmul.mubr.f32.gmra.mxu0 %v3593
      %v3748 = vpop.f32.mrf.mxu0
      %v3749 = vadd.f32 %v3524, %v3748
      %v3750 = vpop.f32.mrf.mxu0
      %3751 = vmatprep.mubr.f32.mxu0 0.0
      %3752 = vmatmul.mubr.f32.gmra.mxu0 %v3596
      %v3753 = vpop.f32.mrf.mxu0
      %v3754 = vadd.f32 %v3529, %v3753
      %v3755 = vpop.f32.mrf.mxu0
      %3756 = vmatprep.mubr.f32.mxu0 0.0
      %3757 = vmatmul.mubr.f32.gmra.mxu0 %v3599
      %v3758 = vpop.f32.mrf.mxu0
      %v3759 = vadd.f32 %v3534, %v3758
      %v3760 = vpop.f32.mrf.mxu0
      %3761 = vmatprep.mubr.f32.mxu0 0.0
      %3762 = vmatmul.mubr.f32.gmra.mxu0 %v3602
      %v3763 = vpop.f32.mrf.mxu0
      %v3764 = vadd.f32 %v3539, %v3763
      %v3765 = vpop.f32.mrf.mxu0
      %3766 = vmatprep.mubr.f32.mxu0 0.0
      %3767 = vmatmul.mubr.f32.gmra.mxu0 %v3605
      %v3768 = vpop.f32.mrf.mxu0
      %v3769 = vadd.f32 %v3544, %v3768
      %v3770 = vpop.f32.mrf.mxu0
      %3771 = vdwg.mxu0
      %v3772 = vmul.f32 %v3674, %v2331
      %v3773 = vmul.f32 %v3679, %v2336
      %v3774 = vmul.f32 %v3684, %v2341
      %v3775 = vmul.f32 %v3689, %v2346
      %v3776 = vmul.f32 %v3694, %v2351
      %v3777 = vmul.f32 %v3699, %v2356
      %v3778 = vmul.f32 %v3704, %v2361
      %v3779 = vmul.f32 %v3709, %v2366
      %v3780 = vmul.f32 %v3714, %v2371
      %v3781 = vmul.f32 %v3719, %v2376
      %v3782 = vmul.f32 %v3724, %v2381
      %v3783 = vmul.f32 %v3729, %v2386
      %v3784 = vmul.f32 %v3734, %v2391
      %v3785 = vmul.f32 %v3739, %v2396
      %v3786 = vmul.f32 %v3744, %v2401
      %v3787 = vmul.f32 %v3749, %v2406
      %v3788 = vmul.f32 %v3754, %v2411
      %v3789 = vmul.f32 %v3759, %v2416
      %v3790 = vmul.f32 %v3764, %v2421
      %v3791 = vmul.f32 %v3769, %v2426
      %3792 = vmatprep.subr.mxu0 0.0
      %3793 = vmatpush1.msra.mxu0 %v403
      %3794 = vmatprep.subr.mxu0 0.0
      %3795 = vmatpush1.msra.mxu0 %v402
      %3796 = vmatprep.subr.mxu0 0.0
      %3797 = vmatpush1.msra.mxu0 %v401
      %3798 = vmatprep.subr.mxu0 0.0
      %3799 = vmatpush1.msra.mxu0 %v400
      %3800 = vmatprep.subr.mxu0 0.0
      %3801 = vmatpush1.msra.mxu0 %v399
      %3802 = vmatprep.subr.mxu0 0.0
      %3803 = vmatpush1.msra.mxu0 %v398
      %3804 = vmatprep.subr.mxu0 0.0
      %3805 = vmatpush1.msra.mxu0 %v397
      %3806 = vmatprep.subr.mxu0 0.0
      %3807 = vmatpush1.msra.mxu0 %v396
      %3808 = vmatprep.subr.mxu0 0.0
      %3809 = vmatpush1.msra.mxu0 %v395
      %3810 = vmatprep.subr.mxu0 0.0
      %3811 = vmatpush1.msra.mxu0 %v394
      %3812 = vmatprep.subr.mxu0 0.0
      %3813 = vmatpush1.msra.mxu0 %v393
      %3814 = vmatprep.subr.mxu0 0.0
      %3815 = vmatpush1.msra.mxu0 %v392
      %3816 = vmatprep.subr.mxu0 0.0
      %3817 = vmatpush1.msra.mxu0 %v391
      %3818 = vmatprep.subr.mxu0 0.0
      %3819 = vmatpush1.msra.mxu0 %v390
      %3820 = vmatprep.subr.mxu0 0.0
      %3821 = vmatpush1.msra.mxu0 %v389
      %3822 = vmatprep.subr.mxu0 0.0
      %3823 = vmatpush1.msra.mxu0 %v388
      %3824 = vmatprep.subr.mxu0 0.0
      %3825 = vmatpush2.msra.mxu0 0.0
      %3826 = vmatprep.subr.mxu0 0.0
      %3827 = vmatpush2.msra.mxu0 0.0
      %3828 = vmatprep.subr.mxu0 0.0
      %3829 = vmatpush2.msra.mxu0 0.0
      %3830 = vmatprep.subr.mxu0 0.0
      %3831 = vmatpush2.msra.mxu0 0.0
      %3832 = vmatprep.subr.mxu0 0.0
      %3833 = vmatpush2.msra.mxu0 0.0
      %3834 = vmatprep.subr.mxu0 0.0
      %3835 = vmatpush2.msra.mxu0 0.0
      %3836 = vmatprep.subr.mxu0 0.0
      %3837 = vmatpush2.msra.mxu0 0.0
      %3838 = vmatprep.subr.mxu0 0.0
      %3839 = vmatpush2.msra.mxu0 0.0
      %3840 = vmatprep.subr.mxu0 0.0
      %3841 = vmatpush2.msra.mxu0 0.0
      %3842 = vmatprep.subr.mxu0 0.0
      %3843 = vmatpush2.msra.mxu0 0.0
      %3844 = vmatprep.subr.mxu0 0.0
      %3845 = vmatpush2.msra.mxu0 0.0
      %3846 = vmatprep.subr.mxu0 0.0
      %3847 = vmatpush2.msra.mxu0 0.0
      %3848 = vmatprep.subr.mxu0 0.0
      %3849 = vmatpush2.msra.mxu0 0.0
      %3850 = vmatprep.subr.mxu0 0.0
      %3851 = vmatpush2.msra.mxu0 0.0
      %3852 = vmatprep.subr.mxu0 0.0
      %3853 = vmatpush2.msra.mxu0 0.0
      %3854 = vmatprep.subr.mxu0 0.0
      %3855 = vmatpush2.msra.mxu0 0.0
      %3856 = vmatprep.mubr.f32.mxu0 0.0
      %3857 = vmatmul.mubr.f32.gmra.mxu0 %v3772
      %v3858 = vpop.f32.mrf.mxu0
      %v3859 = vadd.f32 %v663, %v3858
      %v3860 = vpop.f32.mrf.mxu0
      %3861 = vmatprep.mubr.f32.mxu0 0.0
      %3862 = vmatmul.mubr.f32.gmra.mxu0 %v3773
      %v3863 = vpop.f32.mrf.mxu0
      %v3864 = vadd.f32 %v663, %v3863
      %v3865 = vpop.f32.mrf.mxu0
      %3866 = vmatprep.mubr.f32.mxu0 0.0
      %3867 = vmatmul.mubr.f32.gmra.mxu0 %v3774
      %v3868 = vpop.f32.mrf.mxu0
      %v3869 = vadd.f32 %v663, %v3868
      %v3870 = vpop.f32.mrf.mxu0
      %3871 = vmatprep.mubr.f32.mxu0 0.0
      %3872 = vmatmul.mubr.f32.gmra.mxu0 %v3775
      %v3873 = vpop.f32.mrf.mxu0
      %v3874 = vadd.f32 %v663, %v3873
      %v3875 = vpop.f32.mrf.mxu0
      %3876 = vmatprep.mubr.f32.mxu0 0.0
      %3877 = vmatmul.mubr.f32.gmra.mxu0 %v3776
      %v3878 = vpop.f32.mrf.mxu0
      %v3879 = vadd.f32 %v663, %v3878
      %v3880 = vpop.f32.mrf.mxu0
      %3881 = vmatprep.mubr.f32.mxu0 0.0
      %3882 = vmatmul.mubr.f32.gmra.mxu0 %v3777
      %v3883 = vpop.f32.mrf.mxu0
      %v3884 = vadd.f32 %v663, %v3883
      %v3885 = vpop.f32.mrf.mxu0
      %3886 = vmatprep.mubr.f32.mxu0 0.0
      %3887 = vmatmul.mubr.f32.gmra.mxu0 %v3778
      %v3888 = vpop.f32.mrf.mxu0
      %v3889 = vadd.f32 %v663, %v3888
      %v3890 = vpop.f32.mrf.mxu0
      %3891 = vmatprep.mubr.f32.mxu0 0.0
      %3892 = vmatmul.mubr.f32.gmra.mxu0 %v3779
      %v3893 = vpop.f32.mrf.mxu0
      %v3894 = vadd.f32 %v663, %v3893
      %v3895 = vpop.f32.mrf.mxu0
      %3896 = vmatprep.mubr.f32.mxu0 0.0
      %3897 = vmatmul.mubr.f32.gmra.mxu0 %v3780
      %v3898 = vpop.f32.mrf.mxu0
      %v3899 = vadd.f32 %v663, %v3898
      %v3900 = vpop.f32.mrf.mxu0
      %3901 = vmatprep.mubr.f32.mxu0 0.0
      %3902 = vmatmul.mubr.f32.gmra.mxu0 %v3781
      %v3903 = vpop.f32.mrf.mxu0
      %v3904 = vadd.f32 %v663, %v3903
      %v3905 = vpop.f32.mrf.mxu0
      %3906 = vmatprep.mubr.f32.mxu0 0.0
      %3907 = vmatmul.mubr.f32.gmra.mxu0 %v3782
      %v3908 = vpop.f32.mrf.mxu0
      %v3909 = vadd.f32 %v663, %v3908
      %v3910 = vpop.f32.mrf.mxu0
      %3911 = vmatprep.mubr.f32.mxu0 0.0
      %3912 = vmatmul.mubr.f32.gmra.mxu0 %v3783
      %v3913 = vpop.f32.mrf.mxu0
      %v3914 = vadd.f32 %v663, %v3913
      %v3915 = vpop.f32.mrf.mxu0
      %3916 = vmatprep.mubr.f32.mxu0 0.0
      %3917 = vmatmul.mubr.f32.gmra.mxu0 %v3784
      %v3918 = vpop.f32.mrf.mxu0
      %v3919 = vadd.f32 %v663, %v3918
      %v3920 = vpop.f32.mrf.mxu0
      %3921 = vmatprep.mubr.f32.mxu0 0.0
      %3922 = vmatmul.mubr.f32.gmra.mxu0 %v3785
      %v3923 = vpop.f32.mrf.mxu0
      %v3924 = vadd.f32 %v663, %v3923
      %v3925 = vpop.f32.mrf.mxu0
      %3926 = vmatprep.mubr.f32.mxu0 0.0
      %3927 = vmatmul.mubr.f32.gmra.mxu0 %v3786
      %v3928 = vpop.f32.mrf.mxu0
      %v3929 = vadd.f32 %v663, %v3928
      %v3930 = vpop.f32.mrf.mxu0
      %3931 = vmatprep.mubr.f32.mxu0 0.0
      %3932 = vmatmul.mubr.f32.gmra.mxu0 %v3787
      %v3933 = vpop.f32.mrf.mxu0
      %v3934 = vadd.f32 %v663, %v3933
      %v3935 = vpop.f32.mrf.mxu0
      %3936 = vmatprep.mubr.f32.mxu0 0.0
      %3937 = vmatmul.mubr.f32.gmra.mxu0 %v3788
      %v3938 = vpop.f32.mrf.mxu0
      %v3939 = vadd.f32 %v663, %v3938
      %v3940 = vpop.f32.mrf.mxu0
      %3941 = vmatprep.mubr.f32.mxu0 0.0
      %3942 = vmatmul.mubr.f32.gmra.mxu0 %v3789
      %v3943 = vpop.f32.mrf.mxu0
      %v3944 = vadd.f32 %v663, %v3943
      %v3945 = vpop.f32.mrf.mxu0
      %3946 = vmatprep.mubr.f32.mxu0 0.0
      %3947 = vmatmul.mubr.f32.gmra.mxu0 %v3790
      %v3948 = vpop.f32.mrf.mxu0
      %v3949 = vadd.f32 %v663, %v3948
      %v3950 = vpop.f32.mrf.mxu0
      %3951 = vmatprep.mubr.f32.mxu0 0.0
      %3952 = vmatmul.mubr.f32.gmra.mxu0 %v3791
      %v3953 = vpop.f32.mrf.mxu0
      %v3954 = vadd.f32 %v663, %v3953
      %v3955 = vpop.f32.mrf.mxu0
      %3956 = vdwg.mxu0
      %v3957 = vadd.f32 %v3859, %v272
      %v3958 = vadd.f32 %v3864, %v273
      %v3959 = vadd.f32 %v3869, %v274
      %v3960 = vadd.f32 %v3874, %v275
      %v3961 = vadd.f32 %v3879, %v276
      %v3962 = vadd.f32 %v3884, %v277
      %v3963 = vadd.f32 %v3889, %v278
      %v3964 = vadd.f32 %v3894, %v279
      %v3965 = vadd.f32 %v3899, %v280
      %v3966 = vadd.f32 %v3904, %v281
      %v3967 = vadd.f32 %v3909, %v282
      %v3968 = vadd.f32 %v3914, %v283
      %v3969 = vadd.f32 %v3919, %v284
      %v3970 = vadd.f32 %v3924, %v285
      %v3971 = vadd.f32 %v3929, %v286
      %v3972 = vadd.f32 %v3934, %v287
      %v3973 = vadd.f32 %v3939, %v288
      %v3974 = vadd.f32 %v3944, %v289
      %v3975 = vadd.f32 %v3949, %v290
      %v3976 = vadd.f32 %v3954, %v291
      %3977 = vmatprep.subr.mxu0 0.0
      %3978 = vmatpush1.msra.mxu0 %v517
      %3979 = vmatprep.subr.mxu0 0.0
      %3980 = vmatpush1.msra.mxu0 %v516
      %3981 = vmatprep.subr.mxu0 0.0
      %3982 = vmatpush1.msra.mxu0 %v515
      %3983 = vmatprep.subr.mxu0 0.0
      %3984 = vmatpush1.msra.mxu0 %v514
      %3985 = vmatprep.subr.mxu0 0.0
      %3986 = vmatpush1.msra.mxu0 %v513
      %3987 = vmatprep.subr.mxu0 0.0
      %3988 = vmatpush1.msra.mxu0 %v512
      %3989 = vmatprep.subr.mxu0 0.0
      %3990 = vmatpush1.msra.mxu0 %v511
      %3991 = vmatprep.subr.mxu0 0.0
      %3992 = vmatpush1.msra.mxu0 %v510
      %3993 = vmatprep.subr.mxu0 0.0
      %3994 = vmatpush1.msra.mxu0 %v509
      %3995 = vmatprep.subr.mxu0 0.0
      %3996 = vmatpush1.msra.mxu0 %v508
      %3997 = vmatprep.subr.mxu0 0.0
      %3998 = vmatpush1.msra.mxu0 %v507
      %3999 = vmatprep.subr.mxu0 0.0
      %4000 = vmatpush1.msra.mxu0 %v506
      %4001 = vmatprep.subr.mxu0 0.0
      %4002 = vmatpush1.msra.mxu0 %v505
      %4003 = vmatprep.subr.mxu0 0.0
      %4004 = vmatpush1.msra.mxu0 %v504
      %4005 = vmatprep.subr.mxu0 0.0
      %4006 = vmatpush1.msra.mxu0 %v503
      %4007 = vmatprep.subr.mxu0 0.0
      %4008 = vmatpush1.msra.mxu0 %v502
      %4009 = vmatprep.subr.mxu0 0.0
      %4010 = vmatpush2.msra.mxu0 0.0
      %4011 = vmatprep.subr.mxu0 0.0
      %4012 = vmatpush2.msra.mxu0 0.0
      %4013 = vmatprep.subr.mxu0 0.0
      %4014 = vmatpush2.msra.mxu0 0.0
      %4015 = vmatprep.subr.mxu0 0.0
      %4016 = vmatpush2.msra.mxu0 0.0
      %4017 = vmatprep.subr.mxu0 0.0
      %4018 = vmatpush2.msra.mxu0 0.0
      %4019 = vmatprep.subr.mxu0 0.0
      %4020 = vmatpush2.msra.mxu0 0.0
      %4021 = vmatprep.subr.mxu0 0.0
      %4022 = vmatpush2.msra.mxu0 0.0
      %4023 = vmatprep.subr.mxu0 0.0
      %4024 = vmatpush2.msra.mxu0 0.0
      %4025 = vmatprep.subr.mxu0 0.0
      %4026 = vmatpush2.msra.mxu0 0.0
      %4027 = vmatprep.subr.mxu0 0.0
      %4028 = vmatpush2.msra.mxu0 0.0
      %4029 = vmatprep.subr.mxu0 0.0
      %4030 = vmatpush2.msra.mxu0 0.0
      %4031 = vmatprep.subr.mxu0 0.0
      %4032 = vmatpush2.msra.mxu0 0.0
      %4033 = vmatprep.subr.mxu0 0.0
      %4034 = vmatpush2.msra.mxu0 0.0
      %4035 = vmatprep.subr.mxu0 0.0
      %4036 = vmatpush2.msra.mxu0 0.0
      %4037 = vmatprep.subr.mxu0 0.0
      %4038 = vmatpush2.msra.mxu0 0.0
      %4039 = vmatprep.subr.mxu0 0.0
      %4040 = vmatpush2.msra.mxu0 0.0
      %4041 = vmatprep.mubr.f32.mxu0 0.0
      %4042 = vmatmul.mubr.f32.gmra.mxu0 %v3957
      %v4043 = vpop.f32.mrf.mxu0
      %v4044 = vadd.f32 0.0, %v4043
      %v4045 = vpop.f32.mrf.mxu0
      %4046 = vmatprep.mubr.f32.mxu0 0.0
      %4047 = vmatmul.mubr.f32.gmra.mxu0 %v3958
      %v4048 = vpop.f32.mrf.mxu0
      %v4049 = vadd.f32 0.0, %v4048
      %v4050 = vpop.f32.mrf.mxu0
      %4051 = vmatprep.mubr.f32.mxu0 0.0
      %4052 = vmatmul.mubr.f32.gmra.mxu0 %v3959
      %v4053 = vpop.f32.mrf.mxu0
      %v4054 = vadd.f32 0.0, %v4053
      %v4055 = vpop.f32.mrf.mxu0
      %4056 = vmatprep.mubr.f32.mxu0 0.0
      %4057 = vmatmul.mubr.f32.gmra.mxu0 %v3960
      %v4058 = vpop.f32.mrf.mxu0
      %v4059 = vadd.f32 0.0, %v4058
      %v4060 = vpop.f32.mrf.mxu0
      %4061 = vmatprep.mubr.f32.mxu0 0.0
      %4062 = vmatmul.mubr.f32.gmra.mxu0 %v3961
      %v4063 = vpop.f32.mrf.mxu0
      %v4064 = vadd.f32 0.0, %v4063
      %v4065 = vpop.f32.mrf.mxu0
      %4066 = vmatprep.mubr.f32.mxu0 0.0
      %4067 = vmatmul.mubr.f32.gmra.mxu0 %v3962
      %v4068 = vpop.f32.mrf.mxu0
      %v4069 = vadd.f32 0.0, %v4068
      %v4070 = vpop.f32.mrf.mxu0
      %4071 = vmatprep.mubr.f32.mxu0 0.0
      %4072 = vmatmul.mubr.f32.gmra.mxu0 %v3963
      %v4073 = vpop.f32.mrf.mxu0
      %v4074 = vadd.f32 0.0, %v4073
      %v4075 = vpop.f32.mrf.mxu0
      %4076 = vmatprep.mubr.f32.mxu0 0.0
      %4077 = vmatmul.mubr.f32.gmra.mxu0 %v3964
      %v4078 = vpop.f32.mrf.mxu0
      %v4079 = vadd.f32 0.0, %v4078
      %v4080 = vpop.f32.mrf.mxu0
      %4081 = vmatprep.mubr.f32.mxu0 0.0
      %4082 = vmatmul.mubr.f32.gmra.mxu0 %v3965
      %v4083 = vpop.f32.mrf.mxu0
      %v4084 = vadd.f32 0.0, %v4083
      %v4085 = vpop.f32.mrf.mxu0
      %4086 = vmatprep.mubr.f32.mxu0 0.0
      %4087 = vmatmul.mubr.f32.gmra.mxu0 %v3966
      %v4088 = vpop.f32.mrf.mxu0
      %v4089 = vadd.f32 0.0, %v4088
      %v4090 = vpop.f32.mrf.mxu0
      %4091 = vmatprep.mubr.f32.mxu0 0.0
      %4092 = vmatmul.mubr.f32.gmra.mxu0 %v3967
      %v4093 = vpop.f32.mrf.mxu0
      %v4094 = vadd.f32 0.0, %v4093
      %v4095 = vpop.f32.mrf.mxu0
      %4096 = vmatprep.mubr.f32.mxu0 0.0
      %4097 = vmatmul.mubr.f32.gmra.mxu0 %v3968
      %v4098 = vpop.f32.mrf.mxu0
      %v4099 = vadd.f32 0.0, %v4098
      %v4100 = vpop.f32.mrf.mxu0
      %4101 = vmatprep.mubr.f32.mxu0 0.0
      %4102 = vmatmul.mubr.f32.gmra.mxu0 %v3969
      %v4103 = vpop.f32.mrf.mxu0
      %v4104 = vadd.f32 0.0, %v4103
      %v4105 = vpop.f32.mrf.mxu0
      %4106 = vmatprep.mubr.f32.mxu0 0.0
      %4107 = vmatmul.mubr.f32.gmra.mxu0 %v3970
      %v4108 = vpop.f32.mrf.mxu0
      %v4109 = vadd.f32 0.0, %v4108
      %v4110 = vpop.f32.mrf.mxu0
      %4111 = vmatprep.mubr.f32.mxu0 0.0
      %4112 = vmatmul.mubr.f32.gmra.mxu0 %v3971
      %v4113 = vpop.f32.mrf.mxu0
      %v4114 = vadd.f32 0.0, %v4113
      %v4115 = vpop.f32.mrf.mxu0
      %4116 = vmatprep.mubr.f32.mxu0 0.0
      %4117 = vmatmul.mubr.f32.gmra.mxu0 %v3972
      %v4118 = vpop.f32.mrf.mxu0
      %v4119 = vadd.f32 0.0, %v4118
      %v4120 = vpop.f32.mrf.mxu0
      %4121 = vmatprep.mubr.f32.mxu0 0.0
      %4122 = vmatmul.mubr.f32.gmra.mxu0 %v3973
      %v4123 = vpop.f32.mrf.mxu0
      %v4124 = vadd.f32 0.0, %v4123
      %v4125 = vpop.f32.mrf.mxu0
      %4126 = vmatprep.mubr.f32.mxu0 0.0
      %4127 = vmatmul.mubr.f32.gmra.mxu0 %v3974
      %v4128 = vpop.f32.mrf.mxu0
      %v4129 = vadd.f32 0.0, %v4128
      %v4130 = vpop.f32.mrf.mxu0
      %4131 = vmatprep.mubr.f32.mxu0 0.0
      %4132 = vmatmul.mubr.f32.gmra.mxu0 %v3975
      %v4133 = vpop.f32.mrf.mxu0
      %v4134 = vadd.f32 0.0, %v4133
      %v4135 = vpop.f32.mrf.mxu0
      %4136 = vmatprep.mubr.f32.mxu0 0.0
      %4137 = vmatmul.mubr.f32.gmra.mxu0 %v3976
      %v4138 = vpop.f32.mrf.mxu0
      %v4139 = vadd.f32 0.0, %v4138
      %v4140 = vpop.f32.mrf.mxu0
      %4141 = vdwg.mxu0
      %v4142 = vsub.f32 %v3957, %v4044
      %v4143 = vsub.f32 %v3958, %v4049
      %v4144 = vsub.f32 %v3959, %v4054
      %v4145 = vsub.f32 %v3960, %v4059
      %v4146 = vsub.f32 %v3961, %v4064
      %v4147 = vsub.f32 %v3962, %v4069
      %v4148 = vsub.f32 %v3963, %v4074
      %v4149 = vsub.f32 %v3964, %v4079
      %v4150 = vsub.f32 %v3965, %v4084
      %v4151 = vsub.f32 %v3966, %v4089
      %v4152 = vsub.f32 %v3967, %v4094
      %v4153 = vsub.f32 %v3968, %v4099
      %v4154 = vsub.f32 %v3969, %v4104
      %v4155 = vsub.f32 %v3970, %v4109
      %v4156 = vsub.f32 %v3971, %v4114
      %v4157 = vsub.f32 %v3972, %v4119
      %v4158 = vsub.f32 %v3973, %v4124
      %v4159 = vsub.f32 %v3974, %v4129
      %v4160 = vsub.f32 %v3975, %v4134
      %v4161 = vsub.f32 %v3976, %v4139
      %v4162 = vmul.f32 %v4142, %v4142
      %v4163 = vmul.f32 %v4143, %v4143
      %v4164 = vmul.f32 %v4144, %v4144
      %v4165 = vmul.f32 %v4145, %v4145
      %v4166 = vmul.f32 %v4146, %v4146
      %v4167 = vmul.f32 %v4147, %v4147
      %v4168 = vmul.f32 %v4148, %v4148
      %v4169 = vmul.f32 %v4149, %v4149
      %v4170 = vmul.f32 %v4150, %v4150
      %v4171 = vmul.f32 %v4151, %v4151
      %v4172 = vmul.f32 %v4152, %v4152
      %v4173 = vmul.f32 %v4153, %v4153
      %v4174 = vmul.f32 %v4154, %v4154
      %v4175 = vmul.f32 %v4155, %v4155
      %v4176 = vmul.f32 %v4156, %v4156
      %v4177 = vmul.f32 %v4157, %v4157
      %v4178 = vmul.f32 %v4158, %v4158
      %v4179 = vmul.f32 %v4159, %v4159
      %v4180 = vmul.f32 %v4160, %v4160
      %v4181 = vmul.f32 %v4161, %v4161
      %4182 = vmatprep.subr.mxu0 0.0
      %4183 = vmatpush1.msra.mxu0 %v517
      %4184 = vmatprep.subr.mxu0 0.0
      %4185 = vmatpush1.msra.mxu0 %v516
      %4186 = vmatprep.subr.mxu0 0.0
      %4187 = vmatpush1.msra.mxu0 %v515
      %4188 = vmatprep.subr.mxu0 0.0
      %4189 = vmatpush1.msra.mxu0 %v514
      %4190 = vmatprep.subr.mxu0 0.0
      %4191 = vmatpush1.msra.mxu0 %v513
      %4192 = vmatprep.subr.mxu0 0.0
      %4193 = vmatpush1.msra.mxu0 %v512
      %4194 = vmatprep.subr.mxu0 0.0
      %4195 = vmatpush1.msra.mxu0 %v511
      %4196 = vmatprep.subr.mxu0 0.0
      %4197 = vmatpush1.msra.mxu0 %v510
      %4198 = vmatprep.subr.mxu0 0.0
      %4199 = vmatpush1.msra.mxu0 %v509
      %4200 = vmatprep.subr.mxu0 0.0
      %4201 = vmatpush1.msra.mxu0 %v508
      %4202 = vmatprep.subr.mxu0 0.0
      %4203 = vmatpush1.msra.mxu0 %v507
      %4204 = vmatprep.subr.mxu0 0.0
      %4205 = vmatpush1.msra.mxu0 %v506
      %4206 = vmatprep.subr.mxu0 0.0
      %4207 = vmatpush1.msra.mxu0 %v505
      %4208 = vmatprep.subr.mxu0 0.0
      %4209 = vmatpush1.msra.mxu0 %v504
      %4210 = vmatprep.subr.mxu0 0.0
      %4211 = vmatpush1.msra.mxu0 %v503
      %4212 = vmatprep.subr.mxu0 0.0
      %4213 = vmatpush1.msra.mxu0 %v502
      %4214 = vmatprep.subr.mxu0 0.0
      %4215 = vmatpush2.msra.mxu0 0.0
      %4216 = vmatprep.subr.mxu0 0.0
      %4217 = vmatpush2.msra.mxu0 0.0
      %4218 = vmatprep.subr.mxu0 0.0
      %4219 = vmatpush2.msra.mxu0 0.0
      %4220 = vmatprep.subr.mxu0 0.0
      %4221 = vmatpush2.msra.mxu0 0.0
      %4222 = vmatprep.subr.mxu0 0.0
      %4223 = vmatpush2.msra.mxu0 0.0
      %4224 = vmatprep.subr.mxu0 0.0
      %4225 = vmatpush2.msra.mxu0 0.0
      %4226 = vmatprep.subr.mxu0 0.0
      %4227 = vmatpush2.msra.mxu0 0.0
      %4228 = vmatprep.subr.mxu0 0.0
      %4229 = vmatpush2.msra.mxu0 0.0
      %4230 = vmatprep.subr.mxu0 0.0
      %4231 = vmatpush2.msra.mxu0 0.0
      %4232 = vmatprep.subr.mxu0 0.0
      %4233 = vmatpush2.msra.mxu0 0.0
      %4234 = vmatprep.subr.mxu0 0.0
      %4235 = vmatpush2.msra.mxu0 0.0
      %4236 = vmatprep.subr.mxu0 0.0
      %4237 = vmatpush2.msra.mxu0 0.0
      %4238 = vmatprep.subr.mxu0 0.0
      %4239 = vmatpush2.msra.mxu0 0.0
      %4240 = vmatprep.subr.mxu0 0.0
      %4241 = vmatpush2.msra.mxu0 0.0
      %4242 = vmatprep.subr.mxu0 0.0
      %4243 = vmatpush2.msra.mxu0 0.0
      %4244 = vmatprep.subr.mxu0 0.0
      %4245 = vmatpush2.msra.mxu0 0.0
      %4246 = vmatprep.mubr.f32.mxu0 0.0
      %4247 = vmatmul.mubr.f32.gmra.mxu0 %v4162
      %v4248 = vpop.f32.mrf.mxu0
      %v4249 = vadd.f32 1e-12, %v4248
      %v4250 = vpop.f32.mrf.mxu0
      %4251 = vmatprep.mubr.f32.mxu0 0.0
      %4252 = vmatmul.mubr.f32.gmra.mxu0 %v4163
      %v4253 = vpop.f32.mrf.mxu0
      %v4254 = vadd.f32 1e-12, %v4253
      %v4255 = vpop.f32.mrf.mxu0
      %4256 = vmatprep.mubr.f32.mxu0 0.0
      %4257 = vmatmul.mubr.f32.gmra.mxu0 %v4164
      %v4258 = vpop.f32.mrf.mxu0
      %v4259 = vadd.f32 1e-12, %v4258
      %v4260 = vpop.f32.mrf.mxu0
      %4261 = vmatprep.mubr.f32.mxu0 0.0
      %4262 = vmatmul.mubr.f32.gmra.mxu0 %v4165
      %v4263 = vpop.f32.mrf.mxu0
      %v4264 = vadd.f32 1e-12, %v4263
      %v4265 = vpop.f32.mrf.mxu0
      %4266 = vmatprep.mubr.f32.mxu0 0.0
      %4267 = vmatmul.mubr.f32.gmra.mxu0 %v4166
      %v4268 = vpop.f32.mrf.mxu0
      %v4269 = vadd.f32 1e-12, %v4268
      %v4270 = vpop.f32.mrf.mxu0
      %4271 = vmatprep.mubr.f32.mxu0 0.0
      %4272 = vmatmul.mubr.f32.gmra.mxu0 %v4167
      %v4273 = vpop.f32.mrf.mxu0
      %v4274 = vadd.f32 1e-12, %v4273
      %v4275 = vpop.f32.mrf.mxu0
      %4276 = vmatprep.mubr.f32.mxu0 0.0
      %4277 = vmatmul.mubr.f32.gmra.mxu0 %v4168
      %v4278 = vpop.f32.mrf.mxu0
      %v4279 = vadd.f32 1e-12, %v4278
      %v4280 = vpop.f32.mrf.mxu0
      %4281 = vmatprep.mubr.f32.mxu0 0.0
      %4282 = vmatmul.mubr.f32.gmra.mxu0 %v4169
      %v4283 = vpop.f32.mrf.mxu0
      %v4284 = vadd.f32 1e-12, %v4283
      %v4285 = vpop.f32.mrf.mxu0
      %4286 = vmatprep.mubr.f32.mxu0 0.0
      %4287 = vmatmul.mubr.f32.gmra.mxu0 %v4170
      %v4288 = vpop.f32.mrf.mxu0
      %v4289 = vadd.f32 1e-12, %v4288
      %v4290 = vpop.f32.mrf.mxu0
      %4291 = vmatprep.mubr.f32.mxu0 0.0
      %4292 = vmatmul.mubr.f32.gmra.mxu0 %v4171
      %v4293 = vpop.f32.mrf.mxu0
      %v4294 = vadd.f32 1e-12, %v4293
      %v4295 = vpop.f32.mrf.mxu0
      %4296 = vmatprep.mubr.f32.mxu0 0.0
      %4297 = vmatmul.mubr.f32.gmra.mxu0 %v4172
      %v4298 = vpop.f32.mrf.mxu0
      %v4299 = vadd.f32 1e-12, %v4298
      %v4300 = vpop.f32.mrf.mxu0
      %4301 = vmatprep.mubr.f32.mxu0 0.0
      %4302 = vmatmul.mubr.f32.gmra.mxu0 %v4173
      %v4303 = vpop.f32.mrf.mxu0
      %v4304 = vadd.f32 1e-12, %v4303
      %v4305 = vpop.f32.mrf.mxu0
      %4306 = vmatprep.mubr.f32.mxu0 0.0
      %4307 = vmatmul.mubr.f32.gmra.mxu0 %v4174
      %v4308 = vpop.f32.mrf.mxu0
      %v4309 = vadd.f32 1e-12, %v4308
      %v4310 = vpop.f32.mrf.mxu0
      %4311 = vmatprep.mubr.f32.mxu0 0.0
      %4312 = vmatmul.mubr.f32.gmra.mxu0 %v4175
      %v4313 = vpop.f32.mrf.mxu0
      %v4314 = vadd.f32 1e-12, %v4313
      %v4315 = vpop.f32.mrf.mxu0
      %4316 = vmatprep.mubr.f32.mxu0 0.0
      %4317 = vmatmul.mubr.f32.gmra.mxu0 %v4176
      %v4318 = vpop.f32.mrf.mxu0
      %v4319 = vadd.f32 1e-12, %v4318
      %v4320 = vpop.f32.mrf.mxu0
      %4321 = vmatprep.mubr.f32.mxu0 0.0
      %4322 = vmatmul.mubr.f32.gmra.mxu0 %v4177
      %v4323 = vpop.f32.mrf.mxu0
      %v4324 = vadd.f32 1e-12, %v4323
      %v4325 = vpop.f32.mrf.mxu0
      %4326 = vmatprep.mubr.f32.mxu0 0.0
      %4327 = vmatmul.mubr.f32.gmra.mxu0 %v4178
      %v4328 = vpop.f32.mrf.mxu0
      %v4329 = vadd.f32 1e-12, %v4328
      %v4330 = vpop.f32.mrf.mxu0
      %4331 = vmatprep.mubr.f32.mxu0 0.0
      %4332 = vmatmul.mubr.f32.gmra.mxu0 %v4179
      %v4333 = vpop.f32.mrf.mxu0
      %v4334 = vadd.f32 1e-12, %v4333
      %v4335 = vpop.f32.mrf.mxu0
      %4336 = vmatprep.mubr.f32.mxu0 0.0
      %4337 = vmatmul.mubr.f32.gmra.mxu0 %v4180
      %v4338 = vpop.f32.mrf.mxu0
      %v4339 = vadd.f32 1e-12, %v4338
      %v4340 = vpop.f32.mrf.mxu0
      %4341 = vmatprep.mubr.f32.mxu0 0.0
      %4342 = vmatmul.mubr.f32.gmra.mxu0 %v4181
      %v4343 = vpop.f32.mrf.mxu0
      %v4344 = vadd.f32 1e-12, %v4343
      %v4345 = vpop.f32.mrf.mxu0
      %4346 = vdwg.mxu0
      %v4347 = vrsqrt.pop %v4249
      %v4348 = vrsqrt.pop %v4254
      %v4349 = vrsqrt.pop %v4259
      %v4350 = vrsqrt.pop %v4264
      %v4351 = vrsqrt.pop %v4269
      %v4352 = vrsqrt.pop %v4274
      %v4353 = vrsqrt.pop %v4279
      %v4354 = vrsqrt.pop %v4284
      %v4355 = vrsqrt.pop %v4289
      %v4356 = vrsqrt.pop %v4294
      %v4357 = vrsqrt.pop %v4299
      %v4358 = vrsqrt.pop %v4304
      %v4359 = vrsqrt.pop %v4309
      %v4360 = vrsqrt.pop %v4314
      %v4361 = vrsqrt.pop %v4319
      %v4362 = vrsqrt.pop %v4324
      %v4363 = vrsqrt.pop %v4329
      %v4364 = vrsqrt.pop %v4334
      %v4365 = vrsqrt.pop %v4339
      %v4366 = vrsqrt.pop %v4344
      %v4367 = vmul.f32 %v4142, %v4347
      %v4368 = vmul.f32 %v4143, %v4348
      %v4369 = vmul.f32 %v4144, %v4349
      %v4370 = vmul.f32 %v4145, %v4350
      %v4371 = vmul.f32 %v4146, %v4351
      %v4372 = vmul.f32 %v4147, %v4352
      %v4373 = vmul.f32 %v4148, %v4353
      %v4374 = vmul.f32 %v4149, %v4354
      %v4375 = vmul.f32 %v4150, %v4355
      %v4376 = vmul.f32 %v4151, %v4356
      %v4377 = vmul.f32 %v4152, %v4357
      %v4378 = vmul.f32 %v4153, %v4358
      %v4379 = vmul.f32 %v4154, %v4359
      %v4380 = vmul.f32 %v4155, %v4360
      %v4381 = vmul.f32 %v4156, %v4361
      %v4382 = vmul.f32 %v4157, %v4362
      %v4383 = vmul.f32 %v4158, %v4363
      %v4384 = vmul.f32 %v4159, %v4364
      %v4385 = vmul.f32 %v4160, %v4365
      %v4386 = vmul.f32 %v4161, %v4366
      %v4387 = vmul.f32 %v4367, %v669
      %v4388 = vmul.f32 %v4368, %v669
      %v4389 = vmul.f32 %v4369, %v669
      %v4390 = vmul.f32 %v4370, %v669
      %v4391 = vmul.f32 %v4371, %v669
      %v4392 = vmul.f32 %v4372, %v669
      %v4393 = vmul.f32 %v4373, %v669
      %v4394 = vmul.f32 %v4374, %v669
      %v4395 = vmul.f32 %v4375, %v669
      %v4396 = vmul.f32 %v4376, %v669
      %v4397 = vmul.f32 %v4377, %v669
      %v4398 = vmul.f32 %v4378, %v669
      %v4399 = vmul.f32 %v4379, %v669
      %v4400 = vmul.f32 %v4380, %v669
      %v4401 = vmul.f32 %v4381, %v669
      %v4402 = vmul.f32 %v4382, %v669
      %v4403 = vmul.f32 %v4383, %v669
      %v4404 = vmul.f32 %v4384, %v669
      %v4405 = vmul.f32 %v4385, %v669
      %v4406 = vmul.f32 %v4386, %v669
      %v4407 = vadd.f32 %v4387, %v670
      %v4408 = vadd.f32 %v4388, %v670
      %v4409 = vadd.f32 %v4389, %v670
      %v4410 = vadd.f32 %v4390, %v670
      %v4411 = vadd.f32 %v4391, %v670
      %v4412 = vadd.f32 %v4392, %v670
      %v4413 = vadd.f32 %v4393, %v670
      %v4414 = vadd.f32 %v4394, %v670
      %v4415 = vadd.f32 %v4395, %v670
      %v4416 = vadd.f32 %v4396, %v670
      %v4417 = vadd.f32 %v4397, %v670
      %v4418 = vadd.f32 %v4398, %v670
      %v4419 = vadd.f32 %v4399, %v670
      %v4420 = vadd.f32 %v4400, %v670
      %v4421 = vadd.f32 %v4401, %v670
      %v4422 = vadd.f32 %v4402, %v670
      %v4423 = vadd.f32 %v4403, %v670
      %v4424 = vadd.f32 %v4404, %v670
      %v4425 = vadd.f32 %v4405, %v670
      %v4426 = vadd.f32 %v4406, %v670
      %v4428 = vlaneseq
      %v4429 = vshrl.u32 %v4428, 7
      %v4430 = vsub.s32 0, %v4429
      %v4431 = vrot.slane %v667, %v4430
      %v4432 = vlaneseq
      %v4433 = vshrl.u32 %v4432, 7
      %v4434 = vsub.s32 1, %v4433
      %v4435 = vrot.slane %v667, %v4434
      %4438 = vmatprep.subr.mxu0 %v435
      %4439 = vmatpush1.msra.mxu0 %v434
      %4440 = vmatprep.subr.mxu0 %v433
      %4441 = vmatpush1.msra.mxu0 %v432
      %4442 = vmatprep.subr.mxu0 %v431
      %4443 = vmatpush1.msra.mxu0 %v430
      %4444 = vmatprep.subr.mxu0 %v429
      %4445 = vmatpush1.msra.mxu0 %v428
      %4446 = vmatprep.subr.mxu0 %v427
      %4447 = vmatpush1.msra.mxu0 %v426
      %4448 = vmatprep.subr.mxu0 %v425
      %4449 = vmatpush1.msra.mxu0 %v424
      %4450 = vmatprep.subr.mxu0 %v423
      %4451 = vmatpush1.msra.mxu0 %v422
      %4452 = vmatprep.subr.mxu0 %v421
      %4453 = vmatpush1.msra.mxu0 %v420
      %4454 = vmatprep.subr.mxu0 %v419
      %4455 = vmatpush1.msra.mxu0 %v418
      %4456 = vmatprep.subr.mxu0 %v417
      %4457 = vmatpush1.msra.mxu0 %v416
      %4458 = vmatprep.subr.mxu0 %v415
      %4459 = vmatpush1.msra.mxu0 %v414
      %4460 = vmatprep.subr.mxu0 %v413
      %4461 = vmatpush1.msra.mxu0 %v412
      %4462 = vmatprep.subr.mxu0 %v411
      %4463 = vmatpush1.msra.mxu0 %v410
      %4464 = vmatprep.subr.mxu0 %v409
      %4465 = vmatpush1.msra.mxu0 %v408
      %4466 = vmatprep.subr.mxu0 %v407
      %4467 = vmatpush1.msra.mxu0 %v406
      %4468 = vmatprep.subr.mxu0 %v405
      %4469 = vmatpush1.msra.mxu0 %v404
      %4470 = vmatprep.subr.mxu0 0.0
      %4471 = vmatpush2.msra.mxu0 0.0
      %4472 = vmatprep.subr.mxu0 0.0
      %4473 = vmatpush2.msra.mxu0 0.0
      %4474 = vmatprep.subr.mxu0 0.0
      %4475 = vmatpush2.msra.mxu0 0.0
      %4476 = vmatprep.subr.mxu0 0.0
      %4477 = vmatpush2.msra.mxu0 0.0
      %4478 = vmatprep.subr.mxu0 0.0
      %4479 = vmatpush2.msra.mxu0 0.0
      %4480 = vmatprep.subr.mxu0 0.0
      %4481 = vmatpush2.msra.mxu0 0.0
      %4482 = vmatprep.subr.mxu0 0.0
      %4483 = vmatpush2.msra.mxu0 0.0
      %4484 = vmatprep.subr.mxu0 0.0
      %4485 = vmatpush2.msra.mxu0 0.0
      %4486 = vmatprep.subr.mxu0 0.0
      %4487 = vmatpush2.msra.mxu0 0.0
      %4488 = vmatprep.subr.mxu0 0.0
      %4489 = vmatpush2.msra.mxu0 0.0
      %4490 = vmatprep.subr.mxu0 0.0
      %4491 = vmatpush2.msra.mxu0 0.0
      %4492 = vmatprep.subr.mxu0 0.0
      %4493 = vmatpush2.msra.mxu0 0.0
      %4494 = vmatprep.subr.mxu0 0.0
      %4495 = vmatpush2.msra.mxu0 0.0
      %4496 = vmatprep.subr.mxu0 0.0
      %4497 = vmatpush2.msra.mxu0 0.0
      %4498 = vmatprep.subr.mxu0 0.0
      %4499 = vmatpush2.msra.mxu0 0.0
      %4500 = vmatprep.subr.mxu0 0.0
      %4501 = vmatpush2.msra.mxu0 0.0
      %4502 = vmatprep.mubr.f32.mxu0 0.0
      %4503 = vmatmul.mubr.f32.gmra.mxu0 %v4407
      %v4504 = vpop.f32.mrf.mxu0
      %v4505 = vadd.f32 %v4431, %v4504
      %v4506 = vpop.f32.mrf.mxu0
      %v4507 = vadd.f32 %v4435, %v4506
      %4508 = vmatprep.mubr.f32.mxu0 0.0
      %4509 = vmatmul.mubr.f32.gmra.mxu0 %v4408
      %v4510 = vpop.f32.mrf.mxu0
      %v4511 = vadd.f32 %v4431, %v4510
      %v4512 = vpop.f32.mrf.mxu0
      %v4513 = vadd.f32 %v4435, %v4512
      %4514 = vmatprep.mubr.f32.mxu0 0.0
      %4515 = vmatmul.mubr.f32.gmra.mxu0 %v4409
      %v4516 = vpop.f32.mrf.mxu0
      %v4517 = vadd.f32 %v4431, %v4516
      %v4518 = vpop.f32.mrf.mxu0
      %v4519 = vadd.f32 %v4435, %v4518
      %4520 = vmatprep.mubr.f32.mxu0 0.0
      %4521 = vmatmul.mubr.f32.gmra.mxu0 %v4410
      %v4522 = vpop.f32.mrf.mxu0
      %v4523 = vadd.f32 %v4431, %v4522
      %v4524 = vpop.f32.mrf.mxu0
      %v4525 = vadd.f32 %v4435, %v4524
      %4526 = vmatprep.mubr.f32.mxu0 0.0
      %4527 = vmatmul.mubr.f32.gmra.mxu0 %v4411
      %v4528 = vpop.f32.mrf.mxu0
      %v4529 = vadd.f32 %v4431, %v4528
      %v4530 = vpop.f32.mrf.mxu0
      %v4531 = vadd.f32 %v4435, %v4530
      %4532 = vmatprep.mubr.f32.mxu0 0.0
      %4533 = vmatmul.mubr.f32.gmra.mxu0 %v4412
      %v4534 = vpop.f32.mrf.mxu0
      %v4535 = vadd.f32 %v4431, %v4534
      %v4536 = vpop.f32.mrf.mxu0
      %v4537 = vadd.f32 %v4435, %v4536
      %4538 = vmatprep.mubr.f32.mxu0 0.0
      %4539 = vmatmul.mubr.f32.gmra.mxu0 %v4413
      %v4540 = vpop.f32.mrf.mxu0
      %v4541 = vadd.f32 %v4431, %v4540
      %v4542 = vpop.f32.mrf.mxu0
      %v4543 = vadd.f32 %v4435, %v4542
      %4544 = vmatprep.mubr.f32.mxu0 0.0
      %4545 = vmatmul.mubr.f32.gmra.mxu0 %v4414
      %v4546 = vpop.f32.mrf.mxu0
      %v4547 = vadd.f32 %v4431, %v4546
      %v4548 = vpop.f32.mrf.mxu0
      %v4549 = vadd.f32 %v4435, %v4548
      %4550 = vmatprep.mubr.f32.mxu0 0.0
      %4551 = vmatmul.mubr.f32.gmra.mxu0 %v4415
      %v4552 = vpop.f32.mrf.mxu0
      %v4553 = vadd.f32 %v4431, %v4552
      %v4554 = vpop.f32.mrf.mxu0
      %v4555 = vadd.f32 %v4435, %v4554
      %4556 = vmatprep.mubr.f32.mxu0 0.0
      %4557 = vmatmul.mubr.f32.gmra.mxu0 %v4416
      %v4558 = vpop.f32.mrf.mxu0
      %v4559 = vadd.f32 %v4431, %v4558
      %v4560 = vpop.f32.mrf.mxu0
      %v4561 = vadd.f32 %v4435, %v4560
      %4562 = vmatprep.mubr.f32.mxu0 0.0
      %4563 = vmatmul.mubr.f32.gmra.mxu0 %v4417
      %v4564 = vpop.f32.mrf.mxu0
      %v4565 = vadd.f32 %v4431, %v4564
      %v4566 = vpop.f32.mrf.mxu0
      %v4567 = vadd.f32 %v4435, %v4566
      %4568 = vmatprep.mubr.f32.mxu0 0.0
      %4569 = vmatmul.mubr.f32.gmra.mxu0 %v4418
      %v4570 = vpop.f32.mrf.mxu0
      %v4571 = vadd.f32 %v4431, %v4570
      %v4572 = vpop.f32.mrf.mxu0
      %v4573 = vadd.f32 %v4435, %v4572
      %4574 = vmatprep.mubr.f32.mxu0 0.0
      %4575 = vmatmul.mubr.f32.gmra.mxu0 %v4419
      %v4576 = vpop.f32.mrf.mxu0
      %v4577 = vadd.f32 %v4431, %v4576
      %v4578 = vpop.f32.mrf.mxu0
      %v4579 = vadd.f32 %v4435, %v4578
      %4580 = vmatprep.mubr.f32.mxu0 0.0
      %4581 = vmatmul.mubr.f32.gmra.mxu0 %v4420
      %v4582 = vpop.f32.mrf.mxu0
      %v4583 = vadd.f32 %v4431, %v4582
      %v4584 = vpop.f32.mrf.mxu0
      %v4585 = vadd.f32 %v4435, %v4584
      %4586 = vmatprep.mubr.f32.mxu0 0.0
      %4587 = vmatmul.mubr.f32.gmra.mxu0 %v4421
      %v4588 = vpop.f32.mrf.mxu0
      %v4589 = vadd.f32 %v4431, %v4588
      %v4590 = vpop.f32.mrf.mxu0
      %v4591 = vadd.f32 %v4435, %v4590
      %4592 = vmatprep.mubr.f32.mxu0 0.0
      %4593 = vmatmul.mubr.f32.gmra.mxu0 %v4422
      %v4594 = vpop.f32.mrf.mxu0
      %v4595 = vadd.f32 %v4431, %v4594
      %v4596 = vpop.f32.mrf.mxu0
      %v4597 = vadd.f32 %v4435, %v4596
      %4598 = vmatprep.mubr.f32.mxu0 0.0
      %4599 = vmatmul.mubr.f32.gmra.mxu0 %v4423
      %v4600 = vpop.f32.mrf.mxu0
      %v4601 = vadd.f32 %v4431, %v4600
      %v4602 = vpop.f32.mrf.mxu0
      %v4603 = vadd.f32 %v4435, %v4602
      %4604 = vmatprep.mubr.f32.mxu0 0.0
      %4605 = vmatmul.mubr.f32.gmra.mxu0 %v4424
      %v4606 = vpop.f32.mrf.mxu0
      %v4607 = vadd.f32 %v4431, %v4606
      %v4608 = vpop.f32.mrf.mxu0
      %v4609 = vadd.f32 %v4435, %v4608
      %4610 = vmatprep.mubr.f32.mxu0 0.0
      %4611 = vmatmul.mubr.f32.gmra.mxu0 %v4425
      %v4612 = vpop.f32.mrf.mxu0
      %v4613 = vadd.f32 %v4431, %v4612
      %v4614 = vpop.f32.mrf.mxu0
      %v4615 = vadd.f32 %v4435, %v4614
      %4616 = vmatprep.mubr.f32.mxu0 0.0
      %4617 = vmatmul.mubr.f32.gmra.mxu0 %v4426
      %v4618 = vpop.f32.mrf.mxu0
      %v4619 = vadd.f32 %v4431, %v4618
      %v4620 = vpop.f32.mrf.mxu0
      %v4621 = vadd.f32 %v4435, %v4620
      %4622 = vdwg.mxu0
      %v4623 = vmul.f32 %v4505, 0.70710677
      %v4624 = vmul.f32 %v4507, 0.70710677
      %v4625 = vmul.f32 %v4511, 0.70710677
      %v4626 = vmul.f32 %v4513, 0.70710677
      %v4627 = vmul.f32 %v4517, 0.70710677
      %v4628 = vmul.f32 %v4519, 0.70710677
      %v4629 = vmul.f32 %v4523, 0.70710677
      %v4630 = vmul.f32 %v4525, 0.70710677
      %v4631 = vmul.f32 %v4529, 0.70710677
      %v4632 = vmul.f32 %v4531, 0.70710677
      %v4633 = vmul.f32 %v4535, 0.70710677
      %v4634 = vmul.f32 %v4537, 0.70710677
      %v4635 = vmul.f32 %v4541, 0.70710677
      %v4636 = vmul.f32 %v4543, 0.70710677
      %v4637 = vmul.f32 %v4547, 0.70710677
      %v4638 = vmul.f32 %v4549, 0.70710677
      %v4639 = vmul.f32 %v4553, 0.70710677
      %v4640 = vmul.f32 %v4555, 0.70710677
      %v4641 = vmul.f32 %v4559, 0.70710677
      %v4642 = vmul.f32 %v4561, 0.70710677
      %v4643 = vmul.f32 %v4565, 0.70710677
      %v4644 = vmul.f32 %v4567, 0.70710677
      %v4645 = vmul.f32 %v4571, 0.70710677
      %v4646 = vmul.f32 %v4573, 0.70710677
      %v4647 = vmul.f32 %v4577, 0.70710677
      %v4648 = vmul.f32 %v4579, 0.70710677
      %v4649 = vmul.f32 %v4583, 0.70710677
      %v4650 = vmul.f32 %v4585, 0.70710677
      %v4651 = vmul.f32 %v4589, 0.70710677
      %v4652 = vmul.f32 %v4591, 0.70710677
      %v4653 = vmul.f32 %v4595, 0.70710677
      %v4654 = vmul.f32 %v4597, 0.70710677
      %v4655 = vmul.f32 %v4601, 0.70710677
      %v4656 = vmul.f32 %v4603, 0.70710677
      %v4657 = vmul.f32 %v4607, 0.70710677
      %v4658 = vmul.f32 %v4609, 0.70710677
      %v4659 = vmul.f32 %v4613, 0.70710677
      %v4660 = vmul.f32 %v4615, 0.70710677
      %v4661 = vmul.f32 %v4619, 0.70710677
      %v4662 = vmul.f32 %v4621, 0.70710677
      %vm4663 = vcmp.ge.f32.partialorder %v4623, 0.0
      %vm4664 = vcmp.ge.f32.partialorder %v4624, 0.0
      %vm4665 = vcmp.ge.f32.partialorder %v4625, 0.0
      %vm4666 = vcmp.ge.f32.partialorder %v4626, 0.0
      %vm4667 = vcmp.ge.f32.partialorder %v4627, 0.0
      %vm4668 = vcmp.ge.f32.partialorder %v4628, 0.0
      %vm4669 = vcmp.ge.f32.partialorder %v4629, 0.0
      %vm4670 = vcmp.ge.f32.partialorder %v4630, 0.0
      %vm4671 = vcmp.ge.f32.partialorder %v4631, 0.0
      %vm4672 = vcmp.ge.f32.partialorder %v4632, 0.0
      %vm4673 = vcmp.ge.f32.partialorder %v4633, 0.0
      %vm4674 = vcmp.ge.f32.partialorder %v4634, 0.0
      %vm4675 = vcmp.ge.f32.partialorder %v4635, 0.0
      %vm4676 = vcmp.ge.f32.partialorder %v4636, 0.0
      %vm4677 = vcmp.ge.f32.partialorder %v4637, 0.0
      %vm4678 = vcmp.ge.f32.partialorder %v4638, 0.0
      %vm4679 = vcmp.ge.f32.partialorder %v4639, 0.0
      %vm4680 = vcmp.ge.f32.partialorder %v4640, 0.0
      %vm4681 = vcmp.ge.f32.partialorder %v4641, 0.0
      %vm4682 = vcmp.ge.f32.partialorder %v4642, 0.0
      %vm4683 = vcmp.ge.f32.partialorder %v4643, 0.0
      %vm4684 = vcmp.ge.f32.partialorder %v4644, 0.0
      %vm4685 = vcmp.ge.f32.partialorder %v4645, 0.0
      %vm4686 = vcmp.ge.f32.partialorder %v4646, 0.0
      %vm4687 = vcmp.ge.f32.partialorder %v4647, 0.0
      %vm4688 = vcmp.ge.f32.partialorder %v4648, 0.0
      %vm4689 = vcmp.ge.f32.partialorder %v4649, 0.0
      %vm4690 = vcmp.ge.f32.partialorder %v4650, 0.0
      %vm4691 = vcmp.ge.f32.partialorder %v4651, 0.0
      %vm4692 = vcmp.ge.f32.partialorder %v4652, 0.0
      %vm4693 = vcmp.ge.f32.partialorder %v4653, 0.0
      %vm4694 = vcmp.ge.f32.partialorder %v4654, 0.0
      %vm4695 = vcmp.ge.f32.partialorder %v4655, 0.0
      %vm4696 = vcmp.ge.f32.partialorder %v4656, 0.0
      %vm4697 = vcmp.ge.f32.partialorder %v4657, 0.0
      %vm4698 = vcmp.ge.f32.partialorder %v4658, 0.0
      %vm4699 = vcmp.ge.f32.partialorder %v4659, 0.0
      %vm4700 = vcmp.ge.f32.partialorder %v4660, 0.0
      %vm4701 = vcmp.ge.f32.partialorder %v4661, 0.0
      %vm4702 = vcmp.ge.f32.partialorder %v4662, 0.0
      %v4703 = vsel %vm4663, 1.0, -1.0
      %v4704 = vsel %vm4664, 1.0, -1.0
      %v4705 = vsel %vm4665, 1.0, -1.0
      %v4706 = vsel %vm4666, 1.0, -1.0
      %v4707 = vsel %vm4667, 1.0, -1.0
      %v4708 = vsel %vm4668, 1.0, -1.0
      %v4709 = vsel %vm4669, 1.0, -1.0
      %v4710 = vsel %vm4670, 1.0, -1.0
      %v4711 = vsel %vm4671, 1.0, -1.0
      %v4712 = vsel %vm4672, 1.0, -1.0
      %v4713 = vsel %vm4673, 1.0, -1.0
      %v4714 = vsel %vm4674, 1.0, -1.0
      %v4715 = vsel %vm4675, 1.0, -1.0
      %v4716 = vsel %vm4676, 1.0, -1.0
      %v4717 = vsel %vm4677, 1.0, -1.0
      %v4718 = vsel %vm4678, 1.0, -1.0
      %v4719 = vsel %vm4679, 1.0, -1.0
      %v4720 = vsel %vm4680, 1.0, -1.0
      %v4721 = vsel %vm4681, 1.0, -1.0
      %v4722 = vsel %vm4682, 1.0, -1.0
      %v4723 = vsel %vm4683, 1.0, -1.0
      %v4724 = vsel %vm4684, 1.0, -1.0
      %v4725 = vsel %vm4685, 1.0, -1.0
      %v4726 = vsel %vm4686, 1.0, -1.0
      %v4727 = vsel %vm4687, 1.0, -1.0
      %v4728 = vsel %vm4688, 1.0, -1.0
      %v4729 = vsel %vm4689, 1.0, -1.0
      %v4730 = vsel %vm4690, 1.0, -1.0
      %v4731 = vsel %vm4691, 1.0, -1.0
      %v4732 = vsel %vm4692, 1.0, -1.0
      %v4733 = vsel %vm4693, 1.0, -1.0
      %v4734 = vsel %vm4694, 1.0, -1.0
      %v4735 = vsel %vm4695, 1.0, -1.0
      %v4736 = vsel %vm4696, 1.0, -1.0
      %v4737 = vsel %vm4697, 1.0, -1.0
      %v4738 = vsel %vm4698, 1.0, -1.0
      %v4739 = vsel %vm4699, 1.0, -1.0
      %v4740 = vsel %vm4700, 1.0, -1.0
      %v4741 = vsel %vm4701, 1.0, -1.0
      %v4742 = vsel %vm4702, 1.0, -1.0
      %v4743 = vand.u32 2147483647, %v4623
      %v4744 = vand.u32 2147483647, %v4624
      %v4745 = vand.u32 2147483647, %v4625
      %v4746 = vand.u32 2147483647, %v4626
      %v4747 = vand.u32 2147483647, %v4627
      %v4748 = vand.u32 2147483647, %v4628
      %v4749 = vand.u32 2147483647, %v4629
      %v4750 = vand.u32 2147483647, %v4630
      %v4751 = vand.u32 2147483647, %v4631
      %v4752 = vand.u32 2147483647, %v4632
      %v4753 = vand.u32 2147483647, %v4633
      %v4754 = vand.u32 2147483647, %v4634
      %v4755 = vand.u32 2147483647, %v4635
      %v4756 = vand.u32 2147483647, %v4636
      %v4757 = vand.u32 2147483647, %v4637
      %v4758 = vand.u32 2147483647, %v4638
      %v4759 = vand.u32 2147483647, %v4639
      %v4760 = vand.u32 2147483647, %v4640
      %v4761 = vand.u32 2147483647, %v4641
      %v4762 = vand.u32 2147483647, %v4642
      %v4763 = vand.u32 2147483647, %v4643
      %v4764 = vand.u32 2147483647, %v4644
      %v4765 = vand.u32 2147483647, %v4645
      %v4766 = vand.u32 2147483647, %v4646
      %v4767 = vand.u32 2147483647, %v4647
      %v4768 = vand.u32 2147483647, %v4648
      %v4769 = vand.u32 2147483647, %v4649
      %v4770 = vand.u32 2147483647, %v4650
      %v4771 = vand.u32 2147483647, %v4651
      %v4772 = vand.u32 2147483647, %v4652
      %v4773 = vand.u32 2147483647, %v4653
      %v4774 = vand.u32 2147483647, %v4654
      %v4775 = vand.u32 2147483647, %v4655
      %v4776 = vand.u32 2147483647, %v4656
      %v4777 = vand.u32 2147483647, %v4657
      %v4778 = vand.u32 2147483647, %v4658
      %v4779 = vand.u32 2147483647, %v4659
      %v4780 = vand.u32 2147483647, %v4660
      %v4781 = vand.u32 2147483647, %v4661
      %v4782 = vand.u32 2147483647, %v4662
      %v4783 = vmul.f32 %v4743, 0.3275911
      %v4784 = vmul.f32 %v4744, 0.3275911
      %v4785 = vmul.f32 %v4745, 0.3275911
      %v4786 = vmul.f32 %v4746, 0.3275911
      %v4787 = vmul.f32 %v4747, 0.3275911
      %v4788 = vmul.f32 %v4748, 0.3275911
      %v4789 = vmul.f32 %v4749, 0.3275911
      %v4790 = vmul.f32 %v4750, 0.3275911
      %v4791 = vmul.f32 %v4751, 0.3275911
      %v4792 = vmul.f32 %v4752, 0.3275911
      %v4793 = vmul.f32 %v4753, 0.3275911
      %v4794 = vmul.f32 %v4754, 0.3275911
      %v4795 = vmul.f32 %v4755, 0.3275911
      %v4796 = vmul.f32 %v4756, 0.3275911
      %v4797 = vmul.f32 %v4757, 0.3275911
      %v4798 = vmul.f32 %v4758, 0.3275911
      %v4799 = vmul.f32 %v4759, 0.3275911
      %v4800 = vmul.f32 %v4760, 0.3275911
      %v4801 = vmul.f32 %v4761, 0.3275911
      %v4802 = vmul.f32 %v4762, 0.3275911
      %v4803 = vmul.f32 %v4763, 0.3275911
      %v4804 = vmul.f32 %v4764, 0.3275911
      %v4805 = vmul.f32 %v4765, 0.3275911
      %v4806 = vmul.f32 %v4766, 0.3275911
      %v4807 = vmul.f32 %v4767, 0.3275911
      %v4808 = vmul.f32 %v4768, 0.3275911
      %v4809 = vmul.f32 %v4769, 0.3275911
      %v4810 = vmul.f32 %v4770, 0.3275911
      %v4811 = vmul.f32 %v4771, 0.3275911
      %v4812 = vmul.f32 %v4772, 0.3275911
      %v4813 = vmul.f32 %v4773, 0.3275911
      %v4814 = vmul.f32 %v4774, 0.3275911
      %v4815 = vmul.f32 %v4775, 0.3275911
      %v4816 = vmul.f32 %v4776, 0.3275911
      %v4817 = vmul.f32 %v4777, 0.3275911
      %v4818 = vmul.f32 %v4778, 0.3275911
      %v4819 = vmul.f32 %v4779, 0.3275911
      %v4820 = vmul.f32 %v4780, 0.3275911
      %v4821 = vmul.f32 %v4781, 0.3275911
      %v4822 = vmul.f32 %v4782, 0.3275911
      %v4823 = vadd.f32 %v4783, 1.0
      %v4824 = vadd.f32 %v4784, 1.0
      %v4825 = vadd.f32 %v4785, 1.0
      %v4826 = vadd.f32 %v4786, 1.0
      %v4827 = vadd.f32 %v4787, 1.0
      %v4828 = vadd.f32 %v4788, 1.0
      %v4829 = vadd.f32 %v4789, 1.0
      %v4830 = vadd.f32 %v4790, 1.0
      %v4831 = vadd.f32 %v4791, 1.0
      %v4832 = vadd.f32 %v4792, 1.0
      %v4833 = vadd.f32 %v4793, 1.0
      %v4834 = vadd.f32 %v4794, 1.0
      %v4835 = vadd.f32 %v4795, 1.0
      %v4836 = vadd.f32 %v4796, 1.0
      %v4837 = vadd.f32 %v4797, 1.0
      %v4838 = vadd.f32 %v4798, 1.0
      %v4839 = vadd.f32 %v4799, 1.0
      %v4840 = vadd.f32 %v4800, 1.0
      %v4841 = vadd.f32 %v4801, 1.0
      %v4842 = vadd.f32 %v4802, 1.0
      %v4843 = vadd.f32 %v4803, 1.0
      %v4844 = vadd.f32 %v4804, 1.0
      %v4845 = vadd.f32 %v4805, 1.0
      %v4846 = vadd.f32 %v4806, 1.0
      %v4847 = vadd.f32 %v4807, 1.0
      %v4848 = vadd.f32 %v4808, 1.0
      %v4849 = vadd.f32 %v4809, 1.0
      %v4850 = vadd.f32 %v4810, 1.0
      %v4851 = vadd.f32 %v4811, 1.0
      %v4852 = vadd.f32 %v4812, 1.0
      %v4853 = vadd.f32 %v4813, 1.0
      %v4854 = vadd.f32 %v4814, 1.0
      %v4855 = vadd.f32 %v4815, 1.0
      %v4856 = vadd.f32 %v4816, 1.0
      %v4857 = vadd.f32 %v4817, 1.0
      %v4858 = vadd.f32 %v4818, 1.0
      %v4859 = vadd.f32 %v4819, 1.0
      %v4860 = vadd.f32 %v4820, 1.0
      %v4861 = vadd.f32 %v4821, 1.0
      %v4862 = vadd.f32 %v4822, 1.0
      %v4863 = vrcp.pop %v4823
      %v4864 = vrcp.pop %v4824
      %v4865 = vrcp.pop %v4825
      %v4866 = vrcp.pop %v4826
      %v4867 = vrcp.pop %v4827
      %v4868 = vrcp.pop %v4828
      %v4869 = vrcp.pop %v4829
      %v4870 = vrcp.pop %v4830
      %v4871 = vrcp.pop %v4831
      %v4872 = vrcp.pop %v4832
      %v4873 = vrcp.pop %v4833
      %v4874 = vrcp.pop %v4834
      %v4875 = vrcp.pop %v4835
      %v4876 = vrcp.pop %v4836
      %v4877 = vrcp.pop %v4837
      %v4878 = vrcp.pop %v4838
      %v4879 = vrcp.pop %v4839
      %v4880 = vrcp.pop %v4840
      %v4881 = vrcp.pop %v4841
      %v4882 = vrcp.pop %v4842
      %v4883 = vrcp.pop %v4843
      %v4884 = vrcp.pop %v4844
      %v4885 = vrcp.pop %v4845
      %v4886 = vrcp.pop %v4846
      %v4887 = vrcp.pop %v4847
      %v4888 = vrcp.pop %v4848
      %v4889 = vrcp.pop %v4849
      %v4890 = vrcp.pop %v4850
      %v4891 = vrcp.pop %v4851
      %v4892 = vrcp.pop %v4852
      %v4893 = vrcp.pop %v4853
      %v4894 = vrcp.pop %v4854
      %v4895 = vrcp.pop %v4855
      %v4896 = vrcp.pop %v4856
      %v4897 = vrcp.pop %v4857
      %v4898 = vrcp.pop %v4858
      %v4899 = vrcp.pop %v4859
      %v4900 = vrcp.pop %v4860
      %v4901 = vrcp.pop %v4861
      %v4902 = vrcp.pop %v4862
      %v4903 = vmul.f32 %v4863, 1.0614054
      %v4904 = vmul.f32 %v4864, 1.0614054
      %v4905 = vmul.f32 %v4865, 1.0614054
      %v4906 = vmul.f32 %v4866, 1.0614054
      %v4907 = vmul.f32 %v4867, 1.0614054
      %v4908 = vmul.f32 %v4868, 1.0614054
      %v4909 = vmul.f32 %v4869, 1.0614054
      %v4910 = vmul.f32 %v4870, 1.0614054
      %v4911 = vmul.f32 %v4871, 1.0614054
      %v4912 = vmul.f32 %v4872, 1.0614054
      %v4913 = vmul.f32 %v4873, 1.0614054
      %v4914 = vmul.f32 %v4874, 1.0614054
      %v4915 = vmul.f32 %v4875, 1.0614054
      %v4916 = vmul.f32 %v4876, 1.0614054
      %v4917 = vmul.f32 %v4877, 1.0614054
      %v4918 = vmul.f32 %v4878, 1.0614054
      %v4919 = vmul.f32 %v4879, 1.0614054
      %v4920 = vmul.f32 %v4880, 1.0614054
      %v4921 = vmul.f32 %v4881, 1.0614054
      %v4922 = vmul.f32 %v4882, 1.0614054
      %v4923 = vmul.f32 %v4883, 1.0614054
      %v4924 = vmul.f32 %v4884, 1.0614054
      %v4925 = vmul.f32 %v4885, 1.0614054
      %v4926 = vmul.f32 %v4886, 1.0614054
      %v4927 = vmul.f32 %v4887, 1.0614054
      %v4928 = vmul.f32 %v4888, 1.0614054
      %v4929 = vmul.f32 %v4889, 1.0614054
      %v4930 = vmul.f32 %v4890, 1.0614054
      %v4931 = vmul.f32 %v4891, 1.0614054
      %v4932 = vmul.f32 %v4892, 1.0614054
      %v4933 = vmul.f32 %v4893, 1.0614054
      %v4934 = vmul.f32 %v4894, 1.0614054
      %v4935 = vmul.f32 %v4895, 1.0614054
      %v4936 = vmul.f32 %v4896, 1.0614054
      %v4937 = vmul.f32 %v4897, 1.0614054
      %v4938 = vmul.f32 %v4898, 1.0614054
      %v4939 = vmul.f32 %v4899, 1.0614054
      %v4940 = vmul.f32 %v4900, 1.0614054
      %v4941 = vmul.f32 %v4901, 1.0614054
      %v4942 = vmul.f32 %v4902, 1.0614054
      %v4943 = vadd.f32 %v4903, -1.4531521
      %v4944 = vadd.f32 %v4904, -1.4531521
      %v4945 = vadd.f32 %v4905, -1.4531521
      %v4946 = vadd.f32 %v4906, -1.4531521
      %v4947 = vadd.f32 %v4907, -1.4531521
      %v4948 = vadd.f32 %v4908, -1.4531521
      %v4949 = vadd.f32 %v4909, -1.4531521
      %v4950 = vadd.f32 %v4910, -1.4531521
      %v4951 = vadd.f32 %v4911, -1.4531521
      %v4952 = vadd.f32 %v4912, -1.4531521
      %v4953 = vadd.f32 %v4913, -1.4531521
      %v4954 = vadd.f32 %v4914, -1.4531521
      %v4955 = vadd.f32 %v4915, -1.4531521
      %v4956 = vadd.f32 %v4916, -1.4531521
      %v4957 = vadd.f32 %v4917, -1.4531521
      %v4958 = vadd.f32 %v4918, -1.4531521
      %v4959 = vadd.f32 %v4919, -1.4531521
      %v4960 = vadd.f32 %v4920, -1.4531521
      %v4961 = vadd.f32 %v4921, -1.4531521
      %v4962 = vadd.f32 %v4922, -1.4531521
      %v4963 = vadd.f32 %v4923, -1.4531521
      %v4964 = vadd.f32 %v4924, -1.4531521
      %v4965 = vadd.f32 %v4925, -1.4531521
      %v4966 = vadd.f32 %v4926, -1.4531521
      %v4967 = vadd.f32 %v4927, -1.4531521
      %v4968 = vadd.f32 %v4928, -1.4531521
      %v4969 = vadd.f32 %v4929, -1.4531521
      %v4970 = vadd.f32 %v4930, -1.4531521
      %v4971 = vadd.f32 %v4931, -1.4531521
      %v4972 = vadd.f32 %v4932, -1.4531521
      %v4973 = vadd.f32 %v4933, -1.4531521
      %v4974 = vadd.f32 %v4934, -1.4531521
      %v4975 = vadd.f32 %v4935, -1.4531521
      %v4976 = vadd.f32 %v4936, -1.4531521
      %v4977 = vadd.f32 %v4937, -1.4531521
      %v4978 = vadd.f32 %v4938, -1.4531521
      %v4979 = vadd.f32 %v4939, -1.4531521
      %v4980 = vadd.f32 %v4940, -1.4531521
      %v4981 = vadd.f32 %v4941, -1.4531521
      %v4982 = vadd.f32 %v4942, -1.4531521
      %v4983 = vmul.f32 %v4943, %v4863
      %v4984 = vmul.f32 %v4944, %v4864
      %v4985 = vmul.f32 %v4945, %v4865
      %v4986 = vmul.f32 %v4946, %v4866
      %v4987 = vmul.f32 %v4947, %v4867
      %v4988 = vmul.f32 %v4948, %v4868
      %v4989 = vmul.f32 %v4949, %v4869
      %v4990 = vmul.f32 %v4950, %v4870
      %v4991 = vmul.f32 %v4951, %v4871
      %v4992 = vmul.f32 %v4952, %v4872
      %v4993 = vmul.f32 %v4953, %v4873
      %v4994 = vmul.f32 %v4954, %v4874
      %v4995 = vmul.f32 %v4955, %v4875
      %v4996 = vmul.f32 %v4956, %v4876
      %v4997 = vmul.f32 %v4957, %v4877
      %v4998 = vmul.f32 %v4958, %v4878
      %v4999 = vmul.f32 %v4959, %v4879
      %v5000 = vmul.f32 %v4960, %v4880
      %v5001 = vmul.f32 %v4961, %v4881
      %v5002 = vmul.f32 %v4962, %v4882
      %v5003 = vmul.f32 %v4963, %v4883
      %v5004 = vmul.f32 %v4964, %v4884
      %v5005 = vmul.f32 %v4965, %v4885
      %v5006 = vmul.f32 %v4966, %v4886
      %v5007 = vmul.f32 %v4967, %v4887
      %v5008 = vmul.f32 %v4968, %v4888
      %v5009 = vmul.f32 %v4969, %v4889
      %v5010 = vmul.f32 %v4970, %v4890
      %v5011 = vmul.f32 %v4971, %v4891
      %v5012 = vmul.f32 %v4972, %v4892
      %v5013 = vmul.f32 %v4973, %v4893
      %v5014 = vmul.f32 %v4974, %v4894
      %v5015 = vmul.f32 %v4975, %v4895
      %v5016 = vmul.f32 %v4976, %v4896
      %v5017 = vmul.f32 %v4977, %v4897
      %v5018 = vmul.f32 %v4978, %v4898
      %v5019 = vmul.f32 %v4979, %v4899
      %v5020 = vmul.f32 %v4980, %v4900
      %v5021 = vmul.f32 %v4981, %v4901
      %v5022 = vmul.f32 %v4982, %v4902
      %v5023 = vadd.f32 %v4983, 1.4214138
      %v5024 = vadd.f32 %v4984, 1.4214138
      %v5025 = vadd.f32 %v4985, 1.4214138
      %v5026 = vadd.f32 %v4986, 1.4214138
      %v5027 = vadd.f32 %v4987, 1.4214138
      %v5028 = vadd.f32 %v4988, 1.4214138
      %v5029 = vadd.f32 %v4989, 1.4214138
      %v5030 = vadd.f32 %v4990, 1.4214138
      %v5031 = vadd.f32 %v4991, 1.4214138
      %v5032 = vadd.f32 %v4992, 1.4214138
      %v5033 = vadd.f32 %v4993, 1.4214138
      %v5034 = vadd.f32 %v4994, 1.4214138
      %v5035 = vadd.f32 %v4995, 1.4214138
      %v5036 = vadd.f32 %v4996, 1.4214138
      %v5037 = vadd.f32 %v4997, 1.4214138
      %v5038 = vadd.f32 %v4998, 1.4214138
      %v5039 = vadd.f32 %v4999, 1.4214138
      %v5040 = vadd.f32 %v5000, 1.4214138
      %v5041 = vadd.f32 %v5001, 1.4214138
      %v5042 = vadd.f32 %v5002, 1.4214138
      %v5043 = vadd.f32 %v5003, 1.4214138
      %v5044 = vadd.f32 %v5004, 1.4214138
      %v5045 = vadd.f32 %v5005, 1.4214138
      %v5046 = vadd.f32 %v5006, 1.4214138
      %v5047 = vadd.f32 %v5007, 1.4214138
      %v5048 = vadd.f32 %v5008, 1.4214138
      %v5049 = vadd.f32 %v5009, 1.4214138
      %v5050 = vadd.f32 %v5010, 1.4214138
      %v5051 = vadd.f32 %v5011, 1.4214138
      %v5052 = vadd.f32 %v5012, 1.4214138
      %v5053 = vadd.f32 %v5013, 1.4214138
      %v5054 = vadd.f32 %v5014, 1.4214138
      %v5055 = vadd.f32 %v5015, 1.4214138
      %v5056 = vadd.f32 %v5016, 1.4214138
      %v5057 = vadd.f32 %v5017, 1.4214138
      %v5058 = vadd.f32 %v5018, 1.4214138
      %v5059 = vadd.f32 %v5019, 1.4214138
      %v5060 = vadd.f32 %v5020, 1.4214138
      %v5061 = vadd.f32 %v5021, 1.4214138
      %v5062 = vadd.f32 %v5022, 1.4214138
      %v5063 = vmul.f32 %v5023, %v4863
      %v5064 = vmul.f32 %v5024, %v4864
      %v5065 = vmul.f32 %v5025, %v4865
      %v5066 = vmul.f32 %v5026, %v4866
      %v5067 = vmul.f32 %v5027, %v4867
      %v5068 = vmul.f32 %v5028, %v4868
      %v5069 = vmul.f32 %v5029, %v4869
      %v5070 = vmul.f32 %v5030, %v4870
      %v5071 = vmul.f32 %v5031, %v4871
      %v5072 = vmul.f32 %v5032, %v4872
      %v5073 = vmul.f32 %v5033, %v4873
      %v5074 = vmul.f32 %v5034, %v4874
      %v5075 = vmul.f32 %v5035, %v4875
      %v5076 = vmul.f32 %v5036, %v4876
      %v5077 = vmul.f32 %v5037, %v4877
      %v5078 = vmul.f32 %v5038, %v4878
      %v5079 = vmul.f32 %v5039, %v4879
      %v5080 = vmul.f32 %v5040, %v4880
      %v5081 = vmul.f32 %v5041, %v4881
      %v5082 = vmul.f32 %v5042, %v4882
      %v5083 = vmul.f32 %v5043, %v4883
      %v5084 = vmul.f32 %v5044, %v4884
      %v5085 = vmul.f32 %v5045, %v4885
      %v5086 = vmul.f32 %v5046, %v4886
      %v5087 = vmul.f32 %v5047, %v4887
      %v5088 = vmul.f32 %v5048, %v4888
      %v5089 = vmul.f32 %v5049, %v4889
      %v5090 = vmul.f32 %v5050, %v4890
      %v5091 = vmul.f32 %v5051, %v4891
      %v5092 = vmul.f32 %v5052, %v4892
      %v5093 = vmul.f32 %v5053, %v4893
      %v5094 = vmul.f32 %v5054, %v4894
      %v5095 = vmul.f32 %v5055, %v4895
      %v5096 = vmul.f32 %v5056, %v4896
      %v5097 = vmul.f32 %v5057, %v4897
      %v5098 = vmul.f32 %v5058, %v4898
      %v5099 = vmul.f32 %v5059, %v4899
      %v5100 = vmul.f32 %v5060, %v4900
      %v5101 = vmul.f32 %v5061, %v4901
      %v5102 = vmul.f32 %v5062, %v4902
      %v5103 = vadd.f32 %v5063, -0.28449672
      %v5104 = vadd.f32 %v5064, -0.28449672
      %v5105 = vadd.f32 %v5065, -0.28449672
      %v5106 = vadd.f32 %v5066, -0.28449672
      %v5107 = vadd.f32 %v5067, -0.28449672
      %v5108 = vadd.f32 %v5068, -0.28449672
      %v5109 = vadd.f32 %v5069, -0.28449672
      %v5110 = vadd.f32 %v5070, -0.28449672
      %v5111 = vadd.f32 %v5071, -0.28449672
      %v5112 = vadd.f32 %v5072, -0.28449672
      %v5113 = vadd.f32 %v5073, -0.28449672
      %v5114 = vadd.f32 %v5074, -0.28449672
      %v5115 = vadd.f32 %v5075, -0.28449672
      %v5116 = vadd.f32 %v5076, -0.28449672
      %v5117 = vadd.f32 %v5077, -0.28449672
      %v5118 = vadd.f32 %v5078, -0.28449672
      %v5119 = vadd.f32 %v5079, -0.28449672
      %v5120 = vadd.f32 %v5080, -0.28449672
      %v5121 = vadd.f32 %v5081, -0.28449672
      %v5122 = vadd.f32 %v5082, -0.28449672
      %v5123 = vadd.f32 %v5083, -0.28449672
      %v5124 = vadd.f32 %v5084, -0.28449672
      %v5125 = vadd.f32 %v5085, -0.28449672
      %v5126 = vadd.f32 %v5086, -0.28449672
      %v5127 = vadd.f32 %v5087, -0.28449672
      %v5128 = vadd.f32 %v5088, -0.28449672
      %v5129 = vadd.f32 %v5089, -0.28449672
      %v5130 = vadd.f32 %v5090, -0.28449672
      %v5131 = vadd.f32 %v5091, -0.28449672
      %v5132 = vadd.f32 %v5092, -0.28449672
      %v5133 = vadd.f32 %v5093, -0.28449672
      %v5134 = vadd.f32 %v5094, -0.28449672
      %v5135 = vadd.f32 %v5095, -0.28449672
      %v5136 = vadd.f32 %v5096, -0.28449672
      %v5137 = vadd.f32 %v5097, -0.28449672
      %v5138 = vadd.f32 %v5098, -0.28449672
      %v5139 = vadd.f32 %v5099, -0.28449672
      %v5140 = vadd.f32 %v5100, -0.28449672
      %v5141 = vadd.f32 %v5101, -0.28449672
      %v5142 = vadd.f32 %v5102, -0.28449672
      %v5143 = vmul.f32 %v5103, %v4863
      %v5144 = vmul.f32 %v5104, %v4864
      %v5145 = vmul.f32 %v5105, %v4865
      %v5146 = vmul.f32 %v5106, %v4866
      %v5147 = vmul.f32 %v5107, %v4867
      %v5148 = vmul.f32 %v5108, %v4868
      %v5149 = vmul.f32 %v5109, %v4869
      %v5150 = vmul.f32 %v5110, %v4870
      %v5151 = vmul.f32 %v5111, %v4871
      %v5152 = vmul.f32 %v5112, %v4872
      %v5153 = vmul.f32 %v5113, %v4873
      %v5154 = vmul.f32 %v5114, %v4874
      %v5155 = vmul.f32 %v5115, %v4875
      %v5156 = vmul.f32 %v5116, %v4876
      %v5157 = vmul.f32 %v5117, %v4877
      %v5158 = vmul.f32 %v5118, %v4878
      %v5159 = vmul.f32 %v5119, %v4879
      %v5160 = vmul.f32 %v5120, %v4880
      %v5161 = vmul.f32 %v5121, %v4881
      %v5162 = vmul.f32 %v5122, %v4882
      %v5163 = vmul.f32 %v5123, %v4883
      %v5164 = vmul.f32 %v5124, %v4884
      %v5165 = vmul.f32 %v5125, %v4885
      %v5166 = vmul.f32 %v5126, %v4886
      %v5167 = vmul.f32 %v5127, %v4887
      %v5168 = vmul.f32 %v5128, %v4888
      %v5169 = vmul.f32 %v5129, %v4889
      %v5170 = vmul.f32 %v5130, %v4890
      %v5171 = vmul.f32 %v5131, %v4891
      %v5172 = vmul.f32 %v5132, %v4892
      %v5173 = vmul.f32 %v5133, %v4893
      %v5174 = vmul.f32 %v5134, %v4894
      %v5175 = vmul.f32 %v5135, %v4895
      %v5176 = vmul.f32 %v5136, %v4896
      %v5177 = vmul.f32 %v5137, %v4897
      %v5178 = vmul.f32 %v5138, %v4898
      %v5179 = vmul.f32 %v5139, %v4899
      %v5180 = vmul.f32 %v5140, %v4900
      %v5181 = vmul.f32 %v5141, %v4901
      %v5182 = vmul.f32 %v5142, %v4902
      %v5183 = vadd.f32 %v5143, 0.2548296
      %v5184 = vadd.f32 %v5144, 0.2548296
      %v5185 = vadd.f32 %v5145, 0.2548296
      %v5186 = vadd.f32 %v5146, 0.2548296
      %v5187 = vadd.f32 %v5147, 0.2548296
      %v5188 = vadd.f32 %v5148, 0.2548296
      %v5189 = vadd.f32 %v5149, 0.2548296
      %v5190 = vadd.f32 %v5150, 0.2548296
      %v5191 = vadd.f32 %v5151, 0.2548296
      %v5192 = vadd.f32 %v5152, 0.2548296
      %v5193 = vadd.f32 %v5153, 0.2548296
      %v5194 = vadd.f32 %v5154, 0.2548296
      %v5195 = vadd.f32 %v5155, 0.2548296
      %v5196 = vadd.f32 %v5156, 0.2548296
      %v5197 = vadd.f32 %v5157, 0.2548296
      %v5198 = vadd.f32 %v5158, 0.2548296
      %v5199 = vadd.f32 %v5159, 0.2548296
      %v5200 = vadd.f32 %v5160, 0.2548296
      %v5201 = vadd.f32 %v5161, 0.2548296
      %v5202 = vadd.f32 %v5162, 0.2548296
      %v5203 = vadd.f32 %v5163, 0.2548296
      %v5204 = vadd.f32 %v5164, 0.2548296
      %v5205 = vadd.f32 %v5165, 0.2548296
      %v5206 = vadd.f32 %v5166, 0.2548296
      %v5207 = vadd.f32 %v5167, 0.2548296
      %v5208 = vadd.f32 %v5168, 0.2548296
      %v5209 = vadd.f32 %v5169, 0.2548296
      %v5210 = vadd.f32 %v5170, 0.2548296
      %v5211 = vadd.f32 %v5171, 0.2548296
      %v5212 = vadd.f32 %v5172, 0.2548296
      %v5213 = vadd.f32 %v5173, 0.2548296
      %v5214 = vadd.f32 %v5174, 0.2548296
      %v5215 = vadd.f32 %v5175, 0.2548296
      %v5216 = vadd.f32 %v5176, 0.2548296
      %v5217 = vadd.f32 %v5177, 0.2548296
      %v5218 = vadd.f32 %v5178, 0.2548296
      %v5219 = vadd.f32 %v5179, 0.2548296
      %v5220 = vadd.f32 %v5180, 0.2548296
      %v5221 = vadd.f32 %v5181, 0.2548296
      %v5222 = vadd.f32 %v5182, 0.2548296
      %v5223 = vmul.f32 %v5183, %v4863
      %v5224 = vmul.f32 %v5184, %v4864
      %v5225 = vmul.f32 %v5185, %v4865
      %v5226 = vmul.f32 %v5186, %v4866
      %v5227 = vmul.f32 %v5187, %v4867
      %v5228 = vmul.f32 %v5188, %v4868
      %v5229 = vmul.f32 %v5189, %v4869
      %v5230 = vmul.f32 %v5190, %v4870
      %v5231 = vmul.f32 %v5191, %v4871
      %v5232 = vmul.f32 %v5192, %v4872
      %v5233 = vmul.f32 %v5193, %v4873
      %v5234 = vmul.f32 %v5194, %v4874
      %v5235 = vmul.f32 %v5195, %v4875
      %v5236 = vmul.f32 %v5196, %v4876
      %v5237 = vmul.f32 %v5197, %v4877
      %v5238 = vmul.f32 %v5198, %v4878
      %v5239 = vmul.f32 %v5199, %v4879
      %v5240 = vmul.f32 %v5200, %v4880
      %v5241 = vmul.f32 %v5201, %v4881
      %v5242 = vmul.f32 %v5202, %v4882
      %v5243 = vmul.f32 %v5203, %v4883
      %v5244 = vmul.f32 %v5204, %v4884
      %v5245 = vmul.f32 %v5205, %v4885
      %v5246 = vmul.f32 %v5206, %v4886
      %v5247 = vmul.f32 %v5207, %v4887
      %v5248 = vmul.f32 %v5208, %v4888
      %v5249 = vmul.f32 %v5209, %v4889
      %v5250 = vmul.f32 %v5210, %v4890
      %v5251 = vmul.f32 %v5211, %v4891
      %v5252 = vmul.f32 %v5212, %v4892
      %v5253 = vmul.f32 %v5213, %v4893
      %v5254 = vmul.f32 %v5214, %v4894
      %v5255 = vmul.f32 %v5215, %v4895
      %v5256 = vmul.f32 %v5216, %v4896
      %v5257 = vmul.f32 %v5217, %v4897
      %v5258 = vmul.f32 %v5218, %v4898
      %v5259 = vmul.f32 %v5219, %v4899
      %v5260 = vmul.f32 %v5220, %v4900
      %v5261 = vmul.f32 %v5221, %v4901
      %v5262 = vmul.f32 %v5222, %v4902
      %v5263 = vsub.f32 0.0, %v4743
      %v5264 = vsub.f32 0.0, %v4744
      %v5265 = vsub.f32 0.0, %v4745
      %v5266 = vsub.f32 0.0, %v4746
      %v5267 = vsub.f32 0.0, %v4747
      %v5268 = vsub.f32 0.0, %v4748
      %v5269 = vsub.f32 0.0, %v4749
      %v5270 = vsub.f32 0.0, %v4750
      %v5271 = vsub.f32 0.0, %v4751
      %v5272 = vsub.f32 0.0, %v4752
      %v5273 = vsub.f32 0.0, %v4753
      %v5274 = vsub.f32 0.0, %v4754
      %v5275 = vsub.f32 0.0, %v4755
      %v5276 = vsub.f32 0.0, %v4756
      %v5277 = vsub.f32 0.0, %v4757
      %v5278 = vsub.f32 0.0, %v4758
      %v5279 = vsub.f32 0.0, %v4759
      %v5280 = vsub.f32 0.0, %v4760
      %v5281 = vsub.f32 0.0, %v4761
      %v5282 = vsub.f32 0.0, %v4762
      %v5283 = vsub.f32 0.0, %v4763
      %v5284 = vsub.f32 0.0, %v4764
      %v5285 = vsub.f32 0.0, %v4765
      %v5286 = vsub.f32 0.0, %v4766
      %v5287 = vsub.f32 0.0, %v4767
      %v5288 = vsub.f32 0.0, %v4768
      %v5289 = vsub.f32 0.0, %v4769
      %v5290 = vsub.f32 0.0, %v4770
      %v5291 = vsub.f32 0.0, %v4771
      %v5292 = vsub.f32 0.0, %v4772
      %v5293 = vsub.f32 0.0, %v4773
      %v5294 = vsub.f32 0.0, %v4774
      %v5295 = vsub.f32 0.0, %v4775
      %v5296 = vsub.f32 0.0, %v4776
      %v5297 = vsub.f32 0.0, %v4777
      %v5298 = vsub.f32 0.0, %v4778
      %v5299 = vsub.f32 0.0, %v4779
      %v5300 = vsub.f32 0.0, %v4780
      %v5301 = vsub.f32 0.0, %v4781
      %v5302 = vsub.f32 0.0, %v4782
      %v5303 = vmul.f32 %v5263, %v4743
      %v5304 = vmul.f32 %v5264, %v4744
      %v5305 = vmul.f32 %v5265, %v4745
      %v5306 = vmul.f32 %v5266, %v4746
      %v5307 = vmul.f32 %v5267, %v4747
      %v5308 = vmul.f32 %v5268, %v4748
      %v5309 = vmul.f32 %v5269, %v4749
      %v5310 = vmul.f32 %v5270, %v4750
      %v5311 = vmul.f32 %v5271, %v4751
      %v5312 = vmul.f32 %v5272, %v4752
      %v5313 = vmul.f32 %v5273, %v4753
      %v5314 = vmul.f32 %v5274, %v4754
      %v5315 = vmul.f32 %v5275, %v4755
      %v5316 = vmul.f32 %v5276, %v4756
      %v5317 = vmul.f32 %v5277, %v4757
      %v5318 = vmul.f32 %v5278, %v4758
      %v5319 = vmul.f32 %v5279, %v4759
      %v5320 = vmul.f32 %v5280, %v4760
      %v5321 = vmul.f32 %v5281, %v4761
      %v5322 = vmul.f32 %v5282, %v4762
      %v5323 = vmul.f32 %v5283, %v4763
      %v5324 = vmul.f32 %v5284, %v4764
      %v5325 = vmul.f32 %v5285, %v4765
      %v5326 = vmul.f32 %v5286, %v4766
      %v5327 = vmul.f32 %v5287, %v4767
      %v5328 = vmul.f32 %v5288, %v4768
      %v5329 = vmul.f32 %v5289, %v4769
      %v5330 = vmul.f32 %v5290, %v4770
      %v5331 = vmul.f32 %v5291, %v4771
      %v5332 = vmul.f32 %v5292, %v4772
      %v5333 = vmul.f32 %v5293, %v4773
      %v5334 = vmul.f32 %v5294, %v4774
      %v5335 = vmul.f32 %v5295, %v4775
      %v5336 = vmul.f32 %v5296, %v4776
      %v5337 = vmul.f32 %v5297, %v4777
      %v5338 = vmul.f32 %v5298, %v4778
      %v5339 = vmul.f32 %v5299, %v4779
      %v5340 = vmul.f32 %v5300, %v4780
      %v5341 = vmul.f32 %v5301, %v4781
      %v5342 = vmul.f32 %v5302, %v4782
      %v5343 = vmul.f32 %v5303, 1.442695
      %v5344 = vpow.pop %v5343
      %v5345 = vmul.f32 %v5304, 1.442695
      %v5346 = vpow.pop %v5345
      %v5347 = vmul.f32 %v5305, 1.442695
      %v5348 = vpow.pop %v5347
      %v5349 = vmul.f32 %v5306, 1.442695
      %v5350 = vpow.pop %v5349
      %v5351 = vmul.f32 %v5307, 1.442695
      %v5352 = vpow.pop %v5351
      %v5353 = vmul.f32 %v5308, 1.442695
      %v5354 = vpow.pop %v5353
      %v5355 = vmul.f32 %v5309, 1.442695
      %v5356 = vpow.pop %v5355
      %v5357 = vmul.f32 %v5310, 1.442695
      %v5358 = vpow.pop %v5357
      %v5359 = vmul.f32 %v5311, 1.442695
      %v5360 = vpow.pop %v5359
      %v5361 = vmul.f32 %v5312, 1.442695
      %v5362 = vpow.pop %v5361
      %v5363 = vmul.f32 %v5313, 1.442695
      %v5364 = vpow.pop %v5363
      %v5365 = vmul.f32 %v5314, 1.442695
      %v5366 = vpow.pop %v5365
      %v5367 = vmul.f32 %v5315, 1.442695
      %v5368 = vpow.pop %v5367
      %v5369 = vmul.f32 %v5316, 1.442695
      %v5370 = vpow.pop %v5369
      %v5371 = vmul.f32 %v5317, 1.442695
      %v5372 = vpow.pop %v5371
      %v5373 = vmul.f32 %v5318, 1.442695
      %v5374 = vpow.pop %v5373
      %v5375 = vmul.f32 %v5319, 1.442695
      %v5376 = vpow.pop %v5375
      %v5377 = vmul.f32 %v5320, 1.442695
      %v5378 = vpow.pop %v5377
      %v5379 = vmul.f32 %v5321, 1.442695
      %v5380 = vpow.pop %v5379
      %v5381 = vmul.f32 %v5322, 1.442695
      %v5382 = vpow.pop %v5381
      %v5383 = vmul.f32 %v5323, 1.442695
      %v5384 = vpow.pop %v5383
      %v5385 = vmul.f32 %v5324, 1.442695
      %v5386 = vpow.pop %v5385
      %v5387 = vmul.f32 %v5325, 1.442695
      %v5388 = vpow.pop %v5387
      %v5389 = vmul.f32 %v5326, 1.442695
      %v5390 = vpow.pop %v5389
      %v5391 = vmul.f32 %v5327, 1.442695
      %v5392 = vpow.pop %v5391
      %v5393 = vmul.f32 %v5328, 1.442695
      %v5394 = vpow.pop %v5393
      %v5395 = vmul.f32 %v5329, 1.442695
      %v5396 = vpow.pop %v5395
      %v5397 = vmul.f32 %v5330, 1.442695
      %v5398 = vpow.pop %v5397
      %v5399 = vmul.f32 %v5331, 1.442695
      %v5400 = vpow.pop %v5399
      %v5401 = vmul.f32 %v5332, 1.442695
      %v5402 = vpow.pop %v5401
      %v5403 = vmul.f32 %v5333, 1.442695
      %v5404 = vpow.pop %v5403
      %v5405 = vmul.f32 %v5334, 1.442695
      %v5406 = vpow.pop %v5405
      %v5407 = vmul.f32 %v5335, 1.442695
      %v5408 = vpow.pop %v5407
      %v5409 = vmul.f32 %v5336, 1.442695
      %v5410 = vpow.pop %v5409
      %v5411 = vmul.f32 %v5337, 1.442695
      %v5412 = vpow.pop %v5411
      %v5413 = vmul.f32 %v5338, 1.442695
      %v5414 = vpow.pop %v5413
      %v5415 = vmul.f32 %v5339, 1.442695
      %v5416 = vpow.pop %v5415
      %v5417 = vmul.f32 %v5340, 1.442695
      %v5418 = vpow.pop %v5417
      %v5419 = vmul.f32 %v5341, 1.442695
      %v5420 = vpow.pop %v5419
      %v5421 = vmul.f32 %v5342, 1.442695
      %v5422 = vpow.pop %v5421
      %v5423 = vmul.f32 %v5223, %v5344
      %v5424 = vmul.f32 %v5224, %v5346
      %v5425 = vmul.f32 %v5225, %v5348
      %v5426 = vmul.f32 %v5226, %v5350
      %v5427 = vmul.f32 %v5227, %v5352
      %v5428 = vmul.f32 %v5228, %v5354
      %v5429 = vmul.f32 %v5229, %v5356
      %v5430 = vmul.f32 %v5230, %v5358
      %v5431 = vmul.f32 %v5231, %v5360
      %v5432 = vmul.f32 %v5232, %v5362
      %v5433 = vmul.f32 %v5233, %v5364
      %v5434 = vmul.f32 %v5234, %v5366
      %v5435 = vmul.f32 %v5235, %v5368
      %v5436 = vmul.f32 %v5236, %v5370
      %v5437 = vmul.f32 %v5237, %v5372
      %v5438 = vmul.f32 %v5238, %v5374
      %v5439 = vmul.f32 %v5239, %v5376
      %v5440 = vmul.f32 %v5240, %v5378
      %v5441 = vmul.f32 %v5241, %v5380
      %v5442 = vmul.f32 %v5242, %v5382
      %v5443 = vmul.f32 %v5243, %v5384
      %v5444 = vmul.f32 %v5244, %v5386
      %v5445 = vmul.f32 %v5245, %v5388
      %v5446 = vmul.f32 %v5246, %v5390
      %v5447 = vmul.f32 %v5247, %v5392
      %v5448 = vmul.f32 %v5248, %v5394
      %v5449 = vmul.f32 %v5249, %v5396
      %v5450 = vmul.f32 %v5250, %v5398
      %v5451 = vmul.f32 %v5251, %v5400
      %v5452 = vmul.f32 %v5252, %v5402
      %v5453 = vmul.f32 %v5253, %v5404
      %v5454 = vmul.f32 %v5254, %v5406
      %v5455 = vmul.f32 %v5255, %v5408
      %v5456 = vmul.f32 %v5256, %v5410
      %v5457 = vmul.f32 %v5257, %v5412
      %v5458 = vmul.f32 %v5258, %v5414
      %v5459 = vmul.f32 %v5259, %v5416
      %v5460 = vmul.f32 %v5260, %v5418
      %v5461 = vmul.f32 %v5261, %v5420
      %v5462 = vmul.f32 %v5262, %v5422
      %v5463 = vsub.f32 1.0, %v5423
      %v5464 = vsub.f32 1.0, %v5424
      %v5465 = vsub.f32 1.0, %v5425
      %v5466 = vsub.f32 1.0, %v5426
      %v5467 = vsub.f32 1.0, %v5427
      %v5468 = vsub.f32 1.0, %v5428
      %v5469 = vsub.f32 1.0, %v5429
      %v5470 = vsub.f32 1.0, %v5430
      %v5471 = vsub.f32 1.0, %v5431
      %v5472 = vsub.f32 1.0, %v5432
      %v5473 = vsub.f32 1.0, %v5433
      %v5474 = vsub.f32 1.0, %v5434
      %v5475 = vsub.f32 1.0, %v5435
      %v5476 = vsub.f32 1.0, %v5436
      %v5477 = vsub.f32 1.0, %v5437
      %v5478 = vsub.f32 1.0, %v5438
      %v5479 = vsub.f32 1.0, %v5439
      %v5480 = vsub.f32 1.0, %v5440
      %v5481 = vsub.f32 1.0, %v5441
      %v5482 = vsub.f32 1.0, %v5442
      %v5483 = vsub.f32 1.0, %v5443
      %v5484 = vsub.f32 1.0, %v5444
      %v5485 = vsub.f32 1.0, %v5445
      %v5486 = vsub.f32 1.0, %v5446
      %v5487 = vsub.f32 1.0, %v5447
      %v5488 = vsub.f32 1.0, %v5448
      %v5489 = vsub.f32 1.0, %v5449
      %v5490 = vsub.f32 1.0, %v5450
      %v5491 = vsub.f32 1.0, %v5451
      %v5492 = vsub.f32 1.0, %v5452
      %v5493 = vsub.f32 1.0, %v5453
      %v5494 = vsub.f32 1.0, %v5454
      %v5495 = vsub.f32 1.0, %v5455
      %v5496 = vsub.f32 1.0, %v5456
      %v5497 = vsub.f32 1.0, %v5457
      %v5498 = vsub.f32 1.0, %v5458
      %v5499 = vsub.f32 1.0, %v5459
      %v5500 = vsub.f32 1.0, %v5460
      %v5501 = vsub.f32 1.0, %v5461
      %v5502 = vsub.f32 1.0, %v5462
      %v5503 = vmul.f32 %v4703, %v5463
      %v5504 = vmul.f32 %v4704, %v5464
      %v5505 = vmul.f32 %v4705, %v5465
      %v5506 = vmul.f32 %v4706, %v5466
      %v5507 = vmul.f32 %v4707, %v5467
      %v5508 = vmul.f32 %v4708, %v5468
      %v5509 = vmul.f32 %v4709, %v5469
      %v5510 = vmul.f32 %v4710, %v5470
      %v5511 = vmul.f32 %v4711, %v5471
      %v5512 = vmul.f32 %v4712, %v5472
      %v5513 = vmul.f32 %v4713, %v5473
      %v5514 = vmul.f32 %v4714, %v5474
      %v5515 = vmul.f32 %v4715, %v5475
      %v5516 = vmul.f32 %v4716, %v5476
      %v5517 = vmul.f32 %v4717, %v5477
      %v5518 = vmul.f32 %v4718, %v5478
      %v5519 = vmul.f32 %v4719, %v5479
      %v5520 = vmul.f32 %v4720, %v5480
      %v5521 = vmul.f32 %v4721, %v5481
      %v5522 = vmul.f32 %v4722, %v5482
      %v5523 = vmul.f32 %v4723, %v5483
      %v5524 = vmul.f32 %v4724, %v5484
      %v5525 = vmul.f32 %v4725, %v5485
      %v5526 = vmul.f32 %v4726, %v5486
      %v5527 = vmul.f32 %v4727, %v5487
      %v5528 = vmul.f32 %v4728, %v5488
      %v5529 = vmul.f32 %v4729, %v5489
      %v5530 = vmul.f32 %v4730, %v5490
      %v5531 = vmul.f32 %v4731, %v5491
      %v5532 = vmul.f32 %v4732, %v5492
      %v5533 = vmul.f32 %v4733, %v5493
      %v5534 = vmul.f32 %v4734, %v5494
      %v5535 = vmul.f32 %v4735, %v5495
      %v5536 = vmul.f32 %v4736, %v5496
      %v5537 = vmul.f32 %v4737, %v5497
      %v5538 = vmul.f32 %v4738, %v5498
      %v5539 = vmul.f32 %v4739, %v5499
      %v5540 = vmul.f32 %v4740, %v5500
      %v5541 = vmul.f32 %v4741, %v5501
      %v5542 = vmul.f32 %v4742, %v5502
      %v5543 = vmul.f32 %v4505, 0.5
      %v5544 = vmul.f32 %v4507, 0.5
      %v5545 = vmul.f32 %v4511, 0.5
      %v5546 = vmul.f32 %v4513, 0.5
      %v5547 = vmul.f32 %v4517, 0.5
      %v5548 = vmul.f32 %v4519, 0.5
      %v5549 = vmul.f32 %v4523, 0.5
      %v5550 = vmul.f32 %v4525, 0.5
      %v5551 = vmul.f32 %v4529, 0.5
      %v5552 = vmul.f32 %v4531, 0.5
      %v5553 = vmul.f32 %v4535, 0.5
      %v5554 = vmul.f32 %v4537, 0.5
      %v5555 = vmul.f32 %v4541, 0.5
      %v5556 = vmul.f32 %v4543, 0.5
      %v5557 = vmul.f32 %v4547, 0.5
      %v5558 = vmul.f32 %v4549, 0.5
      %v5559 = vmul.f32 %v4553, 0.5
      %v5560 = vmul.f32 %v4555, 0.5
      %v5561 = vmul.f32 %v4559, 0.5
      %v5562 = vmul.f32 %v4561, 0.5
      %v5563 = vmul.f32 %v4565, 0.5
      %v5564 = vmul.f32 %v4567, 0.5
      %v5565 = vmul.f32 %v4571, 0.5
      %v5566 = vmul.f32 %v4573, 0.5
      %v5567 = vmul.f32 %v4577, 0.5
      %v5568 = vmul.f32 %v4579, 0.5
      %v5569 = vmul.f32 %v4583, 0.5
      %v5570 = vmul.f32 %v4585, 0.5
      %v5571 = vmul.f32 %v4589, 0.5
      %v5572 = vmul.f32 %v4591, 0.5
      %v5573 = vmul.f32 %v4595, 0.5
      %v5574 = vmul.f32 %v4597, 0.5
      %v5575 = vmul.f32 %v4601, 0.5
      %v5576 = vmul.f32 %v4603, 0.5
      %v5577 = vmul.f32 %v4607, 0.5
      %v5578 = vmul.f32 %v4609, 0.5
      %v5579 = vmul.f32 %v4613, 0.5
      %v5580 = vmul.f32 %v4615, 0.5
      %v5581 = vmul.f32 %v4619, 0.5
      %v5582 = vmul.f32 %v4621, 0.5
      %v5583 = vadd.f32 %v5503, 1.0
      %v5584 = vadd.f32 %v5504, 1.0
      %v5585 = vadd.f32 %v5505, 1.0
      %v5586 = vadd.f32 %v5506, 1.0
      %v5587 = vadd.f32 %v5507, 1.0
      %v5588 = vadd.f32 %v5508, 1.0
      %v5589 = vadd.f32 %v5509, 1.0
      %v5590 = vadd.f32 %v5510, 1.0
      %v5591 = vadd.f32 %v5511, 1.0
      %v5592 = vadd.f32 %v5512, 1.0
      %v5593 = vadd.f32 %v5513, 1.0
      %v5594 = vadd.f32 %v5514, 1.0
      %v5595 = vadd.f32 %v5515, 1.0
      %v5596 = vadd.f32 %v5516, 1.0
      %v5597 = vadd.f32 %v5517, 1.0
      %v5598 = vadd.f32 %v5518, 1.0
      %v5599 = vadd.f32 %v5519, 1.0
      %v5600 = vadd.f32 %v5520, 1.0
      %v5601 = vadd.f32 %v5521, 1.0
      %v5602 = vadd.f32 %v5522, 1.0
      %v5603 = vadd.f32 %v5523, 1.0
      %v5604 = vadd.f32 %v5524, 1.0
      %v5605 = vadd.f32 %v5525, 1.0
      %v5606 = vadd.f32 %v5526, 1.0
      %v5607 = vadd.f32 %v5527, 1.0
      %v5608 = vadd.f32 %v5528, 1.0
      %v5609 = vadd.f32 %v5529, 1.0
      %v5610 = vadd.f32 %v5530, 1.0
      %v5611 = vadd.f32 %v5531, 1.0
      %v5612 = vadd.f32 %v5532, 1.0
      %v5613 = vadd.f32 %v5533, 1.0
      %v5614 = vadd.f32 %v5534, 1.0
      %v5615 = vadd.f32 %v5535, 1.0
      %v5616 = vadd.f32 %v5536, 1.0
      %v5617 = vadd.f32 %v5537, 1.0
      %v5618 = vadd.f32 %v5538, 1.0
      %v5619 = vadd.f32 %v5539, 1.0
      %v5620 = vadd.f32 %v5540, 1.0
      %v5621 = vadd.f32 %v5541, 1.0
      %v5622 = vadd.f32 %v5542, 1.0
      %v5623 = vmul.f32 %v5543, %v5583
      %v5624 = vmul.f32 %v5544, %v5584
      %v5625 = vmul.f32 %v5545, %v5585
      %v5626 = vmul.f32 %v5546, %v5586
      %v5627 = vmul.f32 %v5547, %v5587
      %v5628 = vmul.f32 %v5548, %v5588
      %v5629 = vmul.f32 %v5549, %v5589
      %v5630 = vmul.f32 %v5550, %v5590
      %v5631 = vmul.f32 %v5551, %v5591
      %v5632 = vmul.f32 %v5552, %v5592
      %v5633 = vmul.f32 %v5553, %v5593
      %v5634 = vmul.f32 %v5554, %v5594
      %v5635 = vmul.f32 %v5555, %v5595
      %v5636 = vmul.f32 %v5556, %v5596
      %v5637 = vmul.f32 %v5557, %v5597
      %v5638 = vmul.f32 %v5558, %v5598
      %v5639 = vmul.f32 %v5559, %v5599
      %v5640 = vmul.f32 %v5560, %v5600
      %v5641 = vmul.f32 %v5561, %v5601
      %v5642 = vmul.f32 %v5562, %v5602
      %v5643 = vmul.f32 %v5563, %v5603
      %v5644 = vmul.f32 %v5564, %v5604
      %v5645 = vmul.f32 %v5565, %v5605
      %v5646 = vmul.f32 %v5566, %v5606
      %v5647 = vmul.f32 %v5567, %v5607
      %v5648 = vmul.f32 %v5568, %v5608
      %v5649 = vmul.f32 %v5569, %v5609
      %v5650 = vmul.f32 %v5570, %v5610
      %v5651 = vmul.f32 %v5571, %v5611
      %v5652 = vmul.f32 %v5572, %v5612
      %v5653 = vmul.f32 %v5573, %v5613
      %v5654 = vmul.f32 %v5574, %v5614
      %v5655 = vmul.f32 %v5575, %v5615
      %v5656 = vmul.f32 %v5576, %v5616
      %v5657 = vmul.f32 %v5577, %v5617
      %v5658 = vmul.f32 %v5578, %v5618
      %v5659 = vmul.f32 %v5579, %v5619
      %v5660 = vmul.f32 %v5580, %v5620
      %v5661 = vmul.f32 %v5581, %v5621
      %v5662 = vmul.f32 %v5582, %v5622
      %5663 = vmatprep.subr.mxu0 0.0
      %5664 = vmatpush1.msra.mxu0 %v451
      %5665 = vmatprep.subr.mxu0 0.0
      %5666 = vmatpush1.msra.mxu0 %v450
      %5667 = vmatprep.subr.mxu0 0.0
      %5668 = vmatpush1.msra.mxu0 %v449
      %5669 = vmatprep.subr.mxu0 0.0
      %5670 = vmatpush1.msra.mxu0 %v448
      %5671 = vmatprep.subr.mxu0 0.0
      %5672 = vmatpush1.msra.mxu0 %v447
      %5673 = vmatprep.subr.mxu0 0.0
      %5674 = vmatpush1.msra.mxu0 %v446
      %5675 = vmatprep.subr.mxu0 0.0
      %5676 = vmatpush1.msra.mxu0 %v445
      %5677 = vmatprep.subr.mxu0 0.0
      %5678 = vmatpush1.msra.mxu0 %v444
      %5679 = vmatprep.subr.mxu0 0.0
      %5680 = vmatpush1.msra.mxu0 %v443
      %5681 = vmatprep.subr.mxu0 0.0
      %5682 = vmatpush1.msra.mxu0 %v442
      %5683 = vmatprep.subr.mxu0 0.0
      %5684 = vmatpush1.msra.mxu0 %v441
      %5685 = vmatprep.subr.mxu0 0.0
      %5686 = vmatpush1.msra.mxu0 %v440
      %5687 = vmatprep.subr.mxu0 0.0
      %5688 = vmatpush1.msra.mxu0 %v439
      %5689 = vmatprep.subr.mxu0 0.0
      %5690 = vmatpush1.msra.mxu0 %v438
      %5691 = vmatprep.subr.mxu0 0.0
      %5692 = vmatpush1.msra.mxu0 %v437
      %5693 = vmatprep.subr.mxu0 0.0
      %5694 = vmatpush1.msra.mxu0 %v436
      %5695 = vmatprep.subr.mxu0 0.0
      %5696 = vmatpush2.msra.mxu0 %v467
      %5697 = vmatprep.subr.mxu0 0.0
      %5698 = vmatpush2.msra.mxu0 %v466
      %5699 = vmatprep.subr.mxu0 0.0
      %5700 = vmatpush2.msra.mxu0 %v465
      %5701 = vmatprep.subr.mxu0 0.0
      %5702 = vmatpush2.msra.mxu0 %v464
      %5703 = vmatprep.subr.mxu0 0.0
      %5704 = vmatpush2.msra.mxu0 %v463
      %5705 = vmatprep.subr.mxu0 0.0
      %5706 = vmatpush2.msra.mxu0 %v462
      %5707 = vmatprep.subr.mxu0 0.0
      %5708 = vmatpush2.msra.mxu0 %v461
      %5709 = vmatprep.subr.mxu0 0.0
      %5710 = vmatpush2.msra.mxu0 %v460
      %5711 = vmatprep.subr.mxu0 0.0
      %5712 = vmatpush2.msra.mxu0 %v459
      %5713 = vmatprep.subr.mxu0 0.0
      %5714 = vmatpush2.msra.mxu0 %v458
      %5715 = vmatprep.subr.mxu0 0.0
      %5716 = vmatpush2.msra.mxu0 %v457
      %5717 = vmatprep.subr.mxu0 0.0
      %5718 = vmatpush2.msra.mxu0 %v456
      %5719 = vmatprep.subr.mxu0 0.0
      %5720 = vmatpush2.msra.mxu0 %v455
      %5721 = vmatprep.subr.mxu0 0.0
      %5722 = vmatpush2.msra.mxu0 %v454
      %5723 = vmatprep.subr.mxu0 0.0
      %5724 = vmatpush2.msra.mxu0 %v453
      %5725 = vmatprep.subr.mxu0 0.0
      %5726 = vmatpush2.msra.mxu0 %v452
      %5727 = vmatprep.mubr.f32.mxu0 %v5624
      %5728 = vmatmul.mubr.f32.gmra.mxu0 %v5623
      %v5729 = vpop.f32.mrf.mxu0
      %v5730 = vadd.f32 %v668, %v5729
      %v5731 = vpop.f32.mrf.mxu0
      %5732 = vmatprep.mubr.f32.mxu0 %v5626
      %5733 = vmatmul.mubr.f32.gmra.mxu0 %v5625
      %v5734 = vpop.f32.mrf.mxu0
      %v5735 = vadd.f32 %v668, %v5734
      %v5736 = vpop.f32.mrf.mxu0
      %5737 = vmatprep.mubr.f32.mxu0 %v5628
      %5738 = vmatmul.mubr.f32.gmra.mxu0 %v5627
      %v5739 = vpop.f32.mrf.mxu0
      %v5740 = vadd.f32 %v668, %v5739
      %v5741 = vpop.f32.mrf.mxu0
      %5742 = vmatprep.mubr.f32.mxu0 %v5630
      %5743 = vmatmul.mubr.f32.gmra.mxu0 %v5629
      %v5744 = vpop.f32.mrf.mxu0
      %v5745 = vadd.f32 %v668, %v5744
      %v5746 = vpop.f32.mrf.mxu0
      %5747 = vmatprep.mubr.f32.mxu0 %v5632
      %5748 = vmatmul.mubr.f32.gmra.mxu0 %v5631
      %v5749 = vpop.f32.mrf.mxu0
      %v5750 = vadd.f32 %v668, %v5749
      %v5751 = vpop.f32.mrf.mxu0
      %5752 = vmatprep.mubr.f32.mxu0 %v5634
      %5753 = vmatmul.mubr.f32.gmra.mxu0 %v5633
      %v5754 = vpop.f32.mrf.mxu0
      %v5755 = vadd.f32 %v668, %v5754
      %v5756 = vpop.f32.mrf.mxu0
      %5757 = vmatprep.mubr.f32.mxu0 %v5636
      %5758 = vmatmul.mubr.f32.gmra.mxu0 %v5635
      %v5759 = vpop.f32.mrf.mxu0
      %v5760 = vadd.f32 %v668, %v5759
      %v5761 = vpop.f32.mrf.mxu0
      %5762 = vmatprep.mubr.f32.mxu0 %v5638
      %5763 = vmatmul.mubr.f32.gmra.mxu0 %v5637
      %v5764 = vpop.f32.mrf.mxu0
      %v5765 = vadd.f32 %v668, %v5764
      %v5766 = vpop.f32.mrf.mxu0
      %5767 = vmatprep.mubr.f32.mxu0 %v5640
      %5768 = vmatmul.mubr.f32.gmra.mxu0 %v5639
      %v5769 = vpop.f32.mrf.mxu0
      %v5770 = vadd.f32 %v668, %v5769
      %v5771 = vpop.f32.mrf.mxu0
      %5772 = vmatprep.mubr.f32.mxu0 %v5642
      %5773 = vmatmul.mubr.f32.gmra.mxu0 %v5641
      %v5774 = vpop.f32.mrf.mxu0
      %v5775 = vadd.f32 %v668, %v5774
      %v5776 = vpop.f32.mrf.mxu0
      %5777 = vmatprep.mubr.f32.mxu0 %v5644
      %5778 = vmatmul.mubr.f32.gmra.mxu0 %v5643
      %v5779 = vpop.f32.mrf.mxu0
      %v5780 = vadd.f32 %v668, %v5779
      %v5781 = vpop.f32.mrf.mxu0
      %5782 = vmatprep.mubr.f32.mxu0 %v5646
      %5783 = vmatmul.mubr.f32.gmra.mxu0 %v5645
      %v5784 = vpop.f32.mrf.mxu0
      %v5785 = vadd.f32 %v668, %v5784
      %v5786 = vpop.f32.mrf.mxu0
      %5787 = vmatprep.mubr.f32.mxu0 %v5648
      %5788 = vmatmul.mubr.f32.gmra.mxu0 %v5647
      %v5789 = vpop.f32.mrf.mxu0
      %v5790 = vadd.f32 %v668, %v5789
      %v5791 = vpop.f32.mrf.mxu0
      %5792 = vmatprep.mubr.f32.mxu0 %v5650
      %5793 = vmatmul.mubr.f32.gmra.mxu0 %v5649
      %v5794 = vpop.f32.mrf.mxu0
      %v5795 = vadd.f32 %v668, %v5794
      %v5796 = vpop.f32.mrf.mxu0
      %5797 = vmatprep.mubr.f32.mxu0 %v5652
      %5798 = vmatmul.mubr.f32.gmra.mxu0 %v5651
      %v5799 = vpop.f32.mrf.mxu0
      %v5800 = vadd.f32 %v668, %v5799
      %v5801 = vpop.f32.mrf.mxu0
      %5802 = vmatprep.mubr.f32.mxu0 %v5654
      %5803 = vmatmul.mubr.f32.gmra.mxu0 %v5653
      %v5804 = vpop.f32.mrf.mxu0
      %v5805 = vadd.f32 %v668, %v5804
      %v5806 = vpop.f32.mrf.mxu0
      %5807 = vmatprep.mubr.f32.mxu0 %v5656
      %5808 = vmatmul.mubr.f32.gmra.mxu0 %v5655
      %v5809 = vpop.f32.mrf.mxu0
      %v5810 = vadd.f32 %v668, %v5809
      %v5811 = vpop.f32.mrf.mxu0
      %5812 = vmatprep.mubr.f32.mxu0 %v5658
      %5813 = vmatmul.mubr.f32.gmra.mxu0 %v5657
      %v5814 = vpop.f32.mrf.mxu0
      %v5815 = vadd.f32 %v668, %v5814
      %v5816 = vpop.f32.mrf.mxu0
      %5817 = vmatprep.mubr.f32.mxu0 %v5660
      %5818 = vmatmul.mubr.f32.gmra.mxu0 %v5659
      %v5819 = vpop.f32.mrf.mxu0
      %v5820 = vadd.f32 %v668, %v5819
      %v5821 = vpop.f32.mrf.mxu0
      %5822 = vmatprep.mubr.f32.mxu0 %v5662
      %5823 = vmatmul.mubr.f32.gmra.mxu0 %v5661
      %v5824 = vpop.f32.mrf.mxu0
      %v5825 = vadd.f32 %v668, %v5824
      %v5826 = vpop.f32.mrf.mxu0
      %5827 = vdwg.mxu0
      %v5828 = vadd.f32 %v5730, %v4407
      %v5829 = vadd.f32 %v5735, %v4408
      %v5830 = vadd.f32 %v5740, %v4409
      %v5831 = vadd.f32 %v5745, %v4410
      %v5832 = vadd.f32 %v5750, %v4411
      %v5833 = vadd.f32 %v5755, %v4412
      %v5834 = vadd.f32 %v5760, %v4413
      %v5835 = vadd.f32 %v5765, %v4414
      %v5836 = vadd.f32 %v5770, %v4415
      %v5837 = vadd.f32 %v5775, %v4416
      %v5838 = vadd.f32 %v5780, %v4417
      %v5839 = vadd.f32 %v5785, %v4418
      %v5840 = vadd.f32 %v5790, %v4419
      %v5841 = vadd.f32 %v5795, %v4420
      %v5842 = vadd.f32 %v5800, %v4421
      %v5843 = vadd.f32 %v5805, %v4422
      %v5844 = vadd.f32 %v5810, %v4423
      %v5845 = vadd.f32 %v5815, %v4424
      %v5846 = vadd.f32 %v5820, %v4425
      %v5847 = vadd.f32 %v5825, %v4426
      %5848 = vmatprep.subr.mxu0 0.0
      %5849 = vmatpush1.msra.mxu0 %v517
      %5850 = vmatprep.subr.mxu0 0.0
      %5851 = vmatpush1.msra.mxu0 %v516
      %5852 = vmatprep.subr.mxu0 0.0
      %5853 = vmatpush1.msra.mxu0 %v515
      %5854 = vmatprep.subr.mxu0 0.0
      %5855 = vmatpush1.msra.mxu0 %v514
      %5856 = vmatprep.subr.mxu0 0.0
      %5857 = vmatpush1.msra.mxu0 %v513
      %5858 = vmatprep.subr.mxu0 0.0
      %5859 = vmatpush1.msra.mxu0 %v512
      %5860 = vmatprep.subr.mxu0 0.0
      %5861 = vmatpush1.msra.mxu0 %v511
      %5862 = vmatprep.subr.mxu0 0.0
      %5863 = vmatpush1.msra.mxu0 %v510
      %5864 = vmatprep.subr.mxu0 0.0
      %5865 = vmatpush1.msra.mxu0 %v509
      %5866 = vmatprep.subr.mxu0 0.0
      %5867 = vmatpush1.msra.mxu0 %v508
      %5868 = vmatprep.subr.mxu0 0.0
      %5869 = vmatpush1.msra.mxu0 %v507
      %5870 = vmatprep.subr.mxu0 0.0
      %5871 = vmatpush1.msra.mxu0 %v506
      %5872 = vmatprep.subr.mxu0 0.0
      %5873 = vmatpush1.msra.mxu0 %v505
      %5874 = vmatprep.subr.mxu0 0.0
      %5875 = vmatpush1.msra.mxu0 %v504
      %5876 = vmatprep.subr.mxu0 0.0
      %5877 = vmatpush1.msra.mxu0 %v503
      %5878 = vmatprep.subr.mxu0 0.0
      %5879 = vmatpush1.msra.mxu0 %v502
      %5880 = vmatprep.subr.mxu0 0.0
      %5881 = vmatpush2.msra.mxu0 0.0
      %5882 = vmatprep.subr.mxu0 0.0
      %5883 = vmatpush2.msra.mxu0 0.0
      %5884 = vmatprep.subr.mxu0 0.0
      %5885 = vmatpush2.msra.mxu0 0.0
      %5886 = vmatprep.subr.mxu0 0.0
      %5887 = vmatpush2.msra.mxu0 0.0
      %5888 = vmatprep.subr.mxu0 0.0
      %5889 = vmatpush2.msra.mxu0 0.0
      %5890 = vmatprep.subr.mxu0 0.0
      %5891 = vmatpush2.msra.mxu0 0.0
      %5892 = vmatprep.subr.mxu0 0.0
      %5893 = vmatpush2.msra.mxu0 0.0
      %5894 = vmatprep.subr.mxu0 0.0
      %5895 = vmatpush2.msra.mxu0 0.0
      %5896 = vmatprep.subr.mxu0 0.0
      %5897 = vmatpush2.msra.mxu0 0.0
      %5898 = vmatprep.subr.mxu0 0.0
      %5899 = vmatpush2.msra.mxu0 0.0
      %5900 = vmatprep.subr.mxu0 0.0
      %5901 = vmatpush2.msra.mxu0 0.0
      %5902 = vmatprep.subr.mxu0 0.0
      %5903 = vmatpush2.msra.mxu0 0.0
      %5904 = vmatprep.subr.mxu0 0.0
      %5905 = vmatpush2.msra.mxu0 0.0
      %5906 = vmatprep.subr.mxu0 0.0
      %5907 = vmatpush2.msra.mxu0 0.0
      %5908 = vmatprep.subr.mxu0 0.0
      %5909 = vmatpush2.msra.mxu0 0.0
      %5910 = vmatprep.subr.mxu0 0.0
      %5911 = vmatpush2.msra.mxu0 0.0
      %5912 = vmatprep.mubr.f32.mxu0 0.0
      %5913 = vmatmul.mubr.f32.gmra.mxu0 %v5828
      %v5914 = vpop.f32.mrf.mxu0
      %v5915 = vadd.f32 0.0, %v5914
      %v5916 = vpop.f32.mrf.mxu0
      %5917 = vmatprep.mubr.f32.mxu0 0.0
      %5918 = vmatmul.mubr.f32.gmra.mxu0 %v5829
      %v5919 = vpop.f32.mrf.mxu0
      %v5920 = vadd.f32 0.0, %v5919
      %v5921 = vpop.f32.mrf.mxu0
      %5922 = vmatprep.mubr.f32.mxu0 0.0
      %5923 = vmatmul.mubr.f32.gmra.mxu0 %v5830
      %v5924 = vpop.f32.mrf.mxu0
      %v5925 = vadd.f32 0.0, %v5924
      %v5926 = vpop.f32.mrf.mxu0
      %5927 = vmatprep.mubr.f32.mxu0 0.0
      %5928 = vmatmul.mubr.f32.gmra.mxu0 %v5831
      %v5929 = vpop.f32.mrf.mxu0
      %v5930 = vadd.f32 0.0, %v5929
      %v5931 = vpop.f32.mrf.mxu0
      %5932 = vmatprep.mubr.f32.mxu0 0.0
      %5933 = vmatmul.mubr.f32.gmra.mxu0 %v5832
      %v5934 = vpop.f32.mrf.mxu0
      %v5935 = vadd.f32 0.0, %v5934
      %v5936 = vpop.f32.mrf.mxu0
      %5937 = vmatprep.mubr.f32.mxu0 0.0
      %5938 = vmatmul.mubr.f32.gmra.mxu0 %v5833
      %v5939 = vpop.f32.mrf.mxu0
      %v5940 = vadd.f32 0.0, %v5939
      %v5941 = vpop.f32.mrf.mxu0
      %5942 = vmatprep.mubr.f32.mxu0 0.0
      %5943 = vmatmul.mubr.f32.gmra.mxu0 %v5834
      %v5944 = vpop.f32.mrf.mxu0
      %v5945 = vadd.f32 0.0, %v5944
      %v5946 = vpop.f32.mrf.mxu0
      %5947 = vmatprep.mubr.f32.mxu0 0.0
      %5948 = vmatmul.mubr.f32.gmra.mxu0 %v5835
      %v5949 = vpop.f32.mrf.mxu0
      %v5950 = vadd.f32 0.0, %v5949
      %v5951 = vpop.f32.mrf.mxu0
      %5952 = vmatprep.mubr.f32.mxu0 0.0
      %5953 = vmatmul.mubr.f32.gmra.mxu0 %v5836
      %v5954 = vpop.f32.mrf.mxu0
      %v5955 = vadd.f32 0.0, %v5954
      %v5956 = vpop.f32.mrf.mxu0
      %5957 = vmatprep.mubr.f32.mxu0 0.0
      %5958 = vmatmul.mubr.f32.gmra.mxu0 %v5837
      %v5959 = vpop.f32.mrf.mxu0
      %v5960 = vadd.f32 0.0, %v5959
      %v5961 = vpop.f32.mrf.mxu0
      %5962 = vmatprep.mubr.f32.mxu0 0.0
      %5963 = vmatmul.mubr.f32.gmra.mxu0 %v5838
      %v5964 = vpop.f32.mrf.mxu0
      %v5965 = vadd.f32 0.0, %v5964
      %v5966 = vpop.f32.mrf.mxu0
      %5967 = vmatprep.mubr.f32.mxu0 0.0
      %5968 = vmatmul.mubr.f32.gmra.mxu0 %v5839
      %v5969 = vpop.f32.mrf.mxu0
      %v5970 = vadd.f32 0.0, %v5969
      %v5971 = vpop.f32.mrf.mxu0
      %5972 = vmatprep.mubr.f32.mxu0 0.0
      %5973 = vmatmul.mubr.f32.gmra.mxu0 %v5840
      %v5974 = vpop.f32.mrf.mxu0
      %v5975 = vadd.f32 0.0, %v5974
      %v5976 = vpop.f32.mrf.mxu0
      %5977 = vmatprep.mubr.f32.mxu0 0.0
      %5978 = vmatmul.mubr.f32.gmra.mxu0 %v5841
      %v5979 = vpop.f32.mrf.mxu0
      %v5980 = vadd.f32 0.0, %v5979
      %v5981 = vpop.f32.mrf.mxu0
      %5982 = vmatprep.mubr.f32.mxu0 0.0
      %5983 = vmatmul.mubr.f32.gmra.mxu0 %v5842
      %v5984 = vpop.f32.mrf.mxu0
      %v5985 = vadd.f32 0.0, %v5984
      %v5986 = vpop.f32.mrf.mxu0
      %5987 = vmatprep.mubr.f32.mxu0 0.0
      %5988 = vmatmul.mubr.f32.gmra.mxu0 %v5843
      %v5989 = vpop.f32.mrf.mxu0
      %v5990 = vadd.f32 0.0, %v5989
      %v5991 = vpop.f32.mrf.mxu0
      %5992 = vmatprep.mubr.f32.mxu0 0.0
      %5993 = vmatmul.mubr.f32.gmra.mxu0 %v5844
      %v5994 = vpop.f32.mrf.mxu0
      %v5995 = vadd.f32 0.0, %v5994
      %v5996 = vpop.f32.mrf.mxu0
      %5997 = vmatprep.mubr.f32.mxu0 0.0
      %5998 = vmatmul.mubr.f32.gmra.mxu0 %v5845
      %v5999 = vpop.f32.mrf.mxu0
      %v6000 = vadd.f32 0.0, %v5999
      %v6001 = vpop.f32.mrf.mxu0
      %6002 = vmatprep.mubr.f32.mxu0 0.0
      %6003 = vmatmul.mubr.f32.gmra.mxu0 %v5846
      %v6004 = vpop.f32.mrf.mxu0
      %v6005 = vadd.f32 0.0, %v6004
      %v6006 = vpop.f32.mrf.mxu0
      %6007 = vmatprep.mubr.f32.mxu0 0.0
      %6008 = vmatmul.mubr.f32.gmra.mxu0 %v5847
      %v6009 = vpop.f32.mrf.mxu0
      %v6010 = vadd.f32 0.0, %v6009
      %v6011 = vpop.f32.mrf.mxu0
      %6012 = vdwg.mxu0
      %v6013 = vsub.f32 %v5828, %v5915
      %v6014 = vsub.f32 %v5829, %v5920
      %v6015 = vsub.f32 %v5830, %v5925
      %v6016 = vsub.f32 %v5831, %v5930
      %v6017 = vsub.f32 %v5832, %v5935
      %v6018 = vsub.f32 %v5833, %v5940
      %v6019 = vsub.f32 %v5834, %v5945
      %v6020 = vsub.f32 %v5835, %v5950
      %v6021 = vsub.f32 %v5836, %v5955
      %v6022 = vsub.f32 %v5837, %v5960
      %v6023 = vsub.f32 %v5838, %v5965
      %v6024 = vsub.f32 %v5839, %v5970
      %v6025 = vsub.f32 %v5840, %v5975
      %v6026 = vsub.f32 %v5841, %v5980
      %v6027 = vsub.f32 %v5842, %v5985
      %v6028 = vsub.f32 %v5843, %v5990
      %v6029 = vsub.f32 %v5844, %v5995
      %v6030 = vsub.f32 %v5845, %v6000
      %v6031 = vsub.f32 %v5846, %v6005
      %v6032 = vsub.f32 %v5847, %v6010
      %v6033 = vmul.f32 %v6013, %v6013
      %v6034 = vmul.f32 %v6014, %v6014
      %v6035 = vmul.f32 %v6015, %v6015
      %v6036 = vmul.f32 %v6016, %v6016
      %v6037 = vmul.f32 %v6017, %v6017
      %v6038 = vmul.f32 %v6018, %v6018
      %v6039 = vmul.f32 %v6019, %v6019
      %v6040 = vmul.f32 %v6020, %v6020
      %v6041 = vmul.f32 %v6021, %v6021
      %v6042 = vmul.f32 %v6022, %v6022
      %v6043 = vmul.f32 %v6023, %v6023
      %v6044 = vmul.f32 %v6024, %v6024
      %v6045 = vmul.f32 %v6025, %v6025
      %v6046 = vmul.f32 %v6026, %v6026
      %v6047 = vmul.f32 %v6027, %v6027
      %v6048 = vmul.f32 %v6028, %v6028
      %v6049 = vmul.f32 %v6029, %v6029
      %v6050 = vmul.f32 %v6030, %v6030
      %v6051 = vmul.f32 %v6031, %v6031
      %v6052 = vmul.f32 %v6032, %v6032
      %6053 = vmatprep.subr.mxu0 0.0
      %6054 = vmatpush1.msra.mxu0 %v517
      %6055 = vmatprep.subr.mxu0 0.0
      %6056 = vmatpush1.msra.mxu0 %v516
      %6057 = vmatprep.subr.mxu0 0.0
      %6058 = vmatpush1.msra.mxu0 %v515
      %6059 = vmatprep.subr.mxu0 0.0
      %6060 = vmatpush1.msra.mxu0 %v514
      %6061 = vmatprep.subr.mxu0 0.0
      %6062 = vmatpush1.msra.mxu0 %v513
      %6063 = vmatprep.subr.mxu0 0.0
      %6064 = vmatpush1.msra.mxu0 %v512
      %6065 = vmatprep.subr.mxu0 0.0
      %6066 = vmatpush1.msra.mxu0 %v511
      %6067 = vmatprep.subr.mxu0 0.0
      %6068 = vmatpush1.msra.mxu0 %v510
      %6069 = vmatprep.subr.mxu0 0.0
      %6070 = vmatpush1.msra.mxu0 %v509
      %6071 = vmatprep.subr.mxu0 0.0
      %6072 = vmatpush1.msra.mxu0 %v508
      %6073 = vmatprep.subr.mxu0 0.0
      %6074 = vmatpush1.msra.mxu0 %v507
      %6075 = vmatprep.subr.mxu0 0.0
      %6076 = vmatpush1.msra.mxu0 %v506
      %6077 = vmatprep.subr.mxu0 0.0
      %6078 = vmatpush1.msra.mxu0 %v505
      %6079 = vmatprep.subr.mxu0 0.0
      %6080 = vmatpush1.msra.mxu0 %v504
      %6081 = vmatprep.subr.mxu0 0.0
      %6082 = vmatpush1.msra.mxu0 %v503
      %6083 = vmatprep.subr.mxu0 0.0
      %6084 = vmatpush1.msra.mxu0 %v502
      %6085 = vmatprep.subr.mxu0 0.0
      %6086 = vmatpush2.msra.mxu0 0.0
      %6087 = vmatprep.subr.mxu0 0.0
      %6088 = vmatpush2.msra.mxu0 0.0
      %6089 = vmatprep.subr.mxu0 0.0
      %6090 = vmatpush2.msra.mxu0 0.0
      %6091 = vmatprep.subr.mxu0 0.0
      %6092 = vmatpush2.msra.mxu0 0.0
      %6093 = vmatprep.subr.mxu0 0.0
      %6094 = vmatpush2.msra.mxu0 0.0
      %6095 = vmatprep.subr.mxu0 0.0
      %6096 = vmatpush2.msra.mxu0 0.0
      %6097 = vmatprep.subr.mxu0 0.0
      %6098 = vmatpush2.msra.mxu0 0.0
      %6099 = vmatprep.subr.mxu0 0.0
      %6100 = vmatpush2.msra.mxu0 0.0
      %6101 = vmatprep.subr.mxu0 0.0
      %6102 = vmatpush2.msra.mxu0 0.0
      %6103 = vmatprep.subr.mxu0 0.0
      %6104 = vmatpush2.msra.mxu0 0.0
      %6105 = vmatprep.subr.mxu0 0.0
      %6106 = vmatpush2.msra.mxu0 0.0
      %6107 = vmatprep.subr.mxu0 0.0
      %6108 = vmatpush2.msra.mxu0 0.0
      %6109 = vmatprep.subr.mxu0 0.0
      %6110 = vmatpush2.msra.mxu0 0.0
      %6111 = vmatprep.subr.mxu0 0.0
      %6112 = vmatpush2.msra.mxu0 0.0
      %6113 = vmatprep.subr.mxu0 0.0
      %6114 = vmatpush2.msra.mxu0 0.0
      %6115 = vmatprep.subr.mxu0 0.0
      %6116 = vmatpush2.msra.mxu0 0.0
      %6117 = vmatprep.mubr.f32.mxu0 0.0
      %6118 = vmatmul.mubr.f32.gmra.mxu0 %v6033
      %v6119 = vpop.f32.mrf.mxu0
      %v6120 = vadd.f32 1e-12, %v6119
      %v6121 = vpop.f32.mrf.mxu0
      %6122 = vmatprep.mubr.f32.mxu0 0.0
      %6123 = vmatmul.mubr.f32.gmra.mxu0 %v6034
      %v6124 = vpop.f32.mrf.mxu0
      %v6125 = vadd.f32 1e-12, %v6124
      %v6126 = vpop.f32.mrf.mxu0
      %6127 = vmatprep.mubr.f32.mxu0 0.0
      %6128 = vmatmul.mubr.f32.gmra.mxu0 %v6035
      %v6129 = vpop.f32.mrf.mxu0
      %v6130 = vadd.f32 1e-12, %v6129
      %v6131 = vpop.f32.mrf.mxu0
      %6132 = vmatprep.mubr.f32.mxu0 0.0
      %6133 = vmatmul.mubr.f32.gmra.mxu0 %v6036
      %v6134 = vpop.f32.mrf.mxu0
      %v6135 = vadd.f32 1e-12, %v6134
      %v6136 = vpop.f32.mrf.mxu0
      %6137 = vmatprep.mubr.f32.mxu0 0.0
      %6138 = vmatmul.mubr.f32.gmra.mxu0 %v6037
      %v6139 = vpop.f32.mrf.mxu0
      %v6140 = vadd.f32 1e-12, %v6139
      %v6141 = vpop.f32.mrf.mxu0
      %6142 = vmatprep.mubr.f32.mxu0 0.0
      %6143 = vmatmul.mubr.f32.gmra.mxu0 %v6038
      %v6144 = vpop.f32.mrf.mxu0
      %v6145 = vadd.f32 1e-12, %v6144
      %v6146 = vpop.f32.mrf.mxu0
      %6147 = vmatprep.mubr.f32.mxu0 0.0
      %6148 = vmatmul.mubr.f32.gmra.mxu0 %v6039
      %v6149 = vpop.f32.mrf.mxu0
      %v6150 = vadd.f32 1e-12, %v6149
      %v6151 = vpop.f32.mrf.mxu0
      %6152 = vmatprep.mubr.f32.mxu0 0.0
      %6153 = vmatmul.mubr.f32.gmra.mxu0 %v6040
      %v6154 = vpop.f32.mrf.mxu0
      %v6155 = vadd.f32 1e-12, %v6154
      %v6156 = vpop.f32.mrf.mxu0
      %6157 = vmatprep.mubr.f32.mxu0 0.0
      %6158 = vmatmul.mubr.f32.gmra.mxu0 %v6041
      %v6159 = vpop.f32.mrf.mxu0
      %v6160 = vadd.f32 1e-12, %v6159
      %v6161 = vpop.f32.mrf.mxu0
      %6162 = vmatprep.mubr.f32.mxu0 0.0
      %6163 = vmatmul.mubr.f32.gmra.mxu0 %v6042
      %v6164 = vpop.f32.mrf.mxu0
      %v6165 = vadd.f32 1e-12, %v6164
      %v6166 = vpop.f32.mrf.mxu0
      %6167 = vmatprep.mubr.f32.mxu0 0.0
      %6168 = vmatmul.mubr.f32.gmra.mxu0 %v6043
      %v6169 = vpop.f32.mrf.mxu0
      %v6170 = vadd.f32 1e-12, %v6169
      %v6171 = vpop.f32.mrf.mxu0
      %6172 = vmatprep.mubr.f32.mxu0 0.0
      %6173 = vmatmul.mubr.f32.gmra.mxu0 %v6044
      %v6174 = vpop.f32.mrf.mxu0
      %v6175 = vadd.f32 1e-12, %v6174
      %v6176 = vpop.f32.mrf.mxu0
      %6177 = vmatprep.mubr.f32.mxu0 0.0
      %6178 = vmatmul.mubr.f32.gmra.mxu0 %v6045
      %v6179 = vpop.f32.mrf.mxu0
      %v6180 = vadd.f32 1e-12, %v6179
      %v6181 = vpop.f32.mrf.mxu0
      %6182 = vmatprep.mubr.f32.mxu0 0.0
      %6183 = vmatmul.mubr.f32.gmra.mxu0 %v6046
      %v6184 = vpop.f32.mrf.mxu0
      %v6185 = vadd.f32 1e-12, %v6184
      %v6186 = vpop.f32.mrf.mxu0
      %6187 = vmatprep.mubr.f32.mxu0 0.0
      %6188 = vmatmul.mubr.f32.gmra.mxu0 %v6047
      %v6189 = vpop.f32.mrf.mxu0
      %v6190 = vadd.f32 1e-12, %v6189
      %v6191 = vpop.f32.mrf.mxu0
      %6192 = vmatprep.mubr.f32.mxu0 0.0
      %6193 = vmatmul.mubr.f32.gmra.mxu0 %v6048
      %v6194 = vpop.f32.mrf.mxu0
      %v6195 = vadd.f32 1e-12, %v6194
      %v6196 = vpop.f32.mrf.mxu0
      %6197 = vmatprep.mubr.f32.mxu0 0.0
      %6198 = vmatmul.mubr.f32.gmra.mxu0 %v6049
      %v6199 = vpop.f32.mrf.mxu0
      %v6200 = vadd.f32 1e-12, %v6199
      %v6201 = vpop.f32.mrf.mxu0
      %6202 = vmatprep.mubr.f32.mxu0 0.0
      %6203 = vmatmul.mubr.f32.gmra.mxu0 %v6050
      %v6204 = vpop.f32.mrf.mxu0
      %v6205 = vadd.f32 1e-12, %v6204
      %v6206 = vpop.f32.mrf.mxu0
      %6207 = vmatprep.mubr.f32.mxu0 0.0
      %6208 = vmatmul.mubr.f32.gmra.mxu0 %v6051
      %v6209 = vpop.f32.mrf.mxu0
      %v6210 = vadd.f32 1e-12, %v6209
      %v6211 = vpop.f32.mrf.mxu0
      %6212 = vmatprep.mubr.f32.mxu0 0.0
      %6213 = vmatmul.mubr.f32.gmra.mxu0 %v6052
      %v6214 = vpop.f32.mrf.mxu0
      %v6215 = vadd.f32 1e-12, %v6214
      %v6216 = vpop.f32.mrf.mxu0
      %6217 = vdwg.mxu0
      %v6218 = vrsqrt.pop %v6120
      %v6219 = vrsqrt.pop %v6125
      %v6220 = vrsqrt.pop %v6130
      %v6221 = vrsqrt.pop %v6135
      %v6222 = vrsqrt.pop %v6140
      %v6223 = vrsqrt.pop %v6145
      %v6224 = vrsqrt.pop %v6150
      %v6225 = vrsqrt.pop %v6155
      %v6226 = vrsqrt.pop %v6160
      %v6227 = vrsqrt.pop %v6165
      %v6228 = vrsqrt.pop %v6170
      %v6229 = vrsqrt.pop %v6175
      %v6230 = vrsqrt.pop %v6180
      %v6231 = vrsqrt.pop %v6185
      %v6232 = vrsqrt.pop %v6190
      %v6233 = vrsqrt.pop %v6195
      %v6234 = vrsqrt.pop %v6200
      %v6235 = vrsqrt.pop %v6205
      %v6236 = vrsqrt.pop %v6210
      %v6237 = vrsqrt.pop %v6215
      %v6238 = vmul.f32 %v6013, %v6218
      %v6239 = vmul.f32 %v6014, %v6219
      %v6240 = vmul.f32 %v6015, %v6220
      %v6241 = vmul.f32 %v6016, %v6221
      %v6242 = vmul.f32 %v6017, %v6222
      %v6243 = vmul.f32 %v6018, %v6223
      %v6244 = vmul.f32 %v6019, %v6224
      %v6245 = vmul.f32 %v6020, %v6225
      %v6246 = vmul.f32 %v6021, %v6226
      %v6247 = vmul.f32 %v6022, %v6227
      %v6248 = vmul.f32 %v6023, %v6228
      %v6249 = vmul.f32 %v6024, %v6229
      %v6250 = vmul.f32 %v6025, %v6230
      %v6251 = vmul.f32 %v6026, %v6231
      %v6252 = vmul.f32 %v6027, %v6232
      %v6253 = vmul.f32 %v6028, %v6233
      %v6254 = vmul.f32 %v6029, %v6234
      %v6255 = vmul.f32 %v6030, %v6235
      %v6256 = vmul.f32 %v6031, %v6236
      %v6257 = vmul.f32 %v6032, %v6237
      %v6258 = vmul.f32 %v6238, %v671
      %v6259 = vmul.f32 %v6239, %v671
      %v6260 = vmul.f32 %v6240, %v671
      %v6261 = vmul.f32 %v6241, %v671
      %v6262 = vmul.f32 %v6242, %v671
      %v6263 = vmul.f32 %v6243, %v671
      %v6264 = vmul.f32 %v6244, %v671
      %v6265 = vmul.f32 %v6245, %v671
      %v6266 = vmul.f32 %v6246, %v671
      %v6267 = vmul.f32 %v6247, %v671
      %v6268 = vmul.f32 %v6248, %v671
      %v6269 = vmul.f32 %v6249, %v671
      %v6270 = vmul.f32 %v6250, %v671
      %v6271 = vmul.f32 %v6251, %v671
      %v6272 = vmul.f32 %v6252, %v671
      %v6273 = vmul.f32 %v6253, %v671
      %v6274 = vmul.f32 %v6254, %v671
      %v6275 = vmul.f32 %v6255, %v671
      %v6276 = vmul.f32 %v6256, %v671
      %v6277 = vmul.f32 %v6257, %v671
      %v6278 = vadd.f32 %v6258, %v672
      %v6279 = vadd.f32 %v6259, %v672
      %v6280 = vadd.f32 %v6260, %v672
      %v6281 = vadd.f32 %v6261, %v672
      %v6282 = vadd.f32 %v6262, %v672
      %v6283 = vadd.f32 %v6263, %v672
      %v6284 = vadd.f32 %v6264, %v672
      %v6285 = vadd.f32 %v6265, %v672
      %v6286 = vadd.f32 %v6266, %v672
      %v6287 = vadd.f32 %v6267, %v672
      %v6288 = vadd.f32 %v6268, %v672
      %v6289 = vadd.f32 %v6269, %v672
      %v6290 = vadd.f32 %v6270, %v672
      %v6291 = vadd.f32 %v6271, %v672
      %v6292 = vadd.f32 %v6272, %v672
      %v6293 = vadd.f32 %v6273, %v672
      %v6294 = vadd.f32 %v6274, %v672
      %v6295 = vadd.f32 %v6275, %v672
      %v6296 = vadd.f32 %v6276, %v672
      %v6297 = vadd.f32 %v6277, %v672
      %6298 = vst [vmem:[%s270] sm:$0xff] %v6278
      %6299 = vst [vmem:[%s270 + $0x8] sm:$0xff] %v6279
      %6300 = vst [vmem:[%s270 + $0x10] sm:$0xff] %v6280
      %6301 = vst [vmem:[%s270 + $0x18] sm:$0xff] %v6281
      %6302 = vst [vmem:[%s270 + $0x20] sm:$0xff] %v6282
      %6303 = vst [vmem:[%s270 + $0x28] sm:$0xff] %v6283
      %6304 = vst [vmem:[%s270 + $0x30] sm:$0xff] %v6284
      %6305 = vst [vmem:[%s270 + $0x38] sm:$0xff] %v6285
      %6306 = vst [vmem:[%s270 + $0x40] sm:$0xff] %v6286
      %6307 = vst [vmem:[%s270 + $0x48] sm:$0xff] %v6287
      %6308 = vst [vmem:[%s270 + $0x50] sm:$0xff] %v6288
      %6309 = vst [vmem:[%s270 + $0x58] sm:$0xff] %v6289
      %6310 = vst [vmem:[%s270 + $0x60] sm:$0xff] %v6290
      %6311 = vst [vmem:[%s270 + $0x68] sm:$0xff] %v6291
      %6312 = vst [vmem:[%s270 + $0x70] sm:$0xff] %v6292
      %6313 = vst [vmem:[%s270 + $0x78] sm:$0xff] %v6293
      %6314 = vst [vmem:[%s270 + $0x80] sm:$0xff] %v6294
      %6315 = vst [vmem:[%s270 + $0x88] sm:$0xff] %v6295
      %6316 = vst [vmem:[%s270 + $0x90] sm:$0xff] %v6296
      %6317 = vst [vmem:[%s270 + $0x98] sm:$0xff] %v6297
      %s6318 = smul.u32 20, %s16
      %p6319 = scmp.lt.s32.totalorder %s6318, 39
      %s6320 = scalar_select %p6319, %s6318, 39
      %s6321 = smul.addr %s6320, 8
      %s6322 = scalar_lea.vmem %s5, %s6321
      // Predicated region
      $region41: #{mgmha_encoder_text.1} parent=39 // pred_check
        %p6323 = pneg %p154
      $region42: #{mgmha_encoder_text.1} parent=39 // pred_check_branch
        %6325 = sbr.rel (%p6323) target = $region44
      $region43: #{mgmha_encoder_text.1} parent=39 // pred_region
        %s6326 = smul.u32 20, %s16
      $region44: #{mgmha_encoder_text.1} parent=39 // pred_fallthru
        _
    $region40: #{mgmha_encoder_text.1} parent=5 // pred_fallthru
      _
    %p6327 = scmp.le.s32.totalorder 2, %s11
    // Predicated region
    $region45: #{mgmha_encoder_text.1} parent=5 // pred_check
      %p6328 = pneg %p6327
    $region46: #{mgmha_encoder_text.1} parent=5 // pred_check_branch
      %6330 = sbr.rel (%p6328) target = $region48
    $region47: #{mgmha_encoder_text.1} parent=5 // pred_region
      %s6331 = ssub.s32 %s11, 2
      // Predicated region
      $region49: #{mgmha_encoder_text.1} parent=47 // pred_check
        %p6332 = pneg %p160
      $region50: #{mgmha_encoder_text.1} parent=47 // pred_check_branch
        %6334 = sbr.rel (%p6332) target = $region52
      $region51: #{mgmha_encoder_text.1} parent=47 // pred_region
        %s6335 = smul.u32 20, %s17
        %p6336 = scmp.lt.s32.totalorder %s6335, 39
        %s6337 = scalar_select %p6336, %s6335, 39
        %s6338 = smul.addr %s6337, 8
        %s6339 = scalar_lea.vmem %s5, %s6338
      $region52: #{mgmha_encoder_text.1} parent=47 // pred_fallthru
        _
    $region48: #{mgmha_encoder_text.1} parent=5 // pred_fallthru
      _
  $region6: #{mgmha_encoder_text.1} parent=0 // loop_footer
    %s15 = sadd.s32 1, %s11
  $region7: #{mgmha_encoder_text.1} parent=0 // loop_footer_branch
    %10 = sbr.rel target = $region3
  $region8: #{mgmha_encoder_text.1} parent=0 // loop_exit
    _

</llo_original>
